<compile_context>
chip_gen: v6e
topology: v6e:2x2x1
jax: 0.10.0
libtpu: 0.0.40
codegen_flags: <defaults>
</compile_context>

<pallas_src>
import functools
import math

import jax
import jax.numpy as jnp
from jax import lax
from jax.experimental import pallas as pl
from jax.experimental.pallas import tpu as pltpu

LN_EPS = 1e-5          # nn.LayerNorm default eps
_NEG_INF = -1e9        # additive mask for padded keys; exp() underflows to 0 exactly like
                       # torch's -inf (differs from torch only for a fully-masked query row,
                       # where torch yields NaN and this kernel yields uniform attention).


def _erf_f32(x):
    # Abramowitz & Stegun 7.1.26 polynomial erf (max abs err ~1.5e-7).
    # Mosaic has no erf elementwise lowering; exp() runs on the EUP.
    a1, a2, a3, a4, a5 = (0.254829592, -0.284496736, 1.421413741,
                          -1.453152027, 1.061405429)
    p = 0.3275911
    s = jnp.where(x >= 0.0, 1.0, -1.0)
    z = jnp.abs(x)
    t = 1.0 / (1.0 + p * z)
    poly = ((((a5 * t + a4) * t + a3) * t + a2) * t + a1) * t
    return s * (1.0 - poly * jnp.exp(-z * z))


def _gelu_exact(x):
    # torch.nn.GELU() default = exact / erf flavour
    return 0.5 * x * (1.0 + _erf_f32(x * (1.0 / math.sqrt(2.0))))


def _layer_norm(x, gamma, beta):
    mu = jnp.mean(x, axis=-1, keepdims=True)
    xc = x - mu
    var = jnp.mean(xc * xc, axis=-1, keepdims=True)
    return xc * lax.rsqrt(var + LN_EPS) * gamma + beta


def _encoder_layer_kernel(x_ref, kpm_ref, am_ref, w_in_ref, b_in_ref, wo_ref,
                          bo_ref, w1_ref, b1_ref, w2_ref, b2_ref, lnd_ref,
                          lnff_ref, o_ref, *, nhead):
    # x_ref   : (BB, L, D)   current batch block (native dtype, cast in VMEM)
    # kpm_ref : (BB, 1, L)   f32 additive key-padding bias (0 / -1e9)
    # am_ref  : (L, L)       f32 additive attn_mask, VMEM-resident
    # w_in    : (D, 3D) bf16  b_in: (1, 3D) f32     -- in_proj (pre-transposed)
    # wo      : (D, D)  bf16  bo  : (1, D)  f32     -- out_proj
    # w1      : (D, 4D) bf16  b1  : (1, 4D) f32     -- linear1
    # w2      : (4D, D) bf16  b2  : (1, D)  f32     -- linear2
    # lnd     : (4, D)  f32   rows: ln0_g, ln0_b, ln1_g, ln1_b
    # lnff    : (2, 4D) f32   rows: ln2_g, ln2_b
    BB, L, D = x_ref.shape
    H = nhead
    Dh = D // H
    scale = 1.0 / math.sqrt(Dh)
    bf16 = jnp.bfloat16
    f32 = jnp.float32

    # Cast per-tile in VMEM and flatten positions so every projection is a
    # lane-dense (BB*L, D) matmul with a large M dimension.
    x = x_ref[...].astype(f32).reshape(BB * L, D)

    g0, be0 = lnd_ref[0:1, :], lnd_ref[1:2, :]
    g1, be1 = lnd_ref[2:3, :], lnd_ref[3:4, :]
    g2, be2 = lnff_ref[0:1, :], lnff_ref[1:2, :]

    # ---- pre-norm + fused QKV projection (bf16 MXU, f32 accumulation) ----
    xn = _layer_norm(x, g0, be0)
    qkv = jnp.dot(xn.astype(bf16), w_in_ref[...],
                  preferred_element_type=f32) + b_in_ref[...]
    q = (qkv[:, 0:D] * scale).reshape(BB, L, D).astype(bf16)
    k = qkv[:, D:2 * D].reshape(BB, L, D).astype(bf16)
    v = qkv[:, 2 * D:3 * D].reshape(BB, L, D).astype(bf16)

    # Head-independent additive mask rebuilt in-kernel: (BB, L, L).
    bias = am_ref[...][None, :, :] + kpm_ref[...]

    # ---- multi-head attention, batched over the BB batch elements ----
    # TODO(synk): for production L / head_dim, tile the sequence and use an
    # online-softmax (flash) accumulator instead of materializing (BB, L, L).
    ctx_heads = []
    for h in range(H):
        qh = q[:, :, h * Dh:(h + 1) * Dh]           # (BB, L, Dh)
        kh = k[:, :, h * Dh:(h + 1) * Dh]
        vh = v[:, :, h * Dh:(h + 1) * Dh]
        s = lax.dot_general(qh, kh, (((2,), (2,)), ((0,), (0,))),
                            preferred_element_type=f32)          # (BB, L, L)
        s = s + bias
        m = jnp.max(s, axis=-1, keepdims=True)
        p = jnp.exp(s - m)
        p = p * pl.reciprocal(jnp.sum(p, axis=-1, keepdims=True), approx=True)
        ctx_heads.append(
            lax.dot_general(p.astype(bf16), vh, (((2,), (1,)), ((0,), (0,))),
                            preferred_element_type=f32))          # (BB, L, Dh)
    ctx = jnp.concatenate(ctx_heads, axis=-1).reshape(BB * L, D)

    attn = jnp.dot(ctx.astype(bf16), wo_ref[...],
                   preferred_element_type=f32) + bo_ref[...]

    # ---- residual + post-attention LayerNorm ----
    src = _layer_norm(x + attn, g1, be1)

    # ---- feed-forward: Linear1 -> GELU -> LayerNorm2 -> Linear2 ----
    hmid = jnp.dot(src.astype(bf16), w1_ref[...],
                   preferred_element_type=f32) + b1_ref[...]
    hmid = _layer_norm(_gelu_exact(hmid), g2, be2)
    ffn = jnp.dot(hmid.astype(bf16), w2_ref[...],
                  preferred_element_type=f32) + b2_ref[...]

    # TODO(synk): attention-weight dropout and dropout0 are identity in eval
    # mode; stochastic train-mode dropout is not implemented.
    o_ref[...] = (src + ffn).reshape(BB, L, D).astype(o_ref.dtype)


def _step_act_bytes(bb, L, D, x_bytes, out_bytes):
    """Rough per-grid-step VMEM estimate (streamed tiles + live intermediates)."""
    rows = bb * L
    stream = 2 * rows * D * x_bytes + 2 * rows * D * out_bytes + 2 * bb * L * 4
    live = rows * 12 * D * 4            # x, xn/src, qkv, 4D hidden, ctx/ffn (f32)
    live += 4 * bb * L * L * 4          # bias + per-head scores / probs
    return stream + live


def _pick_block_b(B, L, D, x_bytes, out_bytes, act_budget=16 * 1024 * 1024):
    divs = [d for d in range(1, B + 1) if B % d == 0]
    fits = [d for d in divs if _step_act_bytes(d, L, D, x_bytes, out_bytes) <= act_budget]
    if not fits:
        return 1
    # Prefer a block that both fills the MXU (>=256 rows) and leaves >=4 grid
    # steps (DMA pipelining / v7x dual-core split); otherwise take the largest
    # block that fits the VMEM activation budget.
    good = [d for d in fits if d * L >= 256 and B // d >= 4]
    return max(good) if good else max(fits)


def hf_transformer_encoder_layer(x, attn_mask, key_padding_mask, params, *,
                                 nhead, block_b=None):
    B, L, D = x.shape
    H = nhead
    assert D % H == 0, "d_model must be divisible by nhead"

    f32 = jnp.float32
    bf16 = jnp.bfloat16
    out_dtype = x.dtype
    x_bytes = jnp.dtype(x.dtype).itemsize
    out_bytes = jnp.dtype(out_dtype).itemsize

    BB = block_b if block_b is not None else _pick_block_b(B, L, D, x_bytes, out_bytes)
    assert B % BB == 0, "batch must be divisible by the batch block"

    # Tiny per-batch additive key-padding bias replaces the (B, H, L, L) merged mask.
    kpm = jnp.where(key_padding_mask, jnp.float32(_NEG_INF),
                    jnp.float32(0.0)).reshape(B, 1, L)
    am = attn_mask.astype(f32)                                    # (L, L), VMEM-resident

    # Weights resident in VMEM in bf16 (constant index_maps), biases / LN params in f32.
    w_in = params["in_proj_w"].T.astype(bf16)                     # (D, 3D)
    b_in = params["in_proj_b"].reshape(1, 3 * D).astype(f32)
    wo = params["out_proj_w"].T.astype(bf16)                      # (D, D)
    bo = params["out_proj_b"].reshape(1, D).astype(f32)
    w1 = params["lin1_w"].T.astype(bf16)                          # (D, 4D)
    b1 = params["lin1_b"].reshape(1, 4 * D).astype(f32)
    w2 = params["lin2_w"].T.astype(bf16)                          # (4D, D)
    b2 = params["lin2_b"].reshape(1, D).astype(f32)
    ln_d = jnp.stack([params["ln0_g"], params["ln0_b"],
                      params["ln1_g"], params["ln1_b"]], axis=0).astype(f32)   # (4, D)
    ln_ff = jnp.stack([params["ln2_g"], params["ln2_b"]], axis=0).astype(f32)  # (2, 4D)

    weight_bytes = 2 * 2 * (w_in.size + wo.size + w1.size + w2.size)  # bf16, x2 buffers
    est = weight_bytes + _step_act_bytes(BB, L, D, x_bytes, out_bytes) + (4 << 20)
    vmem_limit = int(min(max(est, 32 << 20), 40 << 20))   # explicit, safe on v5e/v6e/v7x

    return pl.pallas_call(
        functools.partial(_encoder_layer_kernel, nhead=H),
        out_shape=jax.ShapeDtypeStruct((B, L, D), out_dtype),
        grid_spec=pltpu.PrefetchScalarGridSpec(
            num_scalar_prefetch=0,
            grid=(B // BB,),
            in_specs=[
                pl.BlockSpec((BB, L, D), lambda b: (b, 0, 0)),     # x (streamed)
                pl.BlockSpec((BB, 1, L), lambda b: (b, 0, 0)),     # key-padding bias
                # Constant index_maps => parameters stay VMEM-resident.
                pl.BlockSpec((L, L), lambda b: (0, 0)),            # attn_mask
                pl.BlockSpec((D, 3 * D), lambda b: (0, 0)),
                pl.BlockSpec((1, 3 * D), lambda b: (0, 0)),
                pl.BlockSpec((D, D), lambda b: (0, 0)),
                pl.BlockSpec((1, D), lambda b: (0, 0)),
                pl.BlockSpec((D, 4 * D), lambda b: (0, 0)),
                pl.BlockSpec((1, 4 * D), lambda b: (0, 0)),
                pl.BlockSpec((4 * D, D), lambda b: (0, 0)),
                pl.BlockSpec((1, D), lambda b: (0, 0)),
                pl.BlockSpec((4, D), lambda b: (0, 0)),
                pl.BlockSpec((2, 4 * D), lambda b: (0, 0)),
            ],
            out_specs=pl.BlockSpec((BB, L, D), lambda b: (b, 0, 0)),
        ),
        compiler_params=pltpu.CompilerParams(
            dimension_semantics=("parallel",),        # shards batch blocks across v7x cores
            vmem_limit_bytes=vmem_limit),
    )(x, kpm, am, w_in, b_in, wo, bo, w1, b1, w2, b2, ln_d, ln_ff)


def encoder_layer_ref(x, attn_mask, key_padding_mask, params, *, nhead,
                      matmul_dtype=jnp.bfloat16):
    # Pure-JAX reference mirroring the PyTorch eval-mode forward.
    # matmul_dtype=bfloat16 matches the kernel's MXU precision; pass float32 for
    # the strict-f32 torch-eval numerics.
    B, L, D = x.shape
    H, Dh = nhead, D // nhead
    f32 = jnp.float32
    md = matmul_dtype

    def ln(t, g, b):
        mu = jnp.mean(t, axis=-1, keepdims=True)
        var = jnp.mean((t - mu) ** 2, axis=-1, keepdims=True)
        return (t - mu) / jnp.sqrt(var + LN_EPS) * g + b

    def mm(a, w):
        return jnp.dot(a.astype(md), w.astype(md), preferred_element_type=f32)

    x = x.astype(f32)
    kpm = jnp.where(key_padding_mask, jnp.float32(_NEG_INF), jnp.float32(0.0))
    bias = attn_mask.astype(f32)[None, None, :, :] + kpm[:, None, None, :]   # (B,1,L,L)

    xn = ln(x, params["ln0_g"], params["ln0_b"])
    qkv = mm(xn.reshape(B * L, D), params["in_proj_w"].T) + params["in_proj_b"]
    q, k, v = jnp.split(qkv, 3, axis=-1)
    q = (q * (1.0 / math.sqrt(Dh))).reshape(B, L, H, Dh).transpose(0, 2, 1, 3)
    k = k.reshape(B, L, H, Dh).transpose(0, 2, 1, 3)
    v = v.reshape(B, L, H, Dh).transpose(0, 2, 1, 3)
    s = jnp.einsum("bhld,bhmd->bhlm", q.astype(md), k.astype(md),
                   preferred_element_type=f32) + bias
    p = jax.nn.softmax(s, axis=-1)
    ctx = jnp.einsum("bhlm,bhmd->bhld", p.astype(md), v.astype(md),
                     preferred_element_type=f32)
    ctx = ctx.transpose(0, 2, 1, 3).reshape(B * L, D)
    attn = mm(ctx, params["out_proj_w"].T) + params["out_proj_b"]
    src = ln(x.reshape(B * L, D) + attn, params["ln1_g"], params["ln1_b"])
    h = mm(src, params["lin1_w"].T) + params["lin1_b"]
    h = 0.5 * h * (1.0 + lax.erf(h / math.sqrt(2.0)))
    h = ln(h, params["ln2_g"], params["ln2_b"])
    ffn = mm(h, params["lin2_w"].T) + params["lin2_b"]
    return (src + ffn).reshape(B, L, D)


if __name__ == "__main__":
    key = jax.random.PRNGKey(0)
    keys = jax.random.split(key, 16)

    B, L, D, H = 4, 16, 128, 8          # batch, seq, d_model, nhead
    sd = 1.0 / math.sqrt(D)
    sf = 1.0 / math.sqrt(4 * D)

    x = jax.random.normal(keys[0], (B, L, D), dtype=jnp.float32)
    # float additive attn mask (L, L) + boolean key-padding mask (B, L)
    attn_mask = 0.1 * jax.random.normal(keys[1], (L, L), dtype=jnp.float32)
    lengths = jnp.array([16, 13, 16, 10], dtype=jnp.int32)
    key_padding_mask = jnp.arange(L, dtype=jnp.int32)[None, :] >= lengths[:, None]

    params = {
        "in_proj_w":  sd * jax.random.normal(keys[2], (3 * D, D), dtype=jnp.float32),
        "in_proj_b":  0.02 * jax.random.normal(keys[3], (3 * D,), dtype=jnp.float32),
        "out_proj_w": sd * jax.random.normal(keys[4], (D, D), dtype=jnp.float32),
        "out_proj_b": 0.02 * jax.random.normal(keys[5], (D,), dtype=jnp.float32),
        "ln0_g": 1.0 + 0.1 * jax.random.normal(keys[6], (D,), dtype=jnp.float32),
        "ln0_b": 0.05 * jax.random.normal(keys[7], (D,), dtype=jnp.float32),
        "ln1_g": 1.0 + 0.1 * jax.random.normal(keys[8], (D,), dtype=jnp.float32),
        "ln1_b": 0.05 * jax.random.normal(keys[9], (D,), dtype=jnp.float32),
        "lin1_w": sd * jax.random.normal(keys[10], (4 * D, D), dtype=jnp.float32),
        "lin1_b": 0.02 * jax.random.normal(keys[11], (4 * D,), dtype=jnp.float32),
        "ln2_g": 1.0 + 0.1 * jax.random.normal(keys[12], (4 * D,), dtype=jnp.float32),
        "ln2_b": 0.05 * jax.random.normal(keys[13], (4 * D,), dtype=jnp.float32),
        "lin2_w": sf * jax.random.normal(keys[14], (D, 4 * D), dtype=jnp.float32),
        "lin2_b": 0.02 * jax.random.normal(keys[15], (D,), dtype=jnp.float32),
    }

    out = hf_transformer_encoder_layer(x, attn_mask, key_padding_mask, params, nhead=H)
    out = jax.block_until_ready(out)

    # Precision-matched (bf16-MXU) reference; tolerance covers the approximate
    # softmax reciprocal, the erf polynomial, and accumulation-order differences.
    ref = encoder_layer_ref(x, attn_mask, key_padding_mask, params, nhead=H,
                            matmul_dtype=jnp.bfloat16)
    assert out.shape == (B, L, D)
    assert out.dtype == x.dtype
    assert bool(jnp.allclose(out, ref, atol=2e-2, rtol=2e-2)), "kernel/reference mismatch"

    print("KERNEL_OK")
</pallas_src>

<mosaic_0001>
module attributes {stable_mosaic.version = 11 : i64} {
  func.func @_encoder_layer_kernel(%arg0: i32, %arg1: memref<4x16x128xf32, #tpu.memory_space<vmem>>, %arg2: memref<4x1x16xf32, #tpu.memory_space<vmem>>, %arg3: memref<16x16xf32, #tpu.memory_space<vmem>>, %arg4: memref<128x384xbf16, #tpu.memory_space<vmem>>, %arg5: memref<1x384xf32, #tpu.memory_space<vmem>>, %arg6: memref<128x128xbf16, #tpu.memory_space<vmem>>, %arg7: memref<1x128xf32, #tpu.memory_space<vmem>>, %arg8: memref<128x512xbf16, #tpu.memory_space<vmem>>, %arg9: memref<1x512xf32, #tpu.memory_space<vmem>>, %arg10: memref<512x128xbf16, #tpu.memory_space<vmem>>, %arg11: memref<1x128xf32, #tpu.memory_space<vmem>>, %arg12: memref<4x128xf32, #tpu.memory_space<vmem>>, %arg13: memref<2x512xf32, #tpu.memory_space<vmem>>, %arg14: memref<4x16x128xf32, #tpu.memory_space<vmem>>) attributes {dimension_semantics = [#tpu.dimension_semantics<parallel>], iteration_bounds = array<i64: 1>, scalar_prefetch = 0 : i64, scratch_operands = 0 : i64, tpu.core_type = #tpu.core_type<tc>, window_params = [{transform_indices = @transform_0, window_bounds = array<i64: 4, 16, 128>}, {transform_indices = @transform_1, window_bounds = array<i64: 4, 1, 16>}, {pipeline_mode = #tpu.pipeline_mode<synchronous>, transform_indices = @transform_2, window_bounds = array<i64: 16, 16>}, {pipeline_mode = #tpu.pipeline_mode<synchronous>, transform_indices = @transform_3, window_bounds = array<i64: 128, 384>}, {pipeline_mode = #tpu.pipeline_mode<synchronous>, transform_indices = @transform_4, window_bounds = array<i64: 1, 384>}, {pipeline_mode = #tpu.pipeline_mode<synchronous>, transform_indices = @transform_5, window_bounds = array<i64: 128, 128>}, {pipeline_mode = #tpu.pipeline_mode<synchronous>, transform_indices = @transform_6, window_bounds = array<i64: 1, 128>}, {pipeline_mode = #tpu.pipeline_mode<synchronous>, transform_indices = @transform_7, window_bounds = array<i64: 128, 512>}, {pipeline_mode = #tpu.pipeline_mode<synchronous>, transform_indices = @transform_8, window_bounds = array<i64: 1, 512>}, {pipeline_mode = #tpu.pipeline_mode<synchronous>, transform_indices = @transform_9, window_bounds = array<i64: 512, 128>}, {pipeline_mode = #tpu.pipeline_mode<synchronous>, transform_indices = @transform_10, window_bounds = array<i64: 1, 128>}, {pipeline_mode = #tpu.pipeline_mode<synchronous>, transform_indices = @transform_11, window_bounds = array<i64: 4, 128>}, {pipeline_mode = #tpu.pipeline_mode<synchronous>, transform_indices = @transform_12, window_bounds = array<i64: 2, 512>}, {transform_indices = @transform_13, window_bounds = array<i64: 4, 16, 128>}]} {
    %c0 = arith.constant 0 : index
    %c0_0 = arith.constant 0 : index
    %c0_1 = arith.constant 0 : index
    %0 = vector.load %arg1[%c0, %c0_0, %c0_1] : memref<4x16x128xf32, #tpu.memory_space<vmem>>, vector<4x16x128xf32>
    %1 = vector.shape_cast %0 : vector<4x16x128xf32> to vector<64x128xf32>
    %c0_2 = arith.constant 0 : index
    %c0_3 = arith.constant 0 : index
    %2 = vector.load %arg12[%c0_2, %c0_3] : memref<4x128xf32, #tpu.memory_space<vmem>>, vector<1x128xf32>
    %c1 = arith.constant 1 : index
    %c0_4 = arith.constant 0 : index
    %3 = vector.load %arg12[%c1, %c0_4] : memref<4x128xf32, #tpu.memory_space<vmem>>, vector<1x128xf32>
    %c2 = arith.constant 2 : index
    %c0_5 = arith.constant 0 : index
    %4 = vector.load %arg12[%c2, %c0_5] : memref<4x128xf32, #tpu.memory_space<vmem>>, vector<1x128xf32>
    %c3 = arith.constant 3 : index
    %c0_6 = arith.constant 0 : index
    %5 = vector.load %arg12[%c3, %c0_6] : memref<4x128xf32, #tpu.memory_space<vmem>>, vector<1x128xf32>
    %c0_7 = arith.constant 0 : index
    %c0_8 = arith.constant 0 : index
    %6 = vector.load %arg13[%c0_7, %c0_8] : memref<2x512xf32, #tpu.memory_space<vmem>>, vector<1x512xf32>
    %c1_9 = arith.constant 1 : index
    %c0_10 = arith.constant 0 : index
    %7 = vector.load %arg13[%c1_9, %c0_10] : memref<2x512xf32, #tpu.memory_space<vmem>>, vector<1x512xf32>
    %cst = arith.constant dense<0.000000e+00> : vector<64xf32>
    %8 = vector.multi_reduction <add>, %1, %cst [1] : vector<64x128xf32> to vector<64xf32>
    %9 = vector.shape_cast %8 : vector<64xf32> to vector<64x1xf32>
    %cst_11 = arith.constant 1.280000e+02 : f32
    %10 = vector.broadcast %cst_11 : f32 to vector<64x1xf32>
    %11 = arith.divf %9, %10 : vector<64x1xf32>
    %12 = vector.broadcast %11 : vector<64x1xf32> to vector<64x128xf32>
    %13 = arith.subf %1, %12 : vector<64x128xf32>
    %14 = arith.mulf %13, %13 : vector<64x128xf32>
    %cst_12 = arith.constant dense<0.000000e+00> : vector<64xf32>
    %15 = vector.multi_reduction <add>, %14, %cst_12 [1] : vector<64x128xf32> to vector<64xf32>
    %16 = vector.shape_cast %15 : vector<64xf32> to vector<64x1xf32>
    %cst_13 = arith.constant 1.280000e+02 : f32
    %17 = vector.broadcast %cst_13 : f32 to vector<64x1xf32>
    %18 = arith.divf %16, %17 : vector<64x1xf32>
    %cst_14 = arith.constant 9.99999974E-6 : f32
    %19 = vector.broadcast %cst_14 : f32 to vector<64x1xf32>
    %20 = arith.addf %18, %19 : vector<64x1xf32>
    %21 = math.rsqrt %20 : vector<64x1xf32>
    %22 = vector.broadcast %21 : vector<64x1xf32> to vector<64x128xf32>
    %23 = arith.mulf %13, %22 : vector<64x128xf32>
    %24 = vector.broadcast %2 : vector<1x128xf32> to vector<64x128xf32>
    %25 = arith.mulf %23, %24 : vector<64x128xf32>
    %26 = vector.broadcast %3 : vector<1x128xf32> to vector<64x128xf32>
    %27 = arith.addf %25, %26 : vector<64x128xf32>
    %28 = arith.truncf %27 : vector<64x128xf32> to vector<64x128xbf16>
    %c0_15 = arith.constant 0 : index
    %c0_16 = arith.constant 0 : index
    %29 = vector.load %arg4[%c0_15, %c0_16] : memref<128x384xbf16, #tpu.memory_space<vmem>>, vector<128x384xbf16>
    %cst_17 = arith.constant dense<0.000000e+00> : vector<64x384xf32>
    %30 = tpu.matmul %28, %29, %cst_17 {dimension_numbers = #tpu.dot_dimension_numbers<[1], [0], [0], [1], [0, 0, 1, 1], [], []>} : vector<64x128xbf16>, vector<128x384xbf16>, vector<64x384xf32> -> vector<64x384xf32>
    %c0_18 = arith.constant 0 : index
    %c0_19 = arith.constant 0 : index
    %31 = vector.load %arg5[%c0_18, %c0_19] : memref<1x384xf32, #tpu.memory_space<vmem>>, vector<1x384xf32>
    %32 = vector.broadcast %31 : vector<1x384xf32> to vector<64x384xf32>
    %33 = arith.addf %30, %32 : vector<64x384xf32>
    %34 = vector.extract_strided_slice %33 {offsets = [0, 0], sizes = [64, 128], strides = [1, 1]} : vector<64x384xf32> to vector<64x128xf32>
    %cst_20 = arith.constant 2.500000e-01 : f32
    %35 = vector.broadcast %cst_20 : f32 to vector<64x128xf32>
    %36 = arith.mulf %34, %35 : vector<64x128xf32>
    %37 = vector.shape_cast %36 : vector<64x128xf32> to vector<4x16x128xf32>
    %38 = arith.truncf %37 : vector<4x16x128xf32> to vector<4x16x128xbf16>
    %39 = vector.extract_strided_slice %33 {offsets = [0, 128], sizes = [64, 128], strides = [1, 1]} : vector<64x384xf32> to vector<64x128xf32>
    %40 = vector.shape_cast %39 : vector<64x128xf32> to vector<4x16x128xf32>
    %41 = arith.truncf %40 : vector<4x16x128xf32> to vector<4x16x128xbf16>
    %42 = vector.extract_strided_slice %33 {offsets = [0, 256], sizes = [64, 128], strides = [1, 1]} : vector<64x384xf32> to vector<64x128xf32>
    %43 = vector.shape_cast %42 : vector<64x128xf32> to vector<4x16x128xf32>
    %44 = arith.truncf %43 : vector<4x16x128xf32> to vector<4x16x128xbf16>
    %c0_21 = arith.constant 0 : index
    %c0_22 = arith.constant 0 : index
    %45 = vector.load %arg3[%c0_21, %c0_22] : memref<16x16xf32, #tpu.memory_space<vmem>>, vector<16x16xf32>
    %46 = vector.shape_cast %45 : vector<16x16xf32> to vector<1x16x16xf32>
    %c0_23 = arith.constant 0 : index
    %c0_24 = arith.constant 0 : index
    %c0_25 = arith.constant 0 : index
    %47 = vector.load %arg2[%c0_23, %c0_24, %c0_25] : memref<4x1x16xf32, #tpu.memory_space<vmem>>, vector<4x1x16xf32>
    %48 = vector.broadcast %46 : vector<1x16x16xf32> to vector<4x16x16xf32>
    %49 = vector.broadcast %47 : vector<4x1x16xf32> to vector<4x16x16xf32>
    %50 = arith.addf %48, %49 : vector<4x16x16xf32>
    %51 = vector.extract_strided_slice %38 {offsets = [0, 0, 0], sizes = [4, 16, 16], strides = [1, 1, 1]} : vector<4x16x128xbf16> to vector<4x16x16xbf16>
    %52 = vector.extract_strided_slice %41 {offsets = [0, 0, 0], sizes = [4, 16, 16], strides = [1, 1, 1]} : vector<4x16x128xbf16> to vector<4x16x16xbf16>
    %53 = vector.extract_strided_slice %44 {offsets = [0, 0, 0], sizes = [4, 16, 16], strides = [1, 1, 1]} : vector<4x16x128xbf16> to vector<4x16x16xbf16>
    %cst_26 = arith.constant dense<0.000000e+00> : vector<4x16x16xf32>
    %54 = tpu.matmul %51, %52, %cst_26 {dimension_numbers = #tpu.dot_dimension_numbers<[2], [2], [1], [1], [0, 0, 0, 1, 1, 1], [0], [0]>} : vector<4x16x16xbf16>, vector<4x16x16xbf16>, vector<4x16x16xf32> -> vector<4x16x16xf32>
    %55 = arith.addf %54, %50 : vector<4x16x16xf32>
    %cst_27 = arith.constant dense<0xFF800000> : vector<4x16xf32>
    %56 = vector.multi_reduction <maximumf>, %55, %cst_27 [2] : vector<4x16x16xf32> to vector<4x16xf32>
    %57 = vector.shape_cast %56 : vector<4x16xf32> to vector<4x16x1xf32>
    %58 = vector.broadcast %57 : vector<4x16x1xf32> to vector<4x16x16xf32>
    %59 = arith.subf %55, %58 : vector<4x16x16xf32>
    %60 = math.exp %59 : vector<4x16x16xf32>
    %cst_28 = arith.constant dense<0.000000e+00> : vector<4x16xf32>
    %61 = vector.multi_reduction <add>, %60, %cst_28 [2] : vector<4x16x16xf32> to vector<4x16xf32>
    %62 = vector.shape_cast %61 : vector<4x16xf32> to vector<4x16x1xf32>
    %63 = tpu.reciprocal %62 {approx = true} : vector<4x16x1xf32> -> vector<4x16x1xf32>
    %64 = vector.broadcast %63 : vector<4x16x1xf32> to vector<4x16x16xf32>
    %65 = arith.mulf %60, %64 : vector<4x16x16xf32>
    %66 = arith.truncf %65 : vector<4x16x16xf32> to vector<4x16x16xbf16>
    %cst_29 = arith.constant dense<0.000000e+00> : vector<4x16x16xf32>
    %67 = tpu.matmul %66, %53, %cst_29 {dimension_numbers = #tpu.dot_dimension_numbers<[2], [1], [1], [2], [0, 0, 0, 1, 1, 2], [0], [0]>} : vector<4x16x16xbf16>, vector<4x16x16xbf16>, vector<4x16x16xf32> -> vector<4x16x16xf32>
    %68 = vector.extract_strided_slice %38 {offsets = [0, 0, 16], sizes = [4, 16, 16], strides = [1, 1, 1]} : vector<4x16x128xbf16> to vector<4x16x16xbf16>
    %69 = vector.extract_strided_slice %41 {offsets = [0, 0, 16], sizes = [4, 16, 16], strides = [1, 1, 1]} : vector<4x16x128xbf16> to vector<4x16x16xbf16>
    %70 = vector.extract_strided_slice %44 {offsets = [0, 0, 16], sizes = [4, 16, 16], strides = [1, 1, 1]} : vector<4x16x128xbf16> to vector<4x16x16xbf16>
    %cst_30 = arith.constant dense<0.000000e+00> : vector<4x16x16xf32>
    %71 = tpu.matmul %68, %69, %cst_30 {dimension_numbers = #tpu.dot_dimension_numbers<[2], [2], [1], [1], [0, 0, 0, 1, 1, 1], [0], [0]>} : vector<4x16x16xbf16>, vector<4x16x16xbf16>, vector<4x16x16xf32> -> vector<4x16x16xf32>
    %72 = arith.addf %71, %50 : vector<4x16x16xf32>
    %cst_31 = arith.constant dense<0xFF800000> : vector<4x16xf32>
    %73 = vector.multi_reduction <maximumf>, %72, %cst_31 [2] : vector<4x16x16xf32> to vector<4x16xf32>
    %74 = vector.shape_cast %73 : vector<4x16xf32> to vector<4x16x1xf32>
    %75 = vector.broadcast %74 : vector<4x16x1xf32> to vector<4x16x16xf32>
    %76 = arith.subf %72, %75 : vector<4x16x16xf32>
    %77 = math.exp %76 : vector<4x16x16xf32>
    %cst_32 = arith.constant dense<0.000000e+00> : vector<4x16xf32>
    %78 = vector.multi_reduction <add>, %77, %cst_32 [2] : vector<4x16x16xf32> to vector<4x16xf32>
    %79 = vector.shape_cast %78 : vector<4x16xf32> to vector<4x16x1xf32>
    %80 = tpu.reciprocal %79 {approx = true} : vector<4x16x1xf32> -> vector<4x16x1xf32>
    %81 = vector.broadcast %80 : vector<4x16x1xf32> to vector<4x16x16xf32>
    %82 = arith.mulf %77, %81 : vector<4x16x16xf32>
    %83 = arith.truncf %82 : vector<4x16x16xf32> to vector<4x16x16xbf16>
    %cst_33 = arith.constant dense<0.000000e+00> : vector<4x16x16xf32>
    %84 = tpu.matmul %83, %70, %cst_33 {dimension_numbers = #tpu.dot_dimension_numbers<[2], [1], [1], [2], [0, 0, 0, 1, 1, 2], [0], [0]>} : vector<4x16x16xbf16>, vector<4x16x16xbf16>, vector<4x16x16xf32> -> vector<4x16x16xf32>
    %85 = vector.extract_strided_slice %38 {offsets = [0, 0, 32], sizes = [4, 16, 16], strides = [1, 1, 1]} : vector<4x16x128xbf16> to vector<4x16x16xbf16>
    %86 = vector.extract_strided_slice %41 {offsets = [0, 0, 32], sizes = [4, 16, 16], strides = [1, 1, 1]} : vector<4x16x128xbf16> to vector<4x16x16xbf16>
    %87 = vector.extract_strided_slice %44 {offsets = [0, 0, 32], sizes = [4, 16, 16], strides = [1, 1, 1]} : vector<4x16x128xbf16> to vector<4x16x16xbf16>
    %cst_34 = arith.constant dense<0.000000e+00> : vector<4x16x16xf32>
    %88 = tpu.matmul %85, %86, %cst_34 {dimension_numbers = #tpu.dot_dimension_numbers<[2], [2], [1], [1], [0, 0, 0, 1, 1, 1], [0], [0]>} : vector<4x16x16xbf16>, vector<4x16x16xbf16>, vector<4x16x16xf32> -> vector<4x16x16xf32>
    %89 = arith.addf %88, %50 : vector<4x16x16xf32>
    %cst_35 = arith.constant dense<0xFF800000> : vector<4x16xf32>
    %90 = vector.multi_reduction <maximumf>, %89, %cst_35 [2] : vector<4x16x16xf32> to vector<4x16xf32>
    %91 = vector.shape_cast %90 : vector<4x16xf32> to vector<4x16x1xf32>
    %92 = vector.broadcast %91 : vector<4x16x1xf32> to vector<4x16x16xf32>
    %93 = arith.subf %89, %92 : vector<4x16x16xf32>
    %94 = math.exp %93 : vector<4x16x16xf32>
    %cst_36 = arith.constant dense<0.000000e+00> : vector<4x16xf32>
    %95 = vector.multi_reduction <add>, %94, %cst_36 [2] : vector<4x16x16xf32> to vector<4x16xf32>
    %96 = vector.shape_cast %95 : vector<4x16xf32> to vector<4x16x1xf32>
    %97 = tpu.reciprocal %96 {approx = true} : vector<4x16x1xf32> -> vector<4x16x1xf32>
    %98 = vector.broadcast %97 : vector<4x16x1xf32> to vector<4x16x16xf32>
    %99 = arith.mulf %94, %98 : vector<4x16x16xf32>
    %100 = arith.truncf %99 : vector<4x16x16xf32> to vector<4x16x16xbf16>
    %cst_37 = arith.constant dense<0.000000e+00> : vector<4x16x16xf32>
    %101 = tpu.matmul %100, %87, %cst_37 {dimension_numbers = #tpu.dot_dimension_numbers<[2], [1], [1], [2], [0, 0, 0, 1, 1, 2], [0], [0]>} : vector<4x16x16xbf16>, vector<4x16x16xbf16>, vector<4x16x16xf32> -> vector<4x16x16xf32>
    %102 = vector.extract_strided_slice %38 {offsets = [0, 0, 48], sizes = [4, 16, 16], strides = [1, 1, 1]} : vector<4x16x128xbf16> to vector<4x16x16xbf16>
    %103 = vector.extract_strided_slice %41 {offsets = [0, 0, 48], sizes = [4, 16, 16], strides = [1, 1, 1]} : vector<4x16x128xbf16> to vector<4x16x16xbf16>
    %104 = vector.extract_strided_slice %44 {offsets = [0, 0, 48], sizes = [4, 16, 16], strides = [1, 1, 1]} : vector<4x16x128xbf16> to vector<4x16x16xbf16>
    %cst_38 = arith.constant dense<0.000000e+00> : vector<4x16x16xf32>
    %105 = tpu.matmul %102, %103, %cst_38 {dimension_numbers = #tpu.dot_dimension_numbers<[2], [2], [1], [1], [0, 0, 0, 1, 1, 1], [0], [0]>} : vector<4x16x16xbf16>, vector<4x16x16xbf16>, vector<4x16x16xf32> -> vector<4x16x16xf32>
    %106 = arith.addf %105, %50 : vector<4x16x16xf32>
    %cst_39 = arith.constant dense<0xFF800000> : vector<4x16xf32>
    %107 = vector.multi_reduction <maximumf>, %106, %cst_39 [2] : vector<4x16x16xf32> to vector<4x16xf32>
    %108 = vector.shape_cast %107 : vector<4x16xf32> to vector<4x16x1xf32>
    %109 = vector.broadcast %108 : vector<4x16x1xf32> to vector<4x16x16xf32>
    %110 = arith.subf %106, %109 : vector<4x16x16xf32>
    %111 = math.exp %110 : vector<4x16x16xf32>
    %cst_40 = arith.constant dense<0.000000e+00> : vector<4x16xf32>
    %112 = vector.multi_reduction <add>, %111, %cst_40 [2] : vector<4x16x16xf32> to vector<4x16xf32>
    %113 = vector.shape_cast %112 : vector<4x16xf32> to vector<4x16x1xf32>
    %114 = tpu.reciprocal %113 {approx = true} : vector<4x16x1xf32> -> vector<4x16x1xf32>
    %115 = vector.broadcast %114 : vector<4x16x1xf32> to vector<4x16x16xf32>
    %116 = arith.mulf %111, %115 : vector<4x16x16xf32>
    %117 = arith.truncf %116 : vector<4x16x16xf32> to vector<4x16x16xbf16>
    %cst_41 = arith.constant dense<0.000000e+00> : vector<4x16x16xf32>
    %118 = tpu.matmul %117, %104, %cst_41 {dimension_numbers = #tpu.dot_dimension_numbers<[2], [1], [1], [2], [0, 0, 0, 1, 1, 2], [0], [0]>} : vector<4x16x16xbf16>, vector<4x16x16xbf16>, vector<4x16x16xf32> -> vector<4x16x16xf32>
    %119 = vector.extract_strided_slice %38 {offsets = [0, 0, 64], sizes = [4, 16, 16], strides = [1, 1, 1]} : vector<4x16x128xbf16> to vector<4x16x16xbf16>
    %120 = vector.extract_strided_slice %41 {offsets = [0, 0, 64], sizes = [4, 16, 16], strides = [1, 1, 1]} : vector<4x16x128xbf16> to vector<4x16x16xbf16>
    %121 = vector.extract_strided_slice %44 {offsets = [0, 0, 64], sizes = [4, 16, 16], strides = [1, 1, 1]} : vector<4x16x128xbf16> to vector<4x16x16xbf16>
    %cst_42 = arith.constant dense<0.000000e+00> : vector<4x16x16xf32>
    %122 = tpu.matmul %119, %120, %cst_42 {dimension_numbers = #tpu.dot_dimension_numbers<[2], [2], [1], [1], [0, 0, 0, 1, 1, 1], [0], [0]>} : vector<4x16x16xbf16>, vector<4x16x16xbf16>, vector<4x16x16xf32> -> vector<4x16x16xf32>
    %123 = arith.addf %122, %50 : vector<4x16x16xf32>
    %cst_43 = arith.constant dense<0xFF800000> : vector<4x16xf32>
    %124 = vector.multi_reduction <maximumf>, %123, %cst_43 [2] : vector<4x16x16xf32> to vector<4x16xf32>
    %125 = vector.shape_cast %124 : vector<4x16xf32> to vector<4x16x1xf32>
    %126 = vector.broadcast %125 : vector<4x16x1xf32> to vector<4x16x16xf32>
    %127 = arith.subf %123, %126 : vector<4x16x16xf32>
    %128 = math.exp %127 : vector<4x16x16xf32>
    %cst_44 = arith.constant dense<0.000000e+00> : vector<4x16xf32>
    %129 = vector.multi_reduction <add>, %128, %cst_44 [2] : vector<4x16x16xf32> to vector<4x16xf32>
    %130 = vector.shape_cast %129 : vector<4x16xf32> to vector<4x16x1xf32>
    %131 = tpu.reciprocal %130 {approx = true} : vector<4x16x1xf32> -> vector<4x16x1xf32>
    %132 = vector.broadcast %131 : vector<4x16x1xf32> to vector<4x16x16xf32>
    %133 = arith.mulf %128, %132 : vector<4x16x16xf32>
    %134 = arith.truncf %133 : vector<4x16x16xf32> to vector<4x16x16xbf16>
    %cst_45 = arith.constant dense<0.000000e+00> : vector<4x16x16xf32>
    %135 = tpu.matmul %134, %121, %cst_45 {dimension_numbers = #tpu.dot_dimension_numbers<[2], [1], [1], [2], [0, 0, 0, 1, 1, 2], [0], [0]>} : vector<4x16x16xbf16>, vector<4x16x16xbf16>, vector<4x16x16xf32> -> vector<4x16x16xf32>
    %136 = vector.extract_strided_slice %38 {offsets = [0, 0, 80], sizes = [4, 16, 16], strides = [1, 1, 1]} : vector<4x16x128xbf16> to vector<4x16x16xbf16>
    %137 = vector.extract_strided_slice %41 {offsets = [0, 0, 80], sizes = [4, 16, 16], strides = [1, 1, 1]} : vector<4x16x128xbf16> to vector<4x16x16xbf16>
    %138 = vector.extract_strided_slice %44 {offsets = [0, 0, 80], sizes = [4, 16, 16], strides = [1, 1, 1]} : vector<4x16x128xbf16> to vector<4x16x16xbf16>
    %cst_46 = arith.constant dense<0.000000e+00> : vector<4x16x16xf32>
    %139 = tpu.matmul %136, %137, %cst_46 {dimension_numbers = #tpu.dot_dimension_numbers<[2], [2], [1], [1], [0, 0, 0, 1, 1, 1], [0], [0]>} : vector<4x16x16xbf16>, vector<4x16x16xbf16>, vector<4x16x16xf32> -> vector<4x16x16xf32>
    %140 = arith.addf %139, %50 : vector<4x16x16xf32>
    %cst_47 = arith.constant dense<0xFF800000> : vector<4x16xf32>
    %141 = vector.multi_reduction <maximumf>, %140, %cst_47 [2] : vector<4x16x16xf32> to vector<4x16xf32>
    %142 = vector.shape_cast %141 : vector<4x16xf32> to vector<4x16x1xf32>
    %143 = vector.broadcast %142 : vector<4x16x1xf32> to vector<4x16x16xf32>
    %144 = arith.subf %140, %143 : vector<4x16x16xf32>
    %145 = math.exp %144 : vector<4x16x16xf32>
    %cst_48 = arith.constant dense<0.000000e+00> : vector<4x16xf32>
    %146 = vector.multi_reduction <add>, %145, %cst_48 [2] : vector<4x16x16xf32> to vector<4x16xf32>
    %147 = vector.shape_cast %146 : vector<4x16xf32> to vector<4x16x1xf32>
    %148 = tpu.reciprocal %147 {approx = true} : vector<4x16x1xf32> -> vector<4x16x1xf32>
    %149 = vector.broadcast %148 : vector<4x16x1xf32> to vector<4x16x16xf32>
    %150 = arith.mulf %145, %149 : vector<4x16x16xf32>
    %151 = arith.truncf %150 : vector<4x16x16xf32> to vector<4x16x16xbf16>
    %cst_49 = arith.constant dense<0.000000e+00> : vector<4x16x16xf32>
    %152 = tpu.matmul %151, %138, %cst_49 {dimension_numbers = #tpu.dot_dimension_numbers<[2], [1], [1], [2], [0, 0, 0, 1, 1, 2], [0], [0]>} : vector<4x16x16xbf16>, vector<4x16x16xbf16>, vector<4x16x16xf32> -> vector<4x16x16xf32>
    %153 = vector.extract_strided_slice %38 {offsets = [0, 0, 96], sizes = [4, 16, 16], strides = [1, 1, 1]} : vector<4x16x128xbf16> to vector<4x16x16xbf16>
    %154 = vector.extract_strided_slice %41 {offsets = [0, 0, 96], sizes = [4, 16, 16], strides = [1, 1, 1]} : vector<4x16x128xbf16> to vector<4x16x16xbf16>
    %155 = vector.extract_strided_slice %44 {offsets = [0, 0, 96], sizes = [4, 16, 16], strides = [1, 1, 1]} : vector<4x16x128xbf16> to vector<4x16x16xbf16>
    %cst_50 = arith.constant dense<0.000000e+00> : vector<4x16x16xf32>
    %156 = tpu.matmul %153, %154, %cst_50 {dimension_numbers = #tpu.dot_dimension_numbers<[2], [2], [1], [1], [0, 0, 0, 1, 1, 1], [0], [0]>} : vector<4x16x16xbf16>, vector<4x16x16xbf16>, vector<4x16x16xf32> -> vector<4x16x16xf32>
    %157 = arith.addf %156, %50 : vector<4x16x16xf32>
    %cst_51 = arith.constant dense<0xFF800000> : vector<4x16xf32>
    %158 = vector.multi_reduction <maximumf>, %157, %cst_51 [2] : vector<4x16x16xf32> to vector<4x16xf32>
    %159 = vector.shape_cast %158 : vector<4x16xf32> to vector<4x16x1xf32>
    %160 = vector.broadcast %159 : vector<4x16x1xf32> to vector<4x16x16xf32>
    %161 = arith.subf %157, %160 : vector<4x16x16xf32>
    %162 = math.exp %161 : vector<4x16x16xf32>
    %cst_52 = arith.constant dense<0.000000e+00> : vector<4x16xf32>
    %163 = vector.multi_reduction <add>, %162, %cst_52 [2] : vector<4x16x16xf32> to vector<4x16xf32>
    %164 = vector.shape_cast %163 : vector<4x16xf32> to vector<4x16x1xf32>
    %165 = tpu.reciprocal %164 {approx = true} : vector<4x16x1xf32> -> vector<4x16x1xf32>
    %166 = vector.broadcast %165 : vector<4x16x1xf32> to vector<4x16x16xf32>
    %167 = arith.mulf %162, %166 : vector<4x16x16xf32>
    %168 = arith.truncf %167 : vector<4x16x16xf32> to vector<4x16x16xbf16>
    %cst_53 = arith.constant dense<0.000000e+00> : vector<4x16x16xf32>
    %169 = tpu.matmul %168, %155, %cst_53 {dimension_numbers = #tpu.dot_dimension_numbers<[2], [1], [1], [2], [0, 0, 0, 1, 1, 2], [0], [0]>} : vector<4x16x16xbf16>, vector<4x16x16xbf16>, vector<4x16x16xf32> -> vector<4x16x16xf32>
    %170 = vector.extract_strided_slice %38 {offsets = [0, 0, 112], sizes = [4, 16, 16], strides = [1, 1, 1]} : vector<4x16x128xbf16> to vector<4x16x16xbf16>
    %171 = vector.extract_strided_slice %41 {offsets = [0, 0, 112], sizes = [4, 16, 16], strides = [1, 1, 1]} : vector<4x16x128xbf16> to vector<4x16x16xbf16>
    %172 = vector.extract_strided_slice %44 {offsets = [0, 0, 112], sizes = [4, 16, 16], strides = [1, 1, 1]} : vector<4x16x128xbf16> to vector<4x16x16xbf16>
    %cst_54 = arith.constant dense<0.000000e+00> : vector<4x16x16xf32>
    %173 = tpu.matmul %170, %171, %cst_54 {dimension_numbers = #tpu.dot_dimension_numbers<[2], [2], [1], [1], [0, 0, 0, 1, 1, 1], [0], [0]>} : vector<4x16x16xbf16>, vector<4x16x16xbf16>, vector<4x16x16xf32> -> vector<4x16x16xf32>
    %174 = arith.addf %173, %50 : vector<4x16x16xf32>
    %cst_55 = arith.constant dense<0xFF800000> : vector<4x16xf32>
    %175 = vector.multi_reduction <maximumf>, %174, %cst_55 [2] : vector<4x16x16xf32> to vector<4x16xf32>
    %176 = vector.shape_cast %175 : vector<4x16xf32> to vector<4x16x1xf32>
    %177 = vector.broadcast %176 : vector<4x16x1xf32> to vector<4x16x16xf32>
    %178 = arith.subf %174, %177 : vector<4x16x16xf32>
    %179 = math.exp %178 : vector<4x16x16xf32>
    %cst_56 = arith.constant dense<0.000000e+00> : vector<4x16xf32>
    %180 = vector.multi_reduction <add>, %179, %cst_56 [2] : vector<4x16x16xf32> to vector<4x16xf32>
    %181 = vector.shape_cast %180 : vector<4x16xf32> to vector<4x16x1xf32>
    %182 = tpu.reciprocal %181 {approx = true} : vector<4x16x1xf32> -> vector<4x16x1xf32>
    %183 = vector.broadcast %182 : vector<4x16x1xf32> to vector<4x16x16xf32>
    %184 = arith.mulf %179, %183 : vector<4x16x16xf32>
    %185 = arith.truncf %184 : vector<4x16x16xf32> to vector<4x16x16xbf16>
    %cst_57 = arith.constant dense<0.000000e+00> : vector<4x16x16xf32>
    %186 = tpu.matmul %185, %172, %cst_57 {dimension_numbers = #tpu.dot_dimension_numbers<[2], [1], [1], [2], [0, 0, 0, 1, 1, 2], [0], [0]>} : vector<4x16x16xbf16>, vector<4x16x16xbf16>, vector<4x16x16xf32> -> vector<4x16x16xf32>
    %187 = tpu.concatenate %67, %84, %101, %118, %135, %152, %169, %186 in 2 : vector<4x16x16xf32>, vector<4x16x16xf32>, vector<4x16x16xf32>, vector<4x16x16xf32>, vector<4x16x16xf32>, vector<4x16x16xf32>, vector<4x16x16xf32>, vector<4x16x16xf32> -> vector<4x16x128xf32>
    %188 = vector.shape_cast %187 : vector<4x16x128xf32> to vector<64x128xf32>
    %189 = arith.truncf %188 : vector<64x128xf32> to vector<64x128xbf16>
    %c0_58 = arith.constant 0 : index
    %c0_59 = arith.constant 0 : index
    %190 = vector.load %arg6[%c0_58, %c0_59] : memref<128x128xbf16, #tpu.memory_space<vmem>>, vector<128x128xbf16>
    %cst_60 = arith.constant dense<0.000000e+00> : vector<64x128xf32>
    %191 = tpu.matmul %189, %190, %cst_60 {dimension_numbers = #tpu.dot_dimension_numbers<[1], [0], [0], [1], [0, 0, 1, 1], [], []>} : vector<64x128xbf16>, vector<128x128xbf16>, vector<64x128xf32> -> vector<64x128xf32>
    %c0_61 = arith.constant 0 : index
    %c0_62 = arith.constant 0 : index
    %192 = vector.load %arg7[%c0_61, %c0_62] : memref<1x128xf32, #tpu.memory_space<vmem>>, vector<1x128xf32>
    %193 = vector.broadcast %192 : vector<1x128xf32> to vector<64x128xf32>
    %194 = arith.addf %191, %193 : vector<64x128xf32>
    %195 = arith.addf %1, %194 : vector<64x128xf32>
    %cst_63 = arith.constant dense<0.000000e+00> : vector<64xf32>
    %196 = vector.multi_reduction <add>, %195, %cst_63 [1] : vector<64x128xf32> to vector<64xf32>
    %197 = vector.shape_cast %196 : vector<64xf32> to vector<64x1xf32>
    %cst_64 = arith.constant 1.280000e+02 : f32
    %198 = vector.broadcast %cst_64 : f32 to vector<64x1xf32>
    %199 = arith.divf %197, %198 : vector<64x1xf32>
    %200 = vector.broadcast %199 : vector<64x1xf32> to vector<64x128xf32>
    %201 = arith.subf %195, %200 : vector<64x128xf32>
    %202 = arith.mulf %201, %201 : vector<64x128xf32>
    %cst_65 = arith.constant dense<0.000000e+00> : vector<64xf32>
    %203 = vector.multi_reduction <add>, %202, %cst_65 [1] : vector<64x128xf32> to vector<64xf32>
    %204 = vector.shape_cast %203 : vector<64xf32> to vector<64x1xf32>
    %cst_66 = arith.constant 1.280000e+02 : f32
    %205 = vector.broadcast %cst_66 : f32 to vector<64x1xf32>
    %206 = arith.divf %204, %205 : vector<64x1xf32>
    %cst_67 = arith.constant 9.99999974E-6 : f32
    %207 = vector.broadcast %cst_67 : f32 to vector<64x1xf32>
    %208 = arith.addf %206, %207 : vector<64x1xf32>
    %209 = math.rsqrt %208 : vector<64x1xf32>
    %210 = vector.broadcast %209 : vector<64x1xf32> to vector<64x128xf32>
    %211 = arith.mulf %201, %210 : vector<64x128xf32>
    %212 = vector.broadcast %4 : vector<1x128xf32> to vector<64x128xf32>
    %213 = arith.mulf %211, %212 : vector<64x128xf32>
    %214 = vector.broadcast %5 : vector<1x128xf32> to vector<64x128xf32>
    %215 = arith.addf %213, %214 : vector<64x128xf32>
    %216 = arith.truncf %215 : vector<64x128xf32> to vector<64x128xbf16>
    %c0_68 = arith.constant 0 : index
    %c0_69 = arith.constant 0 : index
    %217 = vector.load %arg8[%c0_68, %c0_69] : memref<128x512xbf16, #tpu.memory_space<vmem>>, vector<128x512xbf16>
    %cst_70 = arith.constant dense<0.000000e+00> : vector<64x512xf32>
    %218 = tpu.matmul %216, %217, %cst_70 {dimension_numbers = #tpu.dot_dimension_numbers<[1], [0], [0], [1], [0, 0, 1, 1], [], []>} : vector<64x128xbf16>, vector<128x512xbf16>, vector<64x512xf32> -> vector<64x512xf32>
    %c0_71 = arith.constant 0 : index
    %c0_72 = arith.constant 0 : index
    %219 = vector.load %arg9[%c0_71, %c0_72] : memref<1x512xf32, #tpu.memory_space<vmem>>, vector<1x512xf32>
    %220 = vector.broadcast %219 : vector<1x512xf32> to vector<64x512xf32>
    %221 = arith.addf %218, %220 : vector<64x512xf32>
    %cst_73 = arith.constant 5.000000e-01 : f32
    %222 = vector.broadcast %cst_73 : f32 to vector<64x512xf32>
    %223 = arith.mulf %222, %221 : vector<64x512xf32>
    %cst_74 = arith.constant 0.707106769 : f32
    %224 = vector.broadcast %cst_74 : f32 to vector<64x512xf32>
    %225 = arith.mulf %221, %224 : vector<64x512xf32>
    %cst_75 = arith.constant 0.000000e+00 : f32
    %226 = vector.broadcast %cst_75 : f32 to vector<64x512xf32>
    %227 = arith.cmpf oge, %225, %226 : vector<64x512xf32>
    %cst_76 = arith.constant 1.000000e+00 : f32
    %cst_77 = arith.constant -1.000000e+00 : f32
    %228 = vector.broadcast %cst_76 : f32 to vector<64x512xf32>
    %229 = vector.broadcast %cst_77 : f32 to vector<64x512xf32>
    %230 = arith.select %227, %228, %229 : vector<64x512xi1>, vector<64x512xf32>
    %231 = math.absf %225 : vector<64x512xf32>
    %cst_78 = arith.constant 0.327591091 : f32
    %232 = vector.broadcast %cst_78 : f32 to vector<64x512xf32>
    %233 = arith.mulf %232, %231 : vector<64x512xf32>
    %cst_79 = arith.constant 1.000000e+00 : f32
    %234 = vector.broadcast %cst_79 : f32 to vector<64x512xf32>
    %235 = arith.addf %234, %233 : vector<64x512xf32>
    %cst_80 = arith.constant 1.000000e+00 : f32
    %236 = vector.broadcast %cst_80 : f32 to vector<64x512xf32>
    %237 = arith.divf %236, %235 : vector<64x512xf32>
    %cst_81 = arith.constant 1.06140542 : f32
    %238 = vector.broadcast %cst_81 : f32 to vector<64x512xf32>
    %239 = arith.mulf %238, %237 : vector<64x512xf32>
    %cst_82 = arith.constant -1.45315206 : f32
    %240 = vector.broadcast %cst_82 : f32 to vector<64x512xf32>
    %241 = arith.addf %239, %240 : vector<64x512xf32>
    %242 = arith.mulf %241, %237 : vector<64x512xf32>
    %cst_83 = arith.constant 1.42141378 : f32
    %243 = vector.broadcast %cst_83 : f32 to vector<64x512xf32>
    %244 = arith.addf %242, %243 : vector<64x512xf32>
    %245 = arith.mulf %244, %237 : vector<64x512xf32>
    %cst_84 = arith.constant -0.284496725 : f32
    %246 = vector.broadcast %cst_84 : f32 to vector<64x512xf32>
    %247 = arith.addf %245, %246 : vector<64x512xf32>
    %248 = arith.mulf %247, %237 : vector<64x512xf32>
    %cst_85 = arith.constant 0.254829586 : f32
    %249 = vector.broadcast %cst_85 : f32 to vector<64x512xf32>
    %250 = arith.addf %248, %249 : vector<64x512xf32>
    %251 = arith.mulf %250, %237 : vector<64x512xf32>
    %cst_86 = arith.constant 0.000000e+00 : f32
    %252 = vector.broadcast %cst_86 : f32 to vector<64x512xf32>
    %253 = arith.subf %252, %231 : vector<64x512xf32>
    %254 = arith.mulf %253, %231 : vector<64x512xf32>
    %255 = math.exp %254 : vector<64x512xf32>
    %256 = arith.mulf %251, %255 : vector<64x512xf32>
    %cst_87 = arith.constant 1.000000e+00 : f32
    %257 = vector.broadcast %cst_87 : f32 to vector<64x512xf32>
    %258 = arith.subf %257, %256 : vector<64x512xf32>
    %259 = arith.mulf %230, %258 : vector<64x512xf32>
    %cst_88 = arith.constant 1.000000e+00 : f32
    %260 = vector.broadcast %cst_88 : f32 to vector<64x512xf32>
    %261 = arith.addf %260, %259 : vector<64x512xf32>
    %262 = arith.mulf %223, %261 : vector<64x512xf32>
    %cst_89 = arith.constant dense<0.000000e+00> : vector<64xf32>
    %263 = vector.multi_reduction <add>, %262, %cst_89 [1] : vector<64x512xf32> to vector<64xf32>
    %264 = vector.shape_cast %263 : vector<64xf32> to vector<64x1xf32>
    %cst_90 = arith.constant 5.120000e+02 : f32
    %265 = vector.broadcast %cst_90 : f32 to vector<64x1xf32>
    %266 = arith.divf %264, %265 : vector<64x1xf32>
    %267 = vector.broadcast %266 : vector<64x1xf32> to vector<64x512xf32>
    %268 = arith.subf %262, %267 : vector<64x512xf32>
    %269 = arith.mulf %268, %268 : vector<64x512xf32>
    %cst_91 = arith.constant dense<0.000000e+00> : vector<64xf32>
    %270 = vector.multi_reduction <add>, %269, %cst_91 [1] : vector<64x512xf32> to vector<64xf32>
    %271 = vector.shape_cast %270 : vector<64xf32> to vector<64x1xf32>
    %cst_92 = arith.constant 5.120000e+02 : f32
    %272 = vector.broadcast %cst_92 : f32 to vector<64x1xf32>
    %273 = arith.divf %271, %272 : vector<64x1xf32>
    %cst_93 = arith.constant 9.99999974E-6 : f32
    %274 = vector.broadcast %cst_93 : f32 to vector<64x1xf32>
    %275 = arith.addf %273, %274 : vector<64x1xf32>
    %276 = math.rsqrt %275 : vector<64x1xf32>
    %277 = vector.broadcast %276 : vector<64x1xf32> to vector<64x512xf32>
    %278 = arith.mulf %268, %277 : vector<64x512xf32>
    %279 = vector.broadcast %6 : vector<1x512xf32> to vector<64x512xf32>
    %280 = arith.mulf %278, %279 : vector<64x512xf32>
    %281 = vector.broadcast %7 : vector<1x512xf32> to vector<64x512xf32>
    %282 = arith.addf %280, %281 : vector<64x512xf32>
    %283 = arith.truncf %282 : vector<64x512xf32> to vector<64x512xbf16>
    %c0_94 = arith.constant 0 : index
    %c0_95 = arith.constant 0 : index
    %284 = vector.load %arg10[%c0_94, %c0_95] : memref<512x128xbf16, #tpu.memory_space<vmem>>, vector<512x128xbf16>
    %cst_96 = arith.constant dense<0.000000e+00> : vector<64x128xf32>
    %285 = tpu.matmul %283, %284, %cst_96 {dimension_numbers = #tpu.dot_dimension_numbers<[1], [0], [0], [1], [0, 0, 1, 1], [], []>} : vector<64x512xbf16>, vector<512x128xbf16>, vector<64x128xf32> -> vector<64x128xf32>
    %c0_97 = arith.constant 0 : index
    %c0_98 = arith.constant 0 : index
    %286 = vector.load %arg11[%c0_97, %c0_98] : memref<1x128xf32, #tpu.memory_space<vmem>>, vector<1x128xf32>
    %287 = vector.broadcast %286 : vector<1x128xf32> to vector<64x128xf32>
    %288 = arith.addf %285, %287 : vector<64x128xf32>
    %289 = arith.addf %215, %288 : vector<64x128xf32>
    %290 = vector.shape_cast %289 : vector<64x128xf32> to vector<4x16x128xf32>
    %c0_99 = arith.constant 0 : index
    %c0_100 = arith.constant 0 : index
    %c0_101 = arith.constant 0 : index
    %291 = vector.load %arg14[%c0_99, %c0_100, %c0_101] : memref<4x16x128xf32, #tpu.memory_space<vmem>>, vector<4x16x128xf32>
    tpu.vector_store %arg14[%c0_99, %c0_100, %c0_101], %290 {strides = array<i32>} : memref<4x16x128xf32, #tpu.memory_space<vmem>>, vector<4x16x128xf32>,
    return
  }
  func.func @transform_0(%arg0: i32) -> (i32, i32, i32) {
    %c0_i32 = arith.constant 0 : i32
    %c0_i32_0 = arith.constant 0 : i32
    %c0_i32_1 = arith.constant 0 : i32
    return %arg0, %c0_i32, %c0_i32_0 : i32, i32, i32
  }
  func.func @transform_1(%arg0: i32) -> (i32, i32, i32) {
    %c0_i32 = arith.constant 0 : i32
    %c0_i32_0 = arith.constant 0 : i32
    %c0_i32_1 = arith.constant 0 : i32
    return %arg0, %c0_i32, %c0_i32_0 : i32, i32, i32
  }
  func.func @transform_2(%arg0: i32) -> (i32, i32) {
    %c0_i32 = arith.constant 0 : i32
    %c0_i32_0 = arith.constant 0 : i32
    %c0_i32_1 = arith.constant 0 : i32
    return %c0_i32, %c0_i32_0 : i32, i32
  }
  func.func @transform_3(%arg0: i32) -> (i32, i32) {
    %c0_i32 = arith.constant 0 : i32
    %c0_i32_0 = arith.constant 0 : i32
    %c0_i32_1 = arith.constant 0 : i32
    return %c0_i32, %c0_i32_0 : i32, i32
  }
  func.func @transform_4(%arg0: i32) -> (i32, i32) {
    %c0_i32 = arith.constant 0 : i32
    %c0_i32_0 = arith.constant 0 : i32
    %c0_i32_1 = arith.constant 0 : i32
    return %c0_i32, %c0_i32_0 : i32, i32
  }
  func.func @transform_5(%arg0: i32) -> (i32, i32) {
    %c0_i32 = arith.constant 0 : i32
    %c0_i32_0 = arith.constant 0 : i32
    %c0_i32_1 = arith.constant 0 : i32
    return %c0_i32, %c0_i32_0 : i32, i32
  }
  func.func @transform_6(%arg0: i32) -> (i32, i32) {
    %c0_i32 = arith.constant 0 : i32
    %c0_i32_0 = arith.constant 0 : i32
    %c0_i32_1 = arith.constant 0 : i32
    return %c0_i32, %c0_i32_0 : i32, i32
  }
  func.func @transform_7(%arg0: i32) -> (i32, i32) {
    %c0_i32 = arith.constant 0 : i32
    %c0_i32_0 = arith.constant 0 : i32
    %c0_i32_1 = arith.constant 0 : i32
    return %c0_i32, %c0_i32_0 : i32, i32
  }
  func.func @transform_8(%arg0: i32) -> (i32, i32) {
    %c0_i32 = arith.constant 0 : i32
    %c0_i32_0 = arith.constant 0 : i32
    %c0_i32_1 = arith.constant 0 : i32
    return %c0_i32, %c0_i32_0 : i32, i32
  }
  func.func @transform_9(%arg0: i32) -> (i32, i32) {
    %c0_i32 = arith.constant 0 : i32
    %c0_i32_0 = arith.constant 0 : i32
    %c0_i32_1 = arith.constant 0 : i32
    return %c0_i32, %c0_i32_0 : i32, i32
  }
  func.func @transform_10(%arg0: i32) -> (i32, i32) {
    %c0_i32 = arith.constant 0 : i32
    %c0_i32_0 = arith.constant 0 : i32
    %c0_i32_1 = arith.constant 0 : i32
    return %c0_i32, %c0_i32_0 : i32, i32
  }
  func.func @transform_11(%arg0: i32) -> (i32, i32) {
    %c0_i32 = arith.constant 0 : i32
    %c0_i32_0 = arith.constant 0 : i32
    %c0_i32_1 = arith.constant 0 : i32
    return %c0_i32, %c0_i32_0 : i32, i32
  }
  func.func @transform_12(%arg0: i32) -> (i32, i32) {
    %c0_i32 = arith.constant 0 : i32
    %c0_i32_0 = arith.constant 0 : i32
    %c0_i32_1 = arith.constant 0 : i32
    return %c0_i32, %c0_i32_0 : i32, i32
  }
  func.func @transform_13(%arg0: i32) -> (i32, i32, i32) {
    %c0_i32 = arith.constant 0 : i32
    %c0_i32_0 = arith.constant 0 : i32
    %c0_i32_1 = arith.constant 0 : i32
    return %arg0, %c0_i32, %c0_i32_0 : i32, i32, i32
  }
}

</mosaic_0001>

<llo_original>
// kernel: tpu_custom_call.1
$region0: #{tpu_custom_call.1}
  #allocation0 [shape = 'u32[]', space=smem, size = 0x4, offset = 0x4, fixed_abs, tag = 'smem constant byte address 0x4 - core index']
  #allocation1 [shape = 'u32[144,128]{1,0:T(1,128)}', space=vmem, size = 0x12000, scoped, tag = 'internal scratch']
  %s0 = inlined_call_operand.hbm [shape: f32[4,16,128], index: 0, kind: input, shape index: {}]
  %s1 = inlined_call_operand.hbm [shape: f32[4,1,16], index: 1, kind: input, shape index: {}]
  %s2 = inlined_call_operand.hbm [shape: f32[16,16], index: 2, kind: input, shape index: {}]
  %s3 = inlined_call_operand.hbm [shape: bf16[128,384], index: 3, kind: input, shape index: {}]
  %s4 = inlined_call_operand.hbm [shape: f32[1,384], index: 4, kind: input, shape index: {}]
  %s5 = inlined_call_operand.hbm [shape: bf16[128,128], index: 5, kind: input, shape index: {}]
  %s6 = inlined_call_operand.hbm [shape: f32[1,128], index: 6, kind: input, shape index: {}]
  %s7 = inlined_call_operand.hbm [shape: bf16[128,512], index: 7, kind: input, shape index: {}]
  %s8 = inlined_call_operand.vmem [shape: f32[1,512], index: 8, kind: input, shape index: {}]
  %s9 = inlined_call_operand.hbm [shape: bf16[512,128], index: 9, kind: input, shape index: {}]
  %s10 = inlined_call_operand.vmem [shape: f32[1,128], index: 10, kind: input, shape index: {}]
  %s11 = inlined_call_operand.vmem [shape: f32[4,128], index: 11, kind: input, shape index: {}]
  %s12 = inlined_call_operand.vmem [shape: f32[2,512], index: 12, kind: input, shape index: {}]
  %s13 = inlined_call_operand.hbm [shape: f32[4,16,128], index: 13, kind: output, shape index: {}]
  %s14 = sld [smem:[#allocation0]]
  $region98: #{tpu_custom_call.1} parent=0
    _
  %s16 = ssub.s32 1, %s14
  %s17 = scalar_select 0, %s16, %s14
  $region1: #{tpu_custom_call.1} parent=0
    #allocation2 [shape = 'u8[32768]{0}', space=vmem, size = 0x8000, scoped, tag = 'input window, operand 0, single buffered']
    #allocation3 [shape = 's32[1]{0}', space=sflag, size = 0x4, scoped, tag = 'scoped memory for tpu_custom_call.1']
    #allocation4 [shape = 's32[1]{0}', space=sflag, size = 0x4, scoped, tag = 'scoped memory for tpu_custom_call.1']
    #allocation5 [shape = 'u8[2048]{0}', space=vmem, size = 0x800, scoped, tag = 'input window, operand 1, single buffered']
    #allocation6 [shape = 's32[1]{0}', space=sflag, size = 0x4, scoped, tag = 'scoped memory for tpu_custom_call.1']
    #allocation7 [shape = 'u8[8192]{0}', space=vmem, size = 0x2000, scoped, tag = 'input window, operand 2, single buffered']
    #allocation8 [shape = 'u8[98304]{0}', space=vmem, size = 0x18000, scoped, tag = 'input window, operand 3, single buffered']
    #allocation9 [shape = 's32[1]{0}', space=sflag, size = 0x4, scoped, tag = 'scoped memory for tpu_custom_call.1']
    #allocation10 [shape = 'u8[1536]{0}', space=vmem, size = 0x800, scoped, tag = 'input window, operand 4, single buffered']
    #allocation11 [shape = 'u8[32768]{0}', space=vmem, size = 0x8000, scoped, tag = 'input window, operand 5, single buffered']
    #allocation12 [shape = 's32[1]{0}', space=sflag, size = 0x4, scoped, tag = 'scoped memory for tpu_custom_call.1']
    #allocation13 [shape = 'u8[512]{0}', space=vmem, size = 0x400, scoped, tag = 'input window, operand 6, single buffered']
    #allocation14 [shape = 'u8[131072]{0}', space=vmem, size = 0x20000, scoped, tag = 'input window, operand 7, single buffered']
    #allocation15 [shape = 's32[1]{0}', space=sflag, size = 0x4, scoped, tag = 'scoped memory for tpu_custom_call.1']
    #allocation16 [shape = 'u8[131072]{0}', space=vmem, size = 0x20000, scoped, tag = 'input window, operand 9, single buffered']
    #allocation17 [shape = 'u8[32768]{0}', space=vmem, size = 0x8000, scoped, tag = 'output window, operand 0, single buffered']
    %18 = vsyncpa [#allocation3], 0
    %19 = vsyncpa [#allocation6], 0
    %20 = vsyncpa [#allocation9], 0
    %21 = vsyncpa [#allocation12], 0
    %22 = vsyncpa [#allocation15], 0
    %23 = vsyncpa [#allocation4], 0
    // Predicated region
    $region2: #{tpu_custom_call.1} parent=1 // pred_check
      _
    $region3: #{tpu_custom_call.1} parent=1 // pred_check_branch
      %25 = sbr.rel (0) target = $region5
    $region4: #{tpu_custom_call.1} parent=1 // pred_region
      %s27 = ssub.s32 1024, 1024
      %28 = vsyncadd [#allocation3], %s27
      %s29 = sshll.u32 [#allocation2], 4
      %s30 = int_to_ptr.vmem [resolvable:$true] %s29
      %35 = dma.hbm_to_vmem [thread:$0]  %s0, 1024, %s30, [#allocation3], 128, 128, 8
    $region5: #{tpu_custom_call.1} parent=1 // pred_fallthru
      _
    // Predicated region
    $region6: #{tpu_custom_call.1} parent=1 // pred_check
      _
    $region7: #{tpu_custom_call.1} parent=1 // pred_check_branch
      %37 = sbr.rel (0) target = $region9
    $region8: #{tpu_custom_call.1} parent=1 // pred_region
      %s39 = ssub.s32 64, 64
      %40 = vsyncadd [#allocation6], %s39
      %s41 = sshll.u32 [#allocation5], 4
      %s42 = int_to_ptr.vmem [resolvable:$true] %s41
      %47 = dma.hbm_to_vmem [thread:$0]  %s1, 64, %s42, [#allocation6], 16, 16, 1
    $region9: #{tpu_custom_call.1} parent=1 // pred_fallthru
      _
    // Predicated region
    $region10: #{tpu_custom_call.1} parent=1 // pred_check
      _
    $region11: #{tpu_custom_call.1} parent=1 // pred_check_branch
      %49 = sbr.rel (0) target = $region13
    $region12: #{tpu_custom_call.1} parent=1 // pred_region
      %s51 = ssub.s32 256, 256
      %52 = vsyncadd [#allocation6], %s51
      %s53 = sshll.u32 [#allocation7], 4
      %s54 = int_to_ptr.vmem [resolvable:$true] %s53
      %59 = dma.hbm_to_vmem [thread:$0]  %s2, 256, %s54, [#allocation6], 128, 128, 8
    $region13: #{tpu_custom_call.1} parent=1 // pred_fallthru
      _
    // Predicated region
    $region14: #{tpu_custom_call.1} parent=1 // pred_check
      _
    $region15: #{tpu_custom_call.1} parent=1 // pred_check_branch
      %61 = sbr.rel (0) target = $region17
    $region16: #{tpu_custom_call.1} parent=1 // pred_region
      %s63 = ssub.s32 3072, 3072
      %64 = vsyncadd [#allocation9], %s63
      %s65 = sshll.u32 [#allocation8], 4
      %s66 = int_to_ptr.vmem [resolvable:$true] %s65
      %71 = dma.hbm_to_vmem [thread:$0]  %s3, 3072, %s66, [#allocation9], 192, 192, 12
    $region17: #{tpu_custom_call.1} parent=1 // pred_fallthru
      _
    // Predicated region
    $region18: #{tpu_custom_call.1} parent=1 // pred_check
      _
    $region19: #{tpu_custom_call.1} parent=1 // pred_check_branch
      %73 = sbr.rel (0) target = $region21
    $region20: #{tpu_custom_call.1} parent=1 // pred_region
      %s75 = ssub.s32 48, 48
      %76 = vsyncadd [#allocation9], %s75
      %s78 = sshll.u32 [#allocation10], 4
      %s79 = int_to_ptr.vmem [resolvable:$true] %s78
      %81 = dma.hbm_to_vmem [thread:$0]  %s4, 48, %s79, [#allocation9]
    $region21: #{tpu_custom_call.1} parent=1 // pred_fallthru
      _
    // Predicated region
    $region22: #{tpu_custom_call.1} parent=1 // pred_check
      _
    $region23: #{tpu_custom_call.1} parent=1 // pred_check_branch
      %83 = sbr.rel (0) target = $region25
    $region24: #{tpu_custom_call.1} parent=1 // pred_region
      %s85 = ssub.s32 1024, 1024
      %86 = vsyncadd [#allocation12], %s85
      %s87 = sshll.u32 [#allocation11], 4
      %s88 = int_to_ptr.vmem [resolvable:$true] %s87
      %93 = dma.hbm_to_vmem [thread:$0]  %s5, 1024, %s88, [#allocation12], 64, 64, 4
    $region25: #{tpu_custom_call.1} parent=1 // pred_fallthru
      _
    // Predicated region
    $region26: #{tpu_custom_call.1} parent=1 // pred_check
      _
    $region27: #{tpu_custom_call.1} parent=1 // pred_check_branch
      %95 = sbr.rel (0) target = $region29
    $region28: #{tpu_custom_call.1} parent=1 // pred_region
      %s97 = ssub.s32 16, 16
      %98 = vsyncadd [#allocation12], %s97
      %s100 = sshll.u32 [#allocation13], 4
      %s101 = int_to_ptr.vmem [resolvable:$true] %s100
      %103 = dma.hbm_to_vmem [thread:$0]  %s6, 16, %s101, [#allocation12]
    $region29: #{tpu_custom_call.1} parent=1 // pred_fallthru
      _
    // Predicated region
    $region30: #{tpu_custom_call.1} parent=1 // pred_check
      _
    $region31: #{tpu_custom_call.1} parent=1 // pred_check_branch
      %105 = sbr.rel (0) target = $region33
    $region32: #{tpu_custom_call.1} parent=1 // pred_region
      %s107 = ssub.s32 4096, 4096
      %108 = vsyncadd [#allocation15], %s107
      %s109 = sshll.u32 [#allocation14], 4
      %s110 = int_to_ptr.vmem [resolvable:$true] %s109
      %115 = dma.hbm_to_vmem [thread:$0]  %s7, 4096, %s110, [#allocation15], 256, 256, 16
    $region33: #{tpu_custom_call.1} parent=1 // pred_fallthru
      _
    // Predicated region
    $region34: #{tpu_custom_call.1} parent=1 // pred_check
      _
    $region35: #{tpu_custom_call.1} parent=1 // pred_check_branch
      %117 = sbr.rel (0) target = $region37
    $region36: #{tpu_custom_call.1} parent=1 // pred_region
      _
    $region37: #{tpu_custom_call.1} parent=1 // pred_fallthru
      _
    // Predicated region
    $region38: #{tpu_custom_call.1} parent=1 // pred_check
      _
    $region39: #{tpu_custom_call.1} parent=1 // pred_check_branch
      %119 = sbr.rel (0) target = $region41
    $region40: #{tpu_custom_call.1} parent=1 // pred_region
      %s121 = ssub.s32 4096, 4096
      %122 = vsyncadd [#allocation15], %s121
      %s123 = sshll.u32 [#allocation16], 4
      %s124 = int_to_ptr.vmem [resolvable:$true] %s123
      %129 = dma.hbm_to_vmem [thread:$0]  %s9, 4096, %s124, [#allocation15], 64, 64, 4
    $region41: #{tpu_custom_call.1} parent=1 // pred_fallthru
      _
    // Predicated region
    $region42: #{tpu_custom_call.1} parent=1 // pred_check
      _
    $region43: #{tpu_custom_call.1} parent=1 // pred_check_branch
      %131 = sbr.rel (0) target = $region45
    $region44: #{tpu_custom_call.1} parent=1 // pred_region
      _
    $region45: #{tpu_custom_call.1} parent=1 // pred_fallthru
      _
    // Predicated region
    $region46: #{tpu_custom_call.1} parent=1 // pred_check
      _
    $region47: #{tpu_custom_call.1} parent=1 // pred_check_branch
      %133 = sbr.rel (0) target = $region49
    $region48: #{tpu_custom_call.1} parent=1 // pred_region
      _
    $region49: #{tpu_custom_call.1} parent=1 // pred_fallthru
      _
    // Predicated region
    $region50: #{tpu_custom_call.1} parent=1 // pred_check
      _
    $region51: #{tpu_custom_call.1} parent=1 // pred_check_branch
      %135 = sbr.rel (0) target = $region53
    $region52: #{tpu_custom_call.1} parent=1 // pred_region
      _
    $region53: #{tpu_custom_call.1} parent=1 // pred_fallthru
      _
    // Predicated region
    $region54: #{tpu_custom_call.1} parent=1 // pred_check
      _
    $region55: #{tpu_custom_call.1} parent=1 // pred_check_branch
      %137 = sbr.rel (0) target = $region57
    $region56: #{tpu_custom_call.1} parent=1 // pred_region
      %138 = dma.done [#allocation3], 1024
    $region57: #{tpu_custom_call.1} parent=1 // pred_fallthru
      _
    // Predicated region
    $region58: #{tpu_custom_call.1} parent=1 // pred_check
      _
    $region59: #{tpu_custom_call.1} parent=1 // pred_check_branch
      %140 = sbr.rel (0) target = $region61
    $region60: #{tpu_custom_call.1} parent=1 // pred_region
      %141 = dma.done [#allocation6], 64
    $region61: #{tpu_custom_call.1} parent=1 // pred_fallthru
      _
    // Predicated region
    $region62: #{tpu_custom_call.1} parent=1 // pred_check
      _
    $region63: #{tpu_custom_call.1} parent=1 // pred_check_branch
      %143 = sbr.rel (0) target = $region65
    $region64: #{tpu_custom_call.1} parent=1 // pred_region
      %144 = dma.done [#allocation6], 256
    $region65: #{tpu_custom_call.1} parent=1 // pred_fallthru
      _
    // Predicated region
    $region66: #{tpu_custom_call.1} parent=1 // pred_check
      _
    $region67: #{tpu_custom_call.1} parent=1 // pred_check_branch
      %146 = sbr.rel (0) target = $region69
    $region68: #{tpu_custom_call.1} parent=1 // pred_region
      %147 = dma.done [#allocation9], 3072
    $region69: #{tpu_custom_call.1} parent=1 // pred_fallthru
      _
    // Predicated region
    $region70: #{tpu_custom_call.1} parent=1 // pred_check
      _
    $region71: #{tpu_custom_call.1} parent=1 // pred_check_branch
      %149 = sbr.rel (0) target = $region73
    $region72: #{tpu_custom_call.1} parent=1 // pred_region
      %150 = dma.done [#allocation9], 48
    $region73: #{tpu_custom_call.1} parent=1 // pred_fallthru
      _
    // Predicated region
    $region74: #{tpu_custom_call.1} parent=1 // pred_check
      _
    $region75: #{tpu_custom_call.1} parent=1 // pred_check_branch
      %152 = sbr.rel (0) target = $region77
    $region76: #{tpu_custom_call.1} parent=1 // pred_region
      %153 = dma.done [#allocation12], 1024
    $region77: #{tpu_custom_call.1} parent=1 // pred_fallthru
      _
    // Predicated region
    $region78: #{tpu_custom_call.1} parent=1 // pred_check
      _
    $region79: #{tpu_custom_call.1} parent=1 // pred_check_branch
      %155 = sbr.rel (0) target = $region81
    $region80: #{tpu_custom_call.1} parent=1 // pred_region
      %156 = dma.done [#allocation12], 16
    $region81: #{tpu_custom_call.1} parent=1 // pred_fallthru
      _
    // Predicated region
    $region82: #{tpu_custom_call.1} parent=1 // pred_check
      _
    $region83: #{tpu_custom_call.1} parent=1 // pred_check_branch
      %158 = sbr.rel (0) target = $region85
    $region84: #{tpu_custom_call.1} parent=1 // pred_region
      %159 = dma.done [#allocation15], 4096
    $region85: #{tpu_custom_call.1} parent=1 // pred_fallthru
      _
    // Predicated region
    $region86: #{tpu_custom_call.1} parent=1 // pred_check
      _
    $region87: #{tpu_custom_call.1} parent=1 // pred_check_branch
      %161 = sbr.rel (0) target = $region89
    $region88: #{tpu_custom_call.1} parent=1 // pred_region
      %162 = dma.done [#allocation15], 4096
    $region89: #{tpu_custom_call.1} parent=1 // pred_fallthru
      _
    %v164 = vld [vmem:[#allocation2] sm:$0xff]
    %v165 = vld [vmem:[#allocation2 + $0x8] sm:$0xff]
    %v166 = vld [vmem:[#allocation2 + $0x10] sm:$0xff]
    %v167 = vld [vmem:[#allocation2 + $0x18] sm:$0xff]
    %v168 = vld [vmem:[#allocation2 + $0x20] sm:$0xff]
    %v169 = vld [vmem:[#allocation2 + $0x28] sm:$0xff]
    %v170 = vld [vmem:[#allocation2 + $0x30] sm:$0xff]
    %v171 = vld [vmem:[#allocation2 + $0x38] sm:$0xff]
    %v172 = vld [vmem:[%s11] sm:$0x1]
    %v173 = vld [vmem:[%s11 + $0x1] sm:$0x1]
    %v174 = vld [vmem:[%s11 + $0x2] sm:$0x1]
    %v175 = vld [vmem:[%s11 + $0x3] sm:$0x1]
    %v176 = vld [vmem:[%s12] ss:$2 sm:$0xf]
    %s177 = scalar_lea.vmem %s12, 1
    %v178 = vld [vmem:[%s177] ss:$2 sm:$0xf]
    %179 = vadd.xlane.f32.xlu0 %v164
    %v180 = vpop.xlane.xlu0 %179
    %181 = vadd.xlane.f32.xlu0 %v165
    %v182 = vpop.xlane.xlu0 %181
    %183 = vadd.xlane.f32.xlu0 %v166
    %v184 = vpop.xlane.xlu0 %183
    %185 = vadd.xlane.f32.xlu0 %v167
    %v186 = vpop.xlane.xlu0 %185
    %187 = vadd.xlane.f32.xlu0 %v168
    %v188 = vpop.xlane.xlu0 %187
    %189 = vadd.xlane.f32.xlu0 %v169
    %v190 = vpop.xlane.xlu0 %189
    %191 = vadd.xlane.f32.xlu0 %v170
    %v192 = vpop.xlane.xlu0 %191
    %193 = vadd.xlane.f32.xlu0 %v171
    %v194 = vpop.xlane.xlu0 %193
    %v195 = vrcp.pop 128.0
    %v196 = vmul.f32 %v180, %v195
    %v197 = vmul.f32 %v182, %v195
    %v198 = vmul.f32 %v184, %v195
    %v199 = vmul.f32 %v186, %v195
    %v200 = vmul.f32 %v188, %v195
    %v201 = vmul.f32 %v190, %v195
    %v202 = vmul.f32 %v192, %v195
    %v203 = vmul.f32 %v194, %v195
    %v204 = vsub.f32 %v164, %v196
    %v205 = vsub.f32 %v165, %v197
    %v206 = vsub.f32 %v166, %v198
    %v207 = vsub.f32 %v167, %v199
    %v208 = vsub.f32 %v168, %v200
    %v209 = vsub.f32 %v169, %v201
    %v210 = vsub.f32 %v170, %v202
    %v211 = vsub.f32 %v171, %v203
    %v212 = vmul.f32 %v204, %v204
    %v213 = vmul.f32 %v205, %v205
    %v214 = vmul.f32 %v206, %v206
    %v215 = vmul.f32 %v207, %v207
    %v216 = vmul.f32 %v208, %v208
    %v217 = vmul.f32 %v209, %v209
    %v218 = vmul.f32 %v210, %v210
    %v219 = vmul.f32 %v211, %v211
    %220 = vadd.xlane.f32.xlu0 %v212
    %v221 = vpop.xlane.xlu0 %220
    %222 = vadd.xlane.f32.xlu0 %v213
    %v223 = vpop.xlane.xlu0 %222
    %224 = vadd.xlane.f32.xlu0 %v214
    %v225 = vpop.xlane.xlu0 %224
    %226 = vadd.xlane.f32.xlu0 %v215
    %v227 = vpop.xlane.xlu0 %226
    %228 = vadd.xlane.f32.xlu0 %v216
    %v229 = vpop.xlane.xlu0 %228
    %230 = vadd.xlane.f32.xlu0 %v217
    %v231 = vpop.xlane.xlu0 %230
    %232 = vadd.xlane.f32.xlu0 %v218
    %v233 = vpop.xlane.xlu0 %232
    %234 = vadd.xlane.f32.xlu0 %v219
    %v235 = vpop.xlane.xlu0 %234
    %v236 = vmul.f32 %v221, %v195
    %v237 = vmul.f32 %v223, %v195
    %v238 = vmul.f32 %v225, %v195
    %v239 = vmul.f32 %v227, %v195
    %v240 = vmul.f32 %v229, %v195
    %v241 = vmul.f32 %v231, %v195
    %v242 = vmul.f32 %v233, %v195
    %v243 = vmul.f32 %v235, %v195
    %v244 = vadd.f32 %v236, 1e-05
    %v245 = vadd.f32 %v237, 1e-05
    %v246 = vadd.f32 %v238, 1e-05
    %v247 = vadd.f32 %v239, 1e-05
    %v248 = vadd.f32 %v240, 1e-05
    %v249 = vadd.f32 %v241, 1e-05
    %v250 = vadd.f32 %v242, 1e-05
    %v251 = vadd.f32 %v243, 1e-05
    %v252 = vrsqrt.pop %v244
    %v253 = vrsqrt.pop %v245
    %v254 = vrsqrt.pop %v246
    %v255 = vrsqrt.pop %v247
    %v256 = vrsqrt.pop %v248
    %v257 = vrsqrt.pop %v249
    %v258 = vrsqrt.pop %v250
    %v259 = vrsqrt.pop %v251
    %v260 = vmul.f32 %v204, %v252
    %v261 = vmul.f32 %v205, %v253
    %v262 = vmul.f32 %v206, %v254
    %v263 = vmul.f32 %v207, %v255
    %v264 = vmul.f32 %v208, %v256
    %v265 = vmul.f32 %v209, %v257
    %v266 = vmul.f32 %v210, %v258
    %v267 = vmul.f32 %v211, %v259
    %v268 = vlaneseq
    %v269 = vshrl.u32 %v268, 7
    %v270 = vsub.s32 0, %v269
    %v271 = vrot.slane %v172, %v270
    %v272 = vmul.f32 %v260, %v271
    %v273 = vmul.f32 %v261, %v271
    %v274 = vmul.f32 %v262, %v271
    %v275 = vmul.f32 %v263, %v271
    %v276 = vmul.f32 %v264, %v271
    %v277 = vmul.f32 %v265, %v271
    %v278 = vmul.f32 %v266, %v271
    %v279 = vmul.f32 %v267, %v271
    %v280 = vlaneseq
    %v281 = vshrl.u32 %v280, 7
    %v282 = vsub.s32 0, %v281
    %v283 = vrot.slane %v173, %v282
    %v284 = vadd.f32 %v272, %v283
    %v285 = vadd.f32 %v273, %v283
    %v286 = vadd.f32 %v274, %v283
    %v287 = vadd.f32 %v275, %v283
    %v288 = vadd.f32 %v276, %v283
    %v289 = vadd.f32 %v277, %v283
    %v290 = vadd.f32 %v278, %v283
    %v291 = vadd.f32 %v279, %v283
    %v292 = vpack.c.bf16 %v285, %v284
    %v293 = vpack.c.bf16 %v287, %v286
    %v294 = vpack.c.bf16 %v289, %v288
    %v295 = vpack.c.bf16 %v291, %v290
    %v296 = vld [vmem:[#allocation8] sm:$0xff]
    %v297 = vld [vmem:[#allocation8 + $0x8] sm:$0xf]
    %v298 = vld [vmem:[#allocation8 + $0xc] sm:$0xff]
    %v299 = vld [vmem:[#allocation8 + $0x14] sm:$0xf]
    %v300 = vld [vmem:[#allocation8 + $0x18] sm:$0xff]
    %v301 = vld [vmem:[#allocation8 + $0x20] sm:$0xf]
    %v302 = vld [vmem:[#allocation8 + $0x24] sm:$0xff]
    %v303 = vld [vmem:[#allocation8 + $0x2c] sm:$0xf]
    %v304 = vld [vmem:[#allocation8 + $0x30] sm:$0xff]
    %v305 = vld [vmem:[#allocation8 + $0x38] sm:$0xf]
    %v306 = vld [vmem:[#allocation8 + $0x3c] sm:$0xff]
    %v307 = vld [vmem:[#allocation8 + $0x44] sm:$0xf]
    %v308 = vld [vmem:[#allocation8 + $0x48] sm:$0xff]
    %v309 = vld [vmem:[#allocation8 + $0x50] sm:$0xf]
    %v310 = vld [vmem:[#allocation8 + $0x54] sm:$0xff]
    %v311 = vld [vmem:[#allocation8 + $0x5c] sm:$0xf]
    %v312 = vld [vmem:[#allocation8 + $0x60] sm:$0xff]
    %v313 = vld [vmem:[#allocation8 + $0x68] sm:$0xf]
    %v314 = vld [vmem:[#allocation8 + $0x6c] sm:$0xff]
    %v315 = vld [vmem:[#allocation8 + $0x74] sm:$0xf]
    %v316 = vld [vmem:[#allocation8 + $0x78] sm:$0xff]
    %v317 = vld [vmem:[#allocation8 + $0x80] sm:$0xf]
    %v318 = vld [vmem:[#allocation8 + $0x84] sm:$0xff]
    %v319 = vld [vmem:[#allocation8 + $0x8c] sm:$0xf]
    %v320 = vld [vmem:[#allocation8 + $0x90] sm:$0xff]
    %v321 = vld [vmem:[#allocation8 + $0x98] sm:$0xf]
    %v322 = vld [vmem:[#allocation8 + $0x9c] sm:$0xff]
    %v323 = vld [vmem:[#allocation8 + $0xa4] sm:$0xf]
    %v324 = vld [vmem:[#allocation8 + $0xa8] sm:$0xff]
    %v325 = vld [vmem:[#allocation8 + $0xb0] sm:$0xf]
    %v326 = vld [vmem:[#allocation8 + $0xb4] sm:$0xff]
    %v327 = vld [vmem:[#allocation8 + $0xbc] sm:$0xf]
    %v328 = vld [vmem:[#allocation10] sm:$0x7]
    %v330 = vlaneseq
    %v331 = vshrl.u32 %v330, 7
    %v332 = vsub.s32 0, %v331
    %v333 = vrot.slane %v328, %v332
    %v334 = vlaneseq
    %v335 = vshrl.u32 %v334, 7
    %v336 = vsub.s32 1, %v335
    %v337 = vrot.slane %v328, %v336
    %v338 = vlaneseq
    %v339 = vshrl.u32 %v338, 7
    %v340 = vsub.s32 2, %v339
    %v341 = vrot.slane %v328, %v340
    %v377 = vunpack.c.l.b16 %v296
    %v378 = vunpack.c.h.b16 %v296
    %v379 = vunpack.c.l.b16 %v297
    %v380 = vunpack.c.l.b16 %v298
    %v381 = vunpack.c.h.b16 %v298
    %v382 = vunpack.c.l.b16 %v299
    %v383 = vunpack.c.l.b16 %v300
    %v384 = vunpack.c.h.b16 %v300
    %v385 = vunpack.c.l.b16 %v301
    %v386 = vunpack.c.l.b16 %v302
    %v387 = vunpack.c.h.b16 %v302
    %v388 = vunpack.c.l.b16 %v303
    %v389 = vunpack.c.l.b16 %v304
    %v390 = vunpack.c.h.b16 %v304
    %v391 = vunpack.c.l.b16 %v305
    %v392 = vunpack.c.l.b16 %v306
    %v393 = vunpack.c.h.b16 %v306
    %v394 = vunpack.c.l.b16 %v307
    %v395 = vunpack.c.l.b16 %v308
    %v396 = vunpack.c.h.b16 %v308
    %v397 = vunpack.c.l.b16 %v309
    %v398 = vunpack.c.l.b16 %v310
    %v399 = vunpack.c.h.b16 %v310
    %v400 = vunpack.c.l.b16 %v311
    %v401 = vunpack.c.l.b16 %v312
    %v402 = vunpack.c.h.b16 %v312
    %v403 = vunpack.c.l.b16 %v313
    %v404 = vunpack.c.l.b16 %v314
    %v405 = vunpack.c.h.b16 %v314
    %v406 = vunpack.c.l.b16 %v315
    %v407 = vunpack.c.l.b16 %v316
    %v408 = vunpack.c.h.b16 %v316
    %v409 = vunpack.c.l.b16 %v317
    %v410 = vunpack.c.l.b16 %v318
    %v411 = vunpack.c.h.b16 %v318
    %v412 = vunpack.c.l.b16 %v319
    %v413 = vunpack.c.l.b16 %v320
    %v414 = vunpack.c.h.b16 %v320
    %v415 = vunpack.c.l.b16 %v321
    %v416 = vunpack.c.l.b16 %v322
    %v417 = vunpack.c.h.b16 %v322
    %v418 = vunpack.c.l.b16 %v323
    %v419 = vunpack.c.l.b16 %v324
    %v420 = vunpack.c.h.b16 %v324
    %v421 = vunpack.c.l.b16 %v325
    %v422 = vunpack.c.l.b16 %v326
    %v423 = vunpack.c.h.b16 %v326
    %v424 = vunpack.c.l.b16 %v327
    %v425 = vpack.c.b16 %v380, %v377
    %v426 = vpack.c.b16 %v381, %v378
    %v427 = vpack.c.b16 %v382, %v379
    %v428 = vpack.c.b16 %v386, %v383
    %v429 = vpack.c.b16 %v387, %v384
    %v430 = vpack.c.b16 %v388, %v385
    %v431 = vpack.c.b16 %v392, %v389
    %v432 = vpack.c.b16 %v393, %v390
    %v433 = vpack.c.b16 %v394, %v391
    %v434 = vpack.c.b16 %v398, %v395
    %v435 = vpack.c.b16 %v399, %v396
    %v436 = vpack.c.b16 %v400, %v397
    %v437 = vpack.c.b16 %v404, %v401
    %v438 = vpack.c.b16 %v405, %v402
    %v439 = vpack.c.b16 %v406, %v403
    %v440 = vpack.c.b16 %v410, %v407
    %v441 = vpack.c.b16 %v411, %v408
    %v442 = vpack.c.b16 %v412, %v409
    %v443 = vpack.c.b16 %v416, %v413
    %v444 = vpack.c.b16 %v417, %v414
    %v445 = vpack.c.b16 %v418, %v415
    %v446 = vpack.c.b16 %v422, %v419
    %v447 = vpack.c.b16 %v423, %v420
    %v448 = vpack.c.b16 %v424, %v421
    %473 = vmatprep.subr.bf16.mxu0 %v447
    %474 = vmatpush1.bf16.msra.mxu0 %v446
    %475 = vmatprep.subr.bf16.mxu0 %v444
    %476 = vmatpush1.bf16.msra.mxu0 %v443
    %477 = vmatprep.subr.bf16.mxu0 %v441
    %478 = vmatpush1.bf16.msra.mxu0 %v440
    %479 = vmatprep.subr.bf16.mxu0 %v438
    %480 = vmatpush1.bf16.msra.mxu0 %v437
    %481 = vmatprep.subr.bf16.mxu0 %v435
    %482 = vmatpush1.bf16.msra.mxu0 %v434
    %483 = vmatprep.subr.bf16.mxu0 %v432
    %484 = vmatpush1.bf16.msra.mxu0 %v431
    %485 = vmatprep.subr.bf16.mxu0 %v429
    %486 = vmatpush1.bf16.msra.mxu0 %v428
    %487 = vmatprep.subr.bf16.mxu0 %v426
    %488 = vmatpush1.bf16.msra.mxu0 %v425
    %489 = vmatprep.subr.bf16.mxu0 0
    %490 = vmatpush2.bf16.msra.mxu0 0
    %491 = vmatprep.subr.bf16.mxu0 0
    %492 = vmatpush2.bf16.msra.mxu0 0
    %493 = vmatprep.subr.bf16.mxu0 0
    %494 = vmatpush2.bf16.msra.mxu0 0
    %495 = vmatprep.subr.bf16.mxu0 0
    %496 = vmatpush2.bf16.msra.mxu0 0
    %497 = vmatprep.subr.bf16.mxu0 0
    %498 = vmatpush2.bf16.msra.mxu0 0
    %499 = vmatprep.subr.bf16.mxu0 0
    %500 = vmatpush2.bf16.msra.mxu0 0
    %501 = vmatprep.subr.bf16.mxu0 0
    %502 = vmatpush2.bf16.msra.mxu0 0
    %503 = vmatprep.subr.bf16.mxu0 0
    %504 = vmatpush2.bf16.msra.mxu0 0
    %505 = vmatprep.mubr.bf16.mxu0 0
    %506 = vmatmul.mubr.bf16.gmra.mxu0 %v292
    %v507 = vpop.f32.mrf.mxu0
    %v508 = vadd.f32 %v333, %v507
    %v509 = vpop.f32.mrf.mxu0
    %v510 = vadd.f32 %v337, %v509
    %v511 = vpop.f32.mrf.mxu0
    %v512 = vadd.f32 %v333, %v511
    %v513 = vpop.f32.mrf.mxu0
    %v514 = vadd.f32 %v337, %v513
    %515 = vmatprep.mubr.bf16.mxu0 0
    %516 = vmatmul.mubr.bf16.gmra.mxu0 %v293
    %v517 = vpop.f32.mrf.mxu0
    %v518 = vadd.f32 %v333, %v517
    %v519 = vpop.f32.mrf.mxu0
    %v520 = vadd.f32 %v337, %v519
    %v521 = vpop.f32.mrf.mxu0
    %v522 = vadd.f32 %v333, %v521
    %v523 = vpop.f32.mrf.mxu0
    %v524 = vadd.f32 %v337, %v523
    %525 = vmatprep.mubr.bf16.mxu0 0
    %526 = vmatmul.mubr.bf16.gmra.mxu0 %v294
    %v527 = vpop.f32.mrf.mxu0
    %v528 = vadd.f32 %v333, %v527
    %v529 = vpop.f32.mrf.mxu0
    %v530 = vadd.f32 %v337, %v529
    %v531 = vpop.f32.mrf.mxu0
    %v532 = vadd.f32 %v333, %v531
    %v533 = vpop.f32.mrf.mxu0
    %v534 = vadd.f32 %v337, %v533
    %535 = vmatprep.mubr.bf16.mxu0 0
    %536 = vmatmul.mubr.bf16.gmra.mxu0 %v295
    %v537 = vpop.f32.mrf.mxu0
    %v538 = vadd.f32 %v333, %v537
    %v539 = vpop.f32.mrf.mxu0
    %v540 = vadd.f32 %v337, %v539
    %v541 = vpop.f32.mrf.mxu0
    %v542 = vadd.f32 %v333, %v541
    %v543 = vpop.f32.mrf.mxu0
    %v544 = vadd.f32 %v337, %v543
    %545 = vdwg.mxu0
    %546 = vmatprep.subr.bf16.mxu0 0
    %547 = vmatpush1.bf16.msra.mxu0 %v448
    %548 = vmatprep.subr.bf16.mxu0 0
    %549 = vmatpush1.bf16.msra.mxu0 %v445
    %550 = vmatprep.subr.bf16.mxu0 0
    %551 = vmatpush1.bf16.msra.mxu0 %v442
    %552 = vmatprep.subr.bf16.mxu0 0
    %553 = vmatpush1.bf16.msra.mxu0 %v439
    %554 = vmatprep.subr.bf16.mxu0 0
    %555 = vmatpush1.bf16.msra.mxu0 %v436
    %556 = vmatprep.subr.bf16.mxu0 0
    %557 = vmatpush1.bf16.msra.mxu0 %v433
    %558 = vmatprep.subr.bf16.mxu0 0
    %559 = vmatpush1.bf16.msra.mxu0 %v430
    %560 = vmatprep.subr.bf16.mxu0 0
    %561 = vmatpush1.bf16.msra.mxu0 %v427
    %562 = vmatprep.subr.bf16.mxu0 0
    %563 = vmatpush2.bf16.msra.mxu0 0
    %564 = vmatprep.subr.bf16.mxu0 0
    %565 = vmatpush2.bf16.msra.mxu0 0
    %566 = vmatprep.subr.bf16.mxu0 0
    %567 = vmatpush2.bf16.msra.mxu0 0
    %568 = vmatprep.subr.bf16.mxu0 0
    %569 = vmatpush2.bf16.msra.mxu0 0
    %570 = vmatprep.subr.bf16.mxu0 0
    %571 = vmatpush2.bf16.msra.mxu0 0
    %572 = vmatprep.subr.bf16.mxu0 0
    %573 = vmatpush2.bf16.msra.mxu0 0
    %574 = vmatprep.subr.bf16.mxu0 0
    %575 = vmatpush2.bf16.msra.mxu0 0
    %576 = vmatprep.subr.bf16.mxu0 0
    %577 = vmatpush2.bf16.msra.mxu0 0
    %578 = vmatprep.mubr.bf16.mxu0 0
    %579 = vmatmul.mubr.bf16.gmra.mxu0 %v292
    %v580 = vpop.f32.mrf.mxu0
    %v581 = vadd.f32 %v341, %v580
    %v582 = vpop.f32.mrf.mxu0
    %v583 = vpop.f32.mrf.mxu0
    %v584 = vadd.f32 %v341, %v583
    %v585 = vpop.f32.mrf.mxu0
    %586 = vmatprep.mubr.bf16.mxu0 0
    %587 = vmatmul.mubr.bf16.gmra.mxu0 %v293
    %v588 = vpop.f32.mrf.mxu0
    %v589 = vadd.f32 %v341, %v588
    %v590 = vpop.f32.mrf.mxu0
    %v591 = vpop.f32.mrf.mxu0
    %v592 = vadd.f32 %v341, %v591
    %v593 = vpop.f32.mrf.mxu0
    %594 = vmatprep.mubr.bf16.mxu0 0
    %595 = vmatmul.mubr.bf16.gmra.mxu0 %v294
    %v596 = vpop.f32.mrf.mxu0
    %v597 = vadd.f32 %v341, %v596
    %v598 = vpop.f32.mrf.mxu0
    %v599 = vpop.f32.mrf.mxu0
    %v600 = vadd.f32 %v341, %v599
    %v601 = vpop.f32.mrf.mxu0
    %602 = vmatprep.mubr.bf16.mxu0 0
    %603 = vmatmul.mubr.bf16.gmra.mxu0 %v295
    %v604 = vpop.f32.mrf.mxu0
    %v605 = vadd.f32 %v341, %v604
    %v606 = vpop.f32.mrf.mxu0
    %v607 = vpop.f32.mrf.mxu0
    %v608 = vadd.f32 %v341, %v607
    %v609 = vpop.f32.mrf.mxu0
    %610 = vdwg.mxu0
    %v611 = vmul.f32 %v508, 0.25
    %v612 = vmul.f32 %v512, 0.25
    %v613 = vmul.f32 %v518, 0.25
    %v614 = vmul.f32 %v522, 0.25
    %v615 = vmul.f32 %v528, 0.25
    %v616 = vmul.f32 %v532, 0.25
    %v617 = vmul.f32 %v538, 0.25
    %v618 = vmul.f32 %v542, 0.25
    %v619 = vpack.c.bf16 %v612, %v611
    %v620 = vpack.c.bf16 %v614, %v613
    %v621 = vpack.c.bf16 %v616, %v615
    %v622 = vpack.c.bf16 %v618, %v617
    %v623 = vpack.c.bf16 %v514, %v510
    %v624 = vpack.c.bf16 %v524, %v520
    %v625 = vpack.c.bf16 %v534, %v530
    %v626 = vpack.c.bf16 %v544, %v540
    %v627 = vpack.c.bf16 %v584, %v581
    %v628 = vpack.c.bf16 %v592, %v589
    %v629 = vpack.c.bf16 %v600, %v597
    %v630 = vpack.c.bf16 %v608, %v605
    %v631 = vld [vmem:[#allocation7] sm:$0xff]
    %v632 = vld [vmem:[#allocation7 + $0x8] sm:$0xff]
    %v633 = vld [vmem:[#allocation5] sm:$0x1]
    %v634 = vld [vmem:[#allocation5 + $0x1] sm:$0x1]
    %v635 = vld [vmem:[#allocation5 + $0x2] sm:$0x1]
    %v636 = vld [vmem:[#allocation5 + $0x3] sm:$0x1]
    %v641 = vlaneseq
    %v642 = vshrl.u32 %v641, 7
    %v643 = vsub.s32 0, %v642
    %v644 = vrot.slane %v633, %v643
    %v645 = vlaneseq
    %v646 = vshrl.u32 %v645, 7
    %v647 = vsub.s32 0, %v646
    %v648 = vrot.slane %v634, %v647
    %v649 = vlaneseq
    %v650 = vshrl.u32 %v649, 7
    %v651 = vsub.s32 0, %v650
    %v652 = vrot.slane %v635, %v651
    %v653 = vlaneseq
    %v654 = vshrl.u32 %v653, 7
    %v655 = vsub.s32 0, %v654
    %v656 = vrot.slane %v636, %v655
    %v661 = vadd.f32 %v631, %v644
    %v662 = vadd.f32 %v632, %v644
    %v663 = vadd.f32 %v631, %v648
    %v664 = vadd.f32 %v632, %v648
    %v665 = vadd.f32 %v631, %v652
    %v666 = vadd.f32 %v632, %v652
    %v667 = vadd.f32 %v631, %v656
    %v668 = vadd.f32 %v632, %v656
    %vm669 = vcmask 130048
    %v671 = vsel %vm669, %v619, 0
    %v674 = vsel %vm669, %v623, 0
    %676 = vmatprep.subr.bf16.mxu0 0
    %677 = vmatpush1.bf16.xpose.msra.mxu0 0
    %678 = vmatprep.subr.bf16.mxu0 0
    %679 = vmatpush1.bf16.xpose.msra.mxu0 0
    %680 = vmatprep.subr.bf16.mxu0 0
    %681 = vmatpush1.bf16.xpose.msra.mxu0 0
    %682 = vmatprep.subr.bf16.mxu0 0
    %683 = vmatpush1.bf16.xpose.msra.mxu0 0
    %684 = vmatprep.subr.bf16.mxu0 0
    %685 = vmatpush1.bf16.xpose.msra.mxu0 0
    %686 = vmatprep.subr.bf16.mxu0 0
    %687 = vmatpush1.bf16.xpose.msra.mxu0 0
    %688 = vmatprep.subr.bf16.mxu0 0
    %689 = vmatpush1.bf16.xpose.msra.mxu0 0
    %690 = vmatprep.subr.bf16.mxu0 0
    %691 = vmatpush1.bf16.xpose.msra.mxu0 %v674
    %692 = vmatprep.subr.bf16.mxu0 0
    %693 = vmatpush2.bf16.xpose.msra.mxu0 0
    %694 = vmatprep.subr.bf16.mxu0 0
    %695 = vmatpush2.bf16.xpose.msra.mxu0 0
    %696 = vmatprep.subr.bf16.mxu0 0
    %697 = vmatpush2.bf16.xpose.msra.mxu0 0
    %698 = vmatprep.subr.bf16.mxu0 0
    %699 = vmatpush2.bf16.xpose.msra.mxu0 0
    %700 = vmatprep.subr.bf16.mxu0 0
    %701 = vmatpush2.bf16.xpose.msra.mxu0 0
    %702 = vmatprep.subr.bf16.mxu0 0
    %703 = vmatpush2.bf16.xpose.msra.mxu0 0
    %704 = vmatprep.subr.bf16.mxu0 0
    %705 = vmatpush2.bf16.xpose.msra.mxu0 0
    %706 = vmatprep.subr.bf16.mxu0 0
    %707 = vmatpush2.bf16.xpose.msra.mxu0 0
    %708 = vmatprep.mubr.bf16.mxu0 0
    %709 = vmatmul.mubr.bf16.gmra.mxu0 %v671
    %v710 = vpop.f32.mrf.mxu0
    %v711 = vadd.f32 %v661, %v710
    %v712 = vpop.f32.mrf.mxu0
    %v713 = vpop.f32.mrf.mxu0
    %v714 = vadd.f32 %v662, %v713
    %v715 = vpop.f32.mrf.mxu0
    %716 = vdwg.mxu0
    %v718 = vsel %vm669, %v620, 0
    %v721 = vsel %vm669, %v624, 0
    %723 = vmatprep.subr.bf16.mxu0 0
    %724 = vmatpush1.bf16.xpose.msra.mxu0 0
    %725 = vmatprep.subr.bf16.mxu0 0
    %726 = vmatpush1.bf16.xpose.msra.mxu0 0
    %727 = vmatprep.subr.bf16.mxu0 0
    %728 = vmatpush1.bf16.xpose.msra.mxu0 0
    %729 = vmatprep.subr.bf16.mxu0 0
    %730 = vmatpush1.bf16.xpose.msra.mxu0 0
    %731 = vmatprep.subr.bf16.mxu0 0
    %732 = vmatpush1.bf16.xpose.msra.mxu0 0
    %733 = vmatprep.subr.bf16.mxu0 0
    %734 = vmatpush1.bf16.xpose.msra.mxu0 0
    %735 = vmatprep.subr.bf16.mxu0 0
    %736 = vmatpush1.bf16.xpose.msra.mxu0 0
    %737 = vmatprep.subr.bf16.mxu0 0
    %738 = vmatpush1.bf16.xpose.msra.mxu0 %v721
    %739 = vmatprep.subr.bf16.mxu0 0
    %740 = vmatpush2.bf16.xpose.msra.mxu0 0
    %741 = vmatprep.subr.bf16.mxu0 0
    %742 = vmatpush2.bf16.xpose.msra.mxu0 0
    %743 = vmatprep.subr.bf16.mxu0 0
    %744 = vmatpush2.bf16.xpose.msra.mxu0 0
    %745 = vmatprep.subr.bf16.mxu0 0
    %746 = vmatpush2.bf16.xpose.msra.mxu0 0
    %747 = vmatprep.subr.bf16.mxu0 0
    %748 = vmatpush2.bf16.xpose.msra.mxu0 0
    %749 = vmatprep.subr.bf16.mxu0 0
    %750 = vmatpush2.bf16.xpose.msra.mxu0 0
    %751 = vmatprep.subr.bf16.mxu0 0
    %752 = vmatpush2.bf16.xpose.msra.mxu0 0
    %753 = vmatprep.subr.bf16.mxu0 0
    %754 = vmatpush2.bf16.xpose.msra.mxu0 0
    %755 = vmatprep.mubr.bf16.mxu0 0
    %756 = vmatmul.mubr.bf16.gmra.mxu0 %v718
    %v757 = vpop.f32.mrf.mxu0
    %v758 = vadd.f32 %v663, %v757
    %v759 = vpop.f32.mrf.mxu0
    %v760 = vpop.f32.mrf.mxu0
    %v761 = vadd.f32 %v664, %v760
    %v762 = vpop.f32.mrf.mxu0
    %763 = vdwg.mxu0
    %v765 = vsel %vm669, %v621, 0
    %v768 = vsel %vm669, %v625, 0
    %770 = vmatprep.subr.bf16.mxu0 0
    %771 = vmatpush1.bf16.xpose.msra.mxu0 0
    %772 = vmatprep.subr.bf16.mxu0 0
    %773 = vmatpush1.bf16.xpose.msra.mxu0 0
    %774 = vmatprep.subr.bf16.mxu0 0
    %775 = vmatpush1.bf16.xpose.msra.mxu0 0
    %776 = vmatprep.subr.bf16.mxu0 0
    %777 = vmatpush1.bf16.xpose.msra.mxu0 0
    %778 = vmatprep.subr.bf16.mxu0 0
    %779 = vmatpush1.bf16.xpose.msra.mxu0 0
    %780 = vmatprep.subr.bf16.mxu0 0
    %781 = vmatpush1.bf16.xpose.msra.mxu0 0
    %782 = vmatprep.subr.bf16.mxu0 0
    %783 = vmatpush1.bf16.xpose.msra.mxu0 0
    %784 = vmatprep.subr.bf16.mxu0 0
    %785 = vmatpush1.bf16.xpose.msra.mxu0 %v768
    %786 = vmatprep.subr.bf16.mxu0 0
    %787 = vmatpush2.bf16.xpose.msra.mxu0 0
    %788 = vmatprep.subr.bf16.mxu0 0
    %789 = vmatpush2.bf16.xpose.msra.mxu0 0
    %790 = vmatprep.subr.bf16.mxu0 0
    %791 = vmatpush2.bf16.xpose.msra.mxu0 0
    %792 = vmatprep.subr.bf16.mxu0 0
    %793 = vmatpush2.bf16.xpose.msra.mxu0 0
    %794 = vmatprep.subr.bf16.mxu0 0
    %795 = vmatpush2.bf16.xpose.msra.mxu0 0
    %796 = vmatprep.subr.bf16.mxu0 0
    %797 = vmatpush2.bf16.xpose.msra.mxu0 0
    %798 = vmatprep.subr.bf16.mxu0 0
    %799 = vmatpush2.bf16.xpose.msra.mxu0 0
    %800 = vmatprep.subr.bf16.mxu0 0
    %801 = vmatpush2.bf16.xpose.msra.mxu0 0
    %802 = vmatprep.mubr.bf16.mxu0 0
    %803 = vmatmul.mubr.bf16.gmra.mxu0 %v765
    %v804 = vpop.f32.mrf.mxu0
    %v805 = vadd.f32 %v665, %v804
    %v806 = vpop.f32.mrf.mxu0
    %v807 = vpop.f32.mrf.mxu0
    %v808 = vadd.f32 %v666, %v807
    %v809 = vpop.f32.mrf.mxu0
    %810 = vdwg.mxu0
    %v812 = vsel %vm669, %v622, 0
    %v815 = vsel %vm669, %v626, 0
    %817 = vmatprep.subr.bf16.mxu0 0
    %818 = vmatpush1.bf16.xpose.msra.mxu0 0
    %819 = vmatprep.subr.bf16.mxu0 0
    %820 = vmatpush1.bf16.xpose.msra.mxu0 0
    %821 = vmatprep.subr.bf16.mxu0 0
    %822 = vmatpush1.bf16.xpose.msra.mxu0 0
    %823 = vmatprep.subr.bf16.mxu0 0
    %824 = vmatpush1.bf16.xpose.msra.mxu0 0
    %825 = vmatprep.subr.bf16.mxu0 0
    %826 = vmatpush1.bf16.xpose.msra.mxu0 0
    %827 = vmatprep.subr.bf16.mxu0 0
    %828 = vmatpush1.bf16.xpose.msra.mxu0 0
    %829 = vmatprep.subr.bf16.mxu0 0
    %830 = vmatpush1.bf16.xpose.msra.mxu0 0
    %831 = vmatprep.subr.bf16.mxu0 0
    %832 = vmatpush1.bf16.xpose.msra.mxu0 %v815
    %833 = vmatprep.subr.bf16.mxu0 0
    %834 = vmatpush2.bf16.xpose.msra.mxu0 0
    %835 = vmatprep.subr.bf16.mxu0 0
    %836 = vmatpush2.bf16.xpose.msra.mxu0 0
    %837 = vmatprep.subr.bf16.mxu0 0
    %838 = vmatpush2.bf16.xpose.msra.mxu0 0
    %839 = vmatprep.subr.bf16.mxu0 0
    %840 = vmatpush2.bf16.xpose.msra.mxu0 0
    %841 = vmatprep.subr.bf16.mxu0 0
    %842 = vmatpush2.bf16.xpose.msra.mxu0 0
    %843 = vmatprep.subr.bf16.mxu0 0
    %844 = vmatpush2.bf16.xpose.msra.mxu0 0
    %845 = vmatprep.subr.bf16.mxu0 0
    %846 = vmatpush2.bf16.xpose.msra.mxu0 0
    %847 = vmatprep.subr.bf16.mxu0 0
    %848 = vmatpush2.bf16.xpose.msra.mxu0 0
    %849 = vmatprep.mubr.bf16.mxu0 0
    %850 = vmatmul.mubr.bf16.gmra.mxu0 %v812
    %v851 = vpop.f32.mrf.mxu0
    %v852 = vadd.f32 %v667, %v851
    %v853 = vpop.f32.mrf.mxu0
    %v854 = vpop.f32.mrf.mxu0
    %v855 = vadd.f32 %v668, %v854
    %v856 = vpop.f32.mrf.mxu0
    %857 = vdwg.mxu0
    %v858 = vsel %vm669, %v711, -inf
    %859 = vmax.xlane.f32.xlu0 %v858
    %v860 = vpop.xlane.xlu0 %859
    %v861 = vsel %vm669, %v714, -inf
    %862 = vmax.xlane.f32.xlu0 %v861
    %v863 = vpop.xlane.xlu0 %862
    %v864 = vsel %vm669, %v758, -inf
    %865 = vmax.xlane.f32.xlu0 %v864
    %v866 = vpop.xlane.xlu0 %865
    %v867 = vsel %vm669, %v761, -inf
    %868 = vmax.xlane.f32.xlu0 %v867
    %v869 = vpop.xlane.xlu0 %868
    %v870 = vsel %vm669, %v805, -inf
    %871 = vmax.xlane.f32.xlu0 %v870
    %v872 = vpop.xlane.xlu0 %871
    %v873 = vsel %vm669, %v808, -inf
    %874 = vmax.xlane.f32.xlu0 %v873
    %v875 = vpop.xlane.xlu0 %874
    %v876 = vsel %vm669, %v852, -inf
    %877 = vmax.xlane.f32.xlu0 %v876
    %v878 = vpop.xlane.xlu0 %877
    %v879 = vsel %vm669, %v855, -inf
    %880 = vmax.xlane.f32.xlu0 %v879
    %v881 = vpop.xlane.xlu0 %880
    %v882 = vsub.f32 %v711, %v860
    %v883 = vsub.f32 %v714, %v863
    %v884 = vsub.f32 %v758, %v866
    %v885 = vsub.f32 %v761, %v869
    %v886 = vsub.f32 %v805, %v872
    %v887 = vsub.f32 %v808, %v875
    %v888 = vsub.f32 %v852, %v878
    %v889 = vsub.f32 %v855, %v881
    %v890 = vmul.f32 %v882, 1.442695
    %v891 = vpow.pop %v890
    %v892 = vmul.f32 %v883, 1.442695
    %v893 = vpow.pop %v892
    %v894 = vmul.f32 %v884, 1.442695
    %v895 = vpow.pop %v894
    %v896 = vmul.f32 %v885, 1.442695
    %v897 = vpow.pop %v896
    %v898 = vmul.f32 %v886, 1.442695
    %v899 = vpow.pop %v898
    %v900 = vmul.f32 %v887, 1.442695
    %v901 = vpow.pop %v900
    %v902 = vmul.f32 %v888, 1.442695
    %v903 = vpow.pop %v902
    %v904 = vmul.f32 %v889, 1.442695
    %v905 = vpow.pop %v904
    %v906 = vsel %vm669, %v891, 0.0
    %907 = vadd.xlane.f32.xlu0 %v906
    %v908 = vpop.xlane.xlu0 %907
    %v909 = vsel %vm669, %v893, 0.0
    %910 = vadd.xlane.f32.xlu0 %v909
    %v911 = vpop.xlane.xlu0 %910
    %v912 = vsel %vm669, %v895, 0.0
    %913 = vadd.xlane.f32.xlu0 %v912
    %v914 = vpop.xlane.xlu0 %913
    %v915 = vsel %vm669, %v897, 0.0
    %916 = vadd.xlane.f32.xlu0 %v915
    %v917 = vpop.xlane.xlu0 %916
    %v918 = vsel %vm669, %v899, 0.0
    %919 = vadd.xlane.f32.xlu0 %v918
    %v920 = vpop.xlane.xlu0 %919
    %v921 = vsel %vm669, %v901, 0.0
    %922 = vadd.xlane.f32.xlu0 %v921
    %v923 = vpop.xlane.xlu0 %922
    %v924 = vsel %vm669, %v903, 0.0
    %925 = vadd.xlane.f32.xlu0 %v924
    %v926 = vpop.xlane.xlu0 %925
    %v927 = vsel %vm669, %v905, 0.0
    %928 = vadd.xlane.f32.xlu0 %v927
    %v929 = vpop.xlane.xlu0 %928
    %v930 = vrcp.pop %v908
    %v931 = vrcp.pop %v911
    %v932 = vrcp.pop %v914
    %v933 = vrcp.pop %v917
    %v934 = vrcp.pop %v920
    %v935 = vrcp.pop %v923
    %v936 = vrcp.pop %v926
    %v937 = vrcp.pop %v929
    %v938 = vmul.f32 %v891, %v930
    %v939 = vmul.f32 %v893, %v931
    %v940 = vmul.f32 %v895, %v932
    %v941 = vmul.f32 %v897, %v933
    %v942 = vmul.f32 %v899, %v934
    %v943 = vmul.f32 %v901, %v935
    %v944 = vmul.f32 %v903, %v936
    %v945 = vmul.f32 %v905, %v937
    %v946 = vpack.c.bf16 %v939, %v938
    %v947 = vpack.c.bf16 %v941, %v940
    %v948 = vpack.c.bf16 %v943, %v942
    %v949 = vpack.c.bf16 %v945, %v944
    %v951 = vsel %vm669, %v946, 0
    %953 = vmatprep.subr.bf16.mxu0 0
    %954 = vmatpush1.bf16.msra.mxu0 0
    %955 = vmatprep.subr.bf16.mxu0 0
    %956 = vmatpush1.bf16.msra.mxu0 0
    %957 = vmatprep.subr.bf16.mxu0 0
    %958 = vmatpush1.bf16.msra.mxu0 0
    %959 = vmatprep.subr.bf16.mxu0 0
    %960 = vmatpush1.bf16.msra.mxu0 0
    %961 = vmatprep.subr.bf16.mxu0 0
    %962 = vmatpush1.bf16.msra.mxu0 0
    %963 = vmatprep.subr.bf16.mxu0 0
    %964 = vmatpush1.bf16.msra.mxu0 0
    %965 = vmatprep.subr.bf16.mxu0 0
    %966 = vmatpush1.bf16.msra.mxu0 0
    %967 = vmatprep.subr.bf16.mxu0 0
    %968 = vmatpush1.bf16.msra.mxu0 %v627
    %969 = vmatprep.subr.bf16.mxu0 0
    %970 = vmatpush2.bf16.msra.mxu0 0
    %971 = vmatprep.subr.bf16.mxu0 0
    %972 = vmatpush2.bf16.msra.mxu0 0
    %973 = vmatprep.subr.bf16.mxu0 0
    %974 = vmatpush2.bf16.msra.mxu0 0
    %975 = vmatprep.subr.bf16.mxu0 0
    %976 = vmatpush2.bf16.msra.mxu0 0
    %977 = vmatprep.subr.bf16.mxu0 0
    %978 = vmatpush2.bf16.msra.mxu0 0
    %979 = vmatprep.subr.bf16.mxu0 0
    %980 = vmatpush2.bf16.msra.mxu0 0
    %981 = vmatprep.subr.bf16.mxu0 0
    %982 = vmatpush2.bf16.msra.mxu0 0
    %983 = vmatprep.subr.bf16.mxu0 0
    %984 = vmatpush2.bf16.msra.mxu0 0
    %985 = vmatprep.mubr.bf16.mxu0 0
    %986 = vmatmul.mubr.bf16.gmra.mxu0 %v951
    %v987 = vpop.f32.mrf.mxu0
    %v988 = vadd.f32 0.0, %v987
    %v989 = vpop.f32.mrf.mxu0
    %v990 = vpop.f32.mrf.mxu0
    %v991 = vadd.f32 0.0, %v990
    %v992 = vpop.f32.mrf.mxu0
    %993 = vdwg.mxu0
    %v995 = vsel %vm669, %v947, 0
    %997 = vmatprep.subr.bf16.mxu0 0
    %998 = vmatpush1.bf16.msra.mxu0 0
    %999 = vmatprep.subr.bf16.mxu0 0
    %1000 = vmatpush1.bf16.msra.mxu0 0
    %1001 = vmatprep.subr.bf16.mxu0 0
    %1002 = vmatpush1.bf16.msra.mxu0 0
    %1003 = vmatprep.subr.bf16.mxu0 0
    %1004 = vmatpush1.bf16.msra.mxu0 0
    %1005 = vmatprep.subr.bf16.mxu0 0
    %1006 = vmatpush1.bf16.msra.mxu0 0
    %1007 = vmatprep.subr.bf16.mxu0 0
    %1008 = vmatpush1.bf16.msra.mxu0 0
    %1009 = vmatprep.subr.bf16.mxu0 0
    %1010 = vmatpush1.bf16.msra.mxu0 0
    %1011 = vmatprep.subr.bf16.mxu0 0
    %1012 = vmatpush1.bf16.msra.mxu0 %v628
    %1013 = vmatprep.subr.bf16.mxu0 0
    %1014 = vmatpush2.bf16.msra.mxu0 0
    %1015 = vmatprep.subr.bf16.mxu0 0
    %1016 = vmatpush2.bf16.msra.mxu0 0
    %1017 = vmatprep.subr.bf16.mxu0 0
    %1018 = vmatpush2.bf16.msra.mxu0 0
    %1019 = vmatprep.subr.bf16.mxu0 0
    %1020 = vmatpush2.bf16.msra.mxu0 0
    %1021 = vmatprep.subr.bf16.mxu0 0
    %1022 = vmatpush2.bf16.msra.mxu0 0
    %1023 = vmatprep.subr.bf16.mxu0 0
    %1024 = vmatpush2.bf16.msra.mxu0 0
    %1025 = vmatprep.subr.bf16.mxu0 0
    %1026 = vmatpush2.bf16.msra.mxu0 0
    %1027 = vmatprep.subr.bf16.mxu0 0
    %1028 = vmatpush2.bf16.msra.mxu0 0
    %1029 = vmatprep.mubr.bf16.mxu0 0
    %1030 = vmatmul.mubr.bf16.gmra.mxu0 %v995
    %v1031 = vpop.f32.mrf.mxu0
    %v1032 = vadd.f32 0.0, %v1031
    %v1033 = vpop.f32.mrf.mxu0
    %v1034 = vpop.f32.mrf.mxu0
    %v1035 = vadd.f32 0.0, %v1034
    %v1036 = vpop.f32.mrf.mxu0
    %1037 = vdwg.mxu0
    %v1039 = vsel %vm669, %v948, 0
    %1041 = vmatprep.subr.bf16.mxu0 0
    %1042 = vmatpush1.bf16.msra.mxu0 0
    %1043 = vmatprep.subr.bf16.mxu0 0
    %1044 = vmatpush1.bf16.msra.mxu0 0
    %1045 = vmatprep.subr.bf16.mxu0 0
    %1046 = vmatpush1.bf16.msra.mxu0 0
    %1047 = vmatprep.subr.bf16.mxu0 0
    %1048 = vmatpush1.bf16.msra.mxu0 0
    %1049 = vmatprep.subr.bf16.mxu0 0
    %1050 = vmatpush1.bf16.msra.mxu0 0
    %1051 = vmatprep.subr.bf16.mxu0 0
    %1052 = vmatpush1.bf16.msra.mxu0 0
    %1053 = vmatprep.subr.bf16.mxu0 0
    %1054 = vmatpush1.bf16.msra.mxu0 0
    %1055 = vmatprep.subr.bf16.mxu0 0
    %1056 = vmatpush1.bf16.msra.mxu0 %v629
    %1057 = vmatprep.subr.bf16.mxu0 0
    %1058 = vmatpush2.bf16.msra.mxu0 0
    %1059 = vmatprep.subr.bf16.mxu0 0
    %1060 = vmatpush2.bf16.msra.mxu0 0
    %1061 = vmatprep.subr.bf16.mxu0 0
    %1062 = vmatpush2.bf16.msra.mxu0 0
    %1063 = vmatprep.subr.bf16.mxu0 0
    %1064 = vmatpush2.bf16.msra.mxu0 0
    %1065 = vmatprep.subr.bf16.mxu0 0
    %1066 = vmatpush2.bf16.msra.mxu0 0
    %1067 = vmatprep.subr.bf16.mxu0 0
    %1068 = vmatpush2.bf16.msra.mxu0 0
    %1069 = vmatprep.subr.bf16.mxu0 0
    %1070 = vmatpush2.bf16.msra.mxu0 0
    %1071 = vmatprep.subr.bf16.mxu0 0
    %1072 = vmatpush2.bf16.msra.mxu0 0
    %1073 = vmatprep.mubr.bf16.mxu0 0
    %1074 = vmatmul.mubr.bf16.gmra.mxu0 %v1039
    %v1075 = vpop.f32.mrf.mxu0
    %v1076 = vadd.f32 0.0, %v1075
    %v1077 = vpop.f32.mrf.mxu0
    %v1078 = vpop.f32.mrf.mxu0
    %v1079 = vadd.f32 0.0, %v1078
    %v1080 = vpop.f32.mrf.mxu0
    %1081 = vdwg.mxu0
    %v1083 = vsel %vm669, %v949, 0
    %1085 = vmatprep.subr.bf16.mxu0 0
    %1086 = vmatpush1.bf16.msra.mxu0 0
    %1087 = vmatprep.subr.bf16.mxu0 0
    %1088 = vmatpush1.bf16.msra.mxu0 0
    %1089 = vmatprep.subr.bf16.mxu0 0
    %1090 = vmatpush1.bf16.msra.mxu0 0
    %1091 = vmatprep.subr.bf16.mxu0 0
    %1092 = vmatpush1.bf16.msra.mxu0 0
    %1093 = vmatprep.subr.bf16.mxu0 0
    %1094 = vmatpush1.bf16.msra.mxu0 0
    %1095 = vmatprep.subr.bf16.mxu0 0
    %1096 = vmatpush1.bf16.msra.mxu0 0
    %1097 = vmatprep.subr.bf16.mxu0 0
    %1098 = vmatpush1.bf16.msra.mxu0 0
    %1099 = vmatprep.subr.bf16.mxu0 0
    %1100 = vmatpush1.bf16.msra.mxu0 %v630
    %1101 = vmatprep.subr.bf16.mxu0 0
    %1102 = vmatpush2.bf16.msra.mxu0 0
    %1103 = vmatprep.subr.bf16.mxu0 0
    %1104 = vmatpush2.bf16.msra.mxu0 0
    %1105 = vmatprep.subr.bf16.mxu0 0
    %1106 = vmatpush2.bf16.msra.mxu0 0
    %1107 = vmatprep.subr.bf16.mxu0 0
    %1108 = vmatpush2.bf16.msra.mxu0 0
    %1109 = vmatprep.subr.bf16.mxu0 0
    %1110 = vmatpush2.bf16.msra.mxu0 0
    %1111 = vmatprep.subr.bf16.mxu0 0
    %1112 = vmatpush2.bf16.msra.mxu0 0
    %1113 = vmatprep.subr.bf16.mxu0 0
    %1114 = vmatpush2.bf16.msra.mxu0 0
    %1115 = vmatprep.subr.bf16.mxu0 0
    %1116 = vmatpush2.bf16.msra.mxu0 0
    %1117 = vmatprep.mubr.bf16.mxu0 0
    %1118 = vmatmul.mubr.bf16.gmra.mxu0 %v1083
    %v1119 = vpop.f32.mrf.mxu0
    %v1120 = vadd.f32 0.0, %v1119
    %v1121 = vpop.f32.mrf.mxu0
    %v1122 = vpop.f32.mrf.mxu0
    %v1123 = vadd.f32 0.0, %v1122
    %v1124 = vpop.f32.mrf.mxu0
    %1125 = vdwg.mxu0
    %1127 = vrot.lane.b32.xlu0 %v619, 112
    %v1128 = vpop.permute.xlu0 %1127
    %1130 = vrot.lane.b32.xlu0 %v623, 112
    %v1131 = vpop.permute.xlu0 %1130
    %v1133 = vsel %vm669, %v1128, 0
    %v1136 = vsel %vm669, %v1131, 0
    %1138 = vmatprep.subr.bf16.mxu0 0
    %1139 = vmatpush1.bf16.xpose.msra.mxu0 0
    %1140 = vmatprep.subr.bf16.mxu0 0
    %1141 = vmatpush1.bf16.xpose.msra.mxu0 0
    %1142 = vmatprep.subr.bf16.mxu0 0
    %1143 = vmatpush1.bf16.xpose.msra.mxu0 0
    %1144 = vmatprep.subr.bf16.mxu0 0
    %1145 = vmatpush1.bf16.xpose.msra.mxu0 0
    %1146 = vmatprep.subr.bf16.mxu0 0
    %1147 = vmatpush1.bf16.xpose.msra.mxu0 0
    %1148 = vmatprep.subr.bf16.mxu0 0
    %1149 = vmatpush1.bf16.xpose.msra.mxu0 0
    %1150 = vmatprep.subr.bf16.mxu0 0
    %1151 = vmatpush1.bf16.xpose.msra.mxu0 0
    %1152 = vmatprep.subr.bf16.mxu0 0
    %1153 = vmatpush1.bf16.xpose.msra.mxu0 %v1136
    %1154 = vmatprep.subr.bf16.mxu0 0
    %1155 = vmatpush2.bf16.xpose.msra.mxu0 0
    %1156 = vmatprep.subr.bf16.mxu0 0
    %1157 = vmatpush2.bf16.xpose.msra.mxu0 0
    %1158 = vmatprep.subr.bf16.mxu0 0
    %1159 = vmatpush2.bf16.xpose.msra.mxu0 0
    %1160 = vmatprep.subr.bf16.mxu0 0
    %1161 = vmatpush2.bf16.xpose.msra.mxu0 0
    %1162 = vmatprep.subr.bf16.mxu0 0
    %1163 = vmatpush2.bf16.xpose.msra.mxu0 0
    %1164 = vmatprep.subr.bf16.mxu0 0
    %1165 = vmatpush2.bf16.xpose.msra.mxu0 0
    %1166 = vmatprep.subr.bf16.mxu0 0
    %1167 = vmatpush2.bf16.xpose.msra.mxu0 0
    %1168 = vmatprep.subr.bf16.mxu0 0
    %1169 = vmatpush2.bf16.xpose.msra.mxu0 0
    %1170 = vmatprep.mubr.bf16.mxu0 0
    %1171 = vmatmul.mubr.bf16.gmra.mxu0 %v1133
    %v1172 = vpop.f32.mrf.mxu0
    %v1173 = vadd.f32 %v661, %v1172
    %v1174 = vpop.f32.mrf.mxu0
    %v1175 = vpop.f32.mrf.mxu0
    %v1176 = vadd.f32 %v662, %v1175
    %v1177 = vpop.f32.mrf.mxu0
    %1178 = vdwg.mxu0
    %1180 = vrot.lane.b32.xlu0 %v620, 112
    %v1181 = vpop.permute.xlu0 %1180
    %1183 = vrot.lane.b32.xlu0 %v624, 112
    %v1184 = vpop.permute.xlu0 %1183
    %v1186 = vsel %vm669, %v1181, 0
    %v1189 = vsel %vm669, %v1184, 0
    %1191 = vmatprep.subr.bf16.mxu0 0
    %1192 = vmatpush1.bf16.xpose.msra.mxu0 0
    %1193 = vmatprep.subr.bf16.mxu0 0
    %1194 = vmatpush1.bf16.xpose.msra.mxu0 0
    %1195 = vmatprep.subr.bf16.mxu0 0
    %1196 = vmatpush1.bf16.xpose.msra.mxu0 0
    %1197 = vmatprep.subr.bf16.mxu0 0
    %1198 = vmatpush1.bf16.xpose.msra.mxu0 0
    %1199 = vmatprep.subr.bf16.mxu0 0
    %1200 = vmatpush1.bf16.xpose.msra.mxu0 0
    %1201 = vmatprep.subr.bf16.mxu0 0
    %1202 = vmatpush1.bf16.xpose.msra.mxu0 0
    %1203 = vmatprep.subr.bf16.mxu0 0
    %1204 = vmatpush1.bf16.xpose.msra.mxu0 0
    %1205 = vmatprep.subr.bf16.mxu0 0
    %1206 = vmatpush1.bf16.xpose.msra.mxu0 %v1189
    %1207 = vmatprep.subr.bf16.mxu0 0
    %1208 = vmatpush2.bf16.xpose.msra.mxu0 0
    %1209 = vmatprep.subr.bf16.mxu0 0
    %1210 = vmatpush2.bf16.xpose.msra.mxu0 0
    %1211 = vmatprep.subr.bf16.mxu0 0
    %1212 = vmatpush2.bf16.xpose.msra.mxu0 0
    %1213 = vmatprep.subr.bf16.mxu0 0
    %1214 = vmatpush2.bf16.xpose.msra.mxu0 0
    %1215 = vmatprep.subr.bf16.mxu0 0
    %1216 = vmatpush2.bf16.xpose.msra.mxu0 0
    %1217 = vmatprep.subr.bf16.mxu0 0
    %1218 = vmatpush2.bf16.xpose.msra.mxu0 0
    %1219 = vmatprep.subr.bf16.mxu0 0
    %1220 = vmatpush2.bf16.xpose.msra.mxu0 0
    %1221 = vmatprep.subr.bf16.mxu0 0
    %1222 = vmatpush2.bf16.xpose.msra.mxu0 0
    %1223 = vmatprep.mubr.bf16.mxu0 0
    %1224 = vmatmul.mubr.bf16.gmra.mxu0 %v1186
    %v1225 = vpop.f32.mrf.mxu0
    %v1226 = vadd.f32 %v663, %v1225
    %v1227 = vpop.f32.mrf.mxu0
    %v1228 = vpop.f32.mrf.mxu0
    %v1229 = vadd.f32 %v664, %v1228
    %v1230 = vpop.f32.mrf.mxu0
    %1231 = vdwg.mxu0
    %1233 = vrot.lane.b32.xlu0 %v621, 112
    %v1234 = vpop.permute.xlu0 %1233
    %1236 = vrot.lane.b32.xlu0 %v625, 112
    %v1237 = vpop.permute.xlu0 %1236
    %v1239 = vsel %vm669, %v1234, 0
    %v1242 = vsel %vm669, %v1237, 0
    %1244 = vmatprep.subr.bf16.mxu0 0
    %1245 = vmatpush1.bf16.xpose.msra.mxu0 0
    %1246 = vmatprep.subr.bf16.mxu0 0
    %1247 = vmatpush1.bf16.xpose.msra.mxu0 0
    %1248 = vmatprep.subr.bf16.mxu0 0
    %1249 = vmatpush1.bf16.xpose.msra.mxu0 0
    %1250 = vmatprep.subr.bf16.mxu0 0
    %1251 = vmatpush1.bf16.xpose.msra.mxu0 0
    %1252 = vmatprep.subr.bf16.mxu0 0
    %1253 = vmatpush1.bf16.xpose.msra.mxu0 0
    %1254 = vmatprep.subr.bf16.mxu0 0
    %1255 = vmatpush1.bf16.xpose.msra.mxu0 0
    %1256 = vmatprep.subr.bf16.mxu0 0
    %1257 = vmatpush1.bf16.xpose.msra.mxu0 0
    %1258 = vmatprep.subr.bf16.mxu0 0
    %1259 = vmatpush1.bf16.xpose.msra.mxu0 %v1242
    %1260 = vmatprep.subr.bf16.mxu0 0
    %1261 = vmatpush2.bf16.xpose.msra.mxu0 0
    %1262 = vmatprep.subr.bf16.mxu0 0
    %1263 = vmatpush2.bf16.xpose.msra.mxu0 0
    %1264 = vmatprep.subr.bf16.mxu0 0
    %1265 = vmatpush2.bf16.xpose.msra.mxu0 0
    %1266 = vmatprep.subr.bf16.mxu0 0
    %1267 = vmatpush2.bf16.xpose.msra.mxu0 0
    %1268 = vmatprep.subr.bf16.mxu0 0
    %1269 = vmatpush2.bf16.xpose.msra.mxu0 0
    %1270 = vmatprep.subr.bf16.mxu0 0
    %1271 = vmatpush2.bf16.xpose.msra.mxu0 0
    %1272 = vmatprep.subr.bf16.mxu0 0
    %1273 = vmatpush2.bf16.xpose.msra.mxu0 0
    %1274 = vmatprep.subr.bf16.mxu0 0
    %1275 = vmatpush2.bf16.xpose.msra.mxu0 0
    %1276 = vmatprep.mubr.bf16.mxu0 0
    %1277 = vmatmul.mubr.bf16.gmra.mxu0 %v1239
    %v1278 = vpop.f32.mrf.mxu0
    %v1279 = vadd.f32 %v665, %v1278
    %v1280 = vpop.f32.mrf.mxu0
    %v1281 = vpop.f32.mrf.mxu0
    %v1282 = vadd.f32 %v666, %v1281
    %v1283 = vpop.f32.mrf.mxu0
    %1284 = vdwg.mxu0
    %1286 = vrot.lane.b32.xlu0 %v622, 112
    %v1287 = vpop.permute.xlu0 %1286
    %1289 = vrot.lane.b32.xlu0 %v626, 112
    %v1290 = vpop.permute.xlu0 %1289
    %v1292 = vsel %vm669, %v1287, 0
    %v1295 = vsel %vm669, %v1290, 0
    %1297 = vmatprep.subr.bf16.mxu0 0
    %1298 = vmatpush1.bf16.xpose.msra.mxu0 0
    %1299 = vmatprep.subr.bf16.mxu0 0
    %1300 = vmatpush1.bf16.xpose.msra.mxu0 0
    %1301 = vmatprep.subr.bf16.mxu0 0
    %1302 = vmatpush1.bf16.xpose.msra.mxu0 0
    %1303 = vmatprep.subr.bf16.mxu0 0
    %1304 = vmatpush1.bf16.xpose.msra.mxu0 0
    %1305 = vmatprep.subr.bf16.mxu0 0
    %1306 = vmatpush1.bf16.xpose.msra.mxu0 0
    %1307 = vmatprep.subr.bf16.mxu0 0
    %1308 = vmatpush1.bf16.xpose.msra.mxu0 0
    %1309 = vmatprep.subr.bf16.mxu0 0
    %1310 = vmatpush1.bf16.xpose.msra.mxu0 0
    %1311 = vmatprep.subr.bf16.mxu0 0
    %1312 = vmatpush1.bf16.xpose.msra.mxu0 %v1295
    %1313 = vmatprep.subr.bf16.mxu0 0
    %1314 = vmatpush2.bf16.xpose.msra.mxu0 0
    %1315 = vmatprep.subr.bf16.mxu0 0
    %1316 = vmatpush2.bf16.xpose.msra.mxu0 0
    %1317 = vmatprep.subr.bf16.mxu0 0
    %1318 = vmatpush2.bf16.xpose.msra.mxu0 0
    %1319 = vmatprep.subr.bf16.mxu0 0
    %1320 = vmatpush2.bf16.xpose.msra.mxu0 0
    %1321 = vmatprep.subr.bf16.mxu0 0
    %1322 = vmatpush2.bf16.xpose.msra.mxu0 0
    %1323 = vmatprep.subr.bf16.mxu0 0
    %1324 = vmatpush2.bf16.xpose.msra.mxu0 0
    %1325 = vmatprep.subr.bf16.mxu0 0
    %1326 = vmatpush2.bf16.xpose.msra.mxu0 0
    %1327 = vmatprep.subr.bf16.mxu0 0
    %1328 = vmatpush2.bf16.xpose.msra.mxu0 0
    %1329 = vmatprep.mubr.bf16.mxu0 0
    %1330 = vmatmul.mubr.bf16.gmra.mxu0 %v1292
    %v1331 = vpop.f32.mrf.mxu0
    %v1332 = vadd.f32 %v667, %v1331
    %v1333 = vpop.f32.mrf.mxu0
    %v1334 = vpop.f32.mrf.mxu0
    %v1335 = vadd.f32 %v668, %v1334
    %v1336 = vpop.f32.mrf.mxu0
    %1337 = vdwg.mxu0
    %v1338 = vsel %vm669, %v1173, -inf
    %1339 = vmax.xlane.f32.xlu0 %v1338
    %v1340 = vpop.xlane.xlu0 %1339
    %v1341 = vsel %vm669, %v1176, -inf
    %1342 = vmax.xlane.f32.xlu0 %v1341
    %v1343 = vpop.xlane.xlu0 %1342
    %v1344 = vsel %vm669, %v1226, -inf
    %1345 = vmax.xlane.f32.xlu0 %v1344
    %v1346 = vpop.xlane.xlu0 %1345
    %v1347 = vsel %vm669, %v1229, -inf
    %1348 = vmax.xlane.f32.xlu0 %v1347
    %v1349 = vpop.xlane.xlu0 %1348
    %v1350 = vsel %vm669, %v1279, -inf
    %1351 = vmax.xlane.f32.xlu0 %v1350
    %v1352 = vpop.xlane.xlu0 %1351
    %v1353 = vsel %vm669, %v1282, -inf
    %1354 = vmax.xlane.f32.xlu0 %v1353
    %v1355 = vpop.xlane.xlu0 %1354
    %v1356 = vsel %vm669, %v1332, -inf
    %1357 = vmax.xlane.f32.xlu0 %v1356
    %v1358 = vpop.xlane.xlu0 %1357
    %v1359 = vsel %vm669, %v1335, -inf
    %1360 = vmax.xlane.f32.xlu0 %v1359
    %v1361 = vpop.xlane.xlu0 %1360
    %v1362 = vsub.f32 %v1173, %v1340
    %v1363 = vsub.f32 %v1176, %v1343
    %v1364 = vsub.f32 %v1226, %v1346
    %v1365 = vsub.f32 %v1229, %v1349
    %v1366 = vsub.f32 %v1279, %v1352
    %v1367 = vsub.f32 %v1282, %v1355
    %v1368 = vsub.f32 %v1332, %v1358
    %v1369 = vsub.f32 %v1335, %v1361
    %v1370 = vmul.f32 %v1362, 1.442695
    %v1371 = vpow.pop %v1370
    %v1372 = vmul.f32 %v1363, 1.442695
    %v1373 = vpow.pop %v1372
    %v1374 = vmul.f32 %v1364, 1.442695
    %v1375 = vpow.pop %v1374
    %v1376 = vmul.f32 %v1365, 1.442695
    %v1377 = vpow.pop %v1376
    %v1378 = vmul.f32 %v1366, 1.442695
    %v1379 = vpow.pop %v1378
    %v1380 = vmul.f32 %v1367, 1.442695
    %v1381 = vpow.pop %v1380
    %v1382 = vmul.f32 %v1368, 1.442695
    %v1383 = vpow.pop %v1382
    %v1384 = vmul.f32 %v1369, 1.442695
    %v1385 = vpow.pop %v1384
    %v1386 = vsel %vm669, %v1371, 0.0
    %1387 = vadd.xlane.f32.xlu0 %v1386
    %v1388 = vpop.xlane.xlu0 %1387
    %v1389 = vsel %vm669, %v1373, 0.0
    %1390 = vadd.xlane.f32.xlu0 %v1389
    %v1391 = vpop.xlane.xlu0 %1390
    %v1392 = vsel %vm669, %v1375, 0.0
    %1393 = vadd.xlane.f32.xlu0 %v1392
    %v1394 = vpop.xlane.xlu0 %1393
    %v1395 = vsel %vm669, %v1377, 0.0
    %1396 = vadd.xlane.f32.xlu0 %v1395
    %v1397 = vpop.xlane.xlu0 %1396
    %v1398 = vsel %vm669, %v1379, 0.0
    %1399 = vadd.xlane.f32.xlu0 %v1398
    %v1400 = vpop.xlane.xlu0 %1399
    %v1401 = vsel %vm669, %v1381, 0.0
    %1402 = vadd.xlane.f32.xlu0 %v1401
    %v1403 = vpop.xlane.xlu0 %1402
    %v1404 = vsel %vm669, %v1383, 0.0
    %1405 = vadd.xlane.f32.xlu0 %v1404
    %v1406 = vpop.xlane.xlu0 %1405
    %v1407 = vsel %vm669, %v1385, 0.0
    %1408 = vadd.xlane.f32.xlu0 %v1407
    %v1409 = vpop.xlane.xlu0 %1408
    %v1410 = vrcp.pop %v1388
    %v1411 = vrcp.pop %v1391
    %v1412 = vrcp.pop %v1394
    %v1413 = vrcp.pop %v1397
    %v1414 = vrcp.pop %v1400
    %v1415 = vrcp.pop %v1403
    %v1416 = vrcp.pop %v1406
    %v1417 = vrcp.pop %v1409
    %v1418 = vmul.f32 %v1371, %v1410
    %v1419 = vmul.f32 %v1373, %v1411
    %v1420 = vmul.f32 %v1375, %v1412
    %v1421 = vmul.f32 %v1377, %v1413
    %v1422 = vmul.f32 %v1379, %v1414
    %v1423 = vmul.f32 %v1381, %v1415
    %v1424 = vmul.f32 %v1383, %v1416
    %v1425 = vmul.f32 %v1385, %v1417
    %v1426 = vpack.c.bf16 %v1419, %v1418
    %v1427 = vpack.c.bf16 %v1421, %v1420
    %v1428 = vpack.c.bf16 %v1423, %v1422
    %v1429 = vpack.c.bf16 %v1425, %v1424
    %1431 = vrot.lane.b32.xlu0 %v627, 112
    %v1432 = vpop.permute.xlu0 %1431
    %v1435 = vsel %vm669, %v1426, 0
    %1437 = vmatprep.subr.bf16.mxu0 0
    %1438 = vmatpush1.bf16.msra.mxu0 0
    %1439 = vmatprep.subr.bf16.mxu0 0
    %1440 = vmatpush1.bf16.msra.mxu0 0
    %1441 = vmatprep.subr.bf16.mxu0 0
    %1442 = vmatpush1.bf16.msra.mxu0 0
    %1443 = vmatprep.subr.bf16.mxu0 0
    %1444 = vmatpush1.bf16.msra.mxu0 0
    %1445 = vmatprep.subr.bf16.mxu0 0
    %1446 = vmatpush1.bf16.msra.mxu0 0
    %1447 = vmatprep.subr.bf16.mxu0 0
    %1448 = vmatpush1.bf16.msra.mxu0 0
    %1449 = vmatprep.subr.bf16.mxu0 0
    %1450 = vmatpush1.bf16.msra.mxu0 0
    %1451 = vmatprep.subr.bf16.mxu0 0
    %1452 = vmatpush1.bf16.msra.mxu0 %v1432
    %1453 = vmatprep.subr.bf16.mxu0 0
    %1454 = vmatpush2.bf16.msra.mxu0 0
    %1455 = vmatprep.subr.bf16.mxu0 0
    %1456 = vmatpush2.bf16.msra.mxu0 0
    %1457 = vmatprep.subr.bf16.mxu0 0
    %1458 = vmatpush2.bf16.msra.mxu0 0
    %1459 = vmatprep.subr.bf16.mxu0 0
    %1460 = vmatpush2.bf16.msra.mxu0 0
    %1461 = vmatprep.subr.bf16.mxu0 0
    %1462 = vmatpush2.bf16.msra.mxu0 0
    %1463 = vmatprep.subr.bf16.mxu0 0
    %1464 = vmatpush2.bf16.msra.mxu0 0
    %1465 = vmatprep.subr.bf16.mxu0 0
    %1466 = vmatpush2.bf16.msra.mxu0 0
    %1467 = vmatprep.subr.bf16.mxu0 0
    %1468 = vmatpush2.bf16.msra.mxu0 0
    %1469 = vmatprep.mubr.bf16.mxu0 0
    %1470 = vmatmul.mubr.bf16.gmra.mxu0 %v1435
    %v1471 = vpop.f32.mrf.mxu0
    %v1472 = vadd.f32 0.0, %v1471
    %v1473 = vpop.f32.mrf.mxu0
    %v1474 = vpop.f32.mrf.mxu0
    %v1475 = vadd.f32 0.0, %v1474
    %v1476 = vpop.f32.mrf.mxu0
    %1477 = vdwg.mxu0
    %1479 = vrot.lane.b32.xlu0 %v628, 112
    %v1480 = vpop.permute.xlu0 %1479
    %v1483 = vsel %vm669, %v1427, 0
    %1485 = vmatprep.subr.bf16.mxu0 0
    %1486 = vmatpush1.bf16.msra.mxu0 0
    %1487 = vmatprep.subr.bf16.mxu0 0
    %1488 = vmatpush1.bf16.msra.mxu0 0
    %1489 = vmatprep.subr.bf16.mxu0 0
    %1490 = vmatpush1.bf16.msra.mxu0 0
    %1491 = vmatprep.subr.bf16.mxu0 0
    %1492 = vmatpush1.bf16.msra.mxu0 0
    %1493 = vmatprep.subr.bf16.mxu0 0
    %1494 = vmatpush1.bf16.msra.mxu0 0
    %1495 = vmatprep.subr.bf16.mxu0 0
    %1496 = vmatpush1.bf16.msra.mxu0 0
    %1497 = vmatprep.subr.bf16.mxu0 0
    %1498 = vmatpush1.bf16.msra.mxu0 0
    %1499 = vmatprep.subr.bf16.mxu0 0
    %1500 = vmatpush1.bf16.msra.mxu0 %v1480
    %1501 = vmatprep.subr.bf16.mxu0 0
    %1502 = vmatpush2.bf16.msra.mxu0 0
    %1503 = vmatprep.subr.bf16.mxu0 0
    %1504 = vmatpush2.bf16.msra.mxu0 0
    %1505 = vmatprep.subr.bf16.mxu0 0
    %1506 = vmatpush2.bf16.msra.mxu0 0
    %1507 = vmatprep.subr.bf16.mxu0 0
    %1508 = vmatpush2.bf16.msra.mxu0 0
    %1509 = vmatprep.subr.bf16.mxu0 0
    %1510 = vmatpush2.bf16.msra.mxu0 0
    %1511 = vmatprep.subr.bf16.mxu0 0
    %1512 = vmatpush2.bf16.msra.mxu0 0
    %1513 = vmatprep.subr.bf16.mxu0 0
    %1514 = vmatpush2.bf16.msra.mxu0 0
    %1515 = vmatprep.subr.bf16.mxu0 0
    %1516 = vmatpush2.bf16.msra.mxu0 0
    %1517 = vmatprep.mubr.bf16.mxu0 0
    %1518 = vmatmul.mubr.bf16.gmra.mxu0 %v1483
    %v1519 = vpop.f32.mrf.mxu0
    %v1520 = vadd.f32 0.0, %v1519
    %v1521 = vpop.f32.mrf.mxu0
    %v1522 = vpop.f32.mrf.mxu0
    %v1523 = vadd.f32 0.0, %v1522
    %v1524 = vpop.f32.mrf.mxu0
    %1525 = vdwg.mxu0
    %1527 = vrot.lane.b32.xlu0 %v629, 112
    %v1528 = vpop.permute.xlu0 %1527
    %v1531 = vsel %vm669, %v1428, 0
    %1533 = vmatprep.subr.bf16.mxu0 0
    %1534 = vmatpush1.bf16.msra.mxu0 0
    %1535 = vmatprep.subr.bf16.mxu0 0
    %1536 = vmatpush1.bf16.msra.mxu0 0
    %1537 = vmatprep.subr.bf16.mxu0 0
    %1538 = vmatpush1.bf16.msra.mxu0 0
    %1539 = vmatprep.subr.bf16.mxu0 0
    %1540 = vmatpush1.bf16.msra.mxu0 0
    %1541 = vmatprep.subr.bf16.mxu0 0
    %1542 = vmatpush1.bf16.msra.mxu0 0
    %1543 = vmatprep.subr.bf16.mxu0 0
    %1544 = vmatpush1.bf16.msra.mxu0 0
    %1545 = vmatprep.subr.bf16.mxu0 0
    %1546 = vmatpush1.bf16.msra.mxu0 0
    %1547 = vmatprep.subr.bf16.mxu0 0
    %1548 = vmatpush1.bf16.msra.mxu0 %v1528
    %1549 = vmatprep.subr.bf16.mxu0 0
    %1550 = vmatpush2.bf16.msra.mxu0 0
    %1551 = vmatprep.subr.bf16.mxu0 0
    %1552 = vmatpush2.bf16.msra.mxu0 0
    %1553 = vmatprep.subr.bf16.mxu0 0
    %1554 = vmatpush2.bf16.msra.mxu0 0
    %1555 = vmatprep.subr.bf16.mxu0 0
    %1556 = vmatpush2.bf16.msra.mxu0 0
    %1557 = vmatprep.subr.bf16.mxu0 0
    %1558 = vmatpush2.bf16.msra.mxu0 0
    %1559 = vmatprep.subr.bf16.mxu0 0
    %1560 = vmatpush2.bf16.msra.mxu0 0
    %1561 = vmatprep.subr.bf16.mxu0 0
    %1562 = vmatpush2.bf16.msra.mxu0 0
    %1563 = vmatprep.subr.bf16.mxu0 0
    %1564 = vmatpush2.bf16.msra.mxu0 0
    %1565 = vmatprep.mubr.bf16.mxu0 0
    %1566 = vmatmul.mubr.bf16.gmra.mxu0 %v1531
    %v1567 = vpop.f32.mrf.mxu0
    %v1568 = vadd.f32 0.0, %v1567
    %v1569 = vpop.f32.mrf.mxu0
    %v1570 = vpop.f32.mrf.mxu0
    %v1571 = vadd.f32 0.0, %v1570
    %v1572 = vpop.f32.mrf.mxu0
    %1573 = vdwg.mxu0
    %1575 = vrot.lane.b32.xlu0 %v630, 112
    %v1576 = vpop.permute.xlu0 %1575
    %v1579 = vsel %vm669, %v1429, 0
    %1581 = vmatprep.subr.bf16.mxu0 0
    %1582 = vmatpush1.bf16.msra.mxu0 0
    %1583 = vmatprep.subr.bf16.mxu0 0
    %1584 = vmatpush1.bf16.msra.mxu0 0
    %1585 = vmatprep.subr.bf16.mxu0 0
    %1586 = vmatpush1.bf16.msra.mxu0 0
    %1587 = vmatprep.subr.bf16.mxu0 0
    %1588 = vmatpush1.bf16.msra.mxu0 0
    %1589 = vmatprep.subr.bf16.mxu0 0
    %1590 = vmatpush1.bf16.msra.mxu0 0
    %1591 = vmatprep.subr.bf16.mxu0 0
    %1592 = vmatpush1.bf16.msra.mxu0 0
    %1593 = vmatprep.subr.bf16.mxu0 0
    %1594 = vmatpush1.bf16.msra.mxu0 0
    %1595 = vmatprep.subr.bf16.mxu0 0
    %1596 = vmatpush1.bf16.msra.mxu0 %v1576
    %1597 = vmatprep.subr.bf16.mxu0 0
    %1598 = vmatpush2.bf16.msra.mxu0 0
    %1599 = vmatprep.subr.bf16.mxu0 0
    %1600 = vmatpush2.bf16.msra.mxu0 0
    %1601 = vmatprep.subr.bf16.mxu0 0
    %1602 = vmatpush2.bf16.msra.mxu0 0
    %1603 = vmatprep.subr.bf16.mxu0 0
    %1604 = vmatpush2.bf16.msra.mxu0 0
    %1605 = vmatprep.subr.bf16.mxu0 0
    %1606 = vmatpush2.bf16.msra.mxu0 0
    %1607 = vmatprep.subr.bf16.mxu0 0
    %1608 = vmatpush2.bf16.msra.mxu0 0
    %1609 = vmatprep.subr.bf16.mxu0 0
    %1610 = vmatpush2.bf16.msra.mxu0 0
    %1611 = vmatprep.subr.bf16.mxu0 0
    %1612 = vmatpush2.bf16.msra.mxu0 0
    %1613 = vmatprep.mubr.bf16.mxu0 0
    %1614 = vmatmul.mubr.bf16.gmra.mxu0 %v1579
    %v1615 = vpop.f32.mrf.mxu0
    %v1616 = vadd.f32 0.0, %v1615
    %v1617 = vpop.f32.mrf.mxu0
    %v1618 = vpop.f32.mrf.mxu0
    %v1619 = vadd.f32 0.0, %v1618
    %v1620 = vpop.f32.mrf.mxu0
    %1621 = vdwg.mxu0
    %1622 = vrot.lane.b32.xlu0 %v619, 96
    %v1623 = vpop.permute.xlu0 %1622
    %1624 = vrot.lane.b32.xlu0 %v623, 96
    %v1625 = vpop.permute.xlu0 %1624
    %v1627 = vsel %vm669, %v1623, 0
    %v1630 = vsel %vm669, %v1625, 0
    %1632 = vmatprep.subr.bf16.mxu0 0
    %1633 = vmatpush1.bf16.xpose.msra.mxu0 0
    %1634 = vmatprep.subr.bf16.mxu0 0
    %1635 = vmatpush1.bf16.xpose.msra.mxu0 0
    %1636 = vmatprep.subr.bf16.mxu0 0
    %1637 = vmatpush1.bf16.xpose.msra.mxu0 0
    %1638 = vmatprep.subr.bf16.mxu0 0
    %1639 = vmatpush1.bf16.xpose.msra.mxu0 0
    %1640 = vmatprep.subr.bf16.mxu0 0
    %1641 = vmatpush1.bf16.xpose.msra.mxu0 0
    %1642 = vmatprep.subr.bf16.mxu0 0
    %1643 = vmatpush1.bf16.xpose.msra.mxu0 0
    %1644 = vmatprep.subr.bf16.mxu0 0
    %1645 = vmatpush1.bf16.xpose.msra.mxu0 0
    %1646 = vmatprep.subr.bf16.mxu0 0
    %1647 = vmatpush1.bf16.xpose.msra.mxu0 %v1630
    %1648 = vmatprep.subr.bf16.mxu0 0
    %1649 = vmatpush2.bf16.xpose.msra.mxu0 0
    %1650 = vmatprep.subr.bf16.mxu0 0
    %1651 = vmatpush2.bf16.xpose.msra.mxu0 0
    %1652 = vmatprep.subr.bf16.mxu0 0
    %1653 = vmatpush2.bf16.xpose.msra.mxu0 0
    %1654 = vmatprep.subr.bf16.mxu0 0
    %1655 = vmatpush2.bf16.xpose.msra.mxu0 0
    %1656 = vmatprep.subr.bf16.mxu0 0
    %1657 = vmatpush2.bf16.xpose.msra.mxu0 0
    %1658 = vmatprep.subr.bf16.mxu0 0
    %1659 = vmatpush2.bf16.xpose.msra.mxu0 0
    %1660 = vmatprep.subr.bf16.mxu0 0
    %1661 = vmatpush2.bf16.xpose.msra.mxu0 0
    %1662 = vmatprep.subr.bf16.mxu0 0
    %1663 = vmatpush2.bf16.xpose.msra.mxu0 0
    %1664 = vmatprep.mubr.bf16.mxu0 0
    %1665 = vmatmul.mubr.bf16.gmra.mxu0 %v1627
    %v1666 = vpop.f32.mrf.mxu0
    %v1667 = vadd.f32 %v661, %v1666
    %v1668 = vpop.f32.mrf.mxu0
    %v1669 = vpop.f32.mrf.mxu0
    %v1670 = vadd.f32 %v662, %v1669
    %v1671 = vpop.f32.mrf.mxu0
    %1672 = vdwg.mxu0
    %1673 = vrot.lane.b32.xlu0 %v620, 96
    %v1674 = vpop.permute.xlu0 %1673
    %1675 = vrot.lane.b32.xlu0 %v624, 96
    %v1676 = vpop.permute.xlu0 %1675
    %v1678 = vsel %vm669, %v1674, 0
    %v1681 = vsel %vm669, %v1676, 0
    %1683 = vmatprep.subr.bf16.mxu0 0
    %1684 = vmatpush1.bf16.xpose.msra.mxu0 0
    %1685 = vmatprep.subr.bf16.mxu0 0
    %1686 = vmatpush1.bf16.xpose.msra.mxu0 0
    %1687 = vmatprep.subr.bf16.mxu0 0
    %1688 = vmatpush1.bf16.xpose.msra.mxu0 0
    %1689 = vmatprep.subr.bf16.mxu0 0
    %1690 = vmatpush1.bf16.xpose.msra.mxu0 0
    %1691 = vmatprep.subr.bf16.mxu0 0
    %1692 = vmatpush1.bf16.xpose.msra.mxu0 0
    %1693 = vmatprep.subr.bf16.mxu0 0
    %1694 = vmatpush1.bf16.xpose.msra.mxu0 0
    %1695 = vmatprep.subr.bf16.mxu0 0
    %1696 = vmatpush1.bf16.xpose.msra.mxu0 0
    %1697 = vmatprep.subr.bf16.mxu0 0
    %1698 = vmatpush1.bf16.xpose.msra.mxu0 %v1681
    %1699 = vmatprep.subr.bf16.mxu0 0
    %1700 = vmatpush2.bf16.xpose.msra.mxu0 0
    %1701 = vmatprep.subr.bf16.mxu0 0
    %1702 = vmatpush2.bf16.xpose.msra.mxu0 0
    %1703 = vmatprep.subr.bf16.mxu0 0
    %1704 = vmatpush2.bf16.xpose.msra.mxu0 0
    %1705 = vmatprep.subr.bf16.mxu0 0
    %1706 = vmatpush2.bf16.xpose.msra.mxu0 0
    %1707 = vmatprep.subr.bf16.mxu0 0
    %1708 = vmatpush2.bf16.xpose.msra.mxu0 0
    %1709 = vmatprep.subr.bf16.mxu0 0
    %1710 = vmatpush2.bf16.xpose.msra.mxu0 0
    %1711 = vmatprep.subr.bf16.mxu0 0
    %1712 = vmatpush2.bf16.xpose.msra.mxu0 0
    %1713 = vmatprep.subr.bf16.mxu0 0
    %1714 = vmatpush2.bf16.xpose.msra.mxu0 0
    %1715 = vmatprep.mubr.bf16.mxu0 0
    %1716 = vmatmul.mubr.bf16.gmra.mxu0 %v1678
    %v1717 = vpop.f32.mrf.mxu0
    %v1718 = vadd.f32 %v663, %v1717
    %v1719 = vpop.f32.mrf.mxu0
    %v1720 = vpop.f32.mrf.mxu0
    %v1721 = vadd.f32 %v664, %v1720
    %v1722 = vpop.f32.mrf.mxu0
    %1723 = vdwg.mxu0
    %1724 = vrot.lane.b32.xlu0 %v621, 96
    %v1725 = vpop.permute.xlu0 %1724
    %1726 = vrot.lane.b32.xlu0 %v625, 96
    %v1727 = vpop.permute.xlu0 %1726
    %v1729 = vsel %vm669, %v1725, 0
    %v1732 = vsel %vm669, %v1727, 0
    %1734 = vmatprep.subr.bf16.mxu0 0
    %1735 = vmatpush1.bf16.xpose.msra.mxu0 0
    %1736 = vmatprep.subr.bf16.mxu0 0
    %1737 = vmatpush1.bf16.xpose.msra.mxu0 0
    %1738 = vmatprep.subr.bf16.mxu0 0
    %1739 = vmatpush1.bf16.xpose.msra.mxu0 0
    %1740 = vmatprep.subr.bf16.mxu0 0
    %1741 = vmatpush1.bf16.xpose.msra.mxu0 0
    %1742 = vmatprep.subr.bf16.mxu0 0
    %1743 = vmatpush1.bf16.xpose.msra.mxu0 0
    %1744 = vmatprep.subr.bf16.mxu0 0
    %1745 = vmatpush1.bf16.xpose.msra.mxu0 0
    %1746 = vmatprep.subr.bf16.mxu0 0
    %1747 = vmatpush1.bf16.xpose.msra.mxu0 0
    %1748 = vmatprep.subr.bf16.mxu0 0
    %1749 = vmatpush1.bf16.xpose.msra.mxu0 %v1732
    %1750 = vmatprep.subr.bf16.mxu0 0
    %1751 = vmatpush2.bf16.xpose.msra.mxu0 0
    %1752 = vmatprep.subr.bf16.mxu0 0
    %1753 = vmatpush2.bf16.xpose.msra.mxu0 0
    %1754 = vmatprep.subr.bf16.mxu0 0
    %1755 = vmatpush2.bf16.xpose.msra.mxu0 0
    %1756 = vmatprep.subr.bf16.mxu0 0
    %1757 = vmatpush2.bf16.xpose.msra.mxu0 0
    %1758 = vmatprep.subr.bf16.mxu0 0
    %1759 = vmatpush2.bf16.xpose.msra.mxu0 0
    %1760 = vmatprep.subr.bf16.mxu0 0
    %1761 = vmatpush2.bf16.xpose.msra.mxu0 0
    %1762 = vmatprep.subr.bf16.mxu0 0
    %1763 = vmatpush2.bf16.xpose.msra.mxu0 0
    %1764 = vmatprep.subr.bf16.mxu0 0
    %1765 = vmatpush2.bf16.xpose.msra.mxu0 0
    %1766 = vmatprep.mubr.bf16.mxu0 0
    %1767 = vmatmul.mubr.bf16.gmra.mxu0 %v1729
    %v1768 = vpop.f32.mrf.mxu0
    %v1769 = vadd.f32 %v665, %v1768
    %v1770 = vpop.f32.mrf.mxu0
    %v1771 = vpop.f32.mrf.mxu0
    %v1772 = vadd.f32 %v666, %v1771
    %v1773 = vpop.f32.mrf.mxu0
    %1774 = vdwg.mxu0
    %1775 = vrot.lane.b32.xlu0 %v622, 96
    %v1776 = vpop.permute.xlu0 %1775
    %1777 = vrot.lane.b32.xlu0 %v626, 96
    %v1778 = vpop.permute.xlu0 %1777
    %v1780 = vsel %vm669, %v1776, 0
    %v1783 = vsel %vm669, %v1778, 0
    %1785 = vmatprep.subr.bf16.mxu0 0
    %1786 = vmatpush1.bf16.xpose.msra.mxu0 0
    %1787 = vmatprep.subr.bf16.mxu0 0
    %1788 = vmatpush1.bf16.xpose.msra.mxu0 0
    %1789 = vmatprep.subr.bf16.mxu0 0
    %1790 = vmatpush1.bf16.xpose.msra.mxu0 0
    %1791 = vmatprep.subr.bf16.mxu0 0
    %1792 = vmatpush1.bf16.xpose.msra.mxu0 0
    %1793 = vmatprep.subr.bf16.mxu0 0
    %1794 = vmatpush1.bf16.xpose.msra.mxu0 0
    %1795 = vmatprep.subr.bf16.mxu0 0
    %1796 = vmatpush1.bf16.xpose.msra.mxu0 0
    %1797 = vmatprep.subr.bf16.mxu0 0
    %1798 = vmatpush1.bf16.xpose.msra.mxu0 0
    %1799 = vmatprep.subr.bf16.mxu0 0
    %1800 = vmatpush1.bf16.xpose.msra.mxu0 %v1783
    %1801 = vmatprep.subr.bf16.mxu0 0
    %1802 = vmatpush2.bf16.xpose.msra.mxu0 0
    %1803 = vmatprep.subr.bf16.mxu0 0
    %1804 = vmatpush2.bf16.xpose.msra.mxu0 0
    %1805 = vmatprep.subr.bf16.mxu0 0
    %1806 = vmatpush2.bf16.xpose.msra.mxu0 0
    %1807 = vmatprep.subr.bf16.mxu0 0
    %1808 = vmatpush2.bf16.xpose.msra.mxu0 0
    %1809 = vmatprep.subr.bf16.mxu0 0
    %1810 = vmatpush2.bf16.xpose.msra.mxu0 0
    %1811 = vmatprep.subr.bf16.mxu0 0
    %1812 = vmatpush2.bf16.xpose.msra.mxu0 0
    %1813 = vmatprep.subr.bf16.mxu0 0
    %1814 = vmatpush2.bf16.xpose.msra.mxu0 0
    %1815 = vmatprep.subr.bf16.mxu0 0
    %1816 = vmatpush2.bf16.xpose.msra.mxu0 0
    %1817 = vmatprep.mubr.bf16.mxu0 0
    %1818 = vmatmul.mubr.bf16.gmra.mxu0 %v1780
    %v1819 = vpop.f32.mrf.mxu0
    %v1820 = vadd.f32 %v667, %v1819
    %v1821 = vpop.f32.mrf.mxu0
    %v1822 = vpop.f32.mrf.mxu0
    %v1823 = vadd.f32 %v668, %v1822
    %v1824 = vpop.f32.mrf.mxu0
    %1825 = vdwg.mxu0
    %v1826 = vsel %vm669, %v1667, -inf
    %1827 = vmax.xlane.f32.xlu0 %v1826
    %v1828 = vpop.xlane.xlu0 %1827
    %v1829 = vsel %vm669, %v1670, -inf
    %1830 = vmax.xlane.f32.xlu0 %v1829
    %v1831 = vpop.xlane.xlu0 %1830
    %v1832 = vsel %vm669, %v1718, -inf
    %1833 = vmax.xlane.f32.xlu0 %v1832
    %v1834 = vpop.xlane.xlu0 %1833
    %v1835 = vsel %vm669, %v1721, -inf
    %1836 = vmax.xlane.f32.xlu0 %v1835
    %v1837 = vpop.xlane.xlu0 %1836
    %v1838 = vsel %vm669, %v1769, -inf
    %1839 = vmax.xlane.f32.xlu0 %v1838
    %v1840 = vpop.xlane.xlu0 %1839
    %v1841 = vsel %vm669, %v1772, -inf
    %1842 = vmax.xlane.f32.xlu0 %v1841
    %v1843 = vpop.xlane.xlu0 %1842
    %v1844 = vsel %vm669, %v1820, -inf
    %1845 = vmax.xlane.f32.xlu0 %v1844
    %v1846 = vpop.xlane.xlu0 %1845
    %v1847 = vsel %vm669, %v1823, -inf
    %1848 = vmax.xlane.f32.xlu0 %v1847
    %v1849 = vpop.xlane.xlu0 %1848
    %v1850 = vsub.f32 %v1667, %v1828
    %v1851 = vsub.f32 %v1670, %v1831
    %v1852 = vsub.f32 %v1718, %v1834
    %v1853 = vsub.f32 %v1721, %v1837
    %v1854 = vsub.f32 %v1769, %v1840
    %v1855 = vsub.f32 %v1772, %v1843
    %v1856 = vsub.f32 %v1820, %v1846
    %v1857 = vsub.f32 %v1823, %v1849
    %v1858 = vmul.f32 %v1850, 1.442695
    %v1859 = vpow.pop %v1858
    %v1860 = vmul.f32 %v1851, 1.442695
    %v1861 = vpow.pop %v1860
    %v1862 = vmul.f32 %v1852, 1.442695
    %v1863 = vpow.pop %v1862
    %v1864 = vmul.f32 %v1853, 1.442695
    %v1865 = vpow.pop %v1864
    %v1866 = vmul.f32 %v1854, 1.442695
    %v1867 = vpow.pop %v1866
    %v1868 = vmul.f32 %v1855, 1.442695
    %v1869 = vpow.pop %v1868
    %v1870 = vmul.f32 %v1856, 1.442695
    %v1871 = vpow.pop %v1870
    %v1872 = vmul.f32 %v1857, 1.442695
    %v1873 = vpow.pop %v1872
    %v1874 = vsel %vm669, %v1859, 0.0
    %1875 = vadd.xlane.f32.xlu0 %v1874
    %v1876 = vpop.xlane.xlu0 %1875
    %v1877 = vsel %vm669, %v1861, 0.0
    %1878 = vadd.xlane.f32.xlu0 %v1877
    %v1879 = vpop.xlane.xlu0 %1878
    %v1880 = vsel %vm669, %v1863, 0.0
    %1881 = vadd.xlane.f32.xlu0 %v1880
    %v1882 = vpop.xlane.xlu0 %1881
    %v1883 = vsel %vm669, %v1865, 0.0
    %1884 = vadd.xlane.f32.xlu0 %v1883
    %v1885 = vpop.xlane.xlu0 %1884
    %v1886 = vsel %vm669, %v1867, 0.0
    %1887 = vadd.xlane.f32.xlu0 %v1886
    %v1888 = vpop.xlane.xlu0 %1887
    %v1889 = vsel %vm669, %v1869, 0.0
    %1890 = vadd.xlane.f32.xlu0 %v1889
    %v1891 = vpop.xlane.xlu0 %1890
    %v1892 = vsel %vm669, %v1871, 0.0
    %1893 = vadd.xlane.f32.xlu0 %v1892
    %v1894 = vpop.xlane.xlu0 %1893
    %v1895 = vsel %vm669, %v1873, 0.0
    %1896 = vadd.xlane.f32.xlu0 %v1895
    %v1897 = vpop.xlane.xlu0 %1896
    %v1898 = vrcp.pop %v1876
    %v1899 = vrcp.pop %v1879
    %v1900 = vrcp.pop %v1882
    %v1901 = vrcp.pop %v1885
    %v1902 = vrcp.pop %v1888
    %v1903 = vrcp.pop %v1891
    %v1904 = vrcp.pop %v1894
    %v1905 = vrcp.pop %v1897
    %v1906 = vmul.f32 %v1859, %v1898
    %v1907 = vmul.f32 %v1861, %v1899
    %v1908 = vmul.f32 %v1863, %v1900
    %v1909 = vmul.f32 %v1865, %v1901
    %v1910 = vmul.f32 %v1867, %v1902
    %v1911 = vmul.f32 %v1869, %v1903
    %v1912 = vmul.f32 %v1871, %v1904
    %v1913 = vmul.f32 %v1873, %v1905
    %v1914 = vpack.c.bf16 %v1907, %v1906
    %v1915 = vpack.c.bf16 %v1909, %v1908
    %v1916 = vpack.c.bf16 %v1911, %v1910
    %v1917 = vpack.c.bf16 %v1913, %v1912
    %1918 = vrot.lane.b32.xlu0 %v627, 96
    %v1919 = vpop.permute.xlu0 %1918
    %v1922 = vsel %vm669, %v1914, 0
    %1924 = vmatprep.subr.bf16.mxu0 0
    %1925 = vmatpush1.bf16.msra.mxu0 0
    %1926 = vmatprep.subr.bf16.mxu0 0
    %1927 = vmatpush1.bf16.msra.mxu0 0
    %1928 = vmatprep.subr.bf16.mxu0 0
    %1929 = vmatpush1.bf16.msra.mxu0 0
    %1930 = vmatprep.subr.bf16.mxu0 0
    %1931 = vmatpush1.bf16.msra.mxu0 0
    %1932 = vmatprep.subr.bf16.mxu0 0
    %1933 = vmatpush1.bf16.msra.mxu0 0
    %1934 = vmatprep.subr.bf16.mxu0 0
    %1935 = vmatpush1.bf16.msra.mxu0 0
    %1936 = vmatprep.subr.bf16.mxu0 0
    %1937 = vmatpush1.bf16.msra.mxu0 0
    %1938 = vmatprep.subr.bf16.mxu0 0
    %1939 = vmatpush1.bf16.msra.mxu0 %v1919
    %1940 = vmatprep.subr.bf16.mxu0 0
    %1941 = vmatpush2.bf16.msra.mxu0 0
    %1942 = vmatprep.subr.bf16.mxu0 0
    %1943 = vmatpush2.bf16.msra.mxu0 0
    %1944 = vmatprep.subr.bf16.mxu0 0
    %1945 = vmatpush2.bf16.msra.mxu0 0
    %1946 = vmatprep.subr.bf16.mxu0 0
    %1947 = vmatpush2.bf16.msra.mxu0 0
    %1948 = vmatprep.subr.bf16.mxu0 0
    %1949 = vmatpush2.bf16.msra.mxu0 0
    %1950 = vmatprep.subr.bf16.mxu0 0
    %1951 = vmatpush2.bf16.msra.mxu0 0
    %1952 = vmatprep.subr.bf16.mxu0 0
    %1953 = vmatpush2.bf16.msra.mxu0 0
    %1954 = vmatprep.subr.bf16.mxu0 0
    %1955 = vmatpush2.bf16.msra.mxu0 0
    %1956 = vmatprep.mubr.bf16.mxu0 0
    %1957 = vmatmul.mubr.bf16.gmra.mxu0 %v1922
    %v1958 = vpop.f32.mrf.mxu0
    %v1959 = vadd.f32 0.0, %v1958
    %v1960 = vpop.f32.mrf.mxu0
    %v1961 = vpop.f32.mrf.mxu0
    %v1962 = vadd.f32 0.0, %v1961
    %v1963 = vpop.f32.mrf.mxu0
    %1964 = vdwg.mxu0
    %1965 = vrot.lane.b32.xlu0 %v628, 96
    %v1966 = vpop.permute.xlu0 %1965
    %v1969 = vsel %vm669, %v1915, 0
    %1971 = vmatprep.subr.bf16.mxu0 0
    %1972 = vmatpush1.bf16.msra.mxu0 0
    %1973 = vmatprep.subr.bf16.mxu0 0
    %1974 = vmatpush1.bf16.msra.mxu0 0
    %1975 = vmatprep.subr.bf16.mxu0 0
    %1976 = vmatpush1.bf16.msra.mxu0 0
    %1977 = vmatprep.subr.bf16.mxu0 0
    %1978 = vmatpush1.bf16.msra.mxu0 0
    %1979 = vmatprep.subr.bf16.mxu0 0
    %1980 = vmatpush1.bf16.msra.mxu0 0
    %1981 = vmatprep.subr.bf16.mxu0 0
    %1982 = vmatpush1.bf16.msra.mxu0 0
    %1983 = vmatprep.subr.bf16.mxu0 0
    %1984 = vmatpush1.bf16.msra.mxu0 0
    %1985 = vmatprep.subr.bf16.mxu0 0
    %1986 = vmatpush1.bf16.msra.mxu0 %v1966
    %1987 = vmatprep.subr.bf16.mxu0 0
    %1988 = vmatpush2.bf16.msra.mxu0 0
    %1989 = vmatprep.subr.bf16.mxu0 0
    %1990 = vmatpush2.bf16.msra.mxu0 0
    %1991 = vmatprep.subr.bf16.mxu0 0
    %1992 = vmatpush2.bf16.msra.mxu0 0
    %1993 = vmatprep.subr.bf16.mxu0 0
    %1994 = vmatpush2.bf16.msra.mxu0 0
    %1995 = vmatprep.subr.bf16.mxu0 0
    %1996 = vmatpush2.bf16.msra.mxu0 0
    %1997 = vmatprep.subr.bf16.mxu0 0
    %1998 = vmatpush2.bf16.msra.mxu0 0
    %1999 = vmatprep.subr.bf16.mxu0 0
    %2000 = vmatpush2.bf16.msra.mxu0 0
    %2001 = vmatprep.subr.bf16.mxu0 0
    %2002 = vmatpush2.bf16.msra.mxu0 0
    %2003 = vmatprep.mubr.bf16.mxu0 0
    %2004 = vmatmul.mubr.bf16.gmra.mxu0 %v1969
    %v2005 = vpop.f32.mrf.mxu0
    %v2006 = vadd.f32 0.0, %v2005
    %v2007 = vpop.f32.mrf.mxu0
    %v2008 = vpop.f32.mrf.mxu0
    %v2009 = vadd.f32 0.0, %v2008
    %v2010 = vpop.f32.mrf.mxu0
    %2011 = vdwg.mxu0
    %2012 = vrot.lane.b32.xlu0 %v629, 96
    %v2013 = vpop.permute.xlu0 %2012
    %v2016 = vsel %vm669, %v1916, 0
    %2018 = vmatprep.subr.bf16.mxu0 0
    %2019 = vmatpush1.bf16.msra.mxu0 0
    %2020 = vmatprep.subr.bf16.mxu0 0
    %2021 = vmatpush1.bf16.msra.mxu0 0
    %2022 = vmatprep.subr.bf16.mxu0 0
    %2023 = vmatpush1.bf16.msra.mxu0 0
    %2024 = vmatprep.subr.bf16.mxu0 0
    %2025 = vmatpush1.bf16.msra.mxu0 0
    %2026 = vmatprep.subr.bf16.mxu0 0
    %2027 = vmatpush1.bf16.msra.mxu0 0
    %2028 = vmatprep.subr.bf16.mxu0 0
    %2029 = vmatpush1.bf16.msra.mxu0 0
    %2030 = vmatprep.subr.bf16.mxu0 0
    %2031 = vmatpush1.bf16.msra.mxu0 0
    %2032 = vmatprep.subr.bf16.mxu0 0
    %2033 = vmatpush1.bf16.msra.mxu0 %v2013
    %2034 = vmatprep.subr.bf16.mxu0 0
    %2035 = vmatpush2.bf16.msra.mxu0 0
    %2036 = vmatprep.subr.bf16.mxu0 0
    %2037 = vmatpush2.bf16.msra.mxu0 0
    %2038 = vmatprep.subr.bf16.mxu0 0
    %2039 = vmatpush2.bf16.msra.mxu0 0
    %2040 = vmatprep.subr.bf16.mxu0 0
    %2041 = vmatpush2.bf16.msra.mxu0 0
    %2042 = vmatprep.subr.bf16.mxu0 0
    %2043 = vmatpush2.bf16.msra.mxu0 0
    %2044 = vmatprep.subr.bf16.mxu0 0
    %2045 = vmatpush2.bf16.msra.mxu0 0
    %2046 = vmatprep.subr.bf16.mxu0 0
    %2047 = vmatpush2.bf16.msra.mxu0 0
    %2048 = vmatprep.subr.bf16.mxu0 0
    %2049 = vmatpush2.bf16.msra.mxu0 0
    %2050 = vmatprep.mubr.bf16.mxu0 0
    %2051 = vmatmul.mubr.bf16.gmra.mxu0 %v2016
    %v2052 = vpop.f32.mrf.mxu0
    %v2053 = vadd.f32 0.0, %v2052
    %v2054 = vpop.f32.mrf.mxu0
    %v2055 = vpop.f32.mrf.mxu0
    %v2056 = vadd.f32 0.0, %v2055
    %v2057 = vpop.f32.mrf.mxu0
    %2058 = vdwg.mxu0
    %2059 = vrot.lane.b32.xlu0 %v630, 96
    %v2060 = vpop.permute.xlu0 %2059
    %v2063 = vsel %vm669, %v1917, 0
    %2065 = vmatprep.subr.bf16.mxu0 0
    %2066 = vmatpush1.bf16.msra.mxu0 0
    %2067 = vmatprep.subr.bf16.mxu0 0
    %2068 = vmatpush1.bf16.msra.mxu0 0
    %2069 = vmatprep.subr.bf16.mxu0 0
    %2070 = vmatpush1.bf16.msra.mxu0 0
    %2071 = vmatprep.subr.bf16.mxu0 0
    %2072 = vmatpush1.bf16.msra.mxu0 0
    %2073 = vmatprep.subr.bf16.mxu0 0
    %2074 = vmatpush1.bf16.msra.mxu0 0
    %2075 = vmatprep.subr.bf16.mxu0 0
    %2076 = vmatpush1.bf16.msra.mxu0 0
    %2077 = vmatprep.subr.bf16.mxu0 0
    %2078 = vmatpush1.bf16.msra.mxu0 0
    %2079 = vmatprep.subr.bf16.mxu0 0
    %2080 = vmatpush1.bf16.msra.mxu0 %v2060
    %2081 = vmatprep.subr.bf16.mxu0 0
    %2082 = vmatpush2.bf16.msra.mxu0 0
    %2083 = vmatprep.subr.bf16.mxu0 0
    %2084 = vmatpush2.bf16.msra.mxu0 0
    %2085 = vmatprep.subr.bf16.mxu0 0
    %2086 = vmatpush2.bf16.msra.mxu0 0
    %2087 = vmatprep.subr.bf16.mxu0 0
    %2088 = vmatpush2.bf16.msra.mxu0 0
    %2089 = vmatprep.subr.bf16.mxu0 0
    %2090 = vmatpush2.bf16.msra.mxu0 0
    %2091 = vmatprep.subr.bf16.mxu0 0
    %2092 = vmatpush2.bf16.msra.mxu0 0
    %2093 = vmatprep.subr.bf16.mxu0 0
    %2094 = vmatpush2.bf16.msra.mxu0 0
    %2095 = vmatprep.subr.bf16.mxu0 0
    %2096 = vmatpush2.bf16.msra.mxu0 0
    %2097 = vmatprep.mubr.bf16.mxu0 0
    %2098 = vmatmul.mubr.bf16.gmra.mxu0 %v2063
    %v2099 = vpop.f32.mrf.mxu0
    %v2100 = vadd.f32 0.0, %v2099
    %v2101 = vpop.f32.mrf.mxu0
    %v2102 = vpop.f32.mrf.mxu0
    %v2103 = vadd.f32 0.0, %v2102
    %v2104 = vpop.f32.mrf.mxu0
    %2105 = vdwg.mxu0
    %2106 = vrot.lane.b32.xlu0 %v619, 80
    %v2107 = vpop.permute.xlu0 %2106
    %2108 = vrot.lane.b32.xlu0 %v623, 80
    %v2109 = vpop.permute.xlu0 %2108
    %v2111 = vsel %vm669, %v2107, 0
    %v2114 = vsel %vm669, %v2109, 0
    %2116 = vmatprep.subr.bf16.mxu0 0
    %2117 = vmatpush1.bf16.xpose.msra.mxu0 0
    %2118 = vmatprep.subr.bf16.mxu0 0
    %2119 = vmatpush1.bf16.xpose.msra.mxu0 0
    %2120 = vmatprep.subr.bf16.mxu0 0
    %2121 = vmatpush1.bf16.xpose.msra.mxu0 0
    %2122 = vmatprep.subr.bf16.mxu0 0
    %2123 = vmatpush1.bf16.xpose.msra.mxu0 0
    %2124 = vmatprep.subr.bf16.mxu0 0
    %2125 = vmatpush1.bf16.xpose.msra.mxu0 0
    %2126 = vmatprep.subr.bf16.mxu0 0
    %2127 = vmatpush1.bf16.xpose.msra.mxu0 0
    %2128 = vmatprep.subr.bf16.mxu0 0
    %2129 = vmatpush1.bf16.xpose.msra.mxu0 0
    %2130 = vmatprep.subr.bf16.mxu0 0
    %2131 = vmatpush1.bf16.xpose.msra.mxu0 %v2114
    %2132 = vmatprep.subr.bf16.mxu0 0
    %2133 = vmatpush2.bf16.xpose.msra.mxu0 0
    %2134 = vmatprep.subr.bf16.mxu0 0
    %2135 = vmatpush2.bf16.xpose.msra.mxu0 0
    %2136 = vmatprep.subr.bf16.mxu0 0
    %2137 = vmatpush2.bf16.xpose.msra.mxu0 0
    %2138 = vmatprep.subr.bf16.mxu0 0
    %2139 = vmatpush2.bf16.xpose.msra.mxu0 0
    %2140 = vmatprep.subr.bf16.mxu0 0
    %2141 = vmatpush2.bf16.xpose.msra.mxu0 0
    %2142 = vmatprep.subr.bf16.mxu0 0
    %2143 = vmatpush2.bf16.xpose.msra.mxu0 0
    %2144 = vmatprep.subr.bf16.mxu0 0
    %2145 = vmatpush2.bf16.xpose.msra.mxu0 0
    %2146 = vmatprep.subr.bf16.mxu0 0
    %2147 = vmatpush2.bf16.xpose.msra.mxu0 0
    %2148 = vmatprep.mubr.bf16.mxu0 0
    %2149 = vmatmul.mubr.bf16.gmra.mxu0 %v2111
    %v2150 = vpop.f32.mrf.mxu0
    %v2151 = vadd.f32 %v661, %v2150
    %v2152 = vpop.f32.mrf.mxu0
    %v2153 = vpop.f32.mrf.mxu0
    %v2154 = vadd.f32 %v662, %v2153
    %v2155 = vpop.f32.mrf.mxu0
    %2156 = vdwg.mxu0
    %2157 = vrot.lane.b32.xlu0 %v620, 80
    %v2158 = vpop.permute.xlu0 %2157
    %2159 = vrot.lane.b32.xlu0 %v624, 80
    %v2160 = vpop.permute.xlu0 %2159
    %v2162 = vsel %vm669, %v2158, 0
    %v2165 = vsel %vm669, %v2160, 0
    %2167 = vmatprep.subr.bf16.mxu0 0
    %2168 = vmatpush1.bf16.xpose.msra.mxu0 0
    %2169 = vmatprep.subr.bf16.mxu0 0
    %2170 = vmatpush1.bf16.xpose.msra.mxu0 0
    %2171 = vmatprep.subr.bf16.mxu0 0
    %2172 = vmatpush1.bf16.xpose.msra.mxu0 0
    %2173 = vmatprep.subr.bf16.mxu0 0
    %2174 = vmatpush1.bf16.xpose.msra.mxu0 0
    %2175 = vmatprep.subr.bf16.mxu0 0
    %2176 = vmatpush1.bf16.xpose.msra.mxu0 0
    %2177 = vmatprep.subr.bf16.mxu0 0
    %2178 = vmatpush1.bf16.xpose.msra.mxu0 0
    %2179 = vmatprep.subr.bf16.mxu0 0
    %2180 = vmatpush1.bf16.xpose.msra.mxu0 0
    %2181 = vmatprep.subr.bf16.mxu0 0
    %2182 = vmatpush1.bf16.xpose.msra.mxu0 %v2165
    %2183 = vmatprep.subr.bf16.mxu0 0
    %2184 = vmatpush2.bf16.xpose.msra.mxu0 0
    %2185 = vmatprep.subr.bf16.mxu0 0
    %2186 = vmatpush2.bf16.xpose.msra.mxu0 0
    %2187 = vmatprep.subr.bf16.mxu0 0
    %2188 = vmatpush2.bf16.xpose.msra.mxu0 0
    %2189 = vmatprep.subr.bf16.mxu0 0
    %2190 = vmatpush2.bf16.xpose.msra.mxu0 0
    %2191 = vmatprep.subr.bf16.mxu0 0
    %2192 = vmatpush2.bf16.xpose.msra.mxu0 0
    %2193 = vmatprep.subr.bf16.mxu0 0
    %2194 = vmatpush2.bf16.xpose.msra.mxu0 0
    %2195 = vmatprep.subr.bf16.mxu0 0
    %2196 = vmatpush2.bf16.xpose.msra.mxu0 0
    %2197 = vmatprep.subr.bf16.mxu0 0
    %2198 = vmatpush2.bf16.xpose.msra.mxu0 0
    %2199 = vmatprep.mubr.bf16.mxu0 0
    %2200 = vmatmul.mubr.bf16.gmra.mxu0 %v2162
    %v2201 = vpop.f32.mrf.mxu0
    %v2202 = vadd.f32 %v663, %v2201
    %v2203 = vpop.f32.mrf.mxu0
    %v2204 = vpop.f32.mrf.mxu0
    %v2205 = vadd.f32 %v664, %v2204
    %v2206 = vpop.f32.mrf.mxu0
    %2207 = vdwg.mxu0
    %2208 = vrot.lane.b32.xlu0 %v621, 80
    %v2209 = vpop.permute.xlu0 %2208
    %2210 = vrot.lane.b32.xlu0 %v625, 80
    %v2211 = vpop.permute.xlu0 %2210
    %v2213 = vsel %vm669, %v2209, 0
    %v2216 = vsel %vm669, %v2211, 0
    %2218 = vmatprep.subr.bf16.mxu0 0
    %2219 = vmatpush1.bf16.xpose.msra.mxu0 0
    %2220 = vmatprep.subr.bf16.mxu0 0
    %2221 = vmatpush1.bf16.xpose.msra.mxu0 0
    %2222 = vmatprep.subr.bf16.mxu0 0
    %2223 = vmatpush1.bf16.xpose.msra.mxu0 0
    %2224 = vmatprep.subr.bf16.mxu0 0
    %2225 = vmatpush1.bf16.xpose.msra.mxu0 0
    %2226 = vmatprep.subr.bf16.mxu0 0
    %2227 = vmatpush1.bf16.xpose.msra.mxu0 0
    %2228 = vmatprep.subr.bf16.mxu0 0
    %2229 = vmatpush1.bf16.xpose.msra.mxu0 0
    %2230 = vmatprep.subr.bf16.mxu0 0
    %2231 = vmatpush1.bf16.xpose.msra.mxu0 0
    %2232 = vmatprep.subr.bf16.mxu0 0
    %2233 = vmatpush1.bf16.xpose.msra.mxu0 %v2216
    %2234 = vmatprep.subr.bf16.mxu0 0
    %2235 = vmatpush2.bf16.xpose.msra.mxu0 0
    %2236 = vmatprep.subr.bf16.mxu0 0
    %2237 = vmatpush2.bf16.xpose.msra.mxu0 0
    %2238 = vmatprep.subr.bf16.mxu0 0
    %2239 = vmatpush2.bf16.xpose.msra.mxu0 0
    %2240 = vmatprep.subr.bf16.mxu0 0
    %2241 = vmatpush2.bf16.xpose.msra.mxu0 0
    %2242 = vmatprep.subr.bf16.mxu0 0
    %2243 = vmatpush2.bf16.xpose.msra.mxu0 0
    %2244 = vmatprep.subr.bf16.mxu0 0
    %2245 = vmatpush2.bf16.xpose.msra.mxu0 0
    %2246 = vmatprep.subr.bf16.mxu0 0
    %2247 = vmatpush2.bf16.xpose.msra.mxu0 0
    %2248 = vmatprep.subr.bf16.mxu0 0
    %2249 = vmatpush2.bf16.xpose.msra.mxu0 0
    %2250 = vmatprep.mubr.bf16.mxu0 0
    %2251 = vmatmul.mubr.bf16.gmra.mxu0 %v2213
    %v2252 = vpop.f32.mrf.mxu0
    %v2253 = vadd.f32 %v665, %v2252
    %v2254 = vpop.f32.mrf.mxu0
    %v2255 = vpop.f32.mrf.mxu0
    %v2256 = vadd.f32 %v666, %v2255
    %v2257 = vpop.f32.mrf.mxu0
    %2258 = vdwg.mxu0
    %2259 = vrot.lane.b32.xlu0 %v622, 80
    %v2260 = vpop.permute.xlu0 %2259
    %2261 = vrot.lane.b32.xlu0 %v626, 80
    %v2262 = vpop.permute.xlu0 %2261
    %v2264 = vsel %vm669, %v2260, 0
    %v2267 = vsel %vm669, %v2262, 0
    %2269 = vmatprep.subr.bf16.mxu0 0
    %2270 = vmatpush1.bf16.xpose.msra.mxu0 0
    %2271 = vmatprep.subr.bf16.mxu0 0
    %2272 = vmatpush1.bf16.xpose.msra.mxu0 0
    %2273 = vmatprep.subr.bf16.mxu0 0
    %2274 = vmatpush1.bf16.xpose.msra.mxu0 0
    %2275 = vmatprep.subr.bf16.mxu0 0
    %2276 = vmatpush1.bf16.xpose.msra.mxu0 0
    %2277 = vmatprep.subr.bf16.mxu0 0
    %2278 = vmatpush1.bf16.xpose.msra.mxu0 0
    %2279 = vmatprep.subr.bf16.mxu0 0
    %2280 = vmatpush1.bf16.xpose.msra.mxu0 0
    %2281 = vmatprep.subr.bf16.mxu0 0
    %2282 = vmatpush1.bf16.xpose.msra.mxu0 0
    %2283 = vmatprep.subr.bf16.mxu0 0
    %2284 = vmatpush1.bf16.xpose.msra.mxu0 %v2267
    %2285 = vmatprep.subr.bf16.mxu0 0
    %2286 = vmatpush2.bf16.xpose.msra.mxu0 0
    %2287 = vmatprep.subr.bf16.mxu0 0
    %2288 = vmatpush2.bf16.xpose.msra.mxu0 0
    %2289 = vmatprep.subr.bf16.mxu0 0
    %2290 = vmatpush2.bf16.xpose.msra.mxu0 0
    %2291 = vmatprep.subr.bf16.mxu0 0
    %2292 = vmatpush2.bf16.xpose.msra.mxu0 0
    %2293 = vmatprep.subr.bf16.mxu0 0
    %2294 = vmatpush2.bf16.xpose.msra.mxu0 0
    %2295 = vmatprep.subr.bf16.mxu0 0
    %2296 = vmatpush2.bf16.xpose.msra.mxu0 0
    %2297 = vmatprep.subr.bf16.mxu0 0
    %2298 = vmatpush2.bf16.xpose.msra.mxu0 0
    %2299 = vmatprep.subr.bf16.mxu0 0
    %2300 = vmatpush2.bf16.xpose.msra.mxu0 0
    %2301 = vmatprep.mubr.bf16.mxu0 0
    %2302 = vmatmul.mubr.bf16.gmra.mxu0 %v2264
    %v2303 = vpop.f32.mrf.mxu0
    %v2304 = vadd.f32 %v667, %v2303
    %v2305 = vpop.f32.mrf.mxu0
    %v2306 = vpop.f32.mrf.mxu0
    %v2307 = vadd.f32 %v668, %v2306
    %v2308 = vpop.f32.mrf.mxu0
    %2309 = vdwg.mxu0
    %v2310 = vsel %vm669, %v2151, -inf
    %2311 = vmax.xlane.f32.xlu0 %v2310
    %v2312 = vpop.xlane.xlu0 %2311
    %v2313 = vsel %vm669, %v2154, -inf
    %2314 = vmax.xlane.f32.xlu0 %v2313
    %v2315 = vpop.xlane.xlu0 %2314
    %v2316 = vsel %vm669, %v2202, -inf
    %2317 = vmax.xlane.f32.xlu0 %v2316
    %v2318 = vpop.xlane.xlu0 %2317
    %v2319 = vsel %vm669, %v2205, -inf
    %2320 = vmax.xlane.f32.xlu0 %v2319
    %v2321 = vpop.xlane.xlu0 %2320
    %v2322 = vsel %vm669, %v2253, -inf
    %2323 = vmax.xlane.f32.xlu0 %v2322
    %v2324 = vpop.xlane.xlu0 %2323
    %v2325 = vsel %vm669, %v2256, -inf
    %2326 = vmax.xlane.f32.xlu0 %v2325
    %v2327 = vpop.xlane.xlu0 %2326
    %v2328 = vsel %vm669, %v2304, -inf
    %2329 = vmax.xlane.f32.xlu0 %v2328
    %v2330 = vpop.xlane.xlu0 %2329
    %v2331 = vsel %vm669, %v2307, -inf
    %2332 = vmax.xlane.f32.xlu0 %v2331
    %v2333 = vpop.xlane.xlu0 %2332
    %v2334 = vsub.f32 %v2151, %v2312
    %v2335 = vsub.f32 %v2154, %v2315
    %v2336 = vsub.f32 %v2202, %v2318
    %v2337 = vsub.f32 %v2205, %v2321
    %v2338 = vsub.f32 %v2253, %v2324
    %v2339 = vsub.f32 %v2256, %v2327
    %v2340 = vsub.f32 %v2304, %v2330
    %v2341 = vsub.f32 %v2307, %v2333
    %v2342 = vmul.f32 %v2334, 1.442695
    %v2343 = vpow.pop %v2342
    %v2344 = vmul.f32 %v2335, 1.442695
    %v2345 = vpow.pop %v2344
    %v2346 = vmul.f32 %v2336, 1.442695
    %v2347 = vpow.pop %v2346
    %v2348 = vmul.f32 %v2337, 1.442695
    %v2349 = vpow.pop %v2348
    %v2350 = vmul.f32 %v2338, 1.442695
    %v2351 = vpow.pop %v2350
    %v2352 = vmul.f32 %v2339, 1.442695
    %v2353 = vpow.pop %v2352
    %v2354 = vmul.f32 %v2340, 1.442695
    %v2355 = vpow.pop %v2354
    %v2356 = vmul.f32 %v2341, 1.442695
    %v2357 = vpow.pop %v2356
    %v2358 = vsel %vm669, %v2343, 0.0
    %2359 = vadd.xlane.f32.xlu0 %v2358
    %v2360 = vpop.xlane.xlu0 %2359
    %v2361 = vsel %vm669, %v2345, 0.0
    %2362 = vadd.xlane.f32.xlu0 %v2361
    %v2363 = vpop.xlane.xlu0 %2362
    %v2364 = vsel %vm669, %v2347, 0.0
    %2365 = vadd.xlane.f32.xlu0 %v2364
    %v2366 = vpop.xlane.xlu0 %2365
    %v2367 = vsel %vm669, %v2349, 0.0
    %2368 = vadd.xlane.f32.xlu0 %v2367
    %v2369 = vpop.xlane.xlu0 %2368
    %v2370 = vsel %vm669, %v2351, 0.0
    %2371 = vadd.xlane.f32.xlu0 %v2370
    %v2372 = vpop.xlane.xlu0 %2371
    %v2373 = vsel %vm669, %v2353, 0.0
    %2374 = vadd.xlane.f32.xlu0 %v2373
    %v2375 = vpop.xlane.xlu0 %2374
    %v2376 = vsel %vm669, %v2355, 0.0
    %2377 = vadd.xlane.f32.xlu0 %v2376
    %v2378 = vpop.xlane.xlu0 %2377
    %v2379 = vsel %vm669, %v2357, 0.0
    %2380 = vadd.xlane.f32.xlu0 %v2379
    %v2381 = vpop.xlane.xlu0 %2380
    %v2382 = vrcp.pop %v2360
    %v2383 = vrcp.pop %v2363
    %v2384 = vrcp.pop %v2366
    %v2385 = vrcp.pop %v2369
    %v2386 = vrcp.pop %v2372
    %v2387 = vrcp.pop %v2375
    %v2388 = vrcp.pop %v2378
    %v2389 = vrcp.pop %v2381
    %v2390 = vmul.f32 %v2343, %v2382
    %v2391 = vmul.f32 %v2345, %v2383
    %v2392 = vmul.f32 %v2347, %v2384
    %v2393 = vmul.f32 %v2349, %v2385
    %v2394 = vmul.f32 %v2351, %v2386
    %v2395 = vmul.f32 %v2353, %v2387
    %v2396 = vmul.f32 %v2355, %v2388
    %v2397 = vmul.f32 %v2357, %v2389
    %v2398 = vpack.c.bf16 %v2391, %v2390
    %v2399 = vpack.c.bf16 %v2393, %v2392
    %v2400 = vpack.c.bf16 %v2395, %v2394
    %v2401 = vpack.c.bf16 %v2397, %v2396
    %2402 = vrot.lane.b32.xlu0 %v627, 80
    %v2403 = vpop.permute.xlu0 %2402
    %v2406 = vsel %vm669, %v2398, 0
    %2408 = vmatprep.subr.bf16.mxu0 0
    %2409 = vmatpush1.bf16.msra.mxu0 0
    %2410 = vmatprep.subr.bf16.mxu0 0
    %2411 = vmatpush1.bf16.msra.mxu0 0
    %2412 = vmatprep.subr.bf16.mxu0 0
    %2413 = vmatpush1.bf16.msra.mxu0 0
    %2414 = vmatprep.subr.bf16.mxu0 0
    %2415 = vmatpush1.bf16.msra.mxu0 0
    %2416 = vmatprep.subr.bf16.mxu0 0
    %2417 = vmatpush1.bf16.msra.mxu0 0
    %2418 = vmatprep.subr.bf16.mxu0 0
    %2419 = vmatpush1.bf16.msra.mxu0 0
    %2420 = vmatprep.subr.bf16.mxu0 0
    %2421 = vmatpush1.bf16.msra.mxu0 0
    %2422 = vmatprep.subr.bf16.mxu0 0
    %2423 = vmatpush1.bf16.msra.mxu0 %v2403
    %2424 = vmatprep.subr.bf16.mxu0 0
    %2425 = vmatpush2.bf16.msra.mxu0 0
    %2426 = vmatprep.subr.bf16.mxu0 0
    %2427 = vmatpush2.bf16.msra.mxu0 0
    %2428 = vmatprep.subr.bf16.mxu0 0
    %2429 = vmatpush2.bf16.msra.mxu0 0
    %2430 = vmatprep.subr.bf16.mxu0 0
    %2431 = vmatpush2.bf16.msra.mxu0 0
    %2432 = vmatprep.subr.bf16.mxu0 0
    %2433 = vmatpush2.bf16.msra.mxu0 0
    %2434 = vmatprep.subr.bf16.mxu0 0
    %2435 = vmatpush2.bf16.msra.mxu0 0
    %2436 = vmatprep.subr.bf16.mxu0 0
    %2437 = vmatpush2.bf16.msra.mxu0 0
    %2438 = vmatprep.subr.bf16.mxu0 0
    %2439 = vmatpush2.bf16.msra.mxu0 0
    %2440 = vmatprep.mubr.bf16.mxu0 0
    %2441 = vmatmul.mubr.bf16.gmra.mxu0 %v2406
    %v2442 = vpop.f32.mrf.mxu0
    %v2443 = vadd.f32 0.0, %v2442
    %v2444 = vpop.f32.mrf.mxu0
    %v2445 = vpop.f32.mrf.mxu0
    %v2446 = vadd.f32 0.0, %v2445
    %v2447 = vpop.f32.mrf.mxu0
    %2448 = vdwg.mxu0
    %2449 = vrot.lane.b32.xlu0 %v628, 80
    %v2450 = vpop.permute.xlu0 %2449
    %v2453 = vsel %vm669, %v2399, 0
    %2455 = vmatprep.subr.bf16.mxu0 0
    %2456 = vmatpush1.bf16.msra.mxu0 0
    %2457 = vmatprep.subr.bf16.mxu0 0
    %2458 = vmatpush1.bf16.msra.mxu0 0
    %2459 = vmatprep.subr.bf16.mxu0 0
    %2460 = vmatpush1.bf16.msra.mxu0 0
    %2461 = vmatprep.subr.bf16.mxu0 0
    %2462 = vmatpush1.bf16.msra.mxu0 0
    %2463 = vmatprep.subr.bf16.mxu0 0
    %2464 = vmatpush1.bf16.msra.mxu0 0
    %2465 = vmatprep.subr.bf16.mxu0 0
    %2466 = vmatpush1.bf16.msra.mxu0 0
    %2467 = vmatprep.subr.bf16.mxu0 0
    %2468 = vmatpush1.bf16.msra.mxu0 0
    %2469 = vmatprep.subr.bf16.mxu0 0
    %2470 = vmatpush1.bf16.msra.mxu0 %v2450
    %2471 = vmatprep.subr.bf16.mxu0 0
    %2472 = vmatpush2.bf16.msra.mxu0 0
    %2473 = vmatprep.subr.bf16.mxu0 0
    %2474 = vmatpush2.bf16.msra.mxu0 0
    %2475 = vmatprep.subr.bf16.mxu0 0
    %2476 = vmatpush2.bf16.msra.mxu0 0
    %2477 = vmatprep.subr.bf16.mxu0 0
    %2478 = vmatpush2.bf16.msra.mxu0 0
    %2479 = vmatprep.subr.bf16.mxu0 0
    %2480 = vmatpush2.bf16.msra.mxu0 0
    %2481 = vmatprep.subr.bf16.mxu0 0
    %2482 = vmatpush2.bf16.msra.mxu0 0
    %2483 = vmatprep.subr.bf16.mxu0 0
    %2484 = vmatpush2.bf16.msra.mxu0 0
    %2485 = vmatprep.subr.bf16.mxu0 0
    %2486 = vmatpush2.bf16.msra.mxu0 0
    %2487 = vmatprep.mubr.bf16.mxu0 0
    %2488 = vmatmul.mubr.bf16.gmra.mxu0 %v2453
    %v2489 = vpop.f32.mrf.mxu0
    %v2490 = vadd.f32 0.0, %v2489
    %v2491 = vpop.f32.mrf.mxu0
    %v2492 = vpop.f32.mrf.mxu0
    %v2493 = vadd.f32 0.0, %v2492
    %v2494 = vpop.f32.mrf.mxu0
    %2495 = vdwg.mxu0
    %2496 = vrot.lane.b32.xlu0 %v629, 80
    %v2497 = vpop.permute.xlu0 %2496
    %v2500 = vsel %vm669, %v2400, 0
    %2502 = vmatprep.subr.bf16.mxu0 0
    %2503 = vmatpush1.bf16.msra.mxu0 0
    %2504 = vmatprep.subr.bf16.mxu0 0
    %2505 = vmatpush1.bf16.msra.mxu0 0
    %2506 = vmatprep.subr.bf16.mxu0 0
    %2507 = vmatpush1.bf16.msra.mxu0 0
    %2508 = vmatprep.subr.bf16.mxu0 0
    %2509 = vmatpush1.bf16.msra.mxu0 0
    %2510 = vmatprep.subr.bf16.mxu0 0
    %2511 = vmatpush1.bf16.msra.mxu0 0
    %2512 = vmatprep.subr.bf16.mxu0 0
    %2513 = vmatpush1.bf16.msra.mxu0 0
    %2514 = vmatprep.subr.bf16.mxu0 0
    %2515 = vmatpush1.bf16.msra.mxu0 0
    %2516 = vmatprep.subr.bf16.mxu0 0
    %2517 = vmatpush1.bf16.msra.mxu0 %v2497
    %2518 = vmatprep.subr.bf16.mxu0 0
    %2519 = vmatpush2.bf16.msra.mxu0 0
    %2520 = vmatprep.subr.bf16.mxu0 0
    %2521 = vmatpush2.bf16.msra.mxu0 0
    %2522 = vmatprep.subr.bf16.mxu0 0
    %2523 = vmatpush2.bf16.msra.mxu0 0
    %2524 = vmatprep.subr.bf16.mxu0 0
    %2525 = vmatpush2.bf16.msra.mxu0 0
    %2526 = vmatprep.subr.bf16.mxu0 0
    %2527 = vmatpush2.bf16.msra.mxu0 0
    %2528 = vmatprep.subr.bf16.mxu0 0
    %2529 = vmatpush2.bf16.msra.mxu0 0
    %2530 = vmatprep.subr.bf16.mxu0 0
    %2531 = vmatpush2.bf16.msra.mxu0 0
    %2532 = vmatprep.subr.bf16.mxu0 0
    %2533 = vmatpush2.bf16.msra.mxu0 0
    %2534 = vmatprep.mubr.bf16.mxu0 0
    %2535 = vmatmul.mubr.bf16.gmra.mxu0 %v2500
    %v2536 = vpop.f32.mrf.mxu0
    %v2537 = vadd.f32 0.0, %v2536
    %v2538 = vpop.f32.mrf.mxu0
    %v2539 = vpop.f32.mrf.mxu0
    %v2540 = vadd.f32 0.0, %v2539
    %v2541 = vpop.f32.mrf.mxu0
    %2542 = vdwg.mxu0
    %2543 = vrot.lane.b32.xlu0 %v630, 80
    %v2544 = vpop.permute.xlu0 %2543
    %v2547 = vsel %vm669, %v2401, 0
    %2549 = vmatprep.subr.bf16.mxu0 0
    %2550 = vmatpush1.bf16.msra.mxu0 0
    %2551 = vmatprep.subr.bf16.mxu0 0
    %2552 = vmatpush1.bf16.msra.mxu0 0
    %2553 = vmatprep.subr.bf16.mxu0 0
    %2554 = vmatpush1.bf16.msra.mxu0 0
    %2555 = vmatprep.subr.bf16.mxu0 0
    %2556 = vmatpush1.bf16.msra.mxu0 0
    %2557 = vmatprep.subr.bf16.mxu0 0
    %2558 = vmatpush1.bf16.msra.mxu0 0
    %2559 = vmatprep.subr.bf16.mxu0 0
    %2560 = vmatpush1.bf16.msra.mxu0 0
    %2561 = vmatprep.subr.bf16.mxu0 0
    %2562 = vmatpush1.bf16.msra.mxu0 0
    %2563 = vmatprep.subr.bf16.mxu0 0
    %2564 = vmatpush1.bf16.msra.mxu0 %v2544
    %2565 = vmatprep.subr.bf16.mxu0 0
    %2566 = vmatpush2.bf16.msra.mxu0 0
    %2567 = vmatprep.subr.bf16.mxu0 0
    %2568 = vmatpush2.bf16.msra.mxu0 0
    %2569 = vmatprep.subr.bf16.mxu0 0
    %2570 = vmatpush2.bf16.msra.mxu0 0
    %2571 = vmatprep.subr.bf16.mxu0 0
    %2572 = vmatpush2.bf16.msra.mxu0 0
    %2573 = vmatprep.subr.bf16.mxu0 0
    %2574 = vmatpush2.bf16.msra.mxu0 0
    %2575 = vmatprep.subr.bf16.mxu0 0
    %2576 = vmatpush2.bf16.msra.mxu0 0
    %2577 = vmatprep.subr.bf16.mxu0 0
    %2578 = vmatpush2.bf16.msra.mxu0 0
    %2579 = vmatprep.subr.bf16.mxu0 0
    %2580 = vmatpush2.bf16.msra.mxu0 0
    %2581 = vmatprep.mubr.bf16.mxu0 0
    %2582 = vmatmul.mubr.bf16.gmra.mxu0 %v2547
    %v2583 = vpop.f32.mrf.mxu0
    %v2584 = vadd.f32 0.0, %v2583
    %v2585 = vpop.f32.mrf.mxu0
    %v2586 = vpop.f32.mrf.mxu0
    %v2587 = vadd.f32 0.0, %v2586
    %v2588 = vpop.f32.mrf.mxu0
    %2589 = vdwg.mxu0
    %2590 = vrot.lane.b32.xlu0 %v619, 64
    %v2591 = vpop.permute.xlu0 %2590
    %2592 = vrot.lane.b32.xlu0 %v623, 64
    %v2593 = vpop.permute.xlu0 %2592
    %v2595 = vsel %vm669, %v2591, 0
    %v2598 = vsel %vm669, %v2593, 0
    %2600 = vmatprep.subr.bf16.mxu0 0
    %2601 = vmatpush1.bf16.xpose.msra.mxu0 0
    %2602 = vmatprep.subr.bf16.mxu0 0
    %2603 = vmatpush1.bf16.xpose.msra.mxu0 0
    %2604 = vmatprep.subr.bf16.mxu0 0
    %2605 = vmatpush1.bf16.xpose.msra.mxu0 0
    %2606 = vmatprep.subr.bf16.mxu0 0
    %2607 = vmatpush1.bf16.xpose.msra.mxu0 0
    %2608 = vmatprep.subr.bf16.mxu0 0
    %2609 = vmatpush1.bf16.xpose.msra.mxu0 0
    %2610 = vmatprep.subr.bf16.mxu0 0
    %2611 = vmatpush1.bf16.xpose.msra.mxu0 0
    %2612 = vmatprep.subr.bf16.mxu0 0
    %2613 = vmatpush1.bf16.xpose.msra.mxu0 0
    %2614 = vmatprep.subr.bf16.mxu0 0
    %2615 = vmatpush1.bf16.xpose.msra.mxu0 %v2598
    %2616 = vmatprep.subr.bf16.mxu0 0
    %2617 = vmatpush2.bf16.xpose.msra.mxu0 0
    %2618 = vmatprep.subr.bf16.mxu0 0
    %2619 = vmatpush2.bf16.xpose.msra.mxu0 0
    %2620 = vmatprep.subr.bf16.mxu0 0
    %2621 = vmatpush2.bf16.xpose.msra.mxu0 0
    %2622 = vmatprep.subr.bf16.mxu0 0
    %2623 = vmatpush2.bf16.xpose.msra.mxu0 0
    %2624 = vmatprep.subr.bf16.mxu0 0
    %2625 = vmatpush2.bf16.xpose.msra.mxu0 0
    %2626 = vmatprep.subr.bf16.mxu0 0
    %2627 = vmatpush2.bf16.xpose.msra.mxu0 0
    %2628 = vmatprep.subr.bf16.mxu0 0
    %2629 = vmatpush2.bf16.xpose.msra.mxu0 0
    %2630 = vmatprep.subr.bf16.mxu0 0
    %2631 = vmatpush2.bf16.xpose.msra.mxu0 0
    %2632 = vmatprep.mubr.bf16.mxu0 0
    %2633 = vmatmul.mubr.bf16.gmra.mxu0 %v2595
    %v2634 = vpop.f32.mrf.mxu0
    %v2635 = vadd.f32 %v661, %v2634
    %v2636 = vpop.f32.mrf.mxu0
    %v2637 = vpop.f32.mrf.mxu0
    %v2638 = vadd.f32 %v662, %v2637
    %v2639 = vpop.f32.mrf.mxu0
    %2640 = vdwg.mxu0
    %2641 = vrot.lane.b32.xlu0 %v620, 64
    %v2642 = vpop.permute.xlu0 %2641
    %2643 = vrot.lane.b32.xlu0 %v624, 64
    %v2644 = vpop.permute.xlu0 %2643
    %v2646 = vsel %vm669, %v2642, 0
    %v2649 = vsel %vm669, %v2644, 0
    %2651 = vmatprep.subr.bf16.mxu0 0
    %2652 = vmatpush1.bf16.xpose.msra.mxu0 0
    %2653 = vmatprep.subr.bf16.mxu0 0
    %2654 = vmatpush1.bf16.xpose.msra.mxu0 0
    %2655 = vmatprep.subr.bf16.mxu0 0
    %2656 = vmatpush1.bf16.xpose.msra.mxu0 0
    %2657 = vmatprep.subr.bf16.mxu0 0
    %2658 = vmatpush1.bf16.xpose.msra.mxu0 0
    %2659 = vmatprep.subr.bf16.mxu0 0
    %2660 = vmatpush1.bf16.xpose.msra.mxu0 0
    %2661 = vmatprep.subr.bf16.mxu0 0
    %2662 = vmatpush1.bf16.xpose.msra.mxu0 0
    %2663 = vmatprep.subr.bf16.mxu0 0
    %2664 = vmatpush1.bf16.xpose.msra.mxu0 0
    %2665 = vmatprep.subr.bf16.mxu0 0
    %2666 = vmatpush1.bf16.xpose.msra.mxu0 %v2649
    %2667 = vmatprep.subr.bf16.mxu0 0
    %2668 = vmatpush2.bf16.xpose.msra.mxu0 0
    %2669 = vmatprep.subr.bf16.mxu0 0
    %2670 = vmatpush2.bf16.xpose.msra.mxu0 0
    %2671 = vmatprep.subr.bf16.mxu0 0
    %2672 = vmatpush2.bf16.xpose.msra.mxu0 0
    %2673 = vmatprep.subr.bf16.mxu0 0
    %2674 = vmatpush2.bf16.xpose.msra.mxu0 0
    %2675 = vmatprep.subr.bf16.mxu0 0
    %2676 = vmatpush2.bf16.xpose.msra.mxu0 0
    %2677 = vmatprep.subr.bf16.mxu0 0
    %2678 = vmatpush2.bf16.xpose.msra.mxu0 0
    %2679 = vmatprep.subr.bf16.mxu0 0
    %2680 = vmatpush2.bf16.xpose.msra.mxu0 0
    %2681 = vmatprep.subr.bf16.mxu0 0
    %2682 = vmatpush2.bf16.xpose.msra.mxu0 0
    %2683 = vmatprep.mubr.bf16.mxu0 0
    %2684 = vmatmul.mubr.bf16.gmra.mxu0 %v2646
    %v2685 = vpop.f32.mrf.mxu0
    %v2686 = vadd.f32 %v663, %v2685
    %v2687 = vpop.f32.mrf.mxu0
    %v2688 = vpop.f32.mrf.mxu0
    %v2689 = vadd.f32 %v664, %v2688
    %v2690 = vpop.f32.mrf.mxu0
    %2691 = vdwg.mxu0
    %2692 = vrot.lane.b32.xlu0 %v621, 64
    %v2693 = vpop.permute.xlu0 %2692
    %2694 = vrot.lane.b32.xlu0 %v625, 64
    %v2695 = vpop.permute.xlu0 %2694
    %v2697 = vsel %vm669, %v2693, 0
    %v2700 = vsel %vm669, %v2695, 0
    %2702 = vmatprep.subr.bf16.mxu0 0
    %2703 = vmatpush1.bf16.xpose.msra.mxu0 0
    %2704 = vmatprep.subr.bf16.mxu0 0
    %2705 = vmatpush1.bf16.xpose.msra.mxu0 0
    %2706 = vmatprep.subr.bf16.mxu0 0
    %2707 = vmatpush1.bf16.xpose.msra.mxu0 0
    %2708 = vmatprep.subr.bf16.mxu0 0
    %2709 = vmatpush1.bf16.xpose.msra.mxu0 0
    %2710 = vmatprep.subr.bf16.mxu0 0
    %2711 = vmatpush1.bf16.xpose.msra.mxu0 0
    %2712 = vmatprep.subr.bf16.mxu0 0
    %2713 = vmatpush1.bf16.xpose.msra.mxu0 0
    %2714 = vmatprep.subr.bf16.mxu0 0
    %2715 = vmatpush1.bf16.xpose.msra.mxu0 0
    %2716 = vmatprep.subr.bf16.mxu0 0
    %2717 = vmatpush1.bf16.xpose.msra.mxu0 %v2700
    %2718 = vmatprep.subr.bf16.mxu0 0
    %2719 = vmatpush2.bf16.xpose.msra.mxu0 0
    %2720 = vmatprep.subr.bf16.mxu0 0
    %2721 = vmatpush2.bf16.xpose.msra.mxu0 0
    %2722 = vmatprep.subr.bf16.mxu0 0
    %2723 = vmatpush2.bf16.xpose.msra.mxu0 0
    %2724 = vmatprep.subr.bf16.mxu0 0
    %2725 = vmatpush2.bf16.xpose.msra.mxu0 0
    %2726 = vmatprep.subr.bf16.mxu0 0
    %2727 = vmatpush2.bf16.xpose.msra.mxu0 0
    %2728 = vmatprep.subr.bf16.mxu0 0
    %2729 = vmatpush2.bf16.xpose.msra.mxu0 0
    %2730 = vmatprep.subr.bf16.mxu0 0
    %2731 = vmatpush2.bf16.xpose.msra.mxu0 0
    %2732 = vmatprep.subr.bf16.mxu0 0
    %2733 = vmatpush2.bf16.xpose.msra.mxu0 0
    %2734 = vmatprep.mubr.bf16.mxu0 0
    %2735 = vmatmul.mubr.bf16.gmra.mxu0 %v2697
    %v2736 = vpop.f32.mrf.mxu0
    %v2737 = vadd.f32 %v665, %v2736
    %v2738 = vpop.f32.mrf.mxu0
    %v2739 = vpop.f32.mrf.mxu0
    %v2740 = vadd.f32 %v666, %v2739
    %v2741 = vpop.f32.mrf.mxu0
    %2742 = vdwg.mxu0
    %2743 = vrot.lane.b32.xlu0 %v622, 64
    %v2744 = vpop.permute.xlu0 %2743
    %2745 = vrot.lane.b32.xlu0 %v626, 64
    %v2746 = vpop.permute.xlu0 %2745
    %v2748 = vsel %vm669, %v2744, 0
    %v2751 = vsel %vm669, %v2746, 0
    %2753 = vmatprep.subr.bf16.mxu0 0
    %2754 = vmatpush1.bf16.xpose.msra.mxu0 0
    %2755 = vmatprep.subr.bf16.mxu0 0
    %2756 = vmatpush1.bf16.xpose.msra.mxu0 0
    %2757 = vmatprep.subr.bf16.mxu0 0
    %2758 = vmatpush1.bf16.xpose.msra.mxu0 0
    %2759 = vmatprep.subr.bf16.mxu0 0
    %2760 = vmatpush1.bf16.xpose.msra.mxu0 0
    %2761 = vmatprep.subr.bf16.mxu0 0
    %2762 = vmatpush1.bf16.xpose.msra.mxu0 0
    %2763 = vmatprep.subr.bf16.mxu0 0
    %2764 = vmatpush1.bf16.xpose.msra.mxu0 0
    %2765 = vmatprep.subr.bf16.mxu0 0
    %2766 = vmatpush1.bf16.xpose.msra.mxu0 0
    %2767 = vmatprep.subr.bf16.mxu0 0
    %2768 = vmatpush1.bf16.xpose.msra.mxu0 %v2751
    %2769 = vmatprep.subr.bf16.mxu0 0
    %2770 = vmatpush2.bf16.xpose.msra.mxu0 0
    %2771 = vmatprep.subr.bf16.mxu0 0
    %2772 = vmatpush2.bf16.xpose.msra.mxu0 0
    %2773 = vmatprep.subr.bf16.mxu0 0
    %2774 = vmatpush2.bf16.xpose.msra.mxu0 0
    %2775 = vmatprep.subr.bf16.mxu0 0
    %2776 = vmatpush2.bf16.xpose.msra.mxu0 0
    %2777 = vmatprep.subr.bf16.mxu0 0
    %2778 = vmatpush2.bf16.xpose.msra.mxu0 0
    %2779 = vmatprep.subr.bf16.mxu0 0
    %2780 = vmatpush2.bf16.xpose.msra.mxu0 0
    %2781 = vmatprep.subr.bf16.mxu0 0
    %2782 = vmatpush2.bf16.xpose.msra.mxu0 0
    %2783 = vmatprep.subr.bf16.mxu0 0
    %2784 = vmatpush2.bf16.xpose.msra.mxu0 0
    %2785 = vmatprep.mubr.bf16.mxu0 0
    %2786 = vmatmul.mubr.bf16.gmra.mxu0 %v2748
    %v2787 = vpop.f32.mrf.mxu0
    %v2788 = vadd.f32 %v667, %v2787
    %v2789 = vpop.f32.mrf.mxu0
    %v2790 = vpop.f32.mrf.mxu0
    %v2791 = vadd.f32 %v668, %v2790
    %v2792 = vpop.f32.mrf.mxu0
    %2793 = vdwg.mxu0
    %v2794 = vsel %vm669, %v2635, -inf
    %2795 = vmax.xlane.f32.xlu0 %v2794
    %v2796 = vpop.xlane.xlu0 %2795
    %v2797 = vsel %vm669, %v2638, -inf
    %2798 = vmax.xlane.f32.xlu0 %v2797
    %v2799 = vpop.xlane.xlu0 %2798
    %v2800 = vsel %vm669, %v2686, -inf
    %2801 = vmax.xlane.f32.xlu0 %v2800
    %v2802 = vpop.xlane.xlu0 %2801
    %v2803 = vsel %vm669, %v2689, -inf
    %2804 = vmax.xlane.f32.xlu0 %v2803
    %v2805 = vpop.xlane.xlu0 %2804
    %v2806 = vsel %vm669, %v2737, -inf
    %2807 = vmax.xlane.f32.xlu0 %v2806
    %v2808 = vpop.xlane.xlu0 %2807
    %v2809 = vsel %vm669, %v2740, -inf
    %2810 = vmax.xlane.f32.xlu0 %v2809
    %v2811 = vpop.xlane.xlu0 %2810
    %v2812 = vsel %vm669, %v2788, -inf
    %2813 = vmax.xlane.f32.xlu0 %v2812
    %v2814 = vpop.xlane.xlu0 %2813
    %v2815 = vsel %vm669, %v2791, -inf
    %2816 = vmax.xlane.f32.xlu0 %v2815
    %v2817 = vpop.xlane.xlu0 %2816
    %v2818 = vsub.f32 %v2635, %v2796
    %v2819 = vsub.f32 %v2638, %v2799
    %v2820 = vsub.f32 %v2686, %v2802
    %v2821 = vsub.f32 %v2689, %v2805
    %v2822 = vsub.f32 %v2737, %v2808
    %v2823 = vsub.f32 %v2740, %v2811
    %v2824 = vsub.f32 %v2788, %v2814
    %v2825 = vsub.f32 %v2791, %v2817
    %v2826 = vmul.f32 %v2818, 1.442695
    %v2827 = vpow.pop %v2826
    %v2828 = vmul.f32 %v2819, 1.442695
    %v2829 = vpow.pop %v2828
    %v2830 = vmul.f32 %v2820, 1.442695
    %v2831 = vpow.pop %v2830
    %v2832 = vmul.f32 %v2821, 1.442695
    %v2833 = vpow.pop %v2832
    %v2834 = vmul.f32 %v2822, 1.442695
    %v2835 = vpow.pop %v2834
    %v2836 = vmul.f32 %v2823, 1.442695
    %v2837 = vpow.pop %v2836
    %v2838 = vmul.f32 %v2824, 1.442695
    %v2839 = vpow.pop %v2838
    %v2840 = vmul.f32 %v2825, 1.442695
    %v2841 = vpow.pop %v2840
    %v2842 = vsel %vm669, %v2827, 0.0
    %2843 = vadd.xlane.f32.xlu0 %v2842
    %v2844 = vpop.xlane.xlu0 %2843
    %v2845 = vsel %vm669, %v2829, 0.0
    %2846 = vadd.xlane.f32.xlu0 %v2845
    %v2847 = vpop.xlane.xlu0 %2846
    %v2848 = vsel %vm669, %v2831, 0.0
    %2849 = vadd.xlane.f32.xlu0 %v2848
    %v2850 = vpop.xlane.xlu0 %2849
    %v2851 = vsel %vm669, %v2833, 0.0
    %2852 = vadd.xlane.f32.xlu0 %v2851
    %v2853 = vpop.xlane.xlu0 %2852
    %v2854 = vsel %vm669, %v2835, 0.0
    %2855 = vadd.xlane.f32.xlu0 %v2854
    %v2856 = vpop.xlane.xlu0 %2855
    %v2857 = vsel %vm669, %v2837, 0.0
    %2858 = vadd.xlane.f32.xlu0 %v2857
    %v2859 = vpop.xlane.xlu0 %2858
    %v2860 = vsel %vm669, %v2839, 0.0
    %2861 = vadd.xlane.f32.xlu0 %v2860
    %v2862 = vpop.xlane.xlu0 %2861
    %v2863 = vsel %vm669, %v2841, 0.0
    %2864 = vadd.xlane.f32.xlu0 %v2863
    %v2865 = vpop.xlane.xlu0 %2864
    %v2866 = vrcp.pop %v2844
    %v2867 = vrcp.pop %v2847
    %v2868 = vrcp.pop %v2850
    %v2869 = vrcp.pop %v2853
    %v2870 = vrcp.pop %v2856
    %v2871 = vrcp.pop %v2859
    %v2872 = vrcp.pop %v2862
    %v2873 = vrcp.pop %v2865
    %v2874 = vmul.f32 %v2827, %v2866
    %v2875 = vmul.f32 %v2829, %v2867
    %v2876 = vmul.f32 %v2831, %v2868
    %v2877 = vmul.f32 %v2833, %v2869
    %v2878 = vmul.f32 %v2835, %v2870
    %v2879 = vmul.f32 %v2837, %v2871
    %v2880 = vmul.f32 %v2839, %v2872
    %v2881 = vmul.f32 %v2841, %v2873
    %v2882 = vpack.c.bf16 %v2875, %v2874
    %v2883 = vpack.c.bf16 %v2877, %v2876
    %v2884 = vpack.c.bf16 %v2879, %v2878
    %v2885 = vpack.c.bf16 %v2881, %v2880
    %2886 = vrot.lane.b32.xlu0 %v627, 64
    %v2887 = vpop.permute.xlu0 %2886
    %v2890 = vsel %vm669, %v2882, 0
    %2892 = vmatprep.subr.bf16.mxu0 0
    %2893 = vmatpush1.bf16.msra.mxu0 0
    %2894 = vmatprep.subr.bf16.mxu0 0
    %2895 = vmatpush1.bf16.msra.mxu0 0
    %2896 = vmatprep.subr.bf16.mxu0 0
    %2897 = vmatpush1.bf16.msra.mxu0 0
    %2898 = vmatprep.subr.bf16.mxu0 0
    %2899 = vmatpush1.bf16.msra.mxu0 0
    %2900 = vmatprep.subr.bf16.mxu0 0
    %2901 = vmatpush1.bf16.msra.mxu0 0
    %2902 = vmatprep.subr.bf16.mxu0 0
    %2903 = vmatpush1.bf16.msra.mxu0 0
    %2904 = vmatprep.subr.bf16.mxu0 0
    %2905 = vmatpush1.bf16.msra.mxu0 0
    %2906 = vmatprep.subr.bf16.mxu0 0
    %2907 = vmatpush1.bf16.msra.mxu0 %v2887
    %2908 = vmatprep.subr.bf16.mxu0 0
    %2909 = vmatpush2.bf16.msra.mxu0 0
    %2910 = vmatprep.subr.bf16.mxu0 0
    %2911 = vmatpush2.bf16.msra.mxu0 0
    %2912 = vmatprep.subr.bf16.mxu0 0
    %2913 = vmatpush2.bf16.msra.mxu0 0
    %2914 = vmatprep.subr.bf16.mxu0 0
    %2915 = vmatpush2.bf16.msra.mxu0 0
    %2916 = vmatprep.subr.bf16.mxu0 0
    %2917 = vmatpush2.bf16.msra.mxu0 0
    %2918 = vmatprep.subr.bf16.mxu0 0
    %2919 = vmatpush2.bf16.msra.mxu0 0
    %2920 = vmatprep.subr.bf16.mxu0 0
    %2921 = vmatpush2.bf16.msra.mxu0 0
    %2922 = vmatprep.subr.bf16.mxu0 0
    %2923 = vmatpush2.bf16.msra.mxu0 0
    %2924 = vmatprep.mubr.bf16.mxu0 0
    %2925 = vmatmul.mubr.bf16.gmra.mxu0 %v2890
    %v2926 = vpop.f32.mrf.mxu0
    %v2927 = vadd.f32 0.0, %v2926
    %v2928 = vpop.f32.mrf.mxu0
    %v2929 = vpop.f32.mrf.mxu0
    %v2930 = vadd.f32 0.0, %v2929
    %v2931 = vpop.f32.mrf.mxu0
    %2932 = vdwg.mxu0
    %2933 = vrot.lane.b32.xlu0 %v628, 64
    %v2934 = vpop.permute.xlu0 %2933
    %v2937 = vsel %vm669, %v2883, 0
    %2939 = vmatprep.subr.bf16.mxu0 0
    %2940 = vmatpush1.bf16.msra.mxu0 0
    %2941 = vmatprep.subr.bf16.mxu0 0
    %2942 = vmatpush1.bf16.msra.mxu0 0
    %2943 = vmatprep.subr.bf16.mxu0 0
    %2944 = vmatpush1.bf16.msra.mxu0 0
    %2945 = vmatprep.subr.bf16.mxu0 0
    %2946 = vmatpush1.bf16.msra.mxu0 0
    %2947 = vmatprep.subr.bf16.mxu0 0
    %2948 = vmatpush1.bf16.msra.mxu0 0
    %2949 = vmatprep.subr.bf16.mxu0 0
    %2950 = vmatpush1.bf16.msra.mxu0 0
    %2951 = vmatprep.subr.bf16.mxu0 0
    %2952 = vmatpush1.bf16.msra.mxu0 0
    %2953 = vmatprep.subr.bf16.mxu0 0
    %2954 = vmatpush1.bf16.msra.mxu0 %v2934
    %2955 = vmatprep.subr.bf16.mxu0 0
    %2956 = vmatpush2.bf16.msra.mxu0 0
    %2957 = vmatprep.subr.bf16.mxu0 0
    %2958 = vmatpush2.bf16.msra.mxu0 0
    %2959 = vmatprep.subr.bf16.mxu0 0
    %2960 = vmatpush2.bf16.msra.mxu0 0
    %2961 = vmatprep.subr.bf16.mxu0 0
    %2962 = vmatpush2.bf16.msra.mxu0 0
    %2963 = vmatprep.subr.bf16.mxu0 0
    %2964 = vmatpush2.bf16.msra.mxu0 0
    %2965 = vmatprep.subr.bf16.mxu0 0
    %2966 = vmatpush2.bf16.msra.mxu0 0
    %2967 = vmatprep.subr.bf16.mxu0 0
    %2968 = vmatpush2.bf16.msra.mxu0 0
    %2969 = vmatprep.subr.bf16.mxu0 0
    %2970 = vmatpush2.bf16.msra.mxu0 0
    %2971 = vmatprep.mubr.bf16.mxu0 0
    %2972 = vmatmul.mubr.bf16.gmra.mxu0 %v2937
    %v2973 = vpop.f32.mrf.mxu0
    %v2974 = vadd.f32 0.0, %v2973
    %v2975 = vpop.f32.mrf.mxu0
    %v2976 = vpop.f32.mrf.mxu0
    %v2977 = vadd.f32 0.0, %v2976
    %v2978 = vpop.f32.mrf.mxu0
    %2979 = vdwg.mxu0
    %2980 = vrot.lane.b32.xlu0 %v629, 64
    %v2981 = vpop.permute.xlu0 %2980
    %v2984 = vsel %vm669, %v2884, 0
    %2986 = vmatprep.subr.bf16.mxu0 0
    %2987 = vmatpush1.bf16.msra.mxu0 0
    %2988 = vmatprep.subr.bf16.mxu0 0
    %2989 = vmatpush1.bf16.msra.mxu0 0
    %2990 = vmatprep.subr.bf16.mxu0 0
    %2991 = vmatpush1.bf16.msra.mxu0 0
    %2992 = vmatprep.subr.bf16.mxu0 0
    %2993 = vmatpush1.bf16.msra.mxu0 0
    %2994 = vmatprep.subr.bf16.mxu0 0
    %2995 = vmatpush1.bf16.msra.mxu0 0
    %2996 = vmatprep.subr.bf16.mxu0 0
    %2997 = vmatpush1.bf16.msra.mxu0 0
    %2998 = vmatprep.subr.bf16.mxu0 0
    %2999 = vmatpush1.bf16.msra.mxu0 0
    %3000 = vmatprep.subr.bf16.mxu0 0
    %3001 = vmatpush1.bf16.msra.mxu0 %v2981
    %3002 = vmatprep.subr.bf16.mxu0 0
    %3003 = vmatpush2.bf16.msra.mxu0 0
    %3004 = vmatprep.subr.bf16.mxu0 0
    %3005 = vmatpush2.bf16.msra.mxu0 0
    %3006 = vmatprep.subr.bf16.mxu0 0
    %3007 = vmatpush2.bf16.msra.mxu0 0
    %3008 = vmatprep.subr.bf16.mxu0 0
    %3009 = vmatpush2.bf16.msra.mxu0 0
    %3010 = vmatprep.subr.bf16.mxu0 0
    %3011 = vmatpush2.bf16.msra.mxu0 0
    %3012 = vmatprep.subr.bf16.mxu0 0
    %3013 = vmatpush2.bf16.msra.mxu0 0
    %3014 = vmatprep.subr.bf16.mxu0 0
    %3015 = vmatpush2.bf16.msra.mxu0 0
    %3016 = vmatprep.subr.bf16.mxu0 0
    %3017 = vmatpush2.bf16.msra.mxu0 0
    %3018 = vmatprep.mubr.bf16.mxu0 0
    %3019 = vmatmul.mubr.bf16.gmra.mxu0 %v2984
    %v3020 = vpop.f32.mrf.mxu0
    %v3021 = vadd.f32 0.0, %v3020
    %v3022 = vpop.f32.mrf.mxu0
    %v3023 = vpop.f32.mrf.mxu0
    %v3024 = vadd.f32 0.0, %v3023
    %v3025 = vpop.f32.mrf.mxu0
    %3026 = vdwg.mxu0
    %3027 = vrot.lane.b32.xlu0 %v630, 64
    %v3028 = vpop.permute.xlu0 %3027
    %v3031 = vsel %vm669, %v2885, 0
    %3033 = vmatprep.subr.bf16.mxu0 0
    %3034 = vmatpush1.bf16.msra.mxu0 0
    %3035 = vmatprep.subr.bf16.mxu0 0
    %3036 = vmatpush1.bf16.msra.mxu0 0
    %3037 = vmatprep.subr.bf16.mxu0 0
    %3038 = vmatpush1.bf16.msra.mxu0 0
    %3039 = vmatprep.subr.bf16.mxu0 0
    %3040 = vmatpush1.bf16.msra.mxu0 0
    %3041 = vmatprep.subr.bf16.mxu0 0
    %3042 = vmatpush1.bf16.msra.mxu0 0
    %3043 = vmatprep.subr.bf16.mxu0 0
    %3044 = vmatpush1.bf16.msra.mxu0 0
    %3045 = vmatprep.subr.bf16.mxu0 0
    %3046 = vmatpush1.bf16.msra.mxu0 0
    %3047 = vmatprep.subr.bf16.mxu0 0
    %3048 = vmatpush1.bf16.msra.mxu0 %v3028
    %3049 = vmatprep.subr.bf16.mxu0 0
    %3050 = vmatpush2.bf16.msra.mxu0 0
    %3051 = vmatprep.subr.bf16.mxu0 0
    %3052 = vmatpush2.bf16.msra.mxu0 0
    %3053 = vmatprep.subr.bf16.mxu0 0
    %3054 = vmatpush2.bf16.msra.mxu0 0
    %3055 = vmatprep.subr.bf16.mxu0 0
    %3056 = vmatpush2.bf16.msra.mxu0 0
    %3057 = vmatprep.subr.bf16.mxu0 0
    %3058 = vmatpush2.bf16.msra.mxu0 0
    %3059 = vmatprep.subr.bf16.mxu0 0
    %3060 = vmatpush2.bf16.msra.mxu0 0
    %3061 = vmatprep.subr.bf16.mxu0 0
    %3062 = vmatpush2.bf16.msra.mxu0 0
    %3063 = vmatprep.subr.bf16.mxu0 0
    %3064 = vmatpush2.bf16.msra.mxu0 0
    %3065 = vmatprep.mubr.bf16.mxu0 0
    %3066 = vmatmul.mubr.bf16.gmra.mxu0 %v3031
    %v3067 = vpop.f32.mrf.mxu0
    %v3068 = vadd.f32 0.0, %v3067
    %v3069 = vpop.f32.mrf.mxu0
    %v3070 = vpop.f32.mrf.mxu0
    %v3071 = vadd.f32 0.0, %v3070
    %v3072 = vpop.f32.mrf.mxu0
    %3073 = vdwg.mxu0
    %3074 = vrot.lane.b32.xlu0 %v619, 48
    %v3075 = vpop.permute.xlu0 %3074
    %3076 = vrot.lane.b32.xlu0 %v623, 48
    %v3077 = vpop.permute.xlu0 %3076
    %v3079 = vsel %vm669, %v3075, 0
    %v3082 = vsel %vm669, %v3077, 0
    %3084 = vmatprep.subr.bf16.mxu0 0
    %3085 = vmatpush1.bf16.xpose.msra.mxu0 0
    %3086 = vmatprep.subr.bf16.mxu0 0
    %3087 = vmatpush1.bf16.xpose.msra.mxu0 0
    %3088 = vmatprep.subr.bf16.mxu0 0
    %3089 = vmatpush1.bf16.xpose.msra.mxu0 0
    %3090 = vmatprep.subr.bf16.mxu0 0
    %3091 = vmatpush1.bf16.xpose.msra.mxu0 0
    %3092 = vmatprep.subr.bf16.mxu0 0
    %3093 = vmatpush1.bf16.xpose.msra.mxu0 0
    %3094 = vmatprep.subr.bf16.mxu0 0
    %3095 = vmatpush1.bf16.xpose.msra.mxu0 0
    %3096 = vmatprep.subr.bf16.mxu0 0
    %3097 = vmatpush1.bf16.xpose.msra.mxu0 0
    %3098 = vmatprep.subr.bf16.mxu0 0
    %3099 = vmatpush1.bf16.xpose.msra.mxu0 %v3082
    %3100 = vmatprep.subr.bf16.mxu0 0
    %3101 = vmatpush2.bf16.xpose.msra.mxu0 0
    %3102 = vmatprep.subr.bf16.mxu0 0
    %3103 = vmatpush2.bf16.xpose.msra.mxu0 0
    %3104 = vmatprep.subr.bf16.mxu0 0
    %3105 = vmatpush2.bf16.xpose.msra.mxu0 0
    %3106 = vmatprep.subr.bf16.mxu0 0
    %3107 = vmatpush2.bf16.xpose.msra.mxu0 0
    %3108 = vmatprep.subr.bf16.mxu0 0
    %3109 = vmatpush2.bf16.xpose.msra.mxu0 0
    %3110 = vmatprep.subr.bf16.mxu0 0
    %3111 = vmatpush2.bf16.xpose.msra.mxu0 0
    %3112 = vmatprep.subr.bf16.mxu0 0
    %3113 = vmatpush2.bf16.xpose.msra.mxu0 0
    %3114 = vmatprep.subr.bf16.mxu0 0
    %3115 = vmatpush2.bf16.xpose.msra.mxu0 0
    %3116 = vmatprep.mubr.bf16.mxu0 0
    %3117 = vmatmul.mubr.bf16.gmra.mxu0 %v3079
    %v3118 = vpop.f32.mrf.mxu0
    %v3119 = vadd.f32 %v661, %v3118
    %v3120 = vpop.f32.mrf.mxu0
    %v3121 = vpop.f32.mrf.mxu0
    %v3122 = vadd.f32 %v662, %v3121
    %v3123 = vpop.f32.mrf.mxu0
    %3124 = vdwg.mxu0
    %3125 = vrot.lane.b32.xlu0 %v620, 48
    %v3126 = vpop.permute.xlu0 %3125
    %3127 = vrot.lane.b32.xlu0 %v624, 48
    %v3128 = vpop.permute.xlu0 %3127
    %v3130 = vsel %vm669, %v3126, 0
    %v3133 = vsel %vm669, %v3128, 0
    %3135 = vmatprep.subr.bf16.mxu0 0
    %3136 = vmatpush1.bf16.xpose.msra.mxu0 0
    %3137 = vmatprep.subr.bf16.mxu0 0
    %3138 = vmatpush1.bf16.xpose.msra.mxu0 0
    %3139 = vmatprep.subr.bf16.mxu0 0
    %3140 = vmatpush1.bf16.xpose.msra.mxu0 0
    %3141 = vmatprep.subr.bf16.mxu0 0
    %3142 = vmatpush1.bf16.xpose.msra.mxu0 0
    %3143 = vmatprep.subr.bf16.mxu0 0
    %3144 = vmatpush1.bf16.xpose.msra.mxu0 0
    %3145 = vmatprep.subr.bf16.mxu0 0
    %3146 = vmatpush1.bf16.xpose.msra.mxu0 0
    %3147 = vmatprep.subr.bf16.mxu0 0
    %3148 = vmatpush1.bf16.xpose.msra.mxu0 0
    %3149 = vmatprep.subr.bf16.mxu0 0
    %3150 = vmatpush1.bf16.xpose.msra.mxu0 %v3133
    %3151 = vmatprep.subr.bf16.mxu0 0
    %3152 = vmatpush2.bf16.xpose.msra.mxu0 0
    %3153 = vmatprep.subr.bf16.mxu0 0
    %3154 = vmatpush2.bf16.xpose.msra.mxu0 0
    %3155 = vmatprep.subr.bf16.mxu0 0
    %3156 = vmatpush2.bf16.xpose.msra.mxu0 0
    %3157 = vmatprep.subr.bf16.mxu0 0
    %3158 = vmatpush2.bf16.xpose.msra.mxu0 0
    %3159 = vmatprep.subr.bf16.mxu0 0
    %3160 = vmatpush2.bf16.xpose.msra.mxu0 0
    %3161 = vmatprep.subr.bf16.mxu0 0
    %3162 = vmatpush2.bf16.xpose.msra.mxu0 0
    %3163 = vmatprep.subr.bf16.mxu0 0
    %3164 = vmatpush2.bf16.xpose.msra.mxu0 0
    %3165 = vmatprep.subr.bf16.mxu0 0
    %3166 = vmatpush2.bf16.xpose.msra.mxu0 0
    %3167 = vmatprep.mubr.bf16.mxu0 0
    %3168 = vmatmul.mubr.bf16.gmra.mxu0 %v3130
    %v3169 = vpop.f32.mrf.mxu0
    %v3170 = vadd.f32 %v663, %v3169
    %v3171 = vpop.f32.mrf.mxu0
    %v3172 = vpop.f32.mrf.mxu0
    %v3173 = vadd.f32 %v664, %v3172
    %v3174 = vpop.f32.mrf.mxu0
    %3175 = vdwg.mxu0
    %3176 = vrot.lane.b32.xlu0 %v621, 48
    %v3177 = vpop.permute.xlu0 %3176
    %3178 = vrot.lane.b32.xlu0 %v625, 48
    %v3179 = vpop.permute.xlu0 %3178
    %v3181 = vsel %vm669, %v3177, 0
    %v3184 = vsel %vm669, %v3179, 0
    %3186 = vmatprep.subr.bf16.mxu0 0
    %3187 = vmatpush1.bf16.xpose.msra.mxu0 0
    %3188 = vmatprep.subr.bf16.mxu0 0
    %3189 = vmatpush1.bf16.xpose.msra.mxu0 0
    %3190 = vmatprep.subr.bf16.mxu0 0
    %3191 = vmatpush1.bf16.xpose.msra.mxu0 0
    %3192 = vmatprep.subr.bf16.mxu0 0
    %3193 = vmatpush1.bf16.xpose.msra.mxu0 0
    %3194 = vmatprep.subr.bf16.mxu0 0
    %3195 = vmatpush1.bf16.xpose.msra.mxu0 0
    %3196 = vmatprep.subr.bf16.mxu0 0
    %3197 = vmatpush1.bf16.xpose.msra.mxu0 0
    %3198 = vmatprep.subr.bf16.mxu0 0
    %3199 = vmatpush1.bf16.xpose.msra.mxu0 0
    %3200 = vmatprep.subr.bf16.mxu0 0
    %3201 = vmatpush1.bf16.xpose.msra.mxu0 %v3184
    %3202 = vmatprep.subr.bf16.mxu0 0
    %3203 = vmatpush2.bf16.xpose.msra.mxu0 0
    %3204 = vmatprep.subr.bf16.mxu0 0
    %3205 = vmatpush2.bf16.xpose.msra.mxu0 0
    %3206 = vmatprep.subr.bf16.mxu0 0
    %3207 = vmatpush2.bf16.xpose.msra.mxu0 0
    %3208 = vmatprep.subr.bf16.mxu0 0
    %3209 = vmatpush2.bf16.xpose.msra.mxu0 0
    %3210 = vmatprep.subr.bf16.mxu0 0
    %3211 = vmatpush2.bf16.xpose.msra.mxu0 0
    %3212 = vmatprep.subr.bf16.mxu0 0
    %3213 = vmatpush2.bf16.xpose.msra.mxu0 0
    %3214 = vmatprep.subr.bf16.mxu0 0
    %3215 = vmatpush2.bf16.xpose.msra.mxu0 0
    %3216 = vmatprep.subr.bf16.mxu0 0
    %3217 = vmatpush2.bf16.xpose.msra.mxu0 0
    %3218 = vmatprep.mubr.bf16.mxu0 0
    %3219 = vmatmul.mubr.bf16.gmra.mxu0 %v3181
    %v3220 = vpop.f32.mrf.mxu0
    %v3221 = vadd.f32 %v665, %v3220
    %v3222 = vpop.f32.mrf.mxu0
    %v3223 = vpop.f32.mrf.mxu0
    %v3224 = vadd.f32 %v666, %v3223
    %v3225 = vpop.f32.mrf.mxu0
    %3226 = vdwg.mxu0
    %3227 = vrot.lane.b32.xlu0 %v622, 48
    %v3228 = vpop.permute.xlu0 %3227
    %3229 = vrot.lane.b32.xlu0 %v626, 48
    %v3230 = vpop.permute.xlu0 %3229
    %v3232 = vsel %vm669, %v3228, 0
    %v3235 = vsel %vm669, %v3230, 0
    %3237 = vmatprep.subr.bf16.mxu0 0
    %3238 = vmatpush1.bf16.xpose.msra.mxu0 0
    %3239 = vmatprep.subr.bf16.mxu0 0
    %3240 = vmatpush1.bf16.xpose.msra.mxu0 0
    %3241 = vmatprep.subr.bf16.mxu0 0
    %3242 = vmatpush1.bf16.xpose.msra.mxu0 0
    %3243 = vmatprep.subr.bf16.mxu0 0
    %3244 = vmatpush1.bf16.xpose.msra.mxu0 0
    %3245 = vmatprep.subr.bf16.mxu0 0
    %3246 = vmatpush1.bf16.xpose.msra.mxu0 0
    %3247 = vmatprep.subr.bf16.mxu0 0
    %3248 = vmatpush1.bf16.xpose.msra.mxu0 0
    %3249 = vmatprep.subr.bf16.mxu0 0
    %3250 = vmatpush1.bf16.xpose.msra.mxu0 0
    %3251 = vmatprep.subr.bf16.mxu0 0
    %3252 = vmatpush1.bf16.xpose.msra.mxu0 %v3235
    %3253 = vmatprep.subr.bf16.mxu0 0
    %3254 = vmatpush2.bf16.xpose.msra.mxu0 0
    %3255 = vmatprep.subr.bf16.mxu0 0
    %3256 = vmatpush2.bf16.xpose.msra.mxu0 0
    %3257 = vmatprep.subr.bf16.mxu0 0
    %3258 = vmatpush2.bf16.xpose.msra.mxu0 0
    %3259 = vmatprep.subr.bf16.mxu0 0
    %3260 = vmatpush2.bf16.xpose.msra.mxu0 0
    %3261 = vmatprep.subr.bf16.mxu0 0
    %3262 = vmatpush2.bf16.xpose.msra.mxu0 0
    %3263 = vmatprep.subr.bf16.mxu0 0
    %3264 = vmatpush2.bf16.xpose.msra.mxu0 0
    %3265 = vmatprep.subr.bf16.mxu0 0
    %3266 = vmatpush2.bf16.xpose.msra.mxu0 0
    %3267 = vmatprep.subr.bf16.mxu0 0
    %3268 = vmatpush2.bf16.xpose.msra.mxu0 0
    %3269 = vmatprep.mubr.bf16.mxu0 0
    %3270 = vmatmul.mubr.bf16.gmra.mxu0 %v3232
    %v3271 = vpop.f32.mrf.mxu0
    %v3272 = vadd.f32 %v667, %v3271
    %v3273 = vpop.f32.mrf.mxu0
    %v3274 = vpop.f32.mrf.mxu0
    %v3275 = vadd.f32 %v668, %v3274
    %v3276 = vpop.f32.mrf.mxu0
    %3277 = vdwg.mxu0
    %v3278 = vsel %vm669, %v3119, -inf
    %3279 = vmax.xlane.f32.xlu0 %v3278
    %v3280 = vpop.xlane.xlu0 %3279
    %v3281 = vsel %vm669, %v3122, -inf
    %3282 = vmax.xlane.f32.xlu0 %v3281
    %v3283 = vpop.xlane.xlu0 %3282
    %v3284 = vsel %vm669, %v3170, -inf
    %3285 = vmax.xlane.f32.xlu0 %v3284
    %v3286 = vpop.xlane.xlu0 %3285
    %v3287 = vsel %vm669, %v3173, -inf
    %3288 = vmax.xlane.f32.xlu0 %v3287
    %v3289 = vpop.xlane.xlu0 %3288
    %v3290 = vsel %vm669, %v3221, -inf
    %3291 = vmax.xlane.f32.xlu0 %v3290
    %v3292 = vpop.xlane.xlu0 %3291
    %v3293 = vsel %vm669, %v3224, -inf
    %3294 = vmax.xlane.f32.xlu0 %v3293
    %v3295 = vpop.xlane.xlu0 %3294
    %v3296 = vsel %vm669, %v3272, -inf
    %3297 = vmax.xlane.f32.xlu0 %v3296
    %v3298 = vpop.xlane.xlu0 %3297
    %v3299 = vsel %vm669, %v3275, -inf
    %3300 = vmax.xlane.f32.xlu0 %v3299
    %v3301 = vpop.xlane.xlu0 %3300
    %v3302 = vsub.f32 %v3119, %v3280
    %v3303 = vsub.f32 %v3122, %v3283
    %v3304 = vsub.f32 %v3170, %v3286
    %v3305 = vsub.f32 %v3173, %v3289
    %v3306 = vsub.f32 %v3221, %v3292
    %v3307 = vsub.f32 %v3224, %v3295
    %v3308 = vsub.f32 %v3272, %v3298
    %v3309 = vsub.f32 %v3275, %v3301
    %v3310 = vmul.f32 %v3302, 1.442695
    %v3311 = vpow.pop %v3310
    %v3312 = vmul.f32 %v3303, 1.442695
    %v3313 = vpow.pop %v3312
    %v3314 = vmul.f32 %v3304, 1.442695
    %v3315 = vpow.pop %v3314
    %v3316 = vmul.f32 %v3305, 1.442695
    %v3317 = vpow.pop %v3316
    %v3318 = vmul.f32 %v3306, 1.442695
    %v3319 = vpow.pop %v3318
    %v3320 = vmul.f32 %v3307, 1.442695
    %v3321 = vpow.pop %v3320
    %v3322 = vmul.f32 %v3308, 1.442695
    %v3323 = vpow.pop %v3322
    %v3324 = vmul.f32 %v3309, 1.442695
    %v3325 = vpow.pop %v3324
    %v3326 = vsel %vm669, %v3311, 0.0
    %3327 = vadd.xlane.f32.xlu0 %v3326
    %v3328 = vpop.xlane.xlu0 %3327
    %v3329 = vsel %vm669, %v3313, 0.0
    %3330 = vadd.xlane.f32.xlu0 %v3329
    %v3331 = vpop.xlane.xlu0 %3330
    %v3332 = vsel %vm669, %v3315, 0.0
    %3333 = vadd.xlane.f32.xlu0 %v3332
    %v3334 = vpop.xlane.xlu0 %3333
    %v3335 = vsel %vm669, %v3317, 0.0
    %3336 = vadd.xlane.f32.xlu0 %v3335
    %v3337 = vpop.xlane.xlu0 %3336
    %v3338 = vsel %vm669, %v3319, 0.0
    %3339 = vadd.xlane.f32.xlu0 %v3338
    %v3340 = vpop.xlane.xlu0 %3339
    %v3341 = vsel %vm669, %v3321, 0.0
    %3342 = vadd.xlane.f32.xlu0 %v3341
    %v3343 = vpop.xlane.xlu0 %3342
    %v3344 = vsel %vm669, %v3323, 0.0
    %3345 = vadd.xlane.f32.xlu0 %v3344
    %v3346 = vpop.xlane.xlu0 %3345
    %v3347 = vsel %vm669, %v3325, 0.0
    %3348 = vadd.xlane.f32.xlu0 %v3347
    %v3349 = vpop.xlane.xlu0 %3348
    %v3350 = vrcp.pop %v3328
    %v3351 = vrcp.pop %v3331
    %v3352 = vrcp.pop %v3334
    %v3353 = vrcp.pop %v3337
    %v3354 = vrcp.pop %v3340
    %v3355 = vrcp.pop %v3343
    %v3356 = vrcp.pop %v3346
    %v3357 = vrcp.pop %v3349
    %v3358 = vmul.f32 %v3311, %v3350
    %v3359 = vmul.f32 %v3313, %v3351
    %v3360 = vmul.f32 %v3315, %v3352
    %v3361 = vmul.f32 %v3317, %v3353
    %v3362 = vmul.f32 %v3319, %v3354
    %v3363 = vmul.f32 %v3321, %v3355
    %v3364 = vmul.f32 %v3323, %v3356
    %v3365 = vmul.f32 %v3325, %v3357
    %v3366 = vpack.c.bf16 %v3359, %v3358
    %v3367 = vpack.c.bf16 %v3361, %v3360
    %v3368 = vpack.c.bf16 %v3363, %v3362
    %v3369 = vpack.c.bf16 %v3365, %v3364
    %3370 = vrot.lane.b32.xlu0 %v627, 48
    %v3371 = vpop.permute.xlu0 %3370
    %v3374 = vsel %vm669, %v3366, 0
    %3376 = vmatprep.subr.bf16.mxu0 0
    %3377 = vmatpush1.bf16.msra.mxu0 0
    %3378 = vmatprep.subr.bf16.mxu0 0
    %3379 = vmatpush1.bf16.msra.mxu0 0
    %3380 = vmatprep.subr.bf16.mxu0 0
    %3381 = vmatpush1.bf16.msra.mxu0 0
    %3382 = vmatprep.subr.bf16.mxu0 0
    %3383 = vmatpush1.bf16.msra.mxu0 0
    %3384 = vmatprep.subr.bf16.mxu0 0
    %3385 = vmatpush1.bf16.msra.mxu0 0
    %3386 = vmatprep.subr.bf16.mxu0 0
    %3387 = vmatpush1.bf16.msra.mxu0 0
    %3388 = vmatprep.subr.bf16.mxu0 0
    %3389 = vmatpush1.bf16.msra.mxu0 0
    %3390 = vmatprep.subr.bf16.mxu0 0
    %3391 = vmatpush1.bf16.msra.mxu0 %v3371
    %3392 = vmatprep.subr.bf16.mxu0 0
    %3393 = vmatpush2.bf16.msra.mxu0 0
    %3394 = vmatprep.subr.bf16.mxu0 0
    %3395 = vmatpush2.bf16.msra.mxu0 0
    %3396 = vmatprep.subr.bf16.mxu0 0
    %3397 = vmatpush2.bf16.msra.mxu0 0
    %3398 = vmatprep.subr.bf16.mxu0 0
    %3399 = vmatpush2.bf16.msra.mxu0 0
    %3400 = vmatprep.subr.bf16.mxu0 0
    %3401 = vmatpush2.bf16.msra.mxu0 0
    %3402 = vmatprep.subr.bf16.mxu0 0
    %3403 = vmatpush2.bf16.msra.mxu0 0
    %3404 = vmatprep.subr.bf16.mxu0 0
    %3405 = vmatpush2.bf16.msra.mxu0 0
    %3406 = vmatprep.subr.bf16.mxu0 0
    %3407 = vmatpush2.bf16.msra.mxu0 0
    %3408 = vmatprep.mubr.bf16.mxu0 0
    %3409 = vmatmul.mubr.bf16.gmra.mxu0 %v3374
    %v3410 = vpop.f32.mrf.mxu0
    %v3411 = vadd.f32 0.0, %v3410
    %v3412 = vpop.f32.mrf.mxu0
    %v3413 = vpop.f32.mrf.mxu0
    %v3414 = vadd.f32 0.0, %v3413
    %v3415 = vpop.f32.mrf.mxu0
    %3416 = vdwg.mxu0
    %3417 = vrot.lane.b32.xlu0 %v628, 48
    %v3418 = vpop.permute.xlu0 %3417
    %v3421 = vsel %vm669, %v3367, 0
    %3423 = vmatprep.subr.bf16.mxu0 0
    %3424 = vmatpush1.bf16.msra.mxu0 0
    %3425 = vmatprep.subr.bf16.mxu0 0
    %3426 = vmatpush1.bf16.msra.mxu0 0
    %3427 = vmatprep.subr.bf16.mxu0 0
    %3428 = vmatpush1.bf16.msra.mxu0 0
    %3429 = vmatprep.subr.bf16.mxu0 0
    %3430 = vmatpush1.bf16.msra.mxu0 0
    %3431 = vmatprep.subr.bf16.mxu0 0
    %3432 = vmatpush1.bf16.msra.mxu0 0
    %3433 = vmatprep.subr.bf16.mxu0 0
    %3434 = vmatpush1.bf16.msra.mxu0 0
    %3435 = vmatprep.subr.bf16.mxu0 0
    %3436 = vmatpush1.bf16.msra.mxu0 0
    %3437 = vmatprep.subr.bf16.mxu0 0
    %3438 = vmatpush1.bf16.msra.mxu0 %v3418
    %3439 = vmatprep.subr.bf16.mxu0 0
    %3440 = vmatpush2.bf16.msra.mxu0 0
    %3441 = vmatprep.subr.bf16.mxu0 0
    %3442 = vmatpush2.bf16.msra.mxu0 0
    %3443 = vmatprep.subr.bf16.mxu0 0
    %3444 = vmatpush2.bf16.msra.mxu0 0
    %3445 = vmatprep.subr.bf16.mxu0 0
    %3446 = vmatpush2.bf16.msra.mxu0 0
    %3447 = vmatprep.subr.bf16.mxu0 0
    %3448 = vmatpush2.bf16.msra.mxu0 0
    %3449 = vmatprep.subr.bf16.mxu0 0
    %3450 = vmatpush2.bf16.msra.mxu0 0
    %3451 = vmatprep.subr.bf16.mxu0 0
    %3452 = vmatpush2.bf16.msra.mxu0 0
    %3453 = vmatprep.subr.bf16.mxu0 0
    %3454 = vmatpush2.bf16.msra.mxu0 0
    %3455 = vmatprep.mubr.bf16.mxu0 0
    %3456 = vmatmul.mubr.bf16.gmra.mxu0 %v3421
    %v3457 = vpop.f32.mrf.mxu0
    %v3458 = vadd.f32 0.0, %v3457
    %v3459 = vpop.f32.mrf.mxu0
    %v3460 = vpop.f32.mrf.mxu0
    %v3461 = vadd.f32 0.0, %v3460
    %v3462 = vpop.f32.mrf.mxu0
    %3463 = vdwg.mxu0
    %3464 = vrot.lane.b32.xlu0 %v629, 48
    %v3465 = vpop.permute.xlu0 %3464
    %v3468 = vsel %vm669, %v3368, 0
    %3470 = vmatprep.subr.bf16.mxu0 0
    %3471 = vmatpush1.bf16.msra.mxu0 0
    %3472 = vmatprep.subr.bf16.mxu0 0
    %3473 = vmatpush1.bf16.msra.mxu0 0
    %3474 = vmatprep.subr.bf16.mxu0 0
    %3475 = vmatpush1.bf16.msra.mxu0 0
    %3476 = vmatprep.subr.bf16.mxu0 0
    %3477 = vmatpush1.bf16.msra.mxu0 0
    %3478 = vmatprep.subr.bf16.mxu0 0
    %3479 = vmatpush1.bf16.msra.mxu0 0
    %3480 = vmatprep.subr.bf16.mxu0 0
    %3481 = vmatpush1.bf16.msra.mxu0 0
    %3482 = vmatprep.subr.bf16.mxu0 0
    %3483 = vmatpush1.bf16.msra.mxu0 0
    %3484 = vmatprep.subr.bf16.mxu0 0
    %3485 = vmatpush1.bf16.msra.mxu0 %v3465
    %3486 = vmatprep.subr.bf16.mxu0 0
    %3487 = vmatpush2.bf16.msra.mxu0 0
    %3488 = vmatprep.subr.bf16.mxu0 0
    %3489 = vmatpush2.bf16.msra.mxu0 0
    %3490 = vmatprep.subr.bf16.mxu0 0
    %3491 = vmatpush2.bf16.msra.mxu0 0
    %3492 = vmatprep.subr.bf16.mxu0 0
    %3493 = vmatpush2.bf16.msra.mxu0 0
    %3494 = vmatprep.subr.bf16.mxu0 0
    %3495 = vmatpush2.bf16.msra.mxu0 0
    %3496 = vmatprep.subr.bf16.mxu0 0
    %3497 = vmatpush2.bf16.msra.mxu0 0
    %3498 = vmatprep.subr.bf16.mxu0 0
    %3499 = vmatpush2.bf16.msra.mxu0 0
    %3500 = vmatprep.subr.bf16.mxu0 0
    %3501 = vmatpush2.bf16.msra.mxu0 0
    %3502 = vmatprep.mubr.bf16.mxu0 0
    %3503 = vmatmul.mubr.bf16.gmra.mxu0 %v3468
    %v3504 = vpop.f32.mrf.mxu0
    %v3505 = vadd.f32 0.0, %v3504
    %v3506 = vpop.f32.mrf.mxu0
    %v3507 = vpop.f32.mrf.mxu0
    %v3508 = vadd.f32 0.0, %v3507
    %v3509 = vpop.f32.mrf.mxu0
    %3510 = vdwg.mxu0
    %3511 = vrot.lane.b32.xlu0 %v630, 48
    %v3512 = vpop.permute.xlu0 %3511
    %v3515 = vsel %vm669, %v3369, 0
    %3517 = vmatprep.subr.bf16.mxu0 0
    %3518 = vmatpush1.bf16.msra.mxu0 0
    %3519 = vmatprep.subr.bf16.mxu0 0
    %3520 = vmatpush1.bf16.msra.mxu0 0
    %3521 = vmatprep.subr.bf16.mxu0 0
    %3522 = vmatpush1.bf16.msra.mxu0 0
    %3523 = vmatprep.subr.bf16.mxu0 0
    %3524 = vmatpush1.bf16.msra.mxu0 0
    %3525 = vmatprep.subr.bf16.mxu0 0
    %3526 = vmatpush1.bf16.msra.mxu0 0
    %3527 = vmatprep.subr.bf16.mxu0 0
    %3528 = vmatpush1.bf16.msra.mxu0 0
    %3529 = vmatprep.subr.bf16.mxu0 0
    %3530 = vmatpush1.bf16.msra.mxu0 0
    %3531 = vmatprep.subr.bf16.mxu0 0
    %3532 = vmatpush1.bf16.msra.mxu0 %v3512
    %3533 = vmatprep.subr.bf16.mxu0 0
    %3534 = vmatpush2.bf16.msra.mxu0 0
    %3535 = vmatprep.subr.bf16.mxu0 0
    %3536 = vmatpush2.bf16.msra.mxu0 0
    %3537 = vmatprep.subr.bf16.mxu0 0
    %3538 = vmatpush2.bf16.msra.mxu0 0
    %3539 = vmatprep.subr.bf16.mxu0 0
    %3540 = vmatpush2.bf16.msra.mxu0 0
    %3541 = vmatprep.subr.bf16.mxu0 0
    %3542 = vmatpush2.bf16.msra.mxu0 0
    %3543 = vmatprep.subr.bf16.mxu0 0
    %3544 = vmatpush2.bf16.msra.mxu0 0
    %3545 = vmatprep.subr.bf16.mxu0 0
    %3546 = vmatpush2.bf16.msra.mxu0 0
    %3547 = vmatprep.subr.bf16.mxu0 0
    %3548 = vmatpush2.bf16.msra.mxu0 0
    %3549 = vmatprep.mubr.bf16.mxu0 0
    %3550 = vmatmul.mubr.bf16.gmra.mxu0 %v3515
    %v3551 = vpop.f32.mrf.mxu0
    %v3552 = vadd.f32 0.0, %v3551
    %v3553 = vpop.f32.mrf.mxu0
    %v3554 = vpop.f32.mrf.mxu0
    %v3555 = vadd.f32 0.0, %v3554
    %v3556 = vpop.f32.mrf.mxu0
    %3557 = vdwg.mxu0
    %3558 = vrot.lane.b32.xlu0 %v619, 32
    %v3559 = vpop.permute.xlu0 %3558
    %3560 = vrot.lane.b32.xlu0 %v623, 32
    %v3561 = vpop.permute.xlu0 %3560
    %v3563 = vsel %vm669, %v3559, 0
    %v3566 = vsel %vm669, %v3561, 0
    %3568 = vmatprep.subr.bf16.mxu0 0
    %3569 = vmatpush1.bf16.xpose.msra.mxu0 0
    %3570 = vmatprep.subr.bf16.mxu0 0
    %3571 = vmatpush1.bf16.xpose.msra.mxu0 0
    %3572 = vmatprep.subr.bf16.mxu0 0
    %3573 = vmatpush1.bf16.xpose.msra.mxu0 0
    %3574 = vmatprep.subr.bf16.mxu0 0
    %3575 = vmatpush1.bf16.xpose.msra.mxu0 0
    %3576 = vmatprep.subr.bf16.mxu0 0
    %3577 = vmatpush1.bf16.xpose.msra.mxu0 0
    %3578 = vmatprep.subr.bf16.mxu0 0
    %3579 = vmatpush1.bf16.xpose.msra.mxu0 0
    %3580 = vmatprep.subr.bf16.mxu0 0
    %3581 = vmatpush1.bf16.xpose.msra.mxu0 0
    %3582 = vmatprep.subr.bf16.mxu0 0
    %3583 = vmatpush1.bf16.xpose.msra.mxu0 %v3566
    %3584 = vmatprep.subr.bf16.mxu0 0
    %3585 = vmatpush2.bf16.xpose.msra.mxu0 0
    %3586 = vmatprep.subr.bf16.mxu0 0
    %3587 = vmatpush2.bf16.xpose.msra.mxu0 0
    %3588 = vmatprep.subr.bf16.mxu0 0
    %3589 = vmatpush2.bf16.xpose.msra.mxu0 0
    %3590 = vmatprep.subr.bf16.mxu0 0
    %3591 = vmatpush2.bf16.xpose.msra.mxu0 0
    %3592 = vmatprep.subr.bf16.mxu0 0
    %3593 = vmatpush2.bf16.xpose.msra.mxu0 0
    %3594 = vmatprep.subr.bf16.mxu0 0
    %3595 = vmatpush2.bf16.xpose.msra.mxu0 0
    %3596 = vmatprep.subr.bf16.mxu0 0
    %3597 = vmatpush2.bf16.xpose.msra.mxu0 0
    %3598 = vmatprep.subr.bf16.mxu0 0
    %3599 = vmatpush2.bf16.xpose.msra.mxu0 0
    %3600 = vmatprep.mubr.bf16.mxu0 0
    %3601 = vmatmul.mubr.bf16.gmra.mxu0 %v3563
    %v3602 = vpop.f32.mrf.mxu0
    %v3603 = vadd.f32 %v661, %v3602
    %v3604 = vpop.f32.mrf.mxu0
    %v3605 = vpop.f32.mrf.mxu0
    %v3606 = vadd.f32 %v662, %v3605
    %v3607 = vpop.f32.mrf.mxu0
    %3608 = vdwg.mxu0
    %3609 = vrot.lane.b32.xlu0 %v620, 32
    %v3610 = vpop.permute.xlu0 %3609
    %3611 = vrot.lane.b32.xlu0 %v624, 32
    %v3612 = vpop.permute.xlu0 %3611
    %v3614 = vsel %vm669, %v3610, 0
    %v3617 = vsel %vm669, %v3612, 0
    %3619 = vmatprep.subr.bf16.mxu0 0
    %3620 = vmatpush1.bf16.xpose.msra.mxu0 0
    %3621 = vmatprep.subr.bf16.mxu0 0
    %3622 = vmatpush1.bf16.xpose.msra.mxu0 0
    %3623 = vmatprep.subr.bf16.mxu0 0
    %3624 = vmatpush1.bf16.xpose.msra.mxu0 0
    %3625 = vmatprep.subr.bf16.mxu0 0
    %3626 = vmatpush1.bf16.xpose.msra.mxu0 0
    %3627 = vmatprep.subr.bf16.mxu0 0
    %3628 = vmatpush1.bf16.xpose.msra.mxu0 0
    %3629 = vmatprep.subr.bf16.mxu0 0
    %3630 = vmatpush1.bf16.xpose.msra.mxu0 0
    %3631 = vmatprep.subr.bf16.mxu0 0
    %3632 = vmatpush1.bf16.xpose.msra.mxu0 0
    %3633 = vmatprep.subr.bf16.mxu0 0
    %3634 = vmatpush1.bf16.xpose.msra.mxu0 %v3617
    %3635 = vmatprep.subr.bf16.mxu0 0
    %3636 = vmatpush2.bf16.xpose.msra.mxu0 0
    %3637 = vmatprep.subr.bf16.mxu0 0
    %3638 = vmatpush2.bf16.xpose.msra.mxu0 0
    %3639 = vmatprep.subr.bf16.mxu0 0
    %3640 = vmatpush2.bf16.xpose.msra.mxu0 0
    %3641 = vmatprep.subr.bf16.mxu0 0
    %3642 = vmatpush2.bf16.xpose.msra.mxu0 0
    %3643 = vmatprep.subr.bf16.mxu0 0
    %3644 = vmatpush2.bf16.xpose.msra.mxu0 0
    %3645 = vmatprep.subr.bf16.mxu0 0
    %3646 = vmatpush2.bf16.xpose.msra.mxu0 0
    %3647 = vmatprep.subr.bf16.mxu0 0
    %3648 = vmatpush2.bf16.xpose.msra.mxu0 0
    %3649 = vmatprep.subr.bf16.mxu0 0
    %3650 = vmatpush2.bf16.xpose.msra.mxu0 0
    %3651 = vmatprep.mubr.bf16.mxu0 0
    %3652 = vmatmul.mubr.bf16.gmra.mxu0 %v3614
    %v3653 = vpop.f32.mrf.mxu0
    %v3654 = vadd.f32 %v663, %v3653
    %v3655 = vpop.f32.mrf.mxu0
    %v3656 = vpop.f32.mrf.mxu0
    %v3657 = vadd.f32 %v664, %v3656
    %v3658 = vpop.f32.mrf.mxu0
    %3659 = vdwg.mxu0
    %3660 = vrot.lane.b32.xlu0 %v621, 32
    %v3661 = vpop.permute.xlu0 %3660
    %3662 = vrot.lane.b32.xlu0 %v625, 32
    %v3663 = vpop.permute.xlu0 %3662
    %v3665 = vsel %vm669, %v3661, 0
    %v3668 = vsel %vm669, %v3663, 0
    %3670 = vmatprep.subr.bf16.mxu0 0
    %3671 = vmatpush1.bf16.xpose.msra.mxu0 0
    %3672 = vmatprep.subr.bf16.mxu0 0
    %3673 = vmatpush1.bf16.xpose.msra.mxu0 0
    %3674 = vmatprep.subr.bf16.mxu0 0
    %3675 = vmatpush1.bf16.xpose.msra.mxu0 0
    %3676 = vmatprep.subr.bf16.mxu0 0
    %3677 = vmatpush1.bf16.xpose.msra.mxu0 0
    %3678 = vmatprep.subr.bf16.mxu0 0
    %3679 = vmatpush1.bf16.xpose.msra.mxu0 0
    %3680 = vmatprep.subr.bf16.mxu0 0
    %3681 = vmatpush1.bf16.xpose.msra.mxu0 0
    %3682 = vmatprep.subr.bf16.mxu0 0
    %3683 = vmatpush1.bf16.xpose.msra.mxu0 0
    %3684 = vmatprep.subr.bf16.mxu0 0
    %3685 = vmatpush1.bf16.xpose.msra.mxu0 %v3668
    %3686 = vmatprep.subr.bf16.mxu0 0
    %3687 = vmatpush2.bf16.xpose.msra.mxu0 0
    %3688 = vmatprep.subr.bf16.mxu0 0
    %3689 = vmatpush2.bf16.xpose.msra.mxu0 0
    %3690 = vmatprep.subr.bf16.mxu0 0
    %3691 = vmatpush2.bf16.xpose.msra.mxu0 0
    %3692 = vmatprep.subr.bf16.mxu0 0
    %3693 = vmatpush2.bf16.xpose.msra.mxu0 0
    %3694 = vmatprep.subr.bf16.mxu0 0
    %3695 = vmatpush2.bf16.xpose.msra.mxu0 0
    %3696 = vmatprep.subr.bf16.mxu0 0
    %3697 = vmatpush2.bf16.xpose.msra.mxu0 0
    %3698 = vmatprep.subr.bf16.mxu0 0
    %3699 = vmatpush2.bf16.xpose.msra.mxu0 0
    %3700 = vmatprep.subr.bf16.mxu0 0
    %3701 = vmatpush2.bf16.xpose.msra.mxu0 0
    %3702 = vmatprep.mubr.bf16.mxu0 0
    %3703 = vmatmul.mubr.bf16.gmra.mxu0 %v3665
    %v3704 = vpop.f32.mrf.mxu0
    %v3705 = vadd.f32 %v665, %v3704
    %v3706 = vpop.f32.mrf.mxu0
    %v3707 = vpop.f32.mrf.mxu0
    %v3708 = vadd.f32 %v666, %v3707
    %v3709 = vpop.f32.mrf.mxu0
    %3710 = vdwg.mxu0
    %3711 = vrot.lane.b32.xlu0 %v622, 32
    %v3712 = vpop.permute.xlu0 %3711
    %3713 = vrot.lane.b32.xlu0 %v626, 32
    %v3714 = vpop.permute.xlu0 %3713
    %v3716 = vsel %vm669, %v3712, 0
    %v3719 = vsel %vm669, %v3714, 0
    %3721 = vmatprep.subr.bf16.mxu0 0
    %3722 = vmatpush1.bf16.xpose.msra.mxu0 0
    %3723 = vmatprep.subr.bf16.mxu0 0
    %3724 = vmatpush1.bf16.xpose.msra.mxu0 0
    %3725 = vmatprep.subr.bf16.mxu0 0
    %3726 = vmatpush1.bf16.xpose.msra.mxu0 0
    %3727 = vmatprep.subr.bf16.mxu0 0
    %3728 = vmatpush1.bf16.xpose.msra.mxu0 0
    %3729 = vmatprep.subr.bf16.mxu0 0
    %3730 = vmatpush1.bf16.xpose.msra.mxu0 0
    %3731 = vmatprep.subr.bf16.mxu0 0
    %3732 = vmatpush1.bf16.xpose.msra.mxu0 0
    %3733 = vmatprep.subr.bf16.mxu0 0
    %3734 = vmatpush1.bf16.xpose.msra.mxu0 0
    %3735 = vmatprep.subr.bf16.mxu0 0
    %3736 = vmatpush1.bf16.xpose.msra.mxu0 %v3719
    %3737 = vmatprep.subr.bf16.mxu0 0
    %3738 = vmatpush2.bf16.xpose.msra.mxu0 0
    %3739 = vmatprep.subr.bf16.mxu0 0
    %3740 = vmatpush2.bf16.xpose.msra.mxu0 0
    %3741 = vmatprep.subr.bf16.mxu0 0
    %3742 = vmatpush2.bf16.xpose.msra.mxu0 0
    %3743 = vmatprep.subr.bf16.mxu0 0
    %3744 = vmatpush2.bf16.xpose.msra.mxu0 0
    %3745 = vmatprep.subr.bf16.mxu0 0
    %3746 = vmatpush2.bf16.xpose.msra.mxu0 0
    %3747 = vmatprep.subr.bf16.mxu0 0
    %3748 = vmatpush2.bf16.xpose.msra.mxu0 0
    %3749 = vmatprep.subr.bf16.mxu0 0
    %3750 = vmatpush2.bf16.xpose.msra.mxu0 0
    %3751 = vmatprep.subr.bf16.mxu0 0
    %3752 = vmatpush2.bf16.xpose.msra.mxu0 0
    %3753 = vmatprep.mubr.bf16.mxu0 0
    %3754 = vmatmul.mubr.bf16.gmra.mxu0 %v3716
    %v3755 = vpop.f32.mrf.mxu0
    %v3756 = vadd.f32 %v667, %v3755
    %v3757 = vpop.f32.mrf.mxu0
    %v3758 = vpop.f32.mrf.mxu0
    %v3759 = vadd.f32 %v668, %v3758
    %v3760 = vpop.f32.mrf.mxu0
    %3761 = vdwg.mxu0
    %v3762 = vsel %vm669, %v3603, -inf
    %3763 = vmax.xlane.f32.xlu0 %v3762
    %v3764 = vpop.xlane.xlu0 %3763
    %v3765 = vsel %vm669, %v3606, -inf
    %3766 = vmax.xlane.f32.xlu0 %v3765
    %v3767 = vpop.xlane.xlu0 %3766
    %v3768 = vsel %vm669, %v3654, -inf
    %3769 = vmax.xlane.f32.xlu0 %v3768
    %v3770 = vpop.xlane.xlu0 %3769
    %v3771 = vsel %vm669, %v3657, -inf
    %3772 = vmax.xlane.f32.xlu0 %v3771
    %v3773 = vpop.xlane.xlu0 %3772
    %v3774 = vsel %vm669, %v3705, -inf
    %3775 = vmax.xlane.f32.xlu0 %v3774
    %v3776 = vpop.xlane.xlu0 %3775
    %v3777 = vsel %vm669, %v3708, -inf
    %3778 = vmax.xlane.f32.xlu0 %v3777
    %v3779 = vpop.xlane.xlu0 %3778
    %v3780 = vsel %vm669, %v3756, -inf
    %3781 = vmax.xlane.f32.xlu0 %v3780
    %v3782 = vpop.xlane.xlu0 %3781
    %v3783 = vsel %vm669, %v3759, -inf
    %3784 = vmax.xlane.f32.xlu0 %v3783
    %v3785 = vpop.xlane.xlu0 %3784
    %v3786 = vsub.f32 %v3603, %v3764
    %v3787 = vsub.f32 %v3606, %v3767
    %v3788 = vsub.f32 %v3654, %v3770
    %v3789 = vsub.f32 %v3657, %v3773
    %v3790 = vsub.f32 %v3705, %v3776
    %v3791 = vsub.f32 %v3708, %v3779
    %v3792 = vsub.f32 %v3756, %v3782
    %v3793 = vsub.f32 %v3759, %v3785
    %v3794 = vmul.f32 %v3786, 1.442695
    %v3795 = vpow.pop %v3794
    %v3796 = vmul.f32 %v3787, 1.442695
    %v3797 = vpow.pop %v3796
    %v3798 = vmul.f32 %v3788, 1.442695
    %v3799 = vpow.pop %v3798
    %v3800 = vmul.f32 %v3789, 1.442695
    %v3801 = vpow.pop %v3800
    %v3802 = vmul.f32 %v3790, 1.442695
    %v3803 = vpow.pop %v3802
    %v3804 = vmul.f32 %v3791, 1.442695
    %v3805 = vpow.pop %v3804
    %v3806 = vmul.f32 %v3792, 1.442695
    %v3807 = vpow.pop %v3806
    %v3808 = vmul.f32 %v3793, 1.442695
    %v3809 = vpow.pop %v3808
    %v3810 = vsel %vm669, %v3795, 0.0
    %3811 = vadd.xlane.f32.xlu0 %v3810
    %v3812 = vpop.xlane.xlu0 %3811
    %v3813 = vsel %vm669, %v3797, 0.0
    %3814 = vadd.xlane.f32.xlu0 %v3813
    %v3815 = vpop.xlane.xlu0 %3814
    %v3816 = vsel %vm669, %v3799, 0.0
    %3817 = vadd.xlane.f32.xlu0 %v3816
    %v3818 = vpop.xlane.xlu0 %3817
    %v3819 = vsel %vm669, %v3801, 0.0
    %3820 = vadd.xlane.f32.xlu0 %v3819
    %v3821 = vpop.xlane.xlu0 %3820
    %v3822 = vsel %vm669, %v3803, 0.0
    %3823 = vadd.xlane.f32.xlu0 %v3822
    %v3824 = vpop.xlane.xlu0 %3823
    %v3825 = vsel %vm669, %v3805, 0.0
    %3826 = vadd.xlane.f32.xlu0 %v3825
    %v3827 = vpop.xlane.xlu0 %3826
    %v3828 = vsel %vm669, %v3807, 0.0
    %3829 = vadd.xlane.f32.xlu0 %v3828
    %v3830 = vpop.xlane.xlu0 %3829
    %v3831 = vsel %vm669, %v3809, 0.0
    %3832 = vadd.xlane.f32.xlu0 %v3831
    %v3833 = vpop.xlane.xlu0 %3832
    %v3834 = vrcp.pop %v3812
    %v3835 = vrcp.pop %v3815
    %v3836 = vrcp.pop %v3818
    %v3837 = vrcp.pop %v3821
    %v3838 = vrcp.pop %v3824
    %v3839 = vrcp.pop %v3827
    %v3840 = vrcp.pop %v3830
    %v3841 = vrcp.pop %v3833
    %v3842 = vmul.f32 %v3795, %v3834
    %v3843 = vmul.f32 %v3797, %v3835
    %v3844 = vmul.f32 %v3799, %v3836
    %v3845 = vmul.f32 %v3801, %v3837
    %v3846 = vmul.f32 %v3803, %v3838
    %v3847 = vmul.f32 %v3805, %v3839
    %v3848 = vmul.f32 %v3807, %v3840
    %v3849 = vmul.f32 %v3809, %v3841
    %v3850 = vpack.c.bf16 %v3843, %v3842
    %v3851 = vpack.c.bf16 %v3845, %v3844
    %v3852 = vpack.c.bf16 %v3847, %v3846
    %v3853 = vpack.c.bf16 %v3849, %v3848
    %3854 = vrot.lane.b32.xlu0 %v627, 32
    %v3855 = vpop.permute.xlu0 %3854
    %v3858 = vsel %vm669, %v3850, 0
    %3860 = vmatprep.subr.bf16.mxu0 0
    %3861 = vmatpush1.bf16.msra.mxu0 0
    %3862 = vmatprep.subr.bf16.mxu0 0
    %3863 = vmatpush1.bf16.msra.mxu0 0
    %3864 = vmatprep.subr.bf16.mxu0 0
    %3865 = vmatpush1.bf16.msra.mxu0 0
    %3866 = vmatprep.subr.bf16.mxu0 0
    %3867 = vmatpush1.bf16.msra.mxu0 0
    %3868 = vmatprep.subr.bf16.mxu0 0
    %3869 = vmatpush1.bf16.msra.mxu0 0
    %3870 = vmatprep.subr.bf16.mxu0 0
    %3871 = vmatpush1.bf16.msra.mxu0 0
    %3872 = vmatprep.subr.bf16.mxu0 0
    %3873 = vmatpush1.bf16.msra.mxu0 0
    %3874 = vmatprep.subr.bf16.mxu0 0
    %3875 = vmatpush1.bf16.msra.mxu0 %v3855
    %3876 = vmatprep.subr.bf16.mxu0 0
    %3877 = vmatpush2.bf16.msra.mxu0 0
    %3878 = vmatprep.subr.bf16.mxu0 0
    %3879 = vmatpush2.bf16.msra.mxu0 0
    %3880 = vmatprep.subr.bf16.mxu0 0
    %3881 = vmatpush2.bf16.msra.mxu0 0
    %3882 = vmatprep.subr.bf16.mxu0 0
    %3883 = vmatpush2.bf16.msra.mxu0 0
    %3884 = vmatprep.subr.bf16.mxu0 0
    %3885 = vmatpush2.bf16.msra.mxu0 0
    %3886 = vmatprep.subr.bf16.mxu0 0
    %3887 = vmatpush2.bf16.msra.mxu0 0
    %3888 = vmatprep.subr.bf16.mxu0 0
    %3889 = vmatpush2.bf16.msra.mxu0 0
    %3890 = vmatprep.subr.bf16.mxu0 0
    %3891 = vmatpush2.bf16.msra.mxu0 0
    %3892 = vmatprep.mubr.bf16.mxu0 0
    %3893 = vmatmul.mubr.bf16.gmra.mxu0 %v3858
    %v3894 = vpop.f32.mrf.mxu0
    %v3895 = vadd.f32 0.0, %v3894
    %v3896 = vpop.f32.mrf.mxu0
    %v3897 = vpop.f32.mrf.mxu0
    %v3898 = vadd.f32 0.0, %v3897
    %v3899 = vpop.f32.mrf.mxu0
    %3900 = vdwg.mxu0
    %3901 = vrot.lane.b32.xlu0 %v628, 32
    %v3902 = vpop.permute.xlu0 %3901
    %v3905 = vsel %vm669, %v3851, 0
    %3907 = vmatprep.subr.bf16.mxu0 0
    %3908 = vmatpush1.bf16.msra.mxu0 0
    %3909 = vmatprep.subr.bf16.mxu0 0
    %3910 = vmatpush1.bf16.msra.mxu0 0
    %3911 = vmatprep.subr.bf16.mxu0 0
    %3912 = vmatpush1.bf16.msra.mxu0 0
    %3913 = vmatprep.subr.bf16.mxu0 0
    %3914 = vmatpush1.bf16.msra.mxu0 0
    %3915 = vmatprep.subr.bf16.mxu0 0
    %3916 = vmatpush1.bf16.msra.mxu0 0
    %3917 = vmatprep.subr.bf16.mxu0 0
    %3918 = vmatpush1.bf16.msra.mxu0 0
    %3919 = vmatprep.subr.bf16.mxu0 0
    %3920 = vmatpush1.bf16.msra.mxu0 0
    %3921 = vmatprep.subr.bf16.mxu0 0
    %3922 = vmatpush1.bf16.msra.mxu0 %v3902
    %3923 = vmatprep.subr.bf16.mxu0 0
    %3924 = vmatpush2.bf16.msra.mxu0 0
    %3925 = vmatprep.subr.bf16.mxu0 0
    %3926 = vmatpush2.bf16.msra.mxu0 0
    %3927 = vmatprep.subr.bf16.mxu0 0
    %3928 = vmatpush2.bf16.msra.mxu0 0
    %3929 = vmatprep.subr.bf16.mxu0 0
    %3930 = vmatpush2.bf16.msra.mxu0 0
    %3931 = vmatprep.subr.bf16.mxu0 0
    %3932 = vmatpush2.bf16.msra.mxu0 0
    %3933 = vmatprep.subr.bf16.mxu0 0
    %3934 = vmatpush2.bf16.msra.mxu0 0
    %3935 = vmatprep.subr.bf16.mxu0 0
    %3936 = vmatpush2.bf16.msra.mxu0 0
    %3937 = vmatprep.subr.bf16.mxu0 0
    %3938 = vmatpush2.bf16.msra.mxu0 0
    %3939 = vmatprep.mubr.bf16.mxu0 0
    %3940 = vmatmul.mubr.bf16.gmra.mxu0 %v3905
    %v3941 = vpop.f32.mrf.mxu0
    %v3942 = vadd.f32 0.0, %v3941
    %v3943 = vpop.f32.mrf.mxu0
    %v3944 = vpop.f32.mrf.mxu0
    %v3945 = vadd.f32 0.0, %v3944
    %v3946 = vpop.f32.mrf.mxu0
    %3947 = vdwg.mxu0
    %3948 = vrot.lane.b32.xlu0 %v629, 32
    %v3949 = vpop.permute.xlu0 %3948
    %v3952 = vsel %vm669, %v3852, 0
    %3954 = vmatprep.subr.bf16.mxu0 0
    %3955 = vmatpush1.bf16.msra.mxu0 0
    %3956 = vmatprep.subr.bf16.mxu0 0
    %3957 = vmatpush1.bf16.msra.mxu0 0
    %3958 = vmatprep.subr.bf16.mxu0 0
    %3959 = vmatpush1.bf16.msra.mxu0 0
    %3960 = vmatprep.subr.bf16.mxu0 0
    %3961 = vmatpush1.bf16.msra.mxu0 0
    %3962 = vmatprep.subr.bf16.mxu0 0
    %3963 = vmatpush1.bf16.msra.mxu0 0
    %3964 = vmatprep.subr.bf16.mxu0 0
    %3965 = vmatpush1.bf16.msra.mxu0 0
    %3966 = vmatprep.subr.bf16.mxu0 0
    %3967 = vmatpush1.bf16.msra.mxu0 0
    %3968 = vmatprep.subr.bf16.mxu0 0
    %3969 = vmatpush1.bf16.msra.mxu0 %v3949
    %3970 = vmatprep.subr.bf16.mxu0 0
    %3971 = vmatpush2.bf16.msra.mxu0 0
    %3972 = vmatprep.subr.bf16.mxu0 0
    %3973 = vmatpush2.bf16.msra.mxu0 0
    %3974 = vmatprep.subr.bf16.mxu0 0
    %3975 = vmatpush2.bf16.msra.mxu0 0
    %3976 = vmatprep.subr.bf16.mxu0 0
    %3977 = vmatpush2.bf16.msra.mxu0 0
    %3978 = vmatprep.subr.bf16.mxu0 0
    %3979 = vmatpush2.bf16.msra.mxu0 0
    %3980 = vmatprep.subr.bf16.mxu0 0
    %3981 = vmatpush2.bf16.msra.mxu0 0
    %3982 = vmatprep.subr.bf16.mxu0 0
    %3983 = vmatpush2.bf16.msra.mxu0 0
    %3984 = vmatprep.subr.bf16.mxu0 0
    %3985 = vmatpush2.bf16.msra.mxu0 0
    %3986 = vmatprep.mubr.bf16.mxu0 0
    %3987 = vmatmul.mubr.bf16.gmra.mxu0 %v3952
    %v3988 = vpop.f32.mrf.mxu0
    %v3989 = vadd.f32 0.0, %v3988
    %v3990 = vpop.f32.mrf.mxu0
    %v3991 = vpop.f32.mrf.mxu0
    %v3992 = vadd.f32 0.0, %v3991
    %v3993 = vpop.f32.mrf.mxu0
    %3994 = vdwg.mxu0
    %3995 = vrot.lane.b32.xlu0 %v630, 32
    %v3996 = vpop.permute.xlu0 %3995
    %v3999 = vsel %vm669, %v3853, 0
    %4001 = vmatprep.subr.bf16.mxu0 0
    %4002 = vmatpush1.bf16.msra.mxu0 0
    %4003 = vmatprep.subr.bf16.mxu0 0
    %4004 = vmatpush1.bf16.msra.mxu0 0
    %4005 = vmatprep.subr.bf16.mxu0 0
    %4006 = vmatpush1.bf16.msra.mxu0 0
    %4007 = vmatprep.subr.bf16.mxu0 0
    %4008 = vmatpush1.bf16.msra.mxu0 0
    %4009 = vmatprep.subr.bf16.mxu0 0
    %4010 = vmatpush1.bf16.msra.mxu0 0
    %4011 = vmatprep.subr.bf16.mxu0 0
    %4012 = vmatpush1.bf16.msra.mxu0 0
    %4013 = vmatprep.subr.bf16.mxu0 0
    %4014 = vmatpush1.bf16.msra.mxu0 0
    %4015 = vmatprep.subr.bf16.mxu0 0
    %4016 = vmatpush1.bf16.msra.mxu0 %v3996
    %4017 = vmatprep.subr.bf16.mxu0 0
    %4018 = vmatpush2.bf16.msra.mxu0 0
    %4019 = vmatprep.subr.bf16.mxu0 0
    %4020 = vmatpush2.bf16.msra.mxu0 0
    %4021 = vmatprep.subr.bf16.mxu0 0
    %4022 = vmatpush2.bf16.msra.mxu0 0
    %4023 = vmatprep.subr.bf16.mxu0 0
    %4024 = vmatpush2.bf16.msra.mxu0 0
    %4025 = vmatprep.subr.bf16.mxu0 0
    %4026 = vmatpush2.bf16.msra.mxu0 0
    %4027 = vmatprep.subr.bf16.mxu0 0
    %4028 = vmatpush2.bf16.msra.mxu0 0
    %4029 = vmatprep.subr.bf16.mxu0 0
    %4030 = vmatpush2.bf16.msra.mxu0 0
    %4031 = vmatprep.subr.bf16.mxu0 0
    %4032 = vmatpush2.bf16.msra.mxu0 0
    %4033 = vmatprep.mubr.bf16.mxu0 0
    %4034 = vmatmul.mubr.bf16.gmra.mxu0 %v3999
    %v4035 = vpop.f32.mrf.mxu0
    %v4036 = vadd.f32 0.0, %v4035
    %v4037 = vpop.f32.mrf.mxu0
    %v4038 = vpop.f32.mrf.mxu0
    %v4039 = vadd.f32 0.0, %v4038
    %v4040 = vpop.f32.mrf.mxu0
    %4041 = vdwg.mxu0
    %4042 = vrot.lane.b32.xlu0 %v619, 16
    %v4043 = vpop.permute.xlu0 %4042
    %4044 = vrot.lane.b32.xlu0 %v623, 16
    %v4045 = vpop.permute.xlu0 %4044
    %v4047 = vsel %vm669, %v4043, 0
    %v4050 = vsel %vm669, %v4045, 0
    %4052 = vmatprep.subr.bf16.mxu0 0
    %4053 = vmatpush1.bf16.xpose.msra.mxu0 0
    %4054 = vmatprep.subr.bf16.mxu0 0
    %4055 = vmatpush1.bf16.xpose.msra.mxu0 0
    %4056 = vmatprep.subr.bf16.mxu0 0
    %4057 = vmatpush1.bf16.xpose.msra.mxu0 0
    %4058 = vmatprep.subr.bf16.mxu0 0
    %4059 = vmatpush1.bf16.xpose.msra.mxu0 0
    %4060 = vmatprep.subr.bf16.mxu0 0
    %4061 = vmatpush1.bf16.xpose.msra.mxu0 0
    %4062 = vmatprep.subr.bf16.mxu0 0
    %4063 = vmatpush1.bf16.xpose.msra.mxu0 0
    %4064 = vmatprep.subr.bf16.mxu0 0
    %4065 = vmatpush1.bf16.xpose.msra.mxu0 0
    %4066 = vmatprep.subr.bf16.mxu0 0
    %4067 = vmatpush1.bf16.xpose.msra.mxu0 %v4050
    %4068 = vmatprep.subr.bf16.mxu0 0
    %4069 = vmatpush2.bf16.xpose.msra.mxu0 0
    %4070 = vmatprep.subr.bf16.mxu0 0
    %4071 = vmatpush2.bf16.xpose.msra.mxu0 0
    %4072 = vmatprep.subr.bf16.mxu0 0
    %4073 = vmatpush2.bf16.xpose.msra.mxu0 0
    %4074 = vmatprep.subr.bf16.mxu0 0
    %4075 = vmatpush2.bf16.xpose.msra.mxu0 0
    %4076 = vmatprep.subr.bf16.mxu0 0
    %4077 = vmatpush2.bf16.xpose.msra.mxu0 0
    %4078 = vmatprep.subr.bf16.mxu0 0
    %4079 = vmatpush2.bf16.xpose.msra.mxu0 0
    %4080 = vmatprep.subr.bf16.mxu0 0
    %4081 = vmatpush2.bf16.xpose.msra.mxu0 0
    %4082 = vmatprep.subr.bf16.mxu0 0
    %4083 = vmatpush2.bf16.xpose.msra.mxu0 0
    %4084 = vmatprep.mubr.bf16.mxu0 0
    %4085 = vmatmul.mubr.bf16.gmra.mxu0 %v4047
    %v4086 = vpop.f32.mrf.mxu0
    %v4087 = vadd.f32 %v661, %v4086
    %v4088 = vpop.f32.mrf.mxu0
    %v4089 = vpop.f32.mrf.mxu0
    %v4090 = vadd.f32 %v662, %v4089
    %v4091 = vpop.f32.mrf.mxu0
    %4092 = vdwg.mxu0
    %4093 = vrot.lane.b32.xlu0 %v620, 16
    %v4094 = vpop.permute.xlu0 %4093
    %4095 = vrot.lane.b32.xlu0 %v624, 16
    %v4096 = vpop.permute.xlu0 %4095
    %v4098 = vsel %vm669, %v4094, 0
    %v4101 = vsel %vm669, %v4096, 0
    %4103 = vmatprep.subr.bf16.mxu0 0
    %4104 = vmatpush1.bf16.xpose.msra.mxu0 0
    %4105 = vmatprep.subr.bf16.mxu0 0
    %4106 = vmatpush1.bf16.xpose.msra.mxu0 0
    %4107 = vmatprep.subr.bf16.mxu0 0
    %4108 = vmatpush1.bf16.xpose.msra.mxu0 0
    %4109 = vmatprep.subr.bf16.mxu0 0
    %4110 = vmatpush1.bf16.xpose.msra.mxu0 0
    %4111 = vmatprep.subr.bf16.mxu0 0
    %4112 = vmatpush1.bf16.xpose.msra.mxu0 0
    %4113 = vmatprep.subr.bf16.mxu0 0
    %4114 = vmatpush1.bf16.xpose.msra.mxu0 0
    %4115 = vmatprep.subr.bf16.mxu0 0
    %4116 = vmatpush1.bf16.xpose.msra.mxu0 0
    %4117 = vmatprep.subr.bf16.mxu0 0
    %4118 = vmatpush1.bf16.xpose.msra.mxu0 %v4101
    %4119 = vmatprep.subr.bf16.mxu0 0
    %4120 = vmatpush2.bf16.xpose.msra.mxu0 0
    %4121 = vmatprep.subr.bf16.mxu0 0
    %4122 = vmatpush2.bf16.xpose.msra.mxu0 0
    %4123 = vmatprep.subr.bf16.mxu0 0
    %4124 = vmatpush2.bf16.xpose.msra.mxu0 0
    %4125 = vmatprep.subr.bf16.mxu0 0
    %4126 = vmatpush2.bf16.xpose.msra.mxu0 0
    %4127 = vmatprep.subr.bf16.mxu0 0
    %4128 = vmatpush2.bf16.xpose.msra.mxu0 0
    %4129 = vmatprep.subr.bf16.mxu0 0
    %4130 = vmatpush2.bf16.xpose.msra.mxu0 0
    %4131 = vmatprep.subr.bf16.mxu0 0
    %4132 = vmatpush2.bf16.xpose.msra.mxu0 0
    %4133 = vmatprep.subr.bf16.mxu0 0
    %4134 = vmatpush2.bf16.xpose.msra.mxu0 0
    %4135 = vmatprep.mubr.bf16.mxu0 0
    %4136 = vmatmul.mubr.bf16.gmra.mxu0 %v4098
    %v4137 = vpop.f32.mrf.mxu0
    %v4138 = vadd.f32 %v663, %v4137
    %v4139 = vpop.f32.mrf.mxu0
    %v4140 = vpop.f32.mrf.mxu0
    %v4141 = vadd.f32 %v664, %v4140
    %v4142 = vpop.f32.mrf.mxu0
    %4143 = vdwg.mxu0
    %4144 = vrot.lane.b32.xlu0 %v621, 16
    %v4145 = vpop.permute.xlu0 %4144
    %4146 = vrot.lane.b32.xlu0 %v625, 16
    %v4147 = vpop.permute.xlu0 %4146
    %v4149 = vsel %vm669, %v4145, 0
    %v4152 = vsel %vm669, %v4147, 0
    %4154 = vmatprep.subr.bf16.mxu0 0
    %4155 = vmatpush1.bf16.xpose.msra.mxu0 0
    %4156 = vmatprep.subr.bf16.mxu0 0
    %4157 = vmatpush1.bf16.xpose.msra.mxu0 0
    %4158 = vmatprep.subr.bf16.mxu0 0
    %4159 = vmatpush1.bf16.xpose.msra.mxu0 0
    %4160 = vmatprep.subr.bf16.mxu0 0
    %4161 = vmatpush1.bf16.xpose.msra.mxu0 0
    %4162 = vmatprep.subr.bf16.mxu0 0
    %4163 = vmatpush1.bf16.xpose.msra.mxu0 0
    %4164 = vmatprep.subr.bf16.mxu0 0
    %4165 = vmatpush1.bf16.xpose.msra.mxu0 0
    %4166 = vmatprep.subr.bf16.mxu0 0
    %4167 = vmatpush1.bf16.xpose.msra.mxu0 0
    %4168 = vmatprep.subr.bf16.mxu0 0
    %4169 = vmatpush1.bf16.xpose.msra.mxu0 %v4152
    %4170 = vmatprep.subr.bf16.mxu0 0
    %4171 = vmatpush2.bf16.xpose.msra.mxu0 0
    %4172 = vmatprep.subr.bf16.mxu0 0
    %4173 = vmatpush2.bf16.xpose.msra.mxu0 0
    %4174 = vmatprep.subr.bf16.mxu0 0
    %4175 = vmatpush2.bf16.xpose.msra.mxu0 0
    %4176 = vmatprep.subr.bf16.mxu0 0
    %4177 = vmatpush2.bf16.xpose.msra.mxu0 0
    %4178 = vmatprep.subr.bf16.mxu0 0
    %4179 = vmatpush2.bf16.xpose.msra.mxu0 0
    %4180 = vmatprep.subr.bf16.mxu0 0
    %4181 = vmatpush2.bf16.xpose.msra.mxu0 0
    %4182 = vmatprep.subr.bf16.mxu0 0
    %4183 = vmatpush2.bf16.xpose.msra.mxu0 0
    %4184 = vmatprep.subr.bf16.mxu0 0
    %4185 = vmatpush2.bf16.xpose.msra.mxu0 0
    %4186 = vmatprep.mubr.bf16.mxu0 0
    %4187 = vmatmul.mubr.bf16.gmra.mxu0 %v4149
    %v4188 = vpop.f32.mrf.mxu0
    %v4189 = vadd.f32 %v665, %v4188
    %v4190 = vpop.f32.mrf.mxu0
    %v4191 = vpop.f32.mrf.mxu0
    %v4192 = vadd.f32 %v666, %v4191
    %v4193 = vpop.f32.mrf.mxu0
    %4194 = vdwg.mxu0
    %4195 = vrot.lane.b32.xlu0 %v622, 16
    %v4196 = vpop.permute.xlu0 %4195
    %4197 = vrot.lane.b32.xlu0 %v626, 16
    %v4198 = vpop.permute.xlu0 %4197
    %v4200 = vsel %vm669, %v4196, 0
    %v4203 = vsel %vm669, %v4198, 0
    %4205 = vmatprep.subr.bf16.mxu0 0
    %4206 = vmatpush1.bf16.xpose.msra.mxu0 0
    %4207 = vmatprep.subr.bf16.mxu0 0
    %4208 = vmatpush1.bf16.xpose.msra.mxu0 0
    %4209 = vmatprep.subr.bf16.mxu0 0
    %4210 = vmatpush1.bf16.xpose.msra.mxu0 0
    %4211 = vmatprep.subr.bf16.mxu0 0
    %4212 = vmatpush1.bf16.xpose.msra.mxu0 0
    %4213 = vmatprep.subr.bf16.mxu0 0
    %4214 = vmatpush1.bf16.xpose.msra.mxu0 0
    %4215 = vmatprep.subr.bf16.mxu0 0
    %4216 = vmatpush1.bf16.xpose.msra.mxu0 0
    %4217 = vmatprep.subr.bf16.mxu0 0
    %4218 = vmatpush1.bf16.xpose.msra.mxu0 0
    %4219 = vmatprep.subr.bf16.mxu0 0
    %4220 = vmatpush1.bf16.xpose.msra.mxu0 %v4203
    %4221 = vmatprep.subr.bf16.mxu0 0
    %4222 = vmatpush2.bf16.xpose.msra.mxu0 0
    %4223 = vmatprep.subr.bf16.mxu0 0
    %4224 = vmatpush2.bf16.xpose.msra.mxu0 0
    %4225 = vmatprep.subr.bf16.mxu0 0
    %4226 = vmatpush2.bf16.xpose.msra.mxu0 0
    %4227 = vmatprep.subr.bf16.mxu0 0
    %4228 = vmatpush2.bf16.xpose.msra.mxu0 0
    %4229 = vmatprep.subr.bf16.mxu0 0
    %4230 = vmatpush2.bf16.xpose.msra.mxu0 0
    %4231 = vmatprep.subr.bf16.mxu0 0
    %4232 = vmatpush2.bf16.xpose.msra.mxu0 0
    %4233 = vmatprep.subr.bf16.mxu0 0
    %4234 = vmatpush2.bf16.xpose.msra.mxu0 0
    %4235 = vmatprep.subr.bf16.mxu0 0
    %4236 = vmatpush2.bf16.xpose.msra.mxu0 0
    %4237 = vmatprep.mubr.bf16.mxu0 0
    %4238 = vmatmul.mubr.bf16.gmra.mxu0 %v4200
    %v4239 = vpop.f32.mrf.mxu0
    %v4240 = vadd.f32 %v667, %v4239
    %v4241 = vpop.f32.mrf.mxu0
    %v4242 = vpop.f32.mrf.mxu0
    %v4243 = vadd.f32 %v668, %v4242
    %v4244 = vpop.f32.mrf.mxu0
    %4245 = vdwg.mxu0
    %v4246 = vsel %vm669, %v4087, -inf
    %4247 = vmax.xlane.f32.xlu0 %v4246
    %v4248 = vpop.xlane.xlu0 %4247
    %v4249 = vsel %vm669, %v4090, -inf
    %4250 = vmax.xlane.f32.xlu0 %v4249
    %v4251 = vpop.xlane.xlu0 %4250
    %v4252 = vsel %vm669, %v4138, -inf
    %4253 = vmax.xlane.f32.xlu0 %v4252
    %v4254 = vpop.xlane.xlu0 %4253
    %v4255 = vsel %vm669, %v4141, -inf
    %4256 = vmax.xlane.f32.xlu0 %v4255
    %v4257 = vpop.xlane.xlu0 %4256
    %v4258 = vsel %vm669, %v4189, -inf
    %4259 = vmax.xlane.f32.xlu0 %v4258
    %v4260 = vpop.xlane.xlu0 %4259
    %v4261 = vsel %vm669, %v4192, -inf
    %4262 = vmax.xlane.f32.xlu0 %v4261
    %v4263 = vpop.xlane.xlu0 %4262
    %v4264 = vsel %vm669, %v4240, -inf
    %4265 = vmax.xlane.f32.xlu0 %v4264
    %v4266 = vpop.xlane.xlu0 %4265
    %v4267 = vsel %vm669, %v4243, -inf
    %4268 = vmax.xlane.f32.xlu0 %v4267
    %v4269 = vpop.xlane.xlu0 %4268
    %v4270 = vsub.f32 %v4087, %v4248
    %v4271 = vsub.f32 %v4090, %v4251
    %v4272 = vsub.f32 %v4138, %v4254
    %v4273 = vsub.f32 %v4141, %v4257
    %v4274 = vsub.f32 %v4189, %v4260
    %v4275 = vsub.f32 %v4192, %v4263
    %v4276 = vsub.f32 %v4240, %v4266
    %v4277 = vsub.f32 %v4243, %v4269
    %v4278 = vmul.f32 %v4270, 1.442695
    %v4279 = vpow.pop %v4278
    %v4280 = vmul.f32 %v4271, 1.442695
    %v4281 = vpow.pop %v4280
    %v4282 = vmul.f32 %v4272, 1.442695
    %v4283 = vpow.pop %v4282
    %v4284 = vmul.f32 %v4273, 1.442695
    %v4285 = vpow.pop %v4284
    %v4286 = vmul.f32 %v4274, 1.442695
    %v4287 = vpow.pop %v4286
    %v4288 = vmul.f32 %v4275, 1.442695
    %v4289 = vpow.pop %v4288
    %v4290 = vmul.f32 %v4276, 1.442695
    %v4291 = vpow.pop %v4290
    %v4292 = vmul.f32 %v4277, 1.442695
    %v4293 = vpow.pop %v4292
    %v4294 = vsel %vm669, %v4279, 0.0
    %4295 = vadd.xlane.f32.xlu0 %v4294
    %v4296 = vpop.xlane.xlu0 %4295
    %v4297 = vsel %vm669, %v4281, 0.0
    %4298 = vadd.xlane.f32.xlu0 %v4297
    %v4299 = vpop.xlane.xlu0 %4298
    %v4300 = vsel %vm669, %v4283, 0.0
    %4301 = vadd.xlane.f32.xlu0 %v4300
    %v4302 = vpop.xlane.xlu0 %4301
    %v4303 = vsel %vm669, %v4285, 0.0
    %4304 = vadd.xlane.f32.xlu0 %v4303
    %v4305 = vpop.xlane.xlu0 %4304
    %v4306 = vsel %vm669, %v4287, 0.0
    %4307 = vadd.xlane.f32.xlu0 %v4306
    %v4308 = vpop.xlane.xlu0 %4307
    %v4309 = vsel %vm669, %v4289, 0.0
    %4310 = vadd.xlane.f32.xlu0 %v4309
    %v4311 = vpop.xlane.xlu0 %4310
    %v4312 = vsel %vm669, %v4291, 0.0
    %4313 = vadd.xlane.f32.xlu0 %v4312
    %v4314 = vpop.xlane.xlu0 %4313
    %v4315 = vsel %vm669, %v4293, 0.0
    %4316 = vadd.xlane.f32.xlu0 %v4315
    %v4317 = vpop.xlane.xlu0 %4316
    %v4318 = vrcp.pop %v4296
    %v4319 = vrcp.pop %v4299
    %v4320 = vrcp.pop %v4302
    %v4321 = vrcp.pop %v4305
    %v4322 = vrcp.pop %v4308
    %v4323 = vrcp.pop %v4311
    %v4324 = vrcp.pop %v4314
    %v4325 = vrcp.pop %v4317
    %v4326 = vmul.f32 %v4279, %v4318
    %v4327 = vmul.f32 %v4281, %v4319
    %v4328 = vmul.f32 %v4283, %v4320
    %v4329 = vmul.f32 %v4285, %v4321
    %v4330 = vmul.f32 %v4287, %v4322
    %v4331 = vmul.f32 %v4289, %v4323
    %v4332 = vmul.f32 %v4291, %v4324
    %v4333 = vmul.f32 %v4293, %v4325
    %v4334 = vpack.c.bf16 %v4327, %v4326
    %v4335 = vpack.c.bf16 %v4329, %v4328
    %v4336 = vpack.c.bf16 %v4331, %v4330
    %v4337 = vpack.c.bf16 %v4333, %v4332
    %4338 = vrot.lane.b32.xlu0 %v627, 16
    %v4339 = vpop.permute.xlu0 %4338
    %v4342 = vsel %vm669, %v4334, 0
    %4344 = vmatprep.subr.bf16.mxu0 0
    %4345 = vmatpush1.bf16.msra.mxu0 0
    %4346 = vmatprep.subr.bf16.mxu0 0
    %4347 = vmatpush1.bf16.msra.mxu0 0
    %4348 = vmatprep.subr.bf16.mxu0 0
    %4349 = vmatpush1.bf16.msra.mxu0 0
    %4350 = vmatprep.subr.bf16.mxu0 0
    %4351 = vmatpush1.bf16.msra.mxu0 0
    %4352 = vmatprep.subr.bf16.mxu0 0
    %4353 = vmatpush1.bf16.msra.mxu0 0
    %4354 = vmatprep.subr.bf16.mxu0 0
    %4355 = vmatpush1.bf16.msra.mxu0 0
    %4356 = vmatprep.subr.bf16.mxu0 0
    %4357 = vmatpush1.bf16.msra.mxu0 0
    %4358 = vmatprep.subr.bf16.mxu0 0
    %4359 = vmatpush1.bf16.msra.mxu0 %v4339
    %4360 = vmatprep.subr.bf16.mxu0 0
    %4361 = vmatpush2.bf16.msra.mxu0 0
    %4362 = vmatprep.subr.bf16.mxu0 0
    %4363 = vmatpush2.bf16.msra.mxu0 0
    %4364 = vmatprep.subr.bf16.mxu0 0
    %4365 = vmatpush2.bf16.msra.mxu0 0
    %4366 = vmatprep.subr.bf16.mxu0 0
    %4367 = vmatpush2.bf16.msra.mxu0 0
    %4368 = vmatprep.subr.bf16.mxu0 0
    %4369 = vmatpush2.bf16.msra.mxu0 0
    %4370 = vmatprep.subr.bf16.mxu0 0
    %4371 = vmatpush2.bf16.msra.mxu0 0
    %4372 = vmatprep.subr.bf16.mxu0 0
    %4373 = vmatpush2.bf16.msra.mxu0 0
    %4374 = vmatprep.subr.bf16.mxu0 0
    %4375 = vmatpush2.bf16.msra.mxu0 0
    %4376 = vmatprep.mubr.bf16.mxu0 0
    %4377 = vmatmul.mubr.bf16.gmra.mxu0 %v4342
    %v4378 = vpop.f32.mrf.mxu0
    %v4379 = vadd.f32 0.0, %v4378
    %v4380 = vpop.f32.mrf.mxu0
    %v4381 = vpop.f32.mrf.mxu0
    %v4382 = vadd.f32 0.0, %v4381
    %v4383 = vpop.f32.mrf.mxu0
    %4384 = vdwg.mxu0
    %4385 = vrot.lane.b32.xlu0 %v628, 16
    %v4386 = vpop.permute.xlu0 %4385
    %v4389 = vsel %vm669, %v4335, 0
    %4391 = vmatprep.subr.bf16.mxu0 0
    %4392 = vmatpush1.bf16.msra.mxu0 0
    %4393 = vmatprep.subr.bf16.mxu0 0
    %4394 = vmatpush1.bf16.msra.mxu0 0
    %4395 = vmatprep.subr.bf16.mxu0 0
    %4396 = vmatpush1.bf16.msra.mxu0 0
    %4397 = vmatprep.subr.bf16.mxu0 0
    %4398 = vmatpush1.bf16.msra.mxu0 0
    %4399 = vmatprep.subr.bf16.mxu0 0
    %4400 = vmatpush1.bf16.msra.mxu0 0
    %4401 = vmatprep.subr.bf16.mxu0 0
    %4402 = vmatpush1.bf16.msra.mxu0 0
    %4403 = vmatprep.subr.bf16.mxu0 0
    %4404 = vmatpush1.bf16.msra.mxu0 0
    %4405 = vmatprep.subr.bf16.mxu0 0
    %4406 = vmatpush1.bf16.msra.mxu0 %v4386
    %4407 = vmatprep.subr.bf16.mxu0 0
    %4408 = vmatpush2.bf16.msra.mxu0 0
    %4409 = vmatprep.subr.bf16.mxu0 0
    %4410 = vmatpush2.bf16.msra.mxu0 0
    %4411 = vmatprep.subr.bf16.mxu0 0
    %4412 = vmatpush2.bf16.msra.mxu0 0
    %4413 = vmatprep.subr.bf16.mxu0 0
    %4414 = vmatpush2.bf16.msra.mxu0 0
    %4415 = vmatprep.subr.bf16.mxu0 0
    %4416 = vmatpush2.bf16.msra.mxu0 0
    %4417 = vmatprep.subr.bf16.mxu0 0
    %4418 = vmatpush2.bf16.msra.mxu0 0
    %4419 = vmatprep.subr.bf16.mxu0 0
    %4420 = vmatpush2.bf16.msra.mxu0 0
    %4421 = vmatprep.subr.bf16.mxu0 0
    %4422 = vmatpush2.bf16.msra.mxu0 0
    %4423 = vmatprep.mubr.bf16.mxu0 0
    %4424 = vmatmul.mubr.bf16.gmra.mxu0 %v4389
    %v4425 = vpop.f32.mrf.mxu0
    %v4426 = vadd.f32 0.0, %v4425
    %v4427 = vpop.f32.mrf.mxu0
    %v4428 = vpop.f32.mrf.mxu0
    %v4429 = vadd.f32 0.0, %v4428
    %v4430 = vpop.f32.mrf.mxu0
    %4431 = vdwg.mxu0
    %4432 = vrot.lane.b32.xlu0 %v629, 16
    %v4433 = vpop.permute.xlu0 %4432
    %v4436 = vsel %vm669, %v4336, 0
    %4438 = vmatprep.subr.bf16.mxu0 0
    %4439 = vmatpush1.bf16.msra.mxu0 0
    %4440 = vmatprep.subr.bf16.mxu0 0
    %4441 = vmatpush1.bf16.msra.mxu0 0
    %4442 = vmatprep.subr.bf16.mxu0 0
    %4443 = vmatpush1.bf16.msra.mxu0 0
    %4444 = vmatprep.subr.bf16.mxu0 0
    %4445 = vmatpush1.bf16.msra.mxu0 0
    %4446 = vmatprep.subr.bf16.mxu0 0
    %4447 = vmatpush1.bf16.msra.mxu0 0
    %4448 = vmatprep.subr.bf16.mxu0 0
    %4449 = vmatpush1.bf16.msra.mxu0 0
    %4450 = vmatprep.subr.bf16.mxu0 0
    %4451 = vmatpush1.bf16.msra.mxu0 0
    %4452 = vmatprep.subr.bf16.mxu0 0
    %4453 = vmatpush1.bf16.msra.mxu0 %v4433
    %4454 = vmatprep.subr.bf16.mxu0 0
    %4455 = vmatpush2.bf16.msra.mxu0 0
    %4456 = vmatprep.subr.bf16.mxu0 0
    %4457 = vmatpush2.bf16.msra.mxu0 0
    %4458 = vmatprep.subr.bf16.mxu0 0
    %4459 = vmatpush2.bf16.msra.mxu0 0
    %4460 = vmatprep.subr.bf16.mxu0 0
    %4461 = vmatpush2.bf16.msra.mxu0 0
    %4462 = vmatprep.subr.bf16.mxu0 0
    %4463 = vmatpush2.bf16.msra.mxu0 0
    %4464 = vmatprep.subr.bf16.mxu0 0
    %4465 = vmatpush2.bf16.msra.mxu0 0
    %4466 = vmatprep.subr.bf16.mxu0 0
    %4467 = vmatpush2.bf16.msra.mxu0 0
    %4468 = vmatprep.subr.bf16.mxu0 0
    %4469 = vmatpush2.bf16.msra.mxu0 0
    %4470 = vmatprep.mubr.bf16.mxu0 0
    %4471 = vmatmul.mubr.bf16.gmra.mxu0 %v4436
    %v4472 = vpop.f32.mrf.mxu0
    %v4473 = vadd.f32 0.0, %v4472
    %v4474 = vpop.f32.mrf.mxu0
    %v4475 = vpop.f32.mrf.mxu0
    %v4476 = vadd.f32 0.0, %v4475
    %v4477 = vpop.f32.mrf.mxu0
    %4478 = vdwg.mxu0
    %4479 = vrot.lane.b32.xlu0 %v630, 16
    %v4480 = vpop.permute.xlu0 %4479
    %v4483 = vsel %vm669, %v4337, 0
    %4485 = vmatprep.subr.bf16.mxu0 0
    %4486 = vmatpush1.bf16.msra.mxu0 0
    %4487 = vmatprep.subr.bf16.mxu0 0
    %4488 = vmatpush1.bf16.msra.mxu0 0
    %4489 = vmatprep.subr.bf16.mxu0 0
    %4490 = vmatpush1.bf16.msra.mxu0 0
    %4491 = vmatprep.subr.bf16.mxu0 0
    %4492 = vmatpush1.bf16.msra.mxu0 0
    %4493 = vmatprep.subr.bf16.mxu0 0
    %4494 = vmatpush1.bf16.msra.mxu0 0
    %4495 = vmatprep.subr.bf16.mxu0 0
    %4496 = vmatpush1.bf16.msra.mxu0 0
    %4497 = vmatprep.subr.bf16.mxu0 0
    %4498 = vmatpush1.bf16.msra.mxu0 0
    %4499 = vmatprep.subr.bf16.mxu0 0
    %4500 = vmatpush1.bf16.msra.mxu0 %v4480
    %4501 = vmatprep.subr.bf16.mxu0 0
    %4502 = vmatpush2.bf16.msra.mxu0 0
    %4503 = vmatprep.subr.bf16.mxu0 0
    %4504 = vmatpush2.bf16.msra.mxu0 0
    %4505 = vmatprep.subr.bf16.mxu0 0
    %4506 = vmatpush2.bf16.msra.mxu0 0
    %4507 = vmatprep.subr.bf16.mxu0 0
    %4508 = vmatpush2.bf16.msra.mxu0 0
    %4509 = vmatprep.subr.bf16.mxu0 0
    %4510 = vmatpush2.bf16.msra.mxu0 0
    %4511 = vmatprep.subr.bf16.mxu0 0
    %4512 = vmatpush2.bf16.msra.mxu0 0
    %4513 = vmatprep.subr.bf16.mxu0 0
    %4514 = vmatpush2.bf16.msra.mxu0 0
    %4515 = vmatprep.subr.bf16.mxu0 0
    %4516 = vmatpush2.bf16.msra.mxu0 0
    %4517 = vmatprep.mubr.bf16.mxu0 0
    %4518 = vmatmul.mubr.bf16.gmra.mxu0 %v4483
    %v4519 = vpop.f32.mrf.mxu0
    %v4520 = vadd.f32 0.0, %v4519
    %v4521 = vpop.f32.mrf.mxu0
    %v4522 = vpop.f32.mrf.mxu0
    %v4523 = vadd.f32 0.0, %v4522
    %v4524 = vpop.f32.mrf.mxu0
    %4525 = vdwg.mxu0
    %4534 = vrot.lane.b32.xlu0 %v1472, 16
    %v4535 = vpop.permute.xlu0 %4534
    %4536 = vrot.lane.b32.xlu0 %v1475, 16
    %v4537 = vpop.permute.xlu0 %4536
    %4538 = vrot.lane.b32.xlu0 %v1520, 16
    %v4539 = vpop.permute.xlu0 %4538
    %4540 = vrot.lane.b32.xlu0 %v1523, 16
    %v4541 = vpop.permute.xlu0 %4540
    %4542 = vrot.lane.b32.xlu0 %v1568, 16
    %v4543 = vpop.permute.xlu0 %4542
    %4544 = vrot.lane.b32.xlu0 %v1571, 16
    %v4545 = vpop.permute.xlu0 %4544
    %4546 = vrot.lane.b32.xlu0 %v1616, 16
    %v4547 = vpop.permute.xlu0 %4546
    %4548 = vrot.lane.b32.xlu0 %v1619, 16
    %v4549 = vpop.permute.xlu0 %4548
    %4566 = vrot.lane.b32.xlu0 %v1959, 32
    %v4567 = vpop.permute.xlu0 %4566
    %4568 = vrot.lane.b32.xlu0 %v1962, 32
    %v4569 = vpop.permute.xlu0 %4568
    %4570 = vrot.lane.b32.xlu0 %v2006, 32
    %v4571 = vpop.permute.xlu0 %4570
    %4572 = vrot.lane.b32.xlu0 %v2009, 32
    %v4573 = vpop.permute.xlu0 %4572
    %4574 = vrot.lane.b32.xlu0 %v2053, 32
    %v4575 = vpop.permute.xlu0 %4574
    %4576 = vrot.lane.b32.xlu0 %v2056, 32
    %v4577 = vpop.permute.xlu0 %4576
    %4578 = vrot.lane.b32.xlu0 %v2100, 32
    %v4579 = vpop.permute.xlu0 %4578
    %4580 = vrot.lane.b32.xlu0 %v2103, 32
    %v4581 = vpop.permute.xlu0 %4580
    %4598 = vrot.lane.b32.xlu0 %v2443, 48
    %v4599 = vpop.permute.xlu0 %4598
    %4600 = vrot.lane.b32.xlu0 %v2446, 48
    %v4601 = vpop.permute.xlu0 %4600
    %4602 = vrot.lane.b32.xlu0 %v2490, 48
    %v4603 = vpop.permute.xlu0 %4602
    %4604 = vrot.lane.b32.xlu0 %v2493, 48
    %v4605 = vpop.permute.xlu0 %4604
    %4606 = vrot.lane.b32.xlu0 %v2537, 48
    %v4607 = vpop.permute.xlu0 %4606
    %4608 = vrot.lane.b32.xlu0 %v2540, 48
    %v4609 = vpop.permute.xlu0 %4608
    %4610 = vrot.lane.b32.xlu0 %v2584, 48
    %v4611 = vpop.permute.xlu0 %4610
    %4612 = vrot.lane.b32.xlu0 %v2587, 48
    %v4613 = vpop.permute.xlu0 %4612
    %4630 = vrot.lane.b32.xlu0 %v2927, 64
    %v4631 = vpop.permute.xlu0 %4630
    %4632 = vrot.lane.b32.xlu0 %v2930, 64
    %v4633 = vpop.permute.xlu0 %4632
    %4634 = vrot.lane.b32.xlu0 %v2974, 64
    %v4635 = vpop.permute.xlu0 %4634
    %4636 = vrot.lane.b32.xlu0 %v2977, 64
    %v4637 = vpop.permute.xlu0 %4636
    %4638 = vrot.lane.b32.xlu0 %v3021, 64
    %v4639 = vpop.permute.xlu0 %4638
    %4640 = vrot.lane.b32.xlu0 %v3024, 64
    %v4641 = vpop.permute.xlu0 %4640
    %4642 = vrot.lane.b32.xlu0 %v3068, 64
    %v4643 = vpop.permute.xlu0 %4642
    %4644 = vrot.lane.b32.xlu0 %v3071, 64
    %v4645 = vpop.permute.xlu0 %4644
    %4662 = vrot.lane.b32.xlu0 %v3411, 80
    %v4663 = vpop.permute.xlu0 %4662
    %4664 = vrot.lane.b32.xlu0 %v3414, 80
    %v4665 = vpop.permute.xlu0 %4664
    %4666 = vrot.lane.b32.xlu0 %v3458, 80
    %v4667 = vpop.permute.xlu0 %4666
    %4668 = vrot.lane.b32.xlu0 %v3461, 80
    %v4669 = vpop.permute.xlu0 %4668
    %4670 = vrot.lane.b32.xlu0 %v3505, 80
    %v4671 = vpop.permute.xlu0 %4670
    %4672 = vrot.lane.b32.xlu0 %v3508, 80
    %v4673 = vpop.permute.xlu0 %4672
    %4674 = vrot.lane.b32.xlu0 %v3552, 80
    %v4675 = vpop.permute.xlu0 %4674
    %4676 = vrot.lane.b32.xlu0 %v3555, 80
    %v4677 = vpop.permute.xlu0 %4676
    %4694 = vrot.lane.b32.xlu0 %v3895, 96
    %v4695 = vpop.permute.xlu0 %4694
    %4696 = vrot.lane.b32.xlu0 %v3898, 96
    %v4697 = vpop.permute.xlu0 %4696
    %4698 = vrot.lane.b32.xlu0 %v3942, 96
    %v4699 = vpop.permute.xlu0 %4698
    %4700 = vrot.lane.b32.xlu0 %v3945, 96
    %v4701 = vpop.permute.xlu0 %4700
    %4702 = vrot.lane.b32.xlu0 %v3989, 96
    %v4703 = vpop.permute.xlu0 %4702
    %4704 = vrot.lane.b32.xlu0 %v3992, 96
    %v4705 = vpop.permute.xlu0 %4704
    %4706 = vrot.lane.b32.xlu0 %v4036, 96
    %v4707 = vpop.permute.xlu0 %4706
    %4708 = vrot.lane.b32.xlu0 %v4039, 96
    %v4709 = vpop.permute.xlu0 %4708
    %4726 = vrot.lane.b32.xlu0 %v4379, 112
    %v4727 = vpop.permute.xlu0 %4726
    %4728 = vrot.lane.b32.xlu0 %v4382, 112
    %v4729 = vpop.permute.xlu0 %4728
    %4730 = vrot.lane.b32.xlu0 %v4426, 112
    %v4731 = vpop.permute.xlu0 %4730
    %4732 = vrot.lane.b32.xlu0 %v4429, 112
    %v4733 = vpop.permute.xlu0 %4732
    %4734 = vrot.lane.b32.xlu0 %v4473, 112
    %v4735 = vpop.permute.xlu0 %4734
    %4736 = vrot.lane.b32.xlu0 %v4476, 112
    %v4737 = vpop.permute.xlu0 %4736
    %4738 = vrot.lane.b32.xlu0 %v4520, 112
    %v4739 = vpop.permute.xlu0 %4738
    %4740 = vrot.lane.b32.xlu0 %v4523, 112
    %v4741 = vpop.permute.xlu0 %4740
    %v4750 = vsel %vm669, %v988, %v4535
    %v4751 = vsel %vm669, %v991, %v4537
    %v4752 = vsel %vm669, %v1032, %v4539
    %v4753 = vsel %vm669, %v1035, %v4541
    %v4754 = vsel %vm669, %v1076, %v4543
    %v4755 = vsel %vm669, %v1079, %v4545
    %v4756 = vsel %vm669, %v1120, %v4547
    %v4757 = vsel %vm669, %v1123, %v4549
    %vm4758 = vcmask 261120
    %v4759 = vsel %vm4758, %v4750, %v4567
    %v4760 = vsel %vm4758, %v4751, %v4569
    %v4761 = vsel %vm4758, %v4752, %v4571
    %v4762 = vsel %vm4758, %v4753, %v4573
    %v4763 = vsel %vm4758, %v4754, %v4575
    %v4764 = vsel %vm4758, %v4755, %v4577
    %v4765 = vsel %vm4758, %v4756, %v4579
    %v4766 = vsel %vm4758, %v4757, %v4581
    %vm4767 = vcmask 392192
    %v4768 = vsel %vm4767, %v4759, %v4599
    %v4769 = vsel %vm4767, %v4760, %v4601
    %v4770 = vsel %vm4767, %v4761, %v4603
    %v4771 = vsel %vm4767, %v4762, %v4605
    %v4772 = vsel %vm4767, %v4763, %v4607
    %v4773 = vsel %vm4767, %v4764, %v4609
    %v4774 = vsel %vm4767, %v4765, %v4611
    %v4775 = vsel %vm4767, %v4766, %v4613
    %vm4776 = vcmask 523264
    %v4777 = vsel %vm4776, %v4768, %v4631
    %v4778 = vsel %vm4776, %v4769, %v4633
    %v4779 = vsel %vm4776, %v4770, %v4635
    %v4780 = vsel %vm4776, %v4771, %v4637
    %v4781 = vsel %vm4776, %v4772, %v4639
    %v4782 = vsel %vm4776, %v4773, %v4641
    %v4783 = vsel %vm4776, %v4774, %v4643
    %v4784 = vsel %vm4776, %v4775, %v4645
    %vm4785 = vcmask 654336
    %v4786 = vsel %vm4785, %v4777, %v4663
    %v4787 = vsel %vm4785, %v4778, %v4665
    %v4788 = vsel %vm4785, %v4779, %v4667
    %v4789 = vsel %vm4785, %v4780, %v4669
    %v4790 = vsel %vm4785, %v4781, %v4671
    %v4791 = vsel %vm4785, %v4782, %v4673
    %v4792 = vsel %vm4785, %v4783, %v4675
    %v4793 = vsel %vm4785, %v4784, %v4677
    %vm4794 = vcmask 785408
    %v4795 = vsel %vm4794, %v4786, %v4695
    %v4796 = vsel %vm4794, %v4787, %v4697
    %v4797 = vsel %vm4794, %v4788, %v4699
    %v4798 = vsel %vm4794, %v4789, %v4701
    %v4799 = vsel %vm4794, %v4790, %v4703
    %v4800 = vsel %vm4794, %v4791, %v4705
    %v4801 = vsel %vm4794, %v4792, %v4707
    %v4802 = vsel %vm4794, %v4793, %v4709
    %vm4803 = vcmask 916480
    %v4804 = vsel %vm4803, %v4795, %v4727
    %v4805 = vsel %vm4803, %v4796, %v4729
    %v4806 = vsel %vm4803, %v4797, %v4731
    %v4807 = vsel %vm4803, %v4798, %v4733
    %v4808 = vsel %vm4803, %v4799, %v4735
    %v4809 = vsel %vm4803, %v4800, %v4737
    %v4810 = vsel %vm4803, %v4801, %v4739
    %v4811 = vsel %vm4803, %v4802, %v4741
    %v4812 = vpack.c.bf16 %v4805, %v4804
    %v4813 = vpack.c.bf16 %v4807, %v4806
    %v4814 = vpack.c.bf16 %v4809, %v4808
    %v4815 = vpack.c.bf16 %v4811, %v4810
    %v4816 = vld [vmem:[#allocation11] sm:$0xf]
    %v4817 = vld [vmem:[#allocation11 + $0x4] sm:$0xf]
    %v4818 = vld [vmem:[#allocation11 + $0x8] sm:$0xf]
    %v4819 = vld [vmem:[#allocation11 + $0xc] sm:$0xf]
    %v4820 = vld [vmem:[#allocation11 + $0x10] sm:$0xf]
    %v4821 = vld [vmem:[#allocation11 + $0x14] sm:$0xf]
    %v4822 = vld [vmem:[#allocation11 + $0x18] sm:$0xf]
    %v4823 = vld [vmem:[#allocation11 + $0x1c] sm:$0xf]
    %v4824 = vld [vmem:[#allocation11 + $0x20] sm:$0xf]
    %v4825 = vld [vmem:[#allocation11 + $0x24] sm:$0xf]
    %v4826 = vld [vmem:[#allocation11 + $0x28] sm:$0xf]
    %v4827 = vld [vmem:[#allocation11 + $0x2c] sm:$0xf]
    %v4828 = vld [vmem:[#allocation11 + $0x30] sm:$0xf]
    %v4829 = vld [vmem:[#allocation11 + $0x34] sm:$0xf]
    %v4830 = vld [vmem:[#allocation11 + $0x38] sm:$0xf]
    %v4831 = vld [vmem:[#allocation11 + $0x3c] sm:$0xf]
    %v4832 = vld [vmem:[#allocation13] sm:$0x1]
    %v4834 = vlaneseq
    %v4835 = vshrl.u32 %v4834, 7
    %v4836 = vsub.s32 0, %v4835
    %v4837 = vrot.slane %v4832, %v4836
    %v4855 = vunpack.c.l.b16 %v4816
    %v4856 = vunpack.c.l.b16 %v4817
    %v4857 = vunpack.c.l.b16 %v4818
    %v4858 = vunpack.c.l.b16 %v4819
    %v4859 = vunpack.c.l.b16 %v4820
    %v4860 = vunpack.c.l.b16 %v4821
    %v4861 = vunpack.c.l.b16 %v4822
    %v4862 = vunpack.c.l.b16 %v4823
    %v4863 = vunpack.c.l.b16 %v4824
    %v4864 = vunpack.c.l.b16 %v4825
    %v4865 = vunpack.c.l.b16 %v4826
    %v4866 = vunpack.c.l.b16 %v4827
    %v4867 = vunpack.c.l.b16 %v4828
    %v4868 = vunpack.c.l.b16 %v4829
    %v4869 = vunpack.c.l.b16 %v4830
    %v4870 = vunpack.c.l.b16 %v4831
    %v4871 = vpack.c.b16 %v4856, %v4855
    %v4872 = vpack.c.b16 %v4858, %v4857
    %v4873 = vpack.c.b16 %v4860, %v4859
    %v4874 = vpack.c.b16 %v4862, %v4861
    %v4875 = vpack.c.b16 %v4864, %v4863
    %v4876 = vpack.c.b16 %v4866, %v4865
    %v4877 = vpack.c.b16 %v4868, %v4867
    %v4878 = vpack.c.b16 %v4870, %v4869
    %4887 = vmatprep.subr.bf16.mxu0 0
    %4888 = vmatpush1.bf16.msra.mxu0 %v4878
    %4889 = vmatprep.subr.bf16.mxu0 0
    %4890 = vmatpush1.bf16.msra.mxu0 %v4877
    %4891 = vmatprep.subr.bf16.mxu0 0
    %4892 = vmatpush1.bf16.msra.mxu0 %v4876
    %4893 = vmatprep.subr.bf16.mxu0 0
    %4894 = vmatpush1.bf16.msra.mxu0 %v4875
    %4895 = vmatprep.subr.bf16.mxu0 0
    %4896 = vmatpush1.bf16.msra.mxu0 %v4874
    %4897 = vmatprep.subr.bf16.mxu0 0
    %4898 = vmatpush1.bf16.msra.mxu0 %v4873
    %4899 = vmatprep.subr.bf16.mxu0 0
    %4900 = vmatpush1.bf16.msra.mxu0 %v4872
    %4901 = vmatprep.subr.bf16.mxu0 0
    %4902 = vmatpush1.bf16.msra.mxu0 %v4871
    %4903 = vmatprep.subr.bf16.mxu0 0
    %4904 = vmatpush2.bf16.msra.mxu0 0
    %4905 = vmatprep.subr.bf16.mxu0 0
    %4906 = vmatpush2.bf16.msra.mxu0 0
    %4907 = vmatprep.subr.bf16.mxu0 0
    %4908 = vmatpush2.bf16.msra.mxu0 0
    %4909 = vmatprep.subr.bf16.mxu0 0
    %4910 = vmatpush2.bf16.msra.mxu0 0
    %4911 = vmatprep.subr.bf16.mxu0 0
    %4912 = vmatpush2.bf16.msra.mxu0 0
    %4913 = vmatprep.subr.bf16.mxu0 0
    %4914 = vmatpush2.bf16.msra.mxu0 0
    %4915 = vmatprep.subr.bf16.mxu0 0
    %4916 = vmatpush2.bf16.msra.mxu0 0
    %4917 = vmatprep.subr.bf16.mxu0 0
    %4918 = vmatpush2.bf16.msra.mxu0 0
    %4919 = vmatprep.mubr.bf16.mxu0 0
    %4920 = vmatmul.mubr.bf16.gmra.mxu0 %v4812
    %v4921 = vpop.f32.mrf.mxu0
    %v4922 = vadd.f32 %v4837, %v4921
    %v4923 = vpop.f32.mrf.mxu0
    %v4924 = vpop.f32.mrf.mxu0
    %v4925 = vadd.f32 %v4837, %v4924
    %v4926 = vpop.f32.mrf.mxu0
    %4927 = vmatprep.mubr.bf16.mxu0 0
    %4928 = vmatmul.mubr.bf16.gmra.mxu0 %v4813
    %v4929 = vpop.f32.mrf.mxu0
    %v4930 = vadd.f32 %v4837, %v4929
    %v4931 = vpop.f32.mrf.mxu0
    %v4932 = vpop.f32.mrf.mxu0
    %v4933 = vadd.f32 %v4837, %v4932
    %v4934 = vpop.f32.mrf.mxu0
    %4935 = vmatprep.mubr.bf16.mxu0 0
    %4936 = vmatmul.mubr.bf16.gmra.mxu0 %v4814
    %v4937 = vpop.f32.mrf.mxu0
    %v4938 = vadd.f32 %v4837, %v4937
    %v4939 = vpop.f32.mrf.mxu0
    %v4940 = vpop.f32.mrf.mxu0
    %v4941 = vadd.f32 %v4837, %v4940
    %v4942 = vpop.f32.mrf.mxu0
    %4943 = vmatprep.mubr.bf16.mxu0 0
    %4944 = vmatmul.mubr.bf16.gmra.mxu0 %v4815
    %v4945 = vpop.f32.mrf.mxu0
    %v4946 = vadd.f32 %v4837, %v4945
    %v4947 = vpop.f32.mrf.mxu0
    %v4948 = vpop.f32.mrf.mxu0
    %v4949 = vadd.f32 %v4837, %v4948
    %v4950 = vpop.f32.mrf.mxu0
    %4951 = vdwg.mxu0
    %v4952 = vadd.f32 %v164, %v4922
    %v4953 = vadd.f32 %v165, %v4925
    %v4954 = vadd.f32 %v166, %v4930
    %v4955 = vadd.f32 %v167, %v4933
    %v4956 = vadd.f32 %v168, %v4938
    %v4957 = vadd.f32 %v169, %v4941
    %v4958 = vadd.f32 %v170, %v4946
    %v4959 = vadd.f32 %v171, %v4949
    %4960 = vadd.xlane.f32.xlu0 %v4952
    %v4961 = vpop.xlane.xlu0 %4960
    %4962 = vadd.xlane.f32.xlu0 %v4953
    %v4963 = vpop.xlane.xlu0 %4962
    %4964 = vadd.xlane.f32.xlu0 %v4954
    %v4965 = vpop.xlane.xlu0 %4964
    %4966 = vadd.xlane.f32.xlu0 %v4955
    %v4967 = vpop.xlane.xlu0 %4966
    %4968 = vadd.xlane.f32.xlu0 %v4956
    %v4969 = vpop.xlane.xlu0 %4968
    %4970 = vadd.xlane.f32.xlu0 %v4957
    %v4971 = vpop.xlane.xlu0 %4970
    %4972 = vadd.xlane.f32.xlu0 %v4958
    %v4973 = vpop.xlane.xlu0 %4972
    %4974 = vadd.xlane.f32.xlu0 %v4959
    %v4975 = vpop.xlane.xlu0 %4974
    %v4976 = vmul.f32 %v4961, %v195
    %v4977 = vmul.f32 %v4963, %v195
    %v4978 = vmul.f32 %v4965, %v195
    %v4979 = vmul.f32 %v4967, %v195
    %v4980 = vmul.f32 %v4969, %v195
    %v4981 = vmul.f32 %v4971, %v195
    %v4982 = vmul.f32 %v4973, %v195
    %v4983 = vmul.f32 %v4975, %v195
    %v4984 = vsub.f32 %v4952, %v4976
    %v4985 = vsub.f32 %v4953, %v4977
    %v4986 = vsub.f32 %v4954, %v4978
    %v4987 = vsub.f32 %v4955, %v4979
    %v4988 = vsub.f32 %v4956, %v4980
    %v4989 = vsub.f32 %v4957, %v4981
    %v4990 = vsub.f32 %v4958, %v4982
    %v4991 = vsub.f32 %v4959, %v4983
    %v4992 = vmul.f32 %v4984, %v4984
    %v4993 = vmul.f32 %v4985, %v4985
    %v4994 = vmul.f32 %v4986, %v4986
    %v4995 = vmul.f32 %v4987, %v4987
    %v4996 = vmul.f32 %v4988, %v4988
    %v4997 = vmul.f32 %v4989, %v4989
    %v4998 = vmul.f32 %v4990, %v4990
    %v4999 = vmul.f32 %v4991, %v4991
    %5000 = vadd.xlane.f32.xlu0 %v4992
    %v5001 = vpop.xlane.xlu0 %5000
    %5002 = vadd.xlane.f32.xlu0 %v4993
    %v5003 = vpop.xlane.xlu0 %5002
    %5004 = vadd.xlane.f32.xlu0 %v4994
    %v5005 = vpop.xlane.xlu0 %5004
    %5006 = vadd.xlane.f32.xlu0 %v4995
    %v5007 = vpop.xlane.xlu0 %5006
    %5008 = vadd.xlane.f32.xlu0 %v4996
    %v5009 = vpop.xlane.xlu0 %5008
    %5010 = vadd.xlane.f32.xlu0 %v4997
    %v5011 = vpop.xlane.xlu0 %5010
    %5012 = vadd.xlane.f32.xlu0 %v4998
    %v5013 = vpop.xlane.xlu0 %5012
    %5014 = vadd.xlane.f32.xlu0 %v4999
    %v5015 = vpop.xlane.xlu0 %5014
    %v5016 = vmul.f32 %v5001, %v195
    %v5017 = vmul.f32 %v5003, %v195
    %v5018 = vmul.f32 %v5005, %v195
    %v5019 = vmul.f32 %v5007, %v195
    %v5020 = vmul.f32 %v5009, %v195
    %v5021 = vmul.f32 %v5011, %v195
    %v5022 = vmul.f32 %v5013, %v195
    %v5023 = vmul.f32 %v5015, %v195
    %v5024 = vadd.f32 %v5016, 1e-05
    %v5025 = vadd.f32 %v5017, 1e-05
    %v5026 = vadd.f32 %v5018, 1e-05
    %v5027 = vadd.f32 %v5019, 1e-05
    %v5028 = vadd.f32 %v5020, 1e-05
    %v5029 = vadd.f32 %v5021, 1e-05
    %v5030 = vadd.f32 %v5022, 1e-05
    %v5031 = vadd.f32 %v5023, 1e-05
    %v5032 = vrsqrt.pop %v5024
    %v5033 = vrsqrt.pop %v5025
    %v5034 = vrsqrt.pop %v5026
    %v5035 = vrsqrt.pop %v5027
    %v5036 = vrsqrt.pop %v5028
    %v5037 = vrsqrt.pop %v5029
    %v5038 = vrsqrt.pop %v5030
    %v5039 = vrsqrt.pop %v5031
    %v5040 = vmul.f32 %v4984, %v5032
    %v5041 = vmul.f32 %v4985, %v5033
    %v5042 = vmul.f32 %v4986, %v5034
    %v5043 = vmul.f32 %v4987, %v5035
    %v5044 = vmul.f32 %v4988, %v5036
    %v5045 = vmul.f32 %v4989, %v5037
    %v5046 = vmul.f32 %v4990, %v5038
    %v5047 = vmul.f32 %v4991, %v5039
    %v5048 = vlaneseq
    %v5049 = vshrl.u32 %v5048, 7
    %v5050 = vsub.s32 0, %v5049
    %v5051 = vrot.slane %v174, %v5050
    %v5052 = vmul.f32 %v5040, %v5051
    %v5053 = vmul.f32 %v5041, %v5051
    %v5054 = vmul.f32 %v5042, %v5051
    %v5055 = vmul.f32 %v5043, %v5051
    %v5056 = vmul.f32 %v5044, %v5051
    %v5057 = vmul.f32 %v5045, %v5051
    %v5058 = vmul.f32 %v5046, %v5051
    %v5059 = vmul.f32 %v5047, %v5051
    %v5060 = vlaneseq
    %v5061 = vshrl.u32 %v5060, 7
    %v5062 = vsub.s32 0, %v5061
    %v5063 = vrot.slane %v175, %v5062
    %v5064 = vadd.f32 %v5052, %v5063
    %v5065 = vadd.f32 %v5053, %v5063
    %v5066 = vadd.f32 %v5054, %v5063
    %v5067 = vadd.f32 %v5055, %v5063
    %v5068 = vadd.f32 %v5056, %v5063
    %v5069 = vadd.f32 %v5057, %v5063
    %v5070 = vadd.f32 %v5058, %v5063
    %v5071 = vadd.f32 %v5059, %v5063
    %v5072 = vpack.c.bf16 %v5065, %v5064
    %v5073 = vpack.c.bf16 %v5067, %v5066
    %v5074 = vpack.c.bf16 %v5069, %v5068
    %v5075 = vpack.c.bf16 %v5071, %v5070
    %v5076 = vld [vmem:[#allocation14] sm:$0xff]
    %v5077 = vld [vmem:[#allocation14 + $0x8] sm:$0xff]
    %v5078 = vld [vmem:[#allocation14 + $0x10] sm:$0xff]
    %v5079 = vld [vmem:[#allocation14 + $0x18] sm:$0xff]
    %v5080 = vld [vmem:[#allocation14 + $0x20] sm:$0xff]
    %v5081 = vld [vmem:[#allocation14 + $0x28] sm:$0xff]
    %v5082 = vld [vmem:[#allocation14 + $0x30] sm:$0xff]
    %v5083 = vld [vmem:[#allocation14 + $0x38] sm:$0xff]
    %v5084 = vld [vmem:[#allocation14 + $0x40] sm:$0xff]
    %v5085 = vld [vmem:[#allocation14 + $0x48] sm:$0xff]
    %v5086 = vld [vmem:[#allocation14 + $0x50] sm:$0xff]
    %v5087 = vld [vmem:[#allocation14 + $0x58] sm:$0xff]
    %v5088 = vld [vmem:[#allocation14 + $0x60] sm:$0xff]
    %v5089 = vld [vmem:[#allocation14 + $0x68] sm:$0xff]
    %v5090 = vld [vmem:[#allocation14 + $0x70] sm:$0xff]
    %v5091 = vld [vmem:[#allocation14 + $0x78] sm:$0xff]
    %v5092 = vld [vmem:[#allocation14 + $0x80] sm:$0xff]
    %v5093 = vld [vmem:[#allocation14 + $0x88] sm:$0xff]
    %v5094 = vld [vmem:[#allocation14 + $0x90] sm:$0xff]
    %v5095 = vld [vmem:[#allocation14 + $0x98] sm:$0xff]
    %v5096 = vld [vmem:[#allocation14 + $0xa0] sm:$0xff]
    %v5097 = vld [vmem:[#allocation14 + $0xa8] sm:$0xff]
    %v5098 = vld [vmem:[#allocation14 + $0xb0] sm:$0xff]
    %v5099 = vld [vmem:[#allocation14 + $0xb8] sm:$0xff]
    %v5100 = vld [vmem:[#allocation14 + $0xc0] sm:$0xff]
    %v5101 = vld [vmem:[#allocation14 + $0xc8] sm:$0xff]
    %v5102 = vld [vmem:[#allocation14 + $0xd0] sm:$0xff]
    %v5103 = vld [vmem:[#allocation14 + $0xd8] sm:$0xff]
    %v5104 = vld [vmem:[#allocation14 + $0xe0] sm:$0xff]
    %v5105 = vld [vmem:[#allocation14 + $0xe8] sm:$0xff]
    %v5106 = vld [vmem:[#allocation14 + $0xf0] sm:$0xff]
    %v5107 = vld [vmem:[#allocation14 + $0xf8] sm:$0xff]
    %v5108 = vld [vmem:[%s8] sm:$0xf]
    %v5110 = vlaneseq
    %v5111 = vshrl.u32 %v5110, 7
    %v5112 = vsub.s32 0, %v5111
    %v5113 = vrot.slane %v5108, %v5112
    %v5114 = vlaneseq
    %v5115 = vshrl.u32 %v5114, 7
    %v5116 = vsub.s32 1, %v5115
    %v5117 = vrot.slane %v5108, %v5116
    %v5118 = vlaneseq
    %v5119 = vshrl.u32 %v5118, 7
    %v5120 = vsub.s32 2, %v5119
    %v5121 = vrot.slane %v5108, %v5120
    %v5122 = vlaneseq
    %v5123 = vshrl.u32 %v5122, 7
    %v5124 = vsub.s32 3, %v5123
    %v5125 = vrot.slane %v5108, %v5124
    %v5162 = vunpack.c.l.b16 %v5076
    %v5163 = vunpack.c.h.b16 %v5076
    %v5164 = vunpack.c.l.b16 %v5077
    %v5165 = vunpack.c.h.b16 %v5077
    %v5166 = vunpack.c.l.b16 %v5078
    %v5167 = vunpack.c.h.b16 %v5078
    %v5168 = vunpack.c.l.b16 %v5079
    %v5169 = vunpack.c.h.b16 %v5079
    %v5170 = vunpack.c.l.b16 %v5080
    %v5171 = vunpack.c.h.b16 %v5080
    %v5172 = vunpack.c.l.b16 %v5081
    %v5173 = vunpack.c.h.b16 %v5081
    %v5174 = vunpack.c.l.b16 %v5082
    %v5175 = vunpack.c.h.b16 %v5082
    %v5176 = vunpack.c.l.b16 %v5083
    %v5177 = vunpack.c.h.b16 %v5083
    %v5178 = vunpack.c.l.b16 %v5084
    %v5179 = vunpack.c.h.b16 %v5084
    %v5180 = vunpack.c.l.b16 %v5085
    %v5181 = vunpack.c.h.b16 %v5085
    %v5182 = vunpack.c.l.b16 %v5086
    %v5183 = vunpack.c.h.b16 %v5086
    %v5184 = vunpack.c.l.b16 %v5087
    %v5185 = vunpack.c.h.b16 %v5087
    %v5186 = vunpack.c.l.b16 %v5088
    %v5187 = vunpack.c.h.b16 %v5088
    %v5188 = vunpack.c.l.b16 %v5089
    %v5189 = vunpack.c.h.b16 %v5089
    %v5190 = vunpack.c.l.b16 %v5090
    %v5191 = vunpack.c.h.b16 %v5090
    %v5192 = vunpack.c.l.b16 %v5091
    %v5193 = vunpack.c.h.b16 %v5091
    %v5194 = vunpack.c.l.b16 %v5092
    %v5195 = vunpack.c.h.b16 %v5092
    %v5196 = vunpack.c.l.b16 %v5093
    %v5197 = vunpack.c.h.b16 %v5093
    %v5198 = vunpack.c.l.b16 %v5094
    %v5199 = vunpack.c.h.b16 %v5094
    %v5200 = vunpack.c.l.b16 %v5095
    %v5201 = vunpack.c.h.b16 %v5095
    %v5202 = vunpack.c.l.b16 %v5096
    %v5203 = vunpack.c.h.b16 %v5096
    %v5204 = vunpack.c.l.b16 %v5097
    %v5205 = vunpack.c.h.b16 %v5097
    %v5206 = vunpack.c.l.b16 %v5098
    %v5207 = vunpack.c.h.b16 %v5098
    %v5208 = vunpack.c.l.b16 %v5099
    %v5209 = vunpack.c.h.b16 %v5099
    %v5210 = vunpack.c.l.b16 %v5100
    %v5211 = vunpack.c.h.b16 %v5100
    %v5212 = vunpack.c.l.b16 %v5101
    %v5213 = vunpack.c.h.b16 %v5101
    %v5214 = vunpack.c.l.b16 %v5102
    %v5215 = vunpack.c.h.b16 %v5102
    %v5216 = vunpack.c.l.b16 %v5103
    %v5217 = vunpack.c.h.b16 %v5103
    %v5218 = vunpack.c.l.b16 %v5104
    %v5219 = vunpack.c.h.b16 %v5104
    %v5220 = vunpack.c.l.b16 %v5105
    %v5221 = vunpack.c.h.b16 %v5105
    %v5222 = vunpack.c.l.b16 %v5106
    %v5223 = vunpack.c.h.b16 %v5106
    %v5224 = vunpack.c.l.b16 %v5107
    %v5225 = vunpack.c.h.b16 %v5107
    %v5226 = vpack.c.b16 %v5166, %v5162
    %v5227 = vpack.c.b16 %v5167, %v5163
    %v5228 = vpack.c.b16 %v5168, %v5164
    %v5229 = vpack.c.b16 %v5169, %v5165
    %v5230 = vpack.c.b16 %v5174, %v5170
    %v5231 = vpack.c.b16 %v5175, %v5171
    %v5232 = vpack.c.b16 %v5176, %v5172
    %v5233 = vpack.c.b16 %v5177, %v5173
    %v5234 = vpack.c.b16 %v5182, %v5178
    %v5235 = vpack.c.b16 %v5183, %v5179
    %v5236 = vpack.c.b16 %v5184, %v5180
    %v5237 = vpack.c.b16 %v5185, %v5181
    %v5238 = vpack.c.b16 %v5190, %v5186
    %v5239 = vpack.c.b16 %v5191, %v5187
    %v5240 = vpack.c.b16 %v5192, %v5188
    %v5241 = vpack.c.b16 %v5193, %v5189
    %v5242 = vpack.c.b16 %v5198, %v5194
    %v5243 = vpack.c.b16 %v5199, %v5195
    %v5244 = vpack.c.b16 %v5200, %v5196
    %v5245 = vpack.c.b16 %v5201, %v5197
    %v5246 = vpack.c.b16 %v5206, %v5202
    %v5247 = vpack.c.b16 %v5207, %v5203
    %v5248 = vpack.c.b16 %v5208, %v5204
    %v5249 = vpack.c.b16 %v5209, %v5205
    %v5250 = vpack.c.b16 %v5214, %v5210
    %v5251 = vpack.c.b16 %v5215, %v5211
    %v5252 = vpack.c.b16 %v5216, %v5212
    %v5253 = vpack.c.b16 %v5217, %v5213
    %v5254 = vpack.c.b16 %v5222, %v5218
    %v5255 = vpack.c.b16 %v5223, %v5219
    %v5256 = vpack.c.b16 %v5224, %v5220
    %v5257 = vpack.c.b16 %v5225, %v5221
    %5290 = vmatprep.subr.bf16.mxu0 %v5255
    %5291 = vmatpush1.bf16.msra.mxu0 %v5254
    %5292 = vmatprep.subr.bf16.mxu0 %v5251
    %5293 = vmatpush1.bf16.msra.mxu0 %v5250
    %5294 = vmatprep.subr.bf16.mxu0 %v5247
    %5295 = vmatpush1.bf16.msra.mxu0 %v5246
    %5296 = vmatprep.subr.bf16.mxu0 %v5243
    %5297 = vmatpush1.bf16.msra.mxu0 %v5242
    %5298 = vmatprep.subr.bf16.mxu0 %v5239
    %5299 = vmatpush1.bf16.msra.mxu0 %v5238
    %5300 = vmatprep.subr.bf16.mxu0 %v5235
    %5301 = vmatpush1.bf16.msra.mxu0 %v5234
    %5302 = vmatprep.subr.bf16.mxu0 %v5231
    %5303 = vmatpush1.bf16.msra.mxu0 %v5230
    %5304 = vmatprep.subr.bf16.mxu0 %v5227
    %5305 = vmatpush1.bf16.msra.mxu0 %v5226
    %5306 = vmatprep.subr.bf16.mxu0 0
    %5307 = vmatpush2.bf16.msra.mxu0 0
    %5308 = vmatprep.subr.bf16.mxu0 0
    %5309 = vmatpush2.bf16.msra.mxu0 0
    %5310 = vmatprep.subr.bf16.mxu0 0
    %5311 = vmatpush2.bf16.msra.mxu0 0
    %5312 = vmatprep.subr.bf16.mxu0 0
    %5313 = vmatpush2.bf16.msra.mxu0 0
    %5314 = vmatprep.subr.bf16.mxu0 0
    %5315 = vmatpush2.bf16.msra.mxu0 0
    %5316 = vmatprep.subr.bf16.mxu0 0
    %5317 = vmatpush2.bf16.msra.mxu0 0
    %5318 = vmatprep.subr.bf16.mxu0 0
    %5319 = vmatpush2.bf16.msra.mxu0 0
    %5320 = vmatprep.subr.bf16.mxu0 0
    %5321 = vmatpush2.bf16.msra.mxu0 0
    %5322 = vmatprep.mubr.bf16.mxu0 0
    %5323 = vmatmul.mubr.bf16.gmra.mxu0 %v5072
    %v5324 = vpop.f32.mrf.mxu0
    %v5325 = vadd.f32 %v5113, %v5324
    %v5326 = vpop.f32.mrf.mxu0
    %v5327 = vadd.f32 %v5117, %v5326
    %v5328 = vpop.f32.mrf.mxu0
    %v5329 = vadd.f32 %v5113, %v5328
    %v5330 = vpop.f32.mrf.mxu0
    %v5331 = vadd.f32 %v5117, %v5330
    %5332 = vmatprep.mubr.bf16.mxu0 0
    %5333 = vmatmul.mubr.bf16.gmra.mxu0 %v5073
    %v5334 = vpop.f32.mrf.mxu0
    %v5335 = vadd.f32 %v5113, %v5334
    %v5336 = vpop.f32.mrf.mxu0
    %v5337 = vadd.f32 %v5117, %v5336
    %v5338 = vpop.f32.mrf.mxu0
    %v5339 = vadd.f32 %v5113, %v5338
    %v5340 = vpop.f32.mrf.mxu0
    %v5341 = vadd.f32 %v5117, %v5340
    %5342 = vmatprep.mubr.bf16.mxu0 0
    %5343 = vmatmul.mubr.bf16.gmra.mxu0 %v5074
    %v5344 = vpop.f32.mrf.mxu0
    %v5345 = vadd.f32 %v5113, %v5344
    %v5346 = vpop.f32.mrf.mxu0
    %v5347 = vadd.f32 %v5117, %v5346
    %v5348 = vpop.f32.mrf.mxu0
    %v5349 = vadd.f32 %v5113, %v5348
    %v5350 = vpop.f32.mrf.mxu0
    %v5351 = vadd.f32 %v5117, %v5350
    %5352 = vmatprep.mubr.bf16.mxu0 0
    %5353 = vmatmul.mubr.bf16.gmra.mxu0 %v5075
    %v5354 = vpop.f32.mrf.mxu0
    %v5355 = vadd.f32 %v5113, %v5354
    %v5356 = vpop.f32.mrf.mxu0
    %v5357 = vadd.f32 %v5117, %v5356
    %v5358 = vpop.f32.mrf.mxu0
    %v5359 = vadd.f32 %v5113, %v5358
    %v5360 = vpop.f32.mrf.mxu0
    %v5361 = vadd.f32 %v5117, %v5360
    %5362 = vdwg.mxu0
    %5363 = vmatprep.subr.bf16.mxu0 %v5257
    %5364 = vmatpush1.bf16.msra.mxu0 %v5256
    %5365 = vmatprep.subr.bf16.mxu0 %v5253
    %5366 = vmatpush1.bf16.msra.mxu0 %v5252
    %5367 = vmatprep.subr.bf16.mxu0 %v5249
    %5368 = vmatpush1.bf16.msra.mxu0 %v5248
    %5369 = vmatprep.subr.bf16.mxu0 %v5245
    %5370 = vmatpush1.bf16.msra.mxu0 %v5244
    %5371 = vmatprep.subr.bf16.mxu0 %v5241
    %5372 = vmatpush1.bf16.msra.mxu0 %v5240
    %5373 = vmatprep.subr.bf16.mxu0 %v5237
    %5374 = vmatpush1.bf16.msra.mxu0 %v5236
    %5375 = vmatprep.subr.bf16.mxu0 %v5233
    %5376 = vmatpush1.bf16.msra.mxu0 %v5232
    %5377 = vmatprep.subr.bf16.mxu0 %v5229
    %5378 = vmatpush1.bf16.msra.mxu0 %v5228
    %5379 = vmatprep.subr.bf16.mxu0 0
    %5380 = vmatpush2.bf16.msra.mxu0 0
    %5381 = vmatprep.subr.bf16.mxu0 0
    %5382 = vmatpush2.bf16.msra.mxu0 0
    %5383 = vmatprep.subr.bf16.mxu0 0
    %5384 = vmatpush2.bf16.msra.mxu0 0
    %5385 = vmatprep.subr.bf16.mxu0 0
    %5386 = vmatpush2.bf16.msra.mxu0 0
    %5387 = vmatprep.subr.bf16.mxu0 0
    %5388 = vmatpush2.bf16.msra.mxu0 0
    %5389 = vmatprep.subr.bf16.mxu0 0
    %5390 = vmatpush2.bf16.msra.mxu0 0
    %5391 = vmatprep.subr.bf16.mxu0 0
    %5392 = vmatpush2.bf16.msra.mxu0 0
    %5393 = vmatprep.subr.bf16.mxu0 0
    %5394 = vmatpush2.bf16.msra.mxu0 0
    %5395 = vmatprep.mubr.bf16.mxu0 0
    %5396 = vmatmul.mubr.bf16.gmra.mxu0 %v5072
    %v5397 = vpop.f32.mrf.mxu0
    %v5398 = vadd.f32 %v5121, %v5397
    %v5399 = vpop.f32.mrf.mxu0
    %v5400 = vadd.f32 %v5125, %v5399
    %v5401 = vpop.f32.mrf.mxu0
    %v5402 = vadd.f32 %v5121, %v5401
    %v5403 = vpop.f32.mrf.mxu0
    %v5404 = vadd.f32 %v5125, %v5403
    %5405 = vmatprep.mubr.bf16.mxu0 0
    %5406 = vmatmul.mubr.bf16.gmra.mxu0 %v5073
    %v5407 = vpop.f32.mrf.mxu0
    %v5408 = vadd.f32 %v5121, %v5407
    %v5409 = vpop.f32.mrf.mxu0
    %v5410 = vadd.f32 %v5125, %v5409
    %v5411 = vpop.f32.mrf.mxu0
    %v5412 = vadd.f32 %v5121, %v5411
    %v5413 = vpop.f32.mrf.mxu0
    %v5414 = vadd.f32 %v5125, %v5413
    %5415 = vmatprep.mubr.bf16.mxu0 0
    %5416 = vmatmul.mubr.bf16.gmra.mxu0 %v5074
    %v5417 = vpop.f32.mrf.mxu0
    %v5418 = vadd.f32 %v5121, %v5417
    %v5419 = vpop.f32.mrf.mxu0
    %v5420 = vadd.f32 %v5125, %v5419
    %v5421 = vpop.f32.mrf.mxu0
    %v5422 = vadd.f32 %v5121, %v5421
    %v5423 = vpop.f32.mrf.mxu0
    %v5424 = vadd.f32 %v5125, %v5423
    %5425 = vmatprep.mubr.bf16.mxu0 0
    %5426 = vmatmul.mubr.bf16.gmra.mxu0 %v5075
    %v5427 = vpop.f32.mrf.mxu0
    %v5428 = vadd.f32 %v5121, %v5427
    %v5429 = vpop.f32.mrf.mxu0
    %v5430 = vadd.f32 %v5125, %v5429
    %v5431 = vpop.f32.mrf.mxu0
    %v5432 = vadd.f32 %v5121, %v5431
    %v5433 = vpop.f32.mrf.mxu0
    %v5434 = vadd.f32 %v5125, %v5433
    %5435 = vdwg.mxu0
    %v5436 = vmul.f32 %v5325, 0.5
    %v5437 = vmul.f32 %v5327, 0.5
    %v5438 = vmul.f32 %v5398, 0.5
    %v5439 = vmul.f32 %v5400, 0.5
    %v5440 = vmul.f32 %v5329, 0.5
    %v5441 = vmul.f32 %v5331, 0.5
    %v5442 = vmul.f32 %v5402, 0.5
    %v5443 = vmul.f32 %v5404, 0.5
    %v5444 = vmul.f32 %v5335, 0.5
    %v5445 = vmul.f32 %v5337, 0.5
    %v5446 = vmul.f32 %v5408, 0.5
    %v5447 = vmul.f32 %v5410, 0.5
    %v5448 = vmul.f32 %v5339, 0.5
    %v5449 = vmul.f32 %v5341, 0.5
    %v5450 = vmul.f32 %v5412, 0.5
    %v5451 = vmul.f32 %v5414, 0.5
    %v5452 = vmul.f32 %v5345, 0.5
    %v5453 = vmul.f32 %v5347, 0.5
    %v5454 = vmul.f32 %v5418, 0.5
    %v5455 = vmul.f32 %v5420, 0.5
    %v5456 = vmul.f32 %v5349, 0.5
    %v5457 = vmul.f32 %v5351, 0.5
    %v5458 = vmul.f32 %v5422, 0.5
    %v5459 = vmul.f32 %v5424, 0.5
    %v5460 = vmul.f32 %v5355, 0.5
    %v5461 = vmul.f32 %v5357, 0.5
    %v5462 = vmul.f32 %v5428, 0.5
    %v5463 = vmul.f32 %v5430, 0.5
    %v5464 = vmul.f32 %v5359, 0.5
    %v5465 = vmul.f32 %v5361, 0.5
    %v5466 = vmul.f32 %v5432, 0.5
    %v5467 = vmul.f32 %v5434, 0.5
    %v5468 = vmul.f32 %v5325, 0.70710677
    %v5469 = vmul.f32 %v5327, 0.70710677
    %v5470 = vmul.f32 %v5398, 0.70710677
    %v5471 = vmul.f32 %v5400, 0.70710677
    %v5472 = vmul.f32 %v5329, 0.70710677
    %v5473 = vmul.f32 %v5331, 0.70710677
    %v5474 = vmul.f32 %v5402, 0.70710677
    %v5475 = vmul.f32 %v5404, 0.70710677
    %v5476 = vmul.f32 %v5335, 0.70710677
    %v5477 = vmul.f32 %v5337, 0.70710677
    %v5478 = vmul.f32 %v5408, 0.70710677
    %v5479 = vmul.f32 %v5410, 0.70710677
    %v5480 = vmul.f32 %v5339, 0.70710677
    %v5481 = vmul.f32 %v5341, 0.70710677
    %v5482 = vmul.f32 %v5412, 0.70710677
    %v5483 = vmul.f32 %v5414, 0.70710677
    %v5484 = vmul.f32 %v5345, 0.70710677
    %v5485 = vmul.f32 %v5347, 0.70710677
    %v5486 = vmul.f32 %v5418, 0.70710677
    %v5487 = vmul.f32 %v5420, 0.70710677
    %v5488 = vmul.f32 %v5349, 0.70710677
    %v5489 = vmul.f32 %v5351, 0.70710677
    %v5490 = vmul.f32 %v5422, 0.70710677
    %v5491 = vmul.f32 %v5424, 0.70710677
    %v5492 = vmul.f32 %v5355, 0.70710677
    %v5493 = vmul.f32 %v5357, 0.70710677
    %v5494 = vmul.f32 %v5428, 0.70710677
    %v5495 = vmul.f32 %v5430, 0.70710677
    %v5496 = vmul.f32 %v5359, 0.70710677
    %v5497 = vmul.f32 %v5361, 0.70710677
    %v5498 = vmul.f32 %v5432, 0.70710677
    %v5499 = vmul.f32 %v5434, 0.70710677
    %vm5500 = vcmp.ge.f32.partialorder %v5468, 0.0
    %vm5501 = vcmp.ge.f32.partialorder %v5469, 0.0
    %vm5502 = vcmp.ge.f32.partialorder %v5470, 0.0
    %vm5503 = vcmp.ge.f32.partialorder %v5471, 0.0
    %vm5504 = vcmp.ge.f32.partialorder %v5472, 0.0
    %vm5505 = vcmp.ge.f32.partialorder %v5473, 0.0
    %vm5506 = vcmp.ge.f32.partialorder %v5474, 0.0
    %vm5507 = vcmp.ge.f32.partialorder %v5475, 0.0
    %vm5508 = vcmp.ge.f32.partialorder %v5476, 0.0
    %vm5509 = vcmp.ge.f32.partialorder %v5477, 0.0
    %vm5510 = vcmp.ge.f32.partialorder %v5478, 0.0
    %vm5511 = vcmp.ge.f32.partialorder %v5479, 0.0
    %vm5512 = vcmp.ge.f32.partialorder %v5480, 0.0
    %vm5513 = vcmp.ge.f32.partialorder %v5481, 0.0
    %vm5514 = vcmp.ge.f32.partialorder %v5482, 0.0
    %vm5515 = vcmp.ge.f32.partialorder %v5483, 0.0
    %vm5516 = vcmp.ge.f32.partialorder %v5484, 0.0
    %vm5517 = vcmp.ge.f32.partialorder %v5485, 0.0
    %vm5518 = vcmp.ge.f32.partialorder %v5486, 0.0
    %vm5519 = vcmp.ge.f32.partialorder %v5487, 0.0
    %vm5520 = vcmp.ge.f32.partialorder %v5488, 0.0
    %vm5521 = vcmp.ge.f32.partialorder %v5489, 0.0
    %vm5522 = vcmp.ge.f32.partialorder %v5490, 0.0
    %vm5523 = vcmp.ge.f32.partialorder %v5491, 0.0
    %vm5524 = vcmp.ge.f32.partialorder %v5492, 0.0
    %vm5525 = vcmp.ge.f32.partialorder %v5493, 0.0
    %vm5526 = vcmp.ge.f32.partialorder %v5494, 0.0
    %vm5527 = vcmp.ge.f32.partialorder %v5495, 0.0
    %vm5528 = vcmp.ge.f32.partialorder %v5496, 0.0
    %vm5529 = vcmp.ge.f32.partialorder %v5497, 0.0
    %vm5530 = vcmp.ge.f32.partialorder %v5498, 0.0
    %vm5531 = vcmp.ge.f32.partialorder %v5499, 0.0
    %v5532 = vsel %vm5500, 1.0, -1.0
    %v5533 = vsel %vm5501, 1.0, -1.0
    %v5534 = vsel %vm5502, 1.0, -1.0
    %v5535 = vsel %vm5503, 1.0, -1.0
    %v5536 = vsel %vm5504, 1.0, -1.0
    %v5537 = vsel %vm5505, 1.0, -1.0
    %v5538 = vsel %vm5506, 1.0, -1.0
    %v5539 = vsel %vm5507, 1.0, -1.0
    %v5540 = vsel %vm5508, 1.0, -1.0
    %v5541 = vsel %vm5509, 1.0, -1.0
    %v5542 = vsel %vm5510, 1.0, -1.0
    %v5543 = vsel %vm5511, 1.0, -1.0
    %v5544 = vsel %vm5512, 1.0, -1.0
    %v5545 = vsel %vm5513, 1.0, -1.0
    %v5546 = vsel %vm5514, 1.0, -1.0
    %v5547 = vsel %vm5515, 1.0, -1.0
    %v5548 = vsel %vm5516, 1.0, -1.0
    %v5549 = vsel %vm5517, 1.0, -1.0
    %v5550 = vsel %vm5518, 1.0, -1.0
    %v5551 = vsel %vm5519, 1.0, -1.0
    %v5552 = vsel %vm5520, 1.0, -1.0
    %v5553 = vsel %vm5521, 1.0, -1.0
    %v5554 = vsel %vm5522, 1.0, -1.0
    %v5555 = vsel %vm5523, 1.0, -1.0
    %v5556 = vsel %vm5524, 1.0, -1.0
    %v5557 = vsel %vm5525, 1.0, -1.0
    %v5558 = vsel %vm5526, 1.0, -1.0
    %v5559 = vsel %vm5527, 1.0, -1.0
    %v5560 = vsel %vm5528, 1.0, -1.0
    %v5561 = vsel %vm5529, 1.0, -1.0
    %v5562 = vsel %vm5530, 1.0, -1.0
    %v5563 = vsel %vm5531, 1.0, -1.0
    %v5564 = vand.u32 2147483647, %v5468
    %v5565 = vand.u32 2147483647, %v5469
    %v5566 = vand.u32 2147483647, %v5470
    %v5567 = vand.u32 2147483647, %v5471
    %v5568 = vand.u32 2147483647, %v5472
    %v5569 = vand.u32 2147483647, %v5473
    %v5570 = vand.u32 2147483647, %v5474
    %v5571 = vand.u32 2147483647, %v5475
    %v5572 = vand.u32 2147483647, %v5476
    %v5573 = vand.u32 2147483647, %v5477
    %v5574 = vand.u32 2147483647, %v5478
    %v5575 = vand.u32 2147483647, %v5479
    %v5576 = vand.u32 2147483647, %v5480
    %v5577 = vand.u32 2147483647, %v5481
    %v5578 = vand.u32 2147483647, %v5482
    %v5579 = vand.u32 2147483647, %v5483
    %v5580 = vand.u32 2147483647, %v5484
    %v5581 = vand.u32 2147483647, %v5485
    %v5582 = vand.u32 2147483647, %v5486
    %v5583 = vand.u32 2147483647, %v5487
    %v5584 = vand.u32 2147483647, %v5488
    %v5585 = vand.u32 2147483647, %v5489
    %v5586 = vand.u32 2147483647, %v5490
    %v5587 = vand.u32 2147483647, %v5491
    %v5588 = vand.u32 2147483647, %v5492
    %v5589 = vand.u32 2147483647, %v5493
    %v5590 = vand.u32 2147483647, %v5494
    %v5591 = vand.u32 2147483647, %v5495
    %v5592 = vand.u32 2147483647, %v5496
    %v5593 = vand.u32 2147483647, %v5497
    %v5594 = vand.u32 2147483647, %v5498
    %v5595 = vand.u32 2147483647, %v5499
    %v5596 = vmul.f32 %v5564, 0.3275911
    %v5597 = vmul.f32 %v5565, 0.3275911
    %v5598 = vmul.f32 %v5566, 0.3275911
    %v5599 = vmul.f32 %v5567, 0.3275911
    %v5600 = vmul.f32 %v5568, 0.3275911
    %v5601 = vmul.f32 %v5569, 0.3275911
    %v5602 = vmul.f32 %v5570, 0.3275911
    %v5603 = vmul.f32 %v5571, 0.3275911
    %v5604 = vmul.f32 %v5572, 0.3275911
    %v5605 = vmul.f32 %v5573, 0.3275911
    %v5606 = vmul.f32 %v5574, 0.3275911
    %v5607 = vmul.f32 %v5575, 0.3275911
    %v5608 = vmul.f32 %v5576, 0.3275911
    %v5609 = vmul.f32 %v5577, 0.3275911
    %v5610 = vmul.f32 %v5578, 0.3275911
    %v5611 = vmul.f32 %v5579, 0.3275911
    %v5612 = vmul.f32 %v5580, 0.3275911
    %v5613 = vmul.f32 %v5581, 0.3275911
    %v5614 = vmul.f32 %v5582, 0.3275911
    %v5615 = vmul.f32 %v5583, 0.3275911
    %v5616 = vmul.f32 %v5584, 0.3275911
    %v5617 = vmul.f32 %v5585, 0.3275911
    %v5618 = vmul.f32 %v5586, 0.3275911
    %v5619 = vmul.f32 %v5587, 0.3275911
    %v5620 = vmul.f32 %v5588, 0.3275911
    %v5621 = vmul.f32 %v5589, 0.3275911
    %v5622 = vmul.f32 %v5590, 0.3275911
    %v5623 = vmul.f32 %v5591, 0.3275911
    %v5624 = vmul.f32 %v5592, 0.3275911
    %v5625 = vmul.f32 %v5593, 0.3275911
    %v5626 = vmul.f32 %v5594, 0.3275911
    %v5627 = vmul.f32 %v5595, 0.3275911
    %v5628 = vadd.f32 %v5596, 1.0
    %v5629 = vadd.f32 %v5597, 1.0
    %v5630 = vadd.f32 %v5598, 1.0
    %v5631 = vadd.f32 %v5599, 1.0
    %v5632 = vadd.f32 %v5600, 1.0
    %v5633 = vadd.f32 %v5601, 1.0
    %v5634 = vadd.f32 %v5602, 1.0
    %v5635 = vadd.f32 %v5603, 1.0
    %v5636 = vadd.f32 %v5604, 1.0
    %v5637 = vadd.f32 %v5605, 1.0
    %v5638 = vadd.f32 %v5606, 1.0
    %v5639 = vadd.f32 %v5607, 1.0
    %v5640 = vadd.f32 %v5608, 1.0
    %v5641 = vadd.f32 %v5609, 1.0
    %v5642 = vadd.f32 %v5610, 1.0
    %v5643 = vadd.f32 %v5611, 1.0
    %v5644 = vadd.f32 %v5612, 1.0
    %v5645 = vadd.f32 %v5613, 1.0
    %v5646 = vadd.f32 %v5614, 1.0
    %v5647 = vadd.f32 %v5615, 1.0
    %v5648 = vadd.f32 %v5616, 1.0
    %v5649 = vadd.f32 %v5617, 1.0
    %v5650 = vadd.f32 %v5618, 1.0
    %v5651 = vadd.f32 %v5619, 1.0
    %v5652 = vadd.f32 %v5620, 1.0
    %v5653 = vadd.f32 %v5621, 1.0
    %v5654 = vadd.f32 %v5622, 1.0
    %v5655 = vadd.f32 %v5623, 1.0
    %v5656 = vadd.f32 %v5624, 1.0
    %v5657 = vadd.f32 %v5625, 1.0
    %v5658 = vadd.f32 %v5626, 1.0
    %v5659 = vadd.f32 %v5627, 1.0
    %v5660 = vrcp.pop %v5628
    %v5661 = vmul.f32 1.0, %v5660
    %v5662 = vrcp.pop %v5629
    %v5663 = vmul.f32 1.0, %v5662
    %v5664 = vrcp.pop %v5630
    %v5665 = vmul.f32 1.0, %v5664
    %v5666 = vrcp.pop %v5631
    %v5667 = vmul.f32 1.0, %v5666
    %v5668 = vrcp.pop %v5632
    %v5669 = vmul.f32 1.0, %v5668
    %v5670 = vrcp.pop %v5633
    %v5671 = vmul.f32 1.0, %v5670
    %v5672 = vrcp.pop %v5634
    %v5673 = vmul.f32 1.0, %v5672
    %v5674 = vrcp.pop %v5635
    %v5675 = vmul.f32 1.0, %v5674
    %v5676 = vrcp.pop %v5636
    %v5677 = vmul.f32 1.0, %v5676
    %v5678 = vrcp.pop %v5637
    %v5679 = vmul.f32 1.0, %v5678
    %v5680 = vrcp.pop %v5638
    %v5681 = vmul.f32 1.0, %v5680
    %v5682 = vrcp.pop %v5639
    %v5683 = vmul.f32 1.0, %v5682
    %v5684 = vrcp.pop %v5640
    %v5685 = vmul.f32 1.0, %v5684
    %v5686 = vrcp.pop %v5641
    %v5687 = vmul.f32 1.0, %v5686
    %v5688 = vrcp.pop %v5642
    %v5689 = vmul.f32 1.0, %v5688
    %v5690 = vrcp.pop %v5643
    %v5691 = vmul.f32 1.0, %v5690
    %v5692 = vrcp.pop %v5644
    %v5693 = vmul.f32 1.0, %v5692
    %v5694 = vrcp.pop %v5645
    %v5695 = vmul.f32 1.0, %v5694
    %v5696 = vrcp.pop %v5646
    %v5697 = vmul.f32 1.0, %v5696
    %v5698 = vrcp.pop %v5647
    %v5699 = vmul.f32 1.0, %v5698
    %v5700 = vrcp.pop %v5648
    %v5701 = vmul.f32 1.0, %v5700
    %v5702 = vrcp.pop %v5649
    %v5703 = vmul.f32 1.0, %v5702
    %v5704 = vrcp.pop %v5650
    %v5705 = vmul.f32 1.0, %v5704
    %v5706 = vrcp.pop %v5651
    %v5707 = vmul.f32 1.0, %v5706
    %v5708 = vrcp.pop %v5652
    %v5709 = vmul.f32 1.0, %v5708
    %v5710 = vrcp.pop %v5653
    %v5711 = vmul.f32 1.0, %v5710
    %v5712 = vrcp.pop %v5654
    %v5713 = vmul.f32 1.0, %v5712
    %v5714 = vrcp.pop %v5655
    %v5715 = vmul.f32 1.0, %v5714
    %v5716 = vrcp.pop %v5656
    %v5717 = vmul.f32 1.0, %v5716
    %v5718 = vrcp.pop %v5657
    %v5719 = vmul.f32 1.0, %v5718
    %v5720 = vrcp.pop %v5658
    %v5721 = vmul.f32 1.0, %v5720
    %v5722 = vrcp.pop %v5659
    %v5723 = vmul.f32 1.0, %v5722
    %v5724 = vmul.f32 %v5661, 1.0614054
    %v5725 = vmul.f32 %v5663, 1.0614054
    %v5726 = vmul.f32 %v5665, 1.0614054
    %v5727 = vmul.f32 %v5667, 1.0614054
    %v5728 = vmul.f32 %v5669, 1.0614054
    %v5729 = vmul.f32 %v5671, 1.0614054
    %v5730 = vmul.f32 %v5673, 1.0614054
    %v5731 = vmul.f32 %v5675, 1.0614054
    %v5732 = vmul.f32 %v5677, 1.0614054
    %v5733 = vmul.f32 %v5679, 1.0614054
    %v5734 = vmul.f32 %v5681, 1.0614054
    %v5735 = vmul.f32 %v5683, 1.0614054
    %v5736 = vmul.f32 %v5685, 1.0614054
    %v5737 = vmul.f32 %v5687, 1.0614054
    %v5738 = vmul.f32 %v5689, 1.0614054
    %v5739 = vmul.f32 %v5691, 1.0614054
    %v5740 = vmul.f32 %v5693, 1.0614054
    %v5741 = vmul.f32 %v5695, 1.0614054
    %v5742 = vmul.f32 %v5697, 1.0614054
    %v5743 = vmul.f32 %v5699, 1.0614054
    %v5744 = vmul.f32 %v5701, 1.0614054
    %v5745 = vmul.f32 %v5703, 1.0614054
    %v5746 = vmul.f32 %v5705, 1.0614054
    %v5747 = vmul.f32 %v5707, 1.0614054
    %v5748 = vmul.f32 %v5709, 1.0614054
    %v5749 = vmul.f32 %v5711, 1.0614054
    %v5750 = vmul.f32 %v5713, 1.0614054
    %v5751 = vmul.f32 %v5715, 1.0614054
    %v5752 = vmul.f32 %v5717, 1.0614054
    %v5753 = vmul.f32 %v5719, 1.0614054
    %v5754 = vmul.f32 %v5721, 1.0614054
    %v5755 = vmul.f32 %v5723, 1.0614054
    %v5756 = vadd.f32 %v5724, -1.4531521
    %v5757 = vadd.f32 %v5725, -1.4531521
    %v5758 = vadd.f32 %v5726, -1.4531521
    %v5759 = vadd.f32 %v5727, -1.4531521
    %v5760 = vadd.f32 %v5728, -1.4531521
    %v5761 = vadd.f32 %v5729, -1.4531521
    %v5762 = vadd.f32 %v5730, -1.4531521
    %v5763 = vadd.f32 %v5731, -1.4531521
    %v5764 = vadd.f32 %v5732, -1.4531521
    %v5765 = vadd.f32 %v5733, -1.4531521
    %v5766 = vadd.f32 %v5734, -1.4531521
    %v5767 = vadd.f32 %v5735, -1.4531521
    %v5768 = vadd.f32 %v5736, -1.4531521
    %v5769 = vadd.f32 %v5737, -1.4531521
    %v5770 = vadd.f32 %v5738, -1.4531521
    %v5771 = vadd.f32 %v5739, -1.4531521
    %v5772 = vadd.f32 %v5740, -1.4531521
    %v5773 = vadd.f32 %v5741, -1.4531521
    %v5774 = vadd.f32 %v5742, -1.4531521
    %v5775 = vadd.f32 %v5743, -1.4531521
    %v5776 = vadd.f32 %v5744, -1.4531521
    %v5777 = vadd.f32 %v5745, -1.4531521
    %v5778 = vadd.f32 %v5746, -1.4531521
    %v5779 = vadd.f32 %v5747, -1.4531521
    %v5780 = vadd.f32 %v5748, -1.4531521
    %v5781 = vadd.f32 %v5749, -1.4531521
    %v5782 = vadd.f32 %v5750, -1.4531521
    %v5783 = vadd.f32 %v5751, -1.4531521
    %v5784 = vadd.f32 %v5752, -1.4531521
    %v5785 = vadd.f32 %v5753, -1.4531521
    %v5786 = vadd.f32 %v5754, -1.4531521
    %v5787 = vadd.f32 %v5755, -1.4531521
    %v5788 = vmul.f32 %v5756, %v5661
    %v5789 = vmul.f32 %v5757, %v5663
    %v5790 = vmul.f32 %v5758, %v5665
    %v5791 = vmul.f32 %v5759, %v5667
    %v5792 = vmul.f32 %v5760, %v5669
    %v5793 = vmul.f32 %v5761, %v5671
    %v5794 = vmul.f32 %v5762, %v5673
    %v5795 = vmul.f32 %v5763, %v5675
    %v5796 = vmul.f32 %v5764, %v5677
    %v5797 = vmul.f32 %v5765, %v5679
    %v5798 = vmul.f32 %v5766, %v5681
    %v5799 = vmul.f32 %v5767, %v5683
    %v5800 = vmul.f32 %v5768, %v5685
    %v5801 = vmul.f32 %v5769, %v5687
    %v5802 = vmul.f32 %v5770, %v5689
    %v5803 = vmul.f32 %v5771, %v5691
    %v5804 = vmul.f32 %v5772, %v5693
    %v5805 = vmul.f32 %v5773, %v5695
    %v5806 = vmul.f32 %v5774, %v5697
    %v5807 = vmul.f32 %v5775, %v5699
    %v5808 = vmul.f32 %v5776, %v5701
    %v5809 = vmul.f32 %v5777, %v5703
    %v5810 = vmul.f32 %v5778, %v5705
    %v5811 = vmul.f32 %v5779, %v5707
    %v5812 = vmul.f32 %v5780, %v5709
    %v5813 = vmul.f32 %v5781, %v5711
    %v5814 = vmul.f32 %v5782, %v5713
    %v5815 = vmul.f32 %v5783, %v5715
    %v5816 = vmul.f32 %v5784, %v5717
    %v5817 = vmul.f32 %v5785, %v5719
    %v5818 = vmul.f32 %v5786, %v5721
    %v5819 = vmul.f32 %v5787, %v5723
    %v5820 = vadd.f32 %v5788, 1.4214138
    %v5821 = vadd.f32 %v5789, 1.4214138
    %v5822 = vadd.f32 %v5790, 1.4214138
    %v5823 = vadd.f32 %v5791, 1.4214138
    %v5824 = vadd.f32 %v5792, 1.4214138
    %v5825 = vadd.f32 %v5793, 1.4214138
    %v5826 = vadd.f32 %v5794, 1.4214138
    %v5827 = vadd.f32 %v5795, 1.4214138
    %v5828 = vadd.f32 %v5796, 1.4214138
    %v5829 = vadd.f32 %v5797, 1.4214138
    %v5830 = vadd.f32 %v5798, 1.4214138
    %v5831 = vadd.f32 %v5799, 1.4214138
    %v5832 = vadd.f32 %v5800, 1.4214138
    %v5833 = vadd.f32 %v5801, 1.4214138
    %v5834 = vadd.f32 %v5802, 1.4214138
    %v5835 = vadd.f32 %v5803, 1.4214138
    %v5836 = vadd.f32 %v5804, 1.4214138
    %v5837 = vadd.f32 %v5805, 1.4214138
    %v5838 = vadd.f32 %v5806, 1.4214138
    %v5839 = vadd.f32 %v5807, 1.4214138
    %v5840 = vadd.f32 %v5808, 1.4214138
    %v5841 = vadd.f32 %v5809, 1.4214138
    %v5842 = vadd.f32 %v5810, 1.4214138
    %v5843 = vadd.f32 %v5811, 1.4214138
    %v5844 = vadd.f32 %v5812, 1.4214138
    %v5845 = vadd.f32 %v5813, 1.4214138
    %v5846 = vadd.f32 %v5814, 1.4214138
    %v5847 = vadd.f32 %v5815, 1.4214138
    %v5848 = vadd.f32 %v5816, 1.4214138
    %v5849 = vadd.f32 %v5817, 1.4214138
    %v5850 = vadd.f32 %v5818, 1.4214138
    %v5851 = vadd.f32 %v5819, 1.4214138
    %v5852 = vmul.f32 %v5820, %v5661
    %v5853 = vmul.f32 %v5821, %v5663
    %v5854 = vmul.f32 %v5822, %v5665
    %v5855 = vmul.f32 %v5823, %v5667
    %v5856 = vmul.f32 %v5824, %v5669
    %v5857 = vmul.f32 %v5825, %v5671
    %v5858 = vmul.f32 %v5826, %v5673
    %v5859 = vmul.f32 %v5827, %v5675
    %v5860 = vmul.f32 %v5828, %v5677
    %v5861 = vmul.f32 %v5829, %v5679
    %v5862 = vmul.f32 %v5830, %v5681
    %v5863 = vmul.f32 %v5831, %v5683
    %v5864 = vmul.f32 %v5832, %v5685
    %v5865 = vmul.f32 %v5833, %v5687
    %v5866 = vmul.f32 %v5834, %v5689
    %v5867 = vmul.f32 %v5835, %v5691
    %v5868 = vmul.f32 %v5836, %v5693
    %v5869 = vmul.f32 %v5837, %v5695
    %v5870 = vmul.f32 %v5838, %v5697
    %v5871 = vmul.f32 %v5839, %v5699
    %v5872 = vmul.f32 %v5840, %v5701
    %v5873 = vmul.f32 %v5841, %v5703
    %v5874 = vmul.f32 %v5842, %v5705
    %v5875 = vmul.f32 %v5843, %v5707
    %v5876 = vmul.f32 %v5844, %v5709
    %v5877 = vmul.f32 %v5845, %v5711
    %v5878 = vmul.f32 %v5846, %v5713
    %v5879 = vmul.f32 %v5847, %v5715
    %v5880 = vmul.f32 %v5848, %v5717
    %v5881 = vmul.f32 %v5849, %v5719
    %v5882 = vmul.f32 %v5850, %v5721
    %v5883 = vmul.f32 %v5851, %v5723
    %v5884 = vadd.f32 %v5852, -0.28449672
    %v5885 = vadd.f32 %v5853, -0.28449672
    %v5886 = vadd.f32 %v5854, -0.28449672
    %v5887 = vadd.f32 %v5855, -0.28449672
    %v5888 = vadd.f32 %v5856, -0.28449672
    %v5889 = vadd.f32 %v5857, -0.28449672
    %v5890 = vadd.f32 %v5858, -0.28449672
    %v5891 = vadd.f32 %v5859, -0.28449672
    %v5892 = vadd.f32 %v5860, -0.28449672
    %v5893 = vadd.f32 %v5861, -0.28449672
    %v5894 = vadd.f32 %v5862, -0.28449672
    %v5895 = vadd.f32 %v5863, -0.28449672
    %v5896 = vadd.f32 %v5864, -0.28449672
    %v5897 = vadd.f32 %v5865, -0.28449672
    %v5898 = vadd.f32 %v5866, -0.28449672
    %v5899 = vadd.f32 %v5867, -0.28449672
    %v5900 = vadd.f32 %v5868, -0.28449672
    %v5901 = vadd.f32 %v5869, -0.28449672
    %v5902 = vadd.f32 %v5870, -0.28449672
    %v5903 = vadd.f32 %v5871, -0.28449672
    %v5904 = vadd.f32 %v5872, -0.28449672
    %v5905 = vadd.f32 %v5873, -0.28449672
    %v5906 = vadd.f32 %v5874, -0.28449672
    %v5907 = vadd.f32 %v5875, -0.28449672
    %v5908 = vadd.f32 %v5876, -0.28449672
    %v5909 = vadd.f32 %v5877, -0.28449672
    %v5910 = vadd.f32 %v5878, -0.28449672
    %v5911 = vadd.f32 %v5879, -0.28449672
    %v5912 = vadd.f32 %v5880, -0.28449672
    %v5913 = vadd.f32 %v5881, -0.28449672
    %v5914 = vadd.f32 %v5882, -0.28449672
    %v5915 = vadd.f32 %v5883, -0.28449672
    %v5916 = vmul.f32 %v5884, %v5661
    %v5917 = vmul.f32 %v5885, %v5663
    %v5918 = vmul.f32 %v5886, %v5665
    %v5919 = vmul.f32 %v5887, %v5667
    %v5920 = vmul.f32 %v5888, %v5669
    %v5921 = vmul.f32 %v5889, %v5671
    %v5922 = vmul.f32 %v5890, %v5673
    %v5923 = vmul.f32 %v5891, %v5675
    %v5924 = vmul.f32 %v5892, %v5677
    %v5925 = vmul.f32 %v5893, %v5679
    %v5926 = vmul.f32 %v5894, %v5681
    %v5927 = vmul.f32 %v5895, %v5683
    %v5928 = vmul.f32 %v5896, %v5685
    %v5929 = vmul.f32 %v5897, %v5687
    %v5930 = vmul.f32 %v5898, %v5689
    %v5931 = vmul.f32 %v5899, %v5691
    %v5932 = vmul.f32 %v5900, %v5693
    %v5933 = vmul.f32 %v5901, %v5695
    %v5934 = vmul.f32 %v5902, %v5697
    %v5935 = vmul.f32 %v5903, %v5699
    %v5936 = vmul.f32 %v5904, %v5701
    %v5937 = vmul.f32 %v5905, %v5703
    %v5938 = vmul.f32 %v5906, %v5705
    %v5939 = vmul.f32 %v5907, %v5707
    %v5940 = vmul.f32 %v5908, %v5709
    %v5941 = vmul.f32 %v5909, %v5711
    %v5942 = vmul.f32 %v5910, %v5713
    %v5943 = vmul.f32 %v5911, %v5715
    %v5944 = vmul.f32 %v5912, %v5717
    %v5945 = vmul.f32 %v5913, %v5719
    %v5946 = vmul.f32 %v5914, %v5721
    %v5947 = vmul.f32 %v5915, %v5723
    %v5948 = vadd.f32 %v5916, 0.2548296
    %v5949 = vadd.f32 %v5917, 0.2548296
    %v5950 = vadd.f32 %v5918, 0.2548296
    %v5951 = vadd.f32 %v5919, 0.2548296
    %v5952 = vadd.f32 %v5920, 0.2548296
    %v5953 = vadd.f32 %v5921, 0.2548296
    %v5954 = vadd.f32 %v5922, 0.2548296
    %v5955 = vadd.f32 %v5923, 0.2548296
    %v5956 = vadd.f32 %v5924, 0.2548296
    %v5957 = vadd.f32 %v5925, 0.2548296
    %v5958 = vadd.f32 %v5926, 0.2548296
    %v5959 = vadd.f32 %v5927, 0.2548296
    %v5960 = vadd.f32 %v5928, 0.2548296
    %v5961 = vadd.f32 %v5929, 0.2548296
    %v5962 = vadd.f32 %v5930, 0.2548296
    %v5963 = vadd.f32 %v5931, 0.2548296
    %v5964 = vadd.f32 %v5932, 0.2548296
    %v5965 = vadd.f32 %v5933, 0.2548296
    %v5966 = vadd.f32 %v5934, 0.2548296
    %v5967 = vadd.f32 %v5935, 0.2548296
    %v5968 = vadd.f32 %v5936, 0.2548296
    %v5969 = vadd.f32 %v5937, 0.2548296
    %v5970 = vadd.f32 %v5938, 0.2548296
    %v5971 = vadd.f32 %v5939, 0.2548296
    %v5972 = vadd.f32 %v5940, 0.2548296
    %v5973 = vadd.f32 %v5941, 0.2548296
    %v5974 = vadd.f32 %v5942, 0.2548296
    %v5975 = vadd.f32 %v5943, 0.2548296
    %v5976 = vadd.f32 %v5944, 0.2548296
    %v5977 = vadd.f32 %v5945, 0.2548296
    %v5978 = vadd.f32 %v5946, 0.2548296
    %v5979 = vadd.f32 %v5947, 0.2548296
    %v5980 = vmul.f32 %v5948, %v5661
    %v5981 = vmul.f32 %v5949, %v5663
    %v5982 = vmul.f32 %v5950, %v5665
    %v5983 = vmul.f32 %v5951, %v5667
    %v5984 = vmul.f32 %v5952, %v5669
    %v5985 = vmul.f32 %v5953, %v5671
    %v5986 = vmul.f32 %v5954, %v5673
    %v5987 = vmul.f32 %v5955, %v5675
    %v5988 = vmul.f32 %v5956, %v5677
    %v5989 = vmul.f32 %v5957, %v5679
    %v5990 = vmul.f32 %v5958, %v5681
    %v5991 = vmul.f32 %v5959, %v5683
    %v5992 = vmul.f32 %v5960, %v5685
    %v5993 = vmul.f32 %v5961, %v5687
    %v5994 = vmul.f32 %v5962, %v5689
    %v5995 = vmul.f32 %v5963, %v5691
    %v5996 = vmul.f32 %v5964, %v5693
    %v5997 = vmul.f32 %v5965, %v5695
    %v5998 = vmul.f32 %v5966, %v5697
    %v5999 = vmul.f32 %v5967, %v5699
    %v6000 = vmul.f32 %v5968, %v5701
    %v6001 = vmul.f32 %v5969, %v5703
    %v6002 = vmul.f32 %v5970, %v5705
    %v6003 = vmul.f32 %v5971, %v5707
    %v6004 = vmul.f32 %v5972, %v5709
    %v6005 = vmul.f32 %v5973, %v5711
    %v6006 = vmul.f32 %v5974, %v5713
    %v6007 = vmul.f32 %v5975, %v5715
    %v6008 = vmul.f32 %v5976, %v5717
    %v6009 = vmul.f32 %v5977, %v5719
    %v6010 = vmul.f32 %v5978, %v5721
    %v6011 = vmul.f32 %v5979, %v5723
    %v6012 = vsub.f32 0.0, %v5564
    %v6013 = vsub.f32 0.0, %v5565
    %v6014 = vsub.f32 0.0, %v5566
    %v6015 = vsub.f32 0.0, %v5567
    %v6016 = vsub.f32 0.0, %v5568
    %v6017 = vsub.f32 0.0, %v5569
    %v6018 = vsub.f32 0.0, %v5570
    %v6019 = vsub.f32 0.0, %v5571
    %v6020 = vsub.f32 0.0, %v5572
    %v6021 = vsub.f32 0.0, %v5573
    %v6022 = vsub.f32 0.0, %v5574
    %v6023 = vsub.f32 0.0, %v5575
    %v6024 = vsub.f32 0.0, %v5576
    %v6025 = vsub.f32 0.0, %v5577
    %v6026 = vsub.f32 0.0, %v5578
    %v6027 = vsub.f32 0.0, %v5579
    %v6028 = vsub.f32 0.0, %v5580
    %v6029 = vsub.f32 0.0, %v5581
    %v6030 = vsub.f32 0.0, %v5582
    %v6031 = vsub.f32 0.0, %v5583
    %v6032 = vsub.f32 0.0, %v5584
    %v6033 = vsub.f32 0.0, %v5585
    %v6034 = vsub.f32 0.0, %v5586
    %v6035 = vsub.f32 0.0, %v5587
    %v6036 = vsub.f32 0.0, %v5588
    %v6037 = vsub.f32 0.0, %v5589
    %v6038 = vsub.f32 0.0, %v5590
    %v6039 = vsub.f32 0.0, %v5591
    %v6040 = vsub.f32 0.0, %v5592
    %v6041 = vsub.f32 0.0, %v5593
    %v6042 = vsub.f32 0.0, %v5594
    %v6043 = vsub.f32 0.0, %v5595
    %v6044 = vmul.f32 %v6012, %v5564
    %v6045 = vmul.f32 %v6013, %v5565
    %v6046 = vmul.f32 %v6014, %v5566
    %v6047 = vmul.f32 %v6015, %v5567
    %v6048 = vmul.f32 %v6016, %v5568
    %v6049 = vmul.f32 %v6017, %v5569
    %v6050 = vmul.f32 %v6018, %v5570
    %v6051 = vmul.f32 %v6019, %v5571
    %v6052 = vmul.f32 %v6020, %v5572
    %v6053 = vmul.f32 %v6021, %v5573
    %v6054 = vmul.f32 %v6022, %v5574
    %v6055 = vmul.f32 %v6023, %v5575
    %v6056 = vmul.f32 %v6024, %v5576
    %v6057 = vmul.f32 %v6025, %v5577
    %v6058 = vmul.f32 %v6026, %v5578
    %v6059 = vmul.f32 %v6027, %v5579
    %v6060 = vmul.f32 %v6028, %v5580
    %v6061 = vmul.f32 %v6029, %v5581
    %v6062 = vmul.f32 %v6030, %v5582
    %v6063 = vmul.f32 %v6031, %v5583
    %v6064 = vmul.f32 %v6032, %v5584
    %v6065 = vmul.f32 %v6033, %v5585
    %v6066 = vmul.f32 %v6034, %v5586
    %v6067 = vmul.f32 %v6035, %v5587
    %v6068 = vmul.f32 %v6036, %v5588
    %v6069 = vmul.f32 %v6037, %v5589
    %v6070 = vmul.f32 %v6038, %v5590
    %v6071 = vmul.f32 %v6039, %v5591
    %v6072 = vmul.f32 %v6040, %v5592
    %v6073 = vmul.f32 %v6041, %v5593
    %v6074 = vmul.f32 %v6042, %v5594
    %v6075 = vmul.f32 %v6043, %v5595
    %v6076 = vmul.f32 %v6044, 1.442695
    %v6077 = vpow.pop %v6076
    %v6078 = vmul.f32 %v6045, 1.442695
    %v6079 = vpow.pop %v6078
    %v6080 = vmul.f32 %v6046, 1.442695
    %v6081 = vpow.pop %v6080
    %v6082 = vmul.f32 %v6047, 1.442695
    %v6083 = vpow.pop %v6082
    %v6084 = vmul.f32 %v6048, 1.442695
    %v6085 = vpow.pop %v6084
    %v6086 = vmul.f32 %v6049, 1.442695
    %v6087 = vpow.pop %v6086
    %v6088 = vmul.f32 %v6050, 1.442695
    %v6089 = vpow.pop %v6088
    %v6090 = vmul.f32 %v6051, 1.442695
    %v6091 = vpow.pop %v6090
    %v6092 = vmul.f32 %v6052, 1.442695
    %v6093 = vpow.pop %v6092
    %v6094 = vmul.f32 %v6053, 1.442695
    %v6095 = vpow.pop %v6094
    %v6096 = vmul.f32 %v6054, 1.442695
    %v6097 = vpow.pop %v6096
    %v6098 = vmul.f32 %v6055, 1.442695
    %v6099 = vpow.pop %v6098
    %v6100 = vmul.f32 %v6056, 1.442695
    %v6101 = vpow.pop %v6100
    %v6102 = vmul.f32 %v6057, 1.442695
    %v6103 = vpow.pop %v6102
    %v6104 = vmul.f32 %v6058, 1.442695
    %v6105 = vpow.pop %v6104
    %v6106 = vmul.f32 %v6059, 1.442695
    %v6107 = vpow.pop %v6106
    %v6108 = vmul.f32 %v6060, 1.442695
    %v6109 = vpow.pop %v6108
    %v6110 = vmul.f32 %v6061, 1.442695
    %v6111 = vpow.pop %v6110
    %v6112 = vmul.f32 %v6062, 1.442695
    %v6113 = vpow.pop %v6112
    %v6114 = vmul.f32 %v6063, 1.442695
    %v6115 = vpow.pop %v6114
    %v6116 = vmul.f32 %v6064, 1.442695
    %v6117 = vpow.pop %v6116
    %v6118 = vmul.f32 %v6065, 1.442695
    %v6119 = vpow.pop %v6118
    %v6120 = vmul.f32 %v6066, 1.442695
    %v6121 = vpow.pop %v6120
    %v6122 = vmul.f32 %v6067, 1.442695
    %v6123 = vpow.pop %v6122
    %v6124 = vmul.f32 %v6068, 1.442695
    %v6125 = vpow.pop %v6124
    %v6126 = vmul.f32 %v6069, 1.442695
    %v6127 = vpow.pop %v6126
    %v6128 = vmul.f32 %v6070, 1.442695
    %v6129 = vpow.pop %v6128
    %v6130 = vmul.f32 %v6071, 1.442695
    %v6131 = vpow.pop %v6130
    %v6132 = vmul.f32 %v6072, 1.442695
    %v6133 = vpow.pop %v6132
    %v6134 = vmul.f32 %v6073, 1.442695
    %v6135 = vpow.pop %v6134
    %v6136 = vmul.f32 %v6074, 1.442695
    %v6137 = vpow.pop %v6136
    %v6138 = vmul.f32 %v6075, 1.442695
    %v6139 = vpow.pop %v6138
    %v6140 = vmul.f32 %v5980, %v6077
    %v6141 = vmul.f32 %v5981, %v6079
    %v6142 = vmul.f32 %v5982, %v6081
    %v6143 = vmul.f32 %v5983, %v6083
    %v6144 = vmul.f32 %v5984, %v6085
    %v6145 = vmul.f32 %v5985, %v6087
    %v6146 = vmul.f32 %v5986, %v6089
    %v6147 = vmul.f32 %v5987, %v6091
    %v6148 = vmul.f32 %v5988, %v6093
    %v6149 = vmul.f32 %v5989, %v6095
    %v6150 = vmul.f32 %v5990, %v6097
    %v6151 = vmul.f32 %v5991, %v6099
    %v6152 = vmul.f32 %v5992, %v6101
    %v6153 = vmul.f32 %v5993, %v6103
    %v6154 = vmul.f32 %v5994, %v6105
    %v6155 = vmul.f32 %v5995, %v6107
    %v6156 = vmul.f32 %v5996, %v6109
    %v6157 = vmul.f32 %v5997, %v6111
    %v6158 = vmul.f32 %v5998, %v6113
    %v6159 = vmul.f32 %v5999, %v6115
    %v6160 = vmul.f32 %v6000, %v6117
    %v6161 = vmul.f32 %v6001, %v6119
    %v6162 = vmul.f32 %v6002, %v6121
    %v6163 = vmul.f32 %v6003, %v6123
    %v6164 = vmul.f32 %v6004, %v6125
    %v6165 = vmul.f32 %v6005, %v6127
    %v6166 = vmul.f32 %v6006, %v6129
    %v6167 = vmul.f32 %v6007, %v6131
    %v6168 = vmul.f32 %v6008, %v6133
    %v6169 = vmul.f32 %v6009, %v6135
    %v6170 = vmul.f32 %v6010, %v6137
    %v6171 = vmul.f32 %v6011, %v6139
    %v6172 = vsub.f32 1.0, %v6140
    %v6173 = vsub.f32 1.0, %v6141
    %v6174 = vsub.f32 1.0, %v6142
    %v6175 = vsub.f32 1.0, %v6143
    %v6176 = vsub.f32 1.0, %v6144
    %v6177 = vsub.f32 1.0, %v6145
    %v6178 = vsub.f32 1.0, %v6146
    %v6179 = vsub.f32 1.0, %v6147
    %v6180 = vsub.f32 1.0, %v6148
    %v6181 = vsub.f32 1.0, %v6149
    %v6182 = vsub.f32 1.0, %v6150
    %v6183 = vsub.f32 1.0, %v6151
    %v6184 = vsub.f32 1.0, %v6152
    %v6185 = vsub.f32 1.0, %v6153
    %v6186 = vsub.f32 1.0, %v6154
    %v6187 = vsub.f32 1.0, %v6155
    %v6188 = vsub.f32 1.0, %v6156
    %v6189 = vsub.f32 1.0, %v6157
    %v6190 = vsub.f32 1.0, %v6158
    %v6191 = vsub.f32 1.0, %v6159
    %v6192 = vsub.f32 1.0, %v6160
    %v6193 = vsub.f32 1.0, %v6161
    %v6194 = vsub.f32 1.0, %v6162
    %v6195 = vsub.f32 1.0, %v6163
    %v6196 = vsub.f32 1.0, %v6164
    %v6197 = vsub.f32 1.0, %v6165
    %v6198 = vsub.f32 1.0, %v6166
    %v6199 = vsub.f32 1.0, %v6167
    %v6200 = vsub.f32 1.0, %v6168
    %v6201 = vsub.f32 1.0, %v6169
    %v6202 = vsub.f32 1.0, %v6170
    %v6203 = vsub.f32 1.0, %v6171
    %v6204 = vmul.f32 %v5532, %v6172
    %v6205 = vmul.f32 %v5533, %v6173
    %v6206 = vmul.f32 %v5534, %v6174
    %v6207 = vmul.f32 %v5535, %v6175
    %v6208 = vmul.f32 %v5536, %v6176
    %v6209 = vmul.f32 %v5537, %v6177
    %v6210 = vmul.f32 %v5538, %v6178
    %v6211 = vmul.f32 %v5539, %v6179
    %v6212 = vmul.f32 %v5540, %v6180
    %v6213 = vmul.f32 %v5541, %v6181
    %v6214 = vmul.f32 %v5542, %v6182
    %v6215 = vmul.f32 %v5543, %v6183
    %v6216 = vmul.f32 %v5544, %v6184
    %v6217 = vmul.f32 %v5545, %v6185
    %v6218 = vmul.f32 %v5546, %v6186
    %v6219 = vmul.f32 %v5547, %v6187
    %v6220 = vmul.f32 %v5548, %v6188
    %v6221 = vmul.f32 %v5549, %v6189
    %v6222 = vmul.f32 %v5550, %v6190
    %v6223 = vmul.f32 %v5551, %v6191
    %v6224 = vmul.f32 %v5552, %v6192
    %v6225 = vmul.f32 %v5553, %v6193
    %v6226 = vmul.f32 %v5554, %v6194
    %v6227 = vmul.f32 %v5555, %v6195
    %v6228 = vmul.f32 %v5556, %v6196
    %v6229 = vmul.f32 %v5557, %v6197
    %v6230 = vmul.f32 %v5558, %v6198
    %v6231 = vmul.f32 %v5559, %v6199
    %v6232 = vmul.f32 %v5560, %v6200
    %v6233 = vmul.f32 %v5561, %v6201
    %v6234 = vmul.f32 %v5562, %v6202
    %v6235 = vmul.f32 %v5563, %v6203
    %v6236 = vadd.f32 %v6204, 1.0
    %v6237 = vadd.f32 %v6205, 1.0
    %v6238 = vadd.f32 %v6206, 1.0
    %v6239 = vadd.f32 %v6207, 1.0
    %v6240 = vadd.f32 %v6208, 1.0
    %v6241 = vadd.f32 %v6209, 1.0
    %v6242 = vadd.f32 %v6210, 1.0
    %v6243 = vadd.f32 %v6211, 1.0
    %v6244 = vadd.f32 %v6212, 1.0
    %v6245 = vadd.f32 %v6213, 1.0
    %v6246 = vadd.f32 %v6214, 1.0
    %v6247 = vadd.f32 %v6215, 1.0
    %v6248 = vadd.f32 %v6216, 1.0
    %v6249 = vadd.f32 %v6217, 1.0
    %v6250 = vadd.f32 %v6218, 1.0
    %v6251 = vadd.f32 %v6219, 1.0
    %v6252 = vadd.f32 %v6220, 1.0
    %v6253 = vadd.f32 %v6221, 1.0
    %v6254 = vadd.f32 %v6222, 1.0
    %v6255 = vadd.f32 %v6223, 1.0
    %v6256 = vadd.f32 %v6224, 1.0
    %v6257 = vadd.f32 %v6225, 1.0
    %v6258 = vadd.f32 %v6226, 1.0
    %v6259 = vadd.f32 %v6227, 1.0
    %v6260 = vadd.f32 %v6228, 1.0
    %v6261 = vadd.f32 %v6229, 1.0
    %v6262 = vadd.f32 %v6230, 1.0
    %v6263 = vadd.f32 %v6231, 1.0
    %v6264 = vadd.f32 %v6232, 1.0
    %v6265 = vadd.f32 %v6233, 1.0
    %v6266 = vadd.f32 %v6234, 1.0
    %v6267 = vadd.f32 %v6235, 1.0
    %v6268 = vmul.f32 %v5436, %v6236
    %v6269 = vmul.f32 %v5437, %v6237
    %v6270 = vmul.f32 %v5438, %v6238
    %v6271 = vmul.f32 %v5439, %v6239
    %v6272 = vmul.f32 %v5440, %v6240
    %v6273 = vmul.f32 %v5441, %v6241
    %v6274 = vmul.f32 %v5442, %v6242
    %v6275 = vmul.f32 %v5443, %v6243
    %v6276 = vmul.f32 %v5444, %v6244
    %v6277 = vmul.f32 %v5445, %v6245
    %v6278 = vmul.f32 %v5446, %v6246
    %v6279 = vmul.f32 %v5447, %v6247
    %v6280 = vmul.f32 %v5448, %v6248
    %v6281 = vmul.f32 %v5449, %v6249
    %v6282 = vmul.f32 %v5450, %v6250
    %v6283 = vmul.f32 %v5451, %v6251
    %v6284 = vmul.f32 %v5452, %v6252
    %v6285 = vmul.f32 %v5453, %v6253
    %v6286 = vmul.f32 %v5454, %v6254
    %v6287 = vmul.f32 %v5455, %v6255
    %v6288 = vmul.f32 %v5456, %v6256
    %v6289 = vmul.f32 %v5457, %v6257
    %v6290 = vmul.f32 %v5458, %v6258
    %v6291 = vmul.f32 %v5459, %v6259
    %v6292 = vmul.f32 %v5460, %v6260
    %v6293 = vmul.f32 %v5461, %v6261
    %v6294 = vmul.f32 %v5462, %v6262
    %v6295 = vmul.f32 %v5463, %v6263
    %v6296 = vmul.f32 %v5464, %v6264
    %v6297 = vmul.f32 %v5465, %v6265
    %v6298 = vmul.f32 %v5466, %v6266
    %v6299 = vmul.f32 %v5467, %v6267
    %v6300 = vadd.f32 %v6268, %v6269
    %v6301 = vadd.f32 %v6300, %v6270
    %v6302 = vadd.f32 %v6301, %v6271
    %6303 = vadd.xlane.f32.xlu0 %v6302
    %v6304 = vpop.xlane.xlu0 %6303
    %v6305 = vadd.f32 %v6272, %v6273
    %v6306 = vadd.f32 %v6305, %v6274
    %v6307 = vadd.f32 %v6306, %v6275
    %6308 = vadd.xlane.f32.xlu0 %v6307
    %v6309 = vpop.xlane.xlu0 %6308
    %v6310 = vadd.f32 %v6276, %v6277
    %v6311 = vadd.f32 %v6310, %v6278
    %v6312 = vadd.f32 %v6311, %v6279
    %6313 = vadd.xlane.f32.xlu0 %v6312
    %v6314 = vpop.xlane.xlu0 %6313
    %v6315 = vadd.f32 %v6280, %v6281
    %v6316 = vadd.f32 %v6315, %v6282
    %v6317 = vadd.f32 %v6316, %v6283
    %6318 = vadd.xlane.f32.xlu0 %v6317
    %v6319 = vpop.xlane.xlu0 %6318
    %v6320 = vadd.f32 %v6284, %v6285
    %v6321 = vadd.f32 %v6320, %v6286
    %v6322 = vadd.f32 %v6321, %v6287
    %6323 = vadd.xlane.f32.xlu0 %v6322
    %v6324 = vpop.xlane.xlu0 %6323
    %v6325 = vadd.f32 %v6288, %v6289
    %v6326 = vadd.f32 %v6325, %v6290
    %v6327 = vadd.f32 %v6326, %v6291
    %6328 = vadd.xlane.f32.xlu0 %v6327
    %v6329 = vpop.xlane.xlu0 %6328
    %v6330 = vadd.f32 %v6292, %v6293
    %v6331 = vadd.f32 %v6330, %v6294
    %v6332 = vadd.f32 %v6331, %v6295
    %6333 = vadd.xlane.f32.xlu0 %v6332
    %v6334 = vpop.xlane.xlu0 %6333
    %v6335 = vadd.f32 %v6296, %v6297
    %v6336 = vadd.f32 %v6335, %v6298
    %v6337 = vadd.f32 %v6336, %v6299
    %6338 = vadd.xlane.f32.xlu0 %v6337
    %v6339 = vpop.xlane.xlu0 %6338
    %v6340 = vrcp.pop 512.0
    %v6341 = vmul.f32 %v6304, %v6340
    %v6342 = vmul.f32 %v6309, %v6340
    %v6343 = vmul.f32 %v6314, %v6340
    %v6344 = vmul.f32 %v6319, %v6340
    %v6345 = vmul.f32 %v6324, %v6340
    %v6346 = vmul.f32 %v6329, %v6340
    %v6347 = vmul.f32 %v6334, %v6340
    %v6348 = vmul.f32 %v6339, %v6340
    %v6349 = vsub.f32 %v6268, %v6341
    %v6350 = vsub.f32 %v6269, %v6341
    %v6351 = vsub.f32 %v6270, %v6341
    %v6352 = vsub.f32 %v6271, %v6341
    %v6353 = vsub.f32 %v6272, %v6342
    %v6354 = vsub.f32 %v6273, %v6342
    %v6355 = vsub.f32 %v6274, %v6342
    %v6356 = vsub.f32 %v6275, %v6342
    %v6357 = vsub.f32 %v6276, %v6343
    %v6358 = vsub.f32 %v6277, %v6343
    %v6359 = vsub.f32 %v6278, %v6343
    %v6360 = vsub.f32 %v6279, %v6343
    %v6361 = vsub.f32 %v6280, %v6344
    %v6362 = vsub.f32 %v6281, %v6344
    %v6363 = vsub.f32 %v6282, %v6344
    %v6364 = vsub.f32 %v6283, %v6344
    %v6365 = vsub.f32 %v6284, %v6345
    %v6366 = vsub.f32 %v6285, %v6345
    %v6367 = vsub.f32 %v6286, %v6345
    %v6368 = vsub.f32 %v6287, %v6345
    %v6369 = vsub.f32 %v6288, %v6346
    %v6370 = vsub.f32 %v6289, %v6346
    %v6371 = vsub.f32 %v6290, %v6346
    %v6372 = vsub.f32 %v6291, %v6346
    %v6373 = vsub.f32 %v6292, %v6347
    %v6374 = vsub.f32 %v6293, %v6347
    %v6375 = vsub.f32 %v6294, %v6347
    %v6376 = vsub.f32 %v6295, %v6347
    %v6377 = vsub.f32 %v6296, %v6348
    %v6378 = vsub.f32 %v6297, %v6348
    %v6379 = vsub.f32 %v6298, %v6348
    %v6380 = vsub.f32 %v6299, %v6348
    %v6381 = vmul.f32 %v6349, %v6349
    %v6382 = vmul.f32 %v6350, %v6350
    %v6383 = vmul.f32 %v6351, %v6351
    %v6384 = vmul.f32 %v6352, %v6352
    %v6385 = vmul.f32 %v6353, %v6353
    %v6386 = vmul.f32 %v6354, %v6354
    %v6387 = vmul.f32 %v6355, %v6355
    %v6388 = vmul.f32 %v6356, %v6356
    %v6389 = vmul.f32 %v6357, %v6357
    %v6390 = vmul.f32 %v6358, %v6358
    %v6391 = vmul.f32 %v6359, %v6359
    %v6392 = vmul.f32 %v6360, %v6360
    %v6393 = vmul.f32 %v6361, %v6361
    %v6394 = vmul.f32 %v6362, %v6362
    %v6395 = vmul.f32 %v6363, %v6363
    %v6396 = vmul.f32 %v6364, %v6364
    %v6397 = vmul.f32 %v6365, %v6365
    %v6398 = vmul.f32 %v6366, %v6366
    %v6399 = vmul.f32 %v6367, %v6367
    %v6400 = vmul.f32 %v6368, %v6368
    %v6401 = vmul.f32 %v6369, %v6369
    %v6402 = vmul.f32 %v6370, %v6370
    %v6403 = vmul.f32 %v6371, %v6371
    %v6404 = vmul.f32 %v6372, %v6372
    %v6405 = vmul.f32 %v6373, %v6373
    %v6406 = vmul.f32 %v6374, %v6374
    %v6407 = vmul.f32 %v6375, %v6375
    %v6408 = vmul.f32 %v6376, %v6376
    %v6409 = vmul.f32 %v6377, %v6377
    %v6410 = vmul.f32 %v6378, %v6378
    %v6411 = vmul.f32 %v6379, %v6379
    %v6412 = vmul.f32 %v6380, %v6380
    %v6413 = vadd.f32 %v6381, %v6382
    %v6414 = vadd.f32 %v6413, %v6383
    %v6415 = vadd.f32 %v6414, %v6384
    %6416 = vadd.xlane.f32.xlu0 %v6415
    %v6417 = vpop.xlane.xlu0 %6416
    %v6418 = vadd.f32 %v6385, %v6386
    %v6419 = vadd.f32 %v6418, %v6387
    %v6420 = vadd.f32 %v6419, %v6388
    %6421 = vadd.xlane.f32.xlu0 %v6420
    %v6422 = vpop.xlane.xlu0 %6421
    %v6423 = vadd.f32 %v6389, %v6390
    %v6424 = vadd.f32 %v6423, %v6391
    %v6425 = vadd.f32 %v6424, %v6392
    %6426 = vadd.xlane.f32.xlu0 %v6425
    %v6427 = vpop.xlane.xlu0 %6426
    %v6428 = vadd.f32 %v6393, %v6394
    %v6429 = vadd.f32 %v6428, %v6395
    %v6430 = vadd.f32 %v6429, %v6396
    %6431 = vadd.xlane.f32.xlu0 %v6430
    %v6432 = vpop.xlane.xlu0 %6431
    %v6433 = vadd.f32 %v6397, %v6398
    %v6434 = vadd.f32 %v6433, %v6399
    %v6435 = vadd.f32 %v6434, %v6400
    %6436 = vadd.xlane.f32.xlu0 %v6435
    %v6437 = vpop.xlane.xlu0 %6436
    %v6438 = vadd.f32 %v6401, %v6402
    %v6439 = vadd.f32 %v6438, %v6403
    %v6440 = vadd.f32 %v6439, %v6404
    %6441 = vadd.xlane.f32.xlu0 %v6440
    %v6442 = vpop.xlane.xlu0 %6441
    %v6443 = vadd.f32 %v6405, %v6406
    %v6444 = vadd.f32 %v6443, %v6407
    %v6445 = vadd.f32 %v6444, %v6408
    %6446 = vadd.xlane.f32.xlu0 %v6445
    %v6447 = vpop.xlane.xlu0 %6446
    %v6448 = vadd.f32 %v6409, %v6410
    %v6449 = vadd.f32 %v6448, %v6411
    %v6450 = vadd.f32 %v6449, %v6412
    %6451 = vadd.xlane.f32.xlu0 %v6450
    %v6452 = vpop.xlane.xlu0 %6451
    %v6453 = vmul.f32 %v6417, %v6340
    %v6454 = vmul.f32 %v6422, %v6340
    %v6455 = vmul.f32 %v6427, %v6340
    %v6456 = vmul.f32 %v6432, %v6340
    %v6457 = vmul.f32 %v6437, %v6340
    %v6458 = vmul.f32 %v6442, %v6340
    %v6459 = vmul.f32 %v6447, %v6340
    %v6460 = vmul.f32 %v6452, %v6340
    %v6461 = vadd.f32 %v6453, 1e-05
    %v6462 = vadd.f32 %v6454, 1e-05
    %v6463 = vadd.f32 %v6455, 1e-05
    %v6464 = vadd.f32 %v6456, 1e-05
    %v6465 = vadd.f32 %v6457, 1e-05
    %v6466 = vadd.f32 %v6458, 1e-05
    %v6467 = vadd.f32 %v6459, 1e-05
    %v6468 = vadd.f32 %v6460, 1e-05
    %v6469 = vrsqrt.pop %v6461
    %v6470 = vrsqrt.pop %v6462
    %v6471 = vrsqrt.pop %v6463
    %v6472 = vrsqrt.pop %v6464
    %v6473 = vrsqrt.pop %v6465
    %v6474 = vrsqrt.pop %v6466
    %v6475 = vrsqrt.pop %v6467
    %v6476 = vrsqrt.pop %v6468
    %v6477 = vmul.f32 %v6349, %v6469
    %v6478 = vmul.f32 %v6350, %v6469
    %v6479 = vmul.f32 %v6351, %v6469
    %v6480 = vmul.f32 %v6352, %v6469
    %v6481 = vmul.f32 %v6353, %v6470
    %v6482 = vmul.f32 %v6354, %v6470
    %v6483 = vmul.f32 %v6355, %v6470
    %v6484 = vmul.f32 %v6356, %v6470
    %v6485 = vmul.f32 %v6357, %v6471
    %v6486 = vmul.f32 %v6358, %v6471
    %v6487 = vmul.f32 %v6359, %v6471
    %v6488 = vmul.f32 %v6360, %v6471
    %v6489 = vmul.f32 %v6361, %v6472
    %v6490 = vmul.f32 %v6362, %v6472
    %v6491 = vmul.f32 %v6363, %v6472
    %v6492 = vmul.f32 %v6364, %v6472
    %v6493 = vmul.f32 %v6365, %v6473
    %v6494 = vmul.f32 %v6366, %v6473
    %v6495 = vmul.f32 %v6367, %v6473
    %v6496 = vmul.f32 %v6368, %v6473
    %v6497 = vmul.f32 %v6369, %v6474
    %v6498 = vmul.f32 %v6370, %v6474
    %v6499 = vmul.f32 %v6371, %v6474
    %v6500 = vmul.f32 %v6372, %v6474
    %v6501 = vmul.f32 %v6373, %v6475
    %v6502 = vmul.f32 %v6374, %v6475
    %v6503 = vmul.f32 %v6375, %v6475
    %v6504 = vmul.f32 %v6376, %v6475
    %v6505 = vmul.f32 %v6377, %v6476
    %v6506 = vmul.f32 %v6378, %v6476
    %v6507 = vmul.f32 %v6379, %v6476
    %v6508 = vmul.f32 %v6380, %v6476
    %v6510 = vlaneseq
    %v6511 = vshrl.u32 %v6510, 7
    %v6512 = vsub.s32 0, %v6511
    %v6513 = vrot.slane %v176, %v6512
    %v6514 = vlaneseq
    %v6515 = vshrl.u32 %v6514, 7
    %v6516 = vsub.s32 1, %v6515
    %v6517 = vrot.slane %v176, %v6516
    %v6518 = vlaneseq
    %v6519 = vshrl.u32 %v6518, 7
    %v6520 = vsub.s32 2, %v6519
    %v6521 = vrot.slane %v176, %v6520
    %v6522 = vlaneseq
    %v6523 = vshrl.u32 %v6522, 7
    %v6524 = vsub.s32 3, %v6523
    %v6525 = vrot.slane %v176, %v6524
    %v6530 = vmul.f32 %v6477, %v6513
    %v6531 = vmul.f32 %v6478, %v6517
    %v6532 = vmul.f32 %v6479, %v6521
    %v6533 = vmul.f32 %v6480, %v6525
    %v6534 = vmul.f32 %v6481, %v6513
    %v6535 = vmul.f32 %v6482, %v6517
    %v6536 = vmul.f32 %v6483, %v6521
    %v6537 = vmul.f32 %v6484, %v6525
    %v6538 = vmul.f32 %v6485, %v6513
    %v6539 = vmul.f32 %v6486, %v6517
    %v6540 = vmul.f32 %v6487, %v6521
    %v6541 = vmul.f32 %v6488, %v6525
    %v6542 = vmul.f32 %v6489, %v6513
    %v6543 = vmul.f32 %v6490, %v6517
    %v6544 = vmul.f32 %v6491, %v6521
    %v6545 = vmul.f32 %v6492, %v6525
    %v6546 = vmul.f32 %v6493, %v6513
    %v6547 = vmul.f32 %v6494, %v6517
    %v6548 = vmul.f32 %v6495, %v6521
    %v6549 = vmul.f32 %v6496, %v6525
    %v6550 = vmul.f32 %v6497, %v6513
    %v6551 = vmul.f32 %v6498, %v6517
    %v6552 = vmul.f32 %v6499, %v6521
    %v6553 = vmul.f32 %v6500, %v6525
    %v6554 = vmul.f32 %v6501, %v6513
    %v6555 = vmul.f32 %v6502, %v6517
    %v6556 = vmul.f32 %v6503, %v6521
    %v6557 = vmul.f32 %v6504, %v6525
    %v6558 = vmul.f32 %v6505, %v6513
    %v6559 = vmul.f32 %v6506, %v6517
    %v6560 = vmul.f32 %v6507, %v6521
    %v6561 = vmul.f32 %v6508, %v6525
    %v6563 = vlaneseq
    %v6564 = vshrl.u32 %v6563, 7
    %v6565 = vsub.s32 0, %v6564
    %v6566 = vrot.slane %v178, %v6565
    %v6567 = vlaneseq
    %v6568 = vshrl.u32 %v6567, 7
    %v6569 = vsub.s32 1, %v6568
    %v6570 = vrot.slane %v178, %v6569
    %v6571 = vlaneseq
    %v6572 = vshrl.u32 %v6571, 7
    %v6573 = vsub.s32 2, %v6572
    %v6574 = vrot.slane %v178, %v6573
    %v6575 = vlaneseq
    %v6576 = vshrl.u32 %v6575, 7
    %v6577 = vsub.s32 3, %v6576
    %v6578 = vrot.slane %v178, %v6577
    %v6583 = vadd.f32 %v6530, %v6566
    %v6584 = vadd.f32 %v6531, %v6570
    %v6585 = vadd.f32 %v6532, %v6574
    %v6586 = vadd.f32 %v6533, %v6578
    %v6587 = vadd.f32 %v6534, %v6566
    %v6588 = vadd.f32 %v6535, %v6570
    %v6589 = vadd.f32 %v6536, %v6574
    %v6590 = vadd.f32 %v6537, %v6578
    %v6591 = vadd.f32 %v6538, %v6566
    %v6592 = vadd.f32 %v6539, %v6570
    %v6593 = vadd.f32 %v6540, %v6574
    %v6594 = vadd.f32 %v6541, %v6578
    %v6595 = vadd.f32 %v6542, %v6566
    %v6596 = vadd.f32 %v6543, %v6570
    %v6597 = vadd.f32 %v6544, %v6574
    %v6598 = vadd.f32 %v6545, %v6578
    %v6599 = vadd.f32 %v6546, %v6566
    %v6600 = vadd.f32 %v6547, %v6570
    %v6601 = vadd.f32 %v6548, %v6574
    %v6602 = vadd.f32 %v6549, %v6578
    %v6603 = vadd.f32 %v6550, %v6566
    %v6604 = vadd.f32 %v6551, %v6570
    %v6605 = vadd.f32 %v6552, %v6574
    %v6606 = vadd.f32 %v6553, %v6578
    %v6607 = vadd.f32 %v6554, %v6566
    %v6608 = vadd.f32 %v6555, %v6570
    %v6609 = vadd.f32 %v6556, %v6574
    %v6610 = vadd.f32 %v6557, %v6578
    %v6611 = vadd.f32 %v6558, %v6566
    %v6612 = vadd.f32 %v6559, %v6570
    %v6613 = vadd.f32 %v6560, %v6574
    %v6614 = vadd.f32 %v6561, %v6578
    %v6615 = vpack.c.bf16 %v6587, %v6583
    %v6616 = vpack.c.bf16 %v6588, %v6584
    %v6617 = vpack.c.bf16 %v6589, %v6585
    %v6618 = vpack.c.bf16 %v6590, %v6586
    %v6619 = vpack.c.bf16 %v6595, %v6591
    %v6620 = vpack.c.bf16 %v6596, %v6592
    %v6621 = vpack.c.bf16 %v6597, %v6593
    %v6622 = vpack.c.bf16 %v6598, %v6594
    %v6623 = vpack.c.bf16 %v6603, %v6599
    %v6624 = vpack.c.bf16 %v6604, %v6600
    %v6625 = vpack.c.bf16 %v6605, %v6601
    %v6626 = vpack.c.bf16 %v6606, %v6602
    %v6627 = vpack.c.bf16 %v6611, %v6607
    %v6628 = vpack.c.bf16 %v6612, %v6608
    %v6629 = vpack.c.bf16 %v6613, %v6609
    %v6630 = vpack.c.bf16 %v6614, %v6610
    %v6631 = vld [vmem:[#allocation16] sm:$0xf]
    %v6632 = vld [vmem:[#allocation16 + $0x4] sm:$0xf]
    %v6633 = vld [vmem:[#allocation16 + $0x8] sm:$0xf]
    %v6634 = vld [vmem:[#allocation16 + $0xc] sm:$0xf]
    %v6635 = vld [vmem:[#allocation16 + $0x10] sm:$0xf]
    %v6636 = vld [vmem:[#allocation16 + $0x14] sm:$0xf]
    %v6637 = vld [vmem:[#allocation16 + $0x18] sm:$0xf]
    %v6638 = vld [vmem:[#allocation16 + $0x1c] sm:$0xf]
    %v6639 = vld [vmem:[#allocation16 + $0x20] sm:$0xf]
    %v6640 = vld [vmem:[#allocation16 + $0x24] sm:$0xf]
    %v6641 = vld [vmem:[#allocation16 + $0x28] sm:$0xf]
    %v6642 = vld [vmem:[#allocation16 + $0x2c] sm:$0xf]
    %v6643 = vld [vmem:[#allocation16 + $0x30] sm:$0xf]
    %v6644 = vld [vmem:[#allocation16 + $0x34] sm:$0xf]
    %v6645 = vld [vmem:[#allocation16 + $0x38] sm:$0xf]
    %v6646 = vld [vmem:[#allocation16 + $0x3c] sm:$0xf]
    %v6647 = vld [vmem:[#allocation16 + $0x40] sm:$0xf]
    %v6648 = vld [vmem:[#allocation16 + $0x44] sm:$0xf]
    %v6649 = vld [vmem:[#allocation16 + $0x48] sm:$0xf]
    %v6650 = vld [vmem:[#allocation16 + $0x4c] sm:$0xf]
    %v6651 = vld [vmem:[#allocation16 + $0x50] sm:$0xf]
    %v6652 = vld [vmem:[#allocation16 + $0x54] sm:$0xf]
    %v6653 = vld [vmem:[#allocation16 + $0x58] sm:$0xf]
    %v6654 = vld [vmem:[#allocation16 + $0x5c] sm:$0xf]
    %v6655 = vld [vmem:[#allocation16 + $0x60] sm:$0xf]
    %v6656 = vld [vmem:[#allocation16 + $0x64] sm:$0xf]
    %v6657 = vld [vmem:[#allocation16 + $0x68] sm:$0xf]
    %v6658 = vld [vmem:[#allocation16 + $0x6c] sm:$0xf]
    %v6659 = vld [vmem:[#allocation16 + $0x70] sm:$0xf]
    %v6660 = vld [vmem:[#allocation16 + $0x74] sm:$0xf]
    %v6661 = vld [vmem:[#allocation16 + $0x78] sm:$0xf]
    %v6662 = vld [vmem:[#allocation16 + $0x7c] sm:$0xf]
    %v6663 = vld [vmem:[#allocation16 + $0x80] sm:$0xf]
    %v6664 = vld [vmem:[#allocation16 + $0x84] sm:$0xf]
    %v6665 = vld [vmem:[#allocation16 + $0x88] sm:$0xf]
    %v6666 = vld [vmem:[#allocation16 + $0x8c] sm:$0xf]
    %v6667 = vld [vmem:[#allocation16 + $0x90] sm:$0xf]
    %v6668 = vld [vmem:[#allocation16 + $0x94] sm:$0xf]
    %v6669 = vld [vmem:[#allocation16 + $0x98] sm:$0xf]
    %v6670 = vld [vmem:[#allocation16 + $0x9c] sm:$0xf]
    %v6671 = vld [vmem:[#allocation16 + $0xa0] sm:$0xf]
    %v6672 = vld [vmem:[#allocation16 + $0xa4] sm:$0xf]
    %v6673 = vld [vmem:[#allocation16 + $0xa8] sm:$0xf]
    %v6674 = vld [vmem:[#allocation16 + $0xac] sm:$0xf]
    %v6675 = vld [vmem:[#allocation16 + $0xb0] sm:$0xf]
    %v6676 = vld [vmem:[#allocation16 + $0xb4] sm:$0xf]
    %v6677 = vld [vmem:[#allocation16 + $0xb8] sm:$0xf]
    %v6678 = vld [vmem:[#allocation16 + $0xbc] sm:$0xf]
    %v6679 = vld [vmem:[#allocation16 + $0xc0] sm:$0xf]
    %v6680 = vld [vmem:[#allocation16 + $0xc4] sm:$0xf]
    %v6681 = vld [vmem:[#allocation16 + $0xc8] sm:$0xf]
    %v6682 = vld [vmem:[#allocation16 + $0xcc] sm:$0xf]
    %v6683 = vld [vmem:[#allocation16 + $0xd0] sm:$0xf]
    %v6684 = vld [vmem:[#allocation16 + $0xd4] sm:$0xf]
    %v6685 = vld [vmem:[#allocation16 + $0xd8] sm:$0xf]
    %v6686 = vld [vmem:[#allocation16 + $0xdc] sm:$0xf]
    %v6687 = vld [vmem:[#allocation16 + $0xe0] sm:$0xf]
    %v6688 = vld [vmem:[#allocation16 + $0xe4] sm:$0xf]
    %v6689 = vld [vmem:[#allocation16 + $0xe8] sm:$0xf]
    %v6690 = vld [vmem:[#allocation16 + $0xec] sm:$0xf]
    %v6691 = vld [vmem:[#allocation16 + $0xf0] sm:$0xf]
    %v6692 = vld [vmem:[#allocation16 + $0xf4] sm:$0xf]
    %v6693 = vld [vmem:[#allocation16 + $0xf8] sm:$0xf]
    %v6694 = vld [vmem:[#allocation16 + $0xfc] sm:$0xf]
    %v6695 = vld [vmem:[%s10] sm:$0x1]
    %v6697 = vlaneseq
    %v6698 = vshrl.u32 %v6697, 7
    %v6699 = vsub.s32 0, %v6698
    %v6700 = vrot.slane %v6695, %v6699
    %v6766 = vunpack.c.l.b16 %v6631
    %v6767 = vunpack.c.l.b16 %v6632
    %v6768 = vunpack.c.l.b16 %v6633
    %v6769 = vunpack.c.l.b16 %v6634
    %v6770 = vunpack.c.l.b16 %v6635
    %v6771 = vunpack.c.l.b16 %v6636
    %v6772 = vunpack.c.l.b16 %v6637
    %v6773 = vunpack.c.l.b16 %v6638
    %v6774 = vunpack.c.l.b16 %v6639
    %v6775 = vunpack.c.l.b16 %v6640
    %v6776 = vunpack.c.l.b16 %v6641
    %v6777 = vunpack.c.l.b16 %v6642
    %v6778 = vunpack.c.l.b16 %v6643
    %v6779 = vunpack.c.l.b16 %v6644
    %v6780 = vunpack.c.l.b16 %v6645
    %v6781 = vunpack.c.l.b16 %v6646
    %v6782 = vunpack.c.l.b16 %v6647
    %v6783 = vunpack.c.l.b16 %v6648
    %v6784 = vunpack.c.l.b16 %v6649
    %v6785 = vunpack.c.l.b16 %v6650
    %v6786 = vunpack.c.l.b16 %v6651
    %v6787 = vunpack.c.l.b16 %v6652
    %v6788 = vunpack.c.l.b16 %v6653
    %v6789 = vunpack.c.l.b16 %v6654
    %v6790 = vunpack.c.l.b16 %v6655
    %v6791 = vunpack.c.l.b16 %v6656
    %v6792 = vunpack.c.l.b16 %v6657
    %v6793 = vunpack.c.l.b16 %v6658
    %v6794 = vunpack.c.l.b16 %v6659
    %v6795 = vunpack.c.l.b16 %v6660
    %v6796 = vunpack.c.l.b16 %v6661
    %v6797 = vunpack.c.l.b16 %v6662
    %v6798 = vunpack.c.l.b16 %v6663
    %v6799 = vunpack.c.l.b16 %v6664
    %v6800 = vunpack.c.l.b16 %v6665
    %v6801 = vunpack.c.l.b16 %v6666
    %v6802 = vunpack.c.l.b16 %v6667
    %v6803 = vunpack.c.l.b16 %v6668
    %v6804 = vunpack.c.l.b16 %v6669
    %v6805 = vunpack.c.l.b16 %v6670
    %v6806 = vunpack.c.l.b16 %v6671
    %v6807 = vunpack.c.l.b16 %v6672
    %v6808 = vunpack.c.l.b16 %v6673
    %v6809 = vunpack.c.l.b16 %v6674
    %v6810 = vunpack.c.l.b16 %v6675
    %v6811 = vunpack.c.l.b16 %v6676
    %v6812 = vunpack.c.l.b16 %v6677
    %v6813 = vunpack.c.l.b16 %v6678
    %v6814 = vunpack.c.l.b16 %v6679
    %v6815 = vunpack.c.l.b16 %v6680
    %v6816 = vunpack.c.l.b16 %v6681
    %v6817 = vunpack.c.l.b16 %v6682
    %v6818 = vunpack.c.l.b16 %v6683
    %v6819 = vunpack.c.l.b16 %v6684
    %v6820 = vunpack.c.l.b16 %v6685
    %v6821 = vunpack.c.l.b16 %v6686
    %v6822 = vunpack.c.l.b16 %v6687
    %v6823 = vunpack.c.l.b16 %v6688
    %v6824 = vunpack.c.l.b16 %v6689
    %v6825 = vunpack.c.l.b16 %v6690
    %v6826 = vunpack.c.l.b16 %v6691
    %v6827 = vunpack.c.l.b16 %v6692
    %v6828 = vunpack.c.l.b16 %v6693
    %v6829 = vunpack.c.l.b16 %v6694
    %v6830 = vpack.c.b16 %v6767, %v6766
    %v6831 = vpack.c.b16 %v6769, %v6768
    %v6832 = vpack.c.b16 %v6771, %v6770
    %v6833 = vpack.c.b16 %v6773, %v6772
    %v6834 = vpack.c.b16 %v6775, %v6774
    %v6835 = vpack.c.b16 %v6777, %v6776
    %v6836 = vpack.c.b16 %v6779, %v6778
    %v6837 = vpack.c.b16 %v6781, %v6780
    %v6838 = vpack.c.b16 %v6783, %v6782
    %v6839 = vpack.c.b16 %v6785, %v6784
    %v6840 = vpack.c.b16 %v6787, %v6786
    %v6841 = vpack.c.b16 %v6789, %v6788
    %v6842 = vpack.c.b16 %v6791, %v6790
    %v6843 = vpack.c.b16 %v6793, %v6792
    %v6844 = vpack.c.b16 %v6795, %v6794
    %v6845 = vpack.c.b16 %v6797, %v6796
    %v6846 = vpack.c.b16 %v6799, %v6798
    %v6847 = vpack.c.b16 %v6801, %v6800
    %v6848 = vpack.c.b16 %v6803, %v6802
    %v6849 = vpack.c.b16 %v6805, %v6804
    %v6850 = vpack.c.b16 %v6807, %v6806
    %v6851 = vpack.c.b16 %v6809, %v6808
    %v6852 = vpack.c.b16 %v6811, %v6810
    %v6853 = vpack.c.b16 %v6813, %v6812
    %v6854 = vpack.c.b16 %v6815, %v6814
    %v6855 = vpack.c.b16 %v6817, %v6816
    %v6856 = vpack.c.b16 %v6819, %v6818
    %v6857 = vpack.c.b16 %v6821, %v6820
    %v6858 = vpack.c.b16 %v6823, %v6822
    %v6859 = vpack.c.b16 %v6825, %v6824
    %v6860 = vpack.c.b16 %v6827, %v6826
    %v6861 = vpack.c.b16 %v6829, %v6828
    %6894 = vmatprep.subr.bf16.mxu0 0
    %6895 = vmatpush1.bf16.msra.mxu0 %v6837
    %6896 = vmatprep.subr.bf16.mxu0 0
    %6897 = vmatpush1.bf16.msra.mxu0 %v6836
    %6898 = vmatprep.subr.bf16.mxu0 0
    %6899 = vmatpush1.bf16.msra.mxu0 %v6835
    %6900 = vmatprep.subr.bf16.mxu0 0
    %6901 = vmatpush1.bf16.msra.mxu0 %v6834
    %6902 = vmatprep.subr.bf16.mxu0 0
    %6903 = vmatpush1.bf16.msra.mxu0 %v6833
    %6904 = vmatprep.subr.bf16.mxu0 0
    %6905 = vmatpush1.bf16.msra.mxu0 %v6832
    %6906 = vmatprep.subr.bf16.mxu0 0
    %6907 = vmatpush1.bf16.msra.mxu0 %v6831
    %6908 = vmatprep.subr.bf16.mxu0 0
    %6909 = vmatpush1.bf16.msra.mxu0 %v6830
    %6910 = vmatprep.subr.bf16.mxu0 0
    %6911 = vmatpush2.bf16.msra.mxu0 %v6845
    %6912 = vmatprep.subr.bf16.mxu0 0
    %6913 = vmatpush2.bf16.msra.mxu0 %v6844
    %6914 = vmatprep.subr.bf16.mxu0 0
    %6915 = vmatpush2.bf16.msra.mxu0 %v6843
    %6916 = vmatprep.subr.bf16.mxu0 0
    %6917 = vmatpush2.bf16.msra.mxu0 %v6842
    %6918 = vmatprep.subr.bf16.mxu0 0
    %6919 = vmatpush2.bf16.msra.mxu0 %v6841
    %6920 = vmatprep.subr.bf16.mxu0 0
    %6921 = vmatpush2.bf16.msra.mxu0 %v6840
    %6922 = vmatprep.subr.bf16.mxu0 0
    %6923 = vmatpush2.bf16.msra.mxu0 %v6839
    %6924 = vmatprep.subr.bf16.mxu0 0
    %6925 = vmatpush2.bf16.msra.mxu0 %v6838
    %6926 = vmatprep.mubr.bf16.mxu0 %v6616
    %6927 = vmatmul.mubr.bf16.gmra.mxu0 %v6615
    %v6928 = vpop.f32.mrf.mxu0
    %v6929 = vadd.f32 %v6700, %v6928
    %v6930 = vpop.f32.mrf.mxu0
    %v6931 = vpop.f32.mrf.mxu0
    %v6932 = vadd.f32 %v6700, %v6931
    %v6933 = vpop.f32.mrf.mxu0
    %6934 = vmatprep.mubr.bf16.mxu0 %v6620
    %6935 = vmatmul.mubr.bf16.gmra.mxu0 %v6619
    %v6936 = vpop.f32.mrf.mxu0
    %v6937 = vadd.f32 %v6700, %v6936
    %v6938 = vpop.f32.mrf.mxu0
    %v6939 = vpop.f32.mrf.mxu0
    %v6940 = vadd.f32 %v6700, %v6939
    %v6941 = vpop.f32.mrf.mxu0
    %6942 = vmatprep.mubr.bf16.mxu0 %v6624
    %6943 = vmatmul.mubr.bf16.gmra.mxu0 %v6623
    %v6944 = vpop.f32.mrf.mxu0
    %v6945 = vadd.f32 %v6700, %v6944
    %v6946 = vpop.f32.mrf.mxu0
    %v6947 = vpop.f32.mrf.mxu0
    %v6948 = vadd.f32 %v6700, %v6947
    %v6949 = vpop.f32.mrf.mxu0
    %6950 = vmatprep.mubr.bf16.mxu0 %v6628
    %6951 = vmatmul.mubr.bf16.gmra.mxu0 %v6627
    %v6952 = vpop.f32.mrf.mxu0
    %v6953 = vadd.f32 %v6700, %v6952
    %v6954 = vpop.f32.mrf.mxu0
    %v6955 = vpop.f32.mrf.mxu0
    %v6956 = vadd.f32 %v6700, %v6955
    %v6957 = vpop.f32.mrf.mxu0
    %6958 = vdwg.mxu0
    %6959 = vmatprep.subr.bf16.mxu0 0
    %6960 = vmatpush1.bf16.msra.mxu0 %v6853
    %6961 = vmatprep.subr.bf16.mxu0 0
    %6962 = vmatpush1.bf16.msra.mxu0 %v6852
    %6963 = vmatprep.subr.bf16.mxu0 0
    %6964 = vmatpush1.bf16.msra.mxu0 %v6851
    %6965 = vmatprep.subr.bf16.mxu0 0
    %6966 = vmatpush1.bf16.msra.mxu0 %v6850
    %6967 = vmatprep.subr.bf16.mxu0 0
    %6968 = vmatpush1.bf16.msra.mxu0 %v6849
    %6969 = vmatprep.subr.bf16.mxu0 0
    %6970 = vmatpush1.bf16.msra.mxu0 %v6848
    %6971 = vmatprep.subr.bf16.mxu0 0
    %6972 = vmatpush1.bf16.msra.mxu0 %v6847
    %6973 = vmatprep.subr.bf16.mxu0 0
    %6974 = vmatpush1.bf16.msra.mxu0 %v6846
    %6975 = vmatprep.subr.bf16.mxu0 0
    %6976 = vmatpush2.bf16.msra.mxu0 %v6861
    %6977 = vmatprep.subr.bf16.mxu0 0
    %6978 = vmatpush2.bf16.msra.mxu0 %v6860
    %6979 = vmatprep.subr.bf16.mxu0 0
    %6980 = vmatpush2.bf16.msra.mxu0 %v6859
    %6981 = vmatprep.subr.bf16.mxu0 0
    %6982 = vmatpush2.bf16.msra.mxu0 %v6858
    %6983 = vmatprep.subr.bf16.mxu0 0
    %6984 = vmatpush2.bf16.msra.mxu0 %v6857
    %6985 = vmatprep.subr.bf16.mxu0 0
    %6986 = vmatpush2.bf16.msra.mxu0 %v6856
    %6987 = vmatprep.subr.bf16.mxu0 0
    %6988 = vmatpush2.bf16.msra.mxu0 %v6855
    %6989 = vmatprep.subr.bf16.mxu0 0
    %6990 = vmatpush2.bf16.msra.mxu0 %v6854
    %6991 = vmatprep.mubr.bf16.mxu0 %v6618
    %6992 = vmatmul.mubr.bf16.gmra.mxu0 %v6617
    %v6993 = vpop.f32.mrf.mxu0
    %v6994 = vadd.f32 %v6929, %v6993
    %v6995 = vpop.f32.mrf.mxu0
    %v6996 = vpop.f32.mrf.mxu0
    %v6997 = vadd.f32 %v6932, %v6996
    %v6998 = vpop.f32.mrf.mxu0
    %6999 = vmatprep.mubr.bf16.mxu0 %v6622
    %7000 = vmatmul.mubr.bf16.gmra.mxu0 %v6621
    %v7001 = vpop.f32.mrf.mxu0
    %v7002 = vadd.f32 %v6937, %v7001
    %v7003 = vpop.f32.mrf.mxu0
    %v7004 = vpop.f32.mrf.mxu0
    %v7005 = vadd.f32 %v6940, %v7004
    %v7006 = vpop.f32.mrf.mxu0
    %7007 = vmatprep.mubr.bf16.mxu0 %v6626
    %7008 = vmatmul.mubr.bf16.gmra.mxu0 %v6625
    %v7009 = vpop.f32.mrf.mxu0
    %v7010 = vadd.f32 %v6945, %v7009
    %v7011 = vpop.f32.mrf.mxu0
    %v7012 = vpop.f32.mrf.mxu0
    %v7013 = vadd.f32 %v6948, %v7012
    %v7014 = vpop.f32.mrf.mxu0
    %7015 = vmatprep.mubr.bf16.mxu0 %v6630
    %7016 = vmatmul.mubr.bf16.gmra.mxu0 %v6629
    %v7017 = vpop.f32.mrf.mxu0
    %v7018 = vadd.f32 %v6953, %v7017
    %v7019 = vpop.f32.mrf.mxu0
    %v7020 = vpop.f32.mrf.mxu0
    %v7021 = vadd.f32 %v6956, %v7020
    %v7022 = vpop.f32.mrf.mxu0
    %7023 = vdwg.mxu0
    %v7024 = vadd.f32 %v5064, %v6994
    %v7025 = vadd.f32 %v5065, %v6997
    %v7026 = vadd.f32 %v5066, %v7002
    %v7027 = vadd.f32 %v5067, %v7005
    %v7028 = vadd.f32 %v5068, %v7010
    %v7029 = vadd.f32 %v5069, %v7013
    %v7030 = vadd.f32 %v5070, %v7018
    %v7031 = vadd.f32 %v5071, %v7021
    %7032 = vst [vmem:[#allocation17] sm:$0xff] %v7024
    %7033 = vst [vmem:[#allocation17 + $0x8] sm:$0xff] %v7025
    %7034 = vst [vmem:[#allocation17 + $0x10] sm:$0xff] %v7026
    %7035 = vst [vmem:[#allocation17 + $0x18] sm:$0xff] %v7027
    %7036 = vst [vmem:[#allocation17 + $0x20] sm:$0xff] %v7028
    %7037 = vst [vmem:[#allocation17 + $0x28] sm:$0xff] %v7029
    %7038 = vst [vmem:[#allocation17 + $0x30] sm:$0xff] %v7030
    %7039 = vst [vmem:[#allocation17 + $0x38] sm:$0xff] %v7031
    // Predicated region
    $region90: #{tpu_custom_call.1} parent=1 // pred_check
      _
    $region91: #{tpu_custom_call.1} parent=1 // pred_check_branch
      %7041 = sbr.rel (0) target = $region93
    $region92: #{tpu_custom_call.1} parent=1 // pred_region
      %s7043 = ssub.s32 1024, 1024
      %7044 = vsyncadd [#allocation4], %s7043
      %s7045 = sshll.u32 [#allocation17], 4
      %s7046 = int_to_ptr.vmem [resolvable:$true] %s7045
      %7051 = dma.vmem_to_hbm [thread:$0]  %s7046, 1024, %s13, [#allocation4], 128, 128, 8
    $region93: #{tpu_custom_call.1} parent=1 // pred_fallthru
      _
    // Predicated region
    $region94: #{tpu_custom_call.1} parent=1 // pred_check
      _
    $region95: #{tpu_custom_call.1} parent=1 // pred_check_branch
      %7053 = sbr.rel (0) target = $region97
    $region96: #{tpu_custom_call.1} parent=1 // pred_region
      %7054 = dma.done [#allocation4], 1024
    $region97: #{tpu_custom_call.1} parent=1 // pred_fallthru
      _
    %7055 = vsyncpa [#allocation3], 1
    %7056 = vsyncpa [#allocation6], 1
    %7057 = vsyncpa [#allocation9], 1
    %7058 = vsyncpa [#allocation12], 1
    %7059 = vsyncpa [#allocation15], 1
    %7060 = vsyncpa [#allocation4], 1

</llo_original>
